<compile_context>
chip_gen: v5e
topology: v5e:2x2
jax: 0.10.0
libtpu: 0.0.40
codegen_flags: <defaults>
</compile_context>

<pallas_src>
import jax
import jax.numpy as jnp
from jax.experimental import pallas as pl
from jax.experimental.pallas import tpu as pltpu

EPS = 1e-5
LANE = 128


def _bn_affine(y, g, b):
    """BatchNorm2d training-mode normalization on an (M, Cp) matrix."""
    m = jnp.mean(y, axis=0, keepdims=True)
    d = y - m
    v = jnp.mean(d * d, axis=0, keepdims=True)   # biased variance, like PyTorch
    return d * jax.lax.rsqrt(v + EPS) * g + b


def _stage_padded(y1, y1p_ref, N, H, W, Hp, Wp, Cp):
    """Write y1 (M, Cp) into y1p_ref interior; zero only the 1-pixel halo."""
    zrow = jnp.zeros((N, 1, Wp, Cp), jnp.float32)
    zcol = jnp.zeros((N, Hp, 1, Cp), jnp.float32)
    y1p_ref[:, 0:1, :, :] = zrow
    y1p_ref[:, Hp - 1:Hp, :, :] = zrow
    y1p_ref[:, :, 0:1, :] = zcol
    y1p_ref[:, :, Wp - 1:Wp, :] = zcol
    y1p_ref[:, 1:H + 1, 1:W + 1, :] = y1.reshape(N, H, W, Cp)


def _make_packed_kernel(C):
    """Kernel for small channel counts (9*C <= 128): one K=128 matmul/conv."""

    def kernel(x_ref, w1_ref, w2_ref, g1_ref, b1_ref, g2_ref, b2_ref,
               o_ref, y1p_ref):
        N, Hp, Wp, Cp = x_ref.shape
        H, W = Hp - 2, Wp - 2
        M = N * H * W

        def packed_patches(src_ref):
            # Lane tap*C + c holds channel c of the (dy,dx)-shifted window.
            # Padded channels of src are exactly zero, so the lane rolls only
            # wrap zeros and the 9 taps never overlap (needs 9*C <= 128).
            acc = src_ref[:, 0:H, 0:W, :].reshape(M, Cp)      # tap 0, no roll
            for tap in range(1, 9):
                dy, dx = divmod(tap, 3)
                s = src_ref[:, dy:dy + H, dx:dx + W, :].reshape(M, Cp)
                acc = acc + pltpu.roll(s, shift=tap * C, axis=1)
            return acc

        # ---- conv1 (single MXU matmul, K = 128) + bn1 + relu ------------
        y1 = jnp.dot(packed_patches(x_ref), w1_ref[...],
                     preferred_element_type=jnp.float32)
        y1 = jnp.maximum(_bn_affine(y1, g1_ref[...], b1_ref[...]), 0.0)

        # ---- stage conv2 input with a zeroed 1-pixel halo ----------------
        _stage_padded(y1, y1p_ref, N, H, W, Hp, Wp, Cp)

        # ---- conv2 + bn2 + residual + relu, single lane-dense store ------
        y2 = jnp.dot(packed_patches(y1p_ref), w2_ref[...],
                     preferred_element_type=jnp.float32)
        y2 = _bn_affine(y2, g2_ref[...], b2_ref[...])
        identity = x_ref[:, 1:H + 1, 1:W + 1, :].reshape(M, Cp)
        o_ref[...] = jnp.maximum(y2 + identity, 0.0).reshape(N, H, W, Cp)

    return kernel


def _striped_kernel(x_ref, w1_ref, w2_ref, g1_ref, b1_ref, g2_ref, b2_ref,
                    o_ref, y1p_ref, patches_ref):
    """General fallback (9*C > 128): tap-striped im2col, K = 9*Cp."""
    N, Hp, Wp, Cp = x_ref.shape
    H, W = Hp - 2, Wp - 2
    M = N * H * W

    def im2col(src_ref):
        for dy in range(3):
            for dx in range(3):
                tap = dy * 3 + dx
                patches_ref[:, tap * Cp:(tap + 1) * Cp] = (
                    src_ref[:, dy:dy + H, dx:dx + W, :].reshape(M, Cp))
        return patches_ref[...]

    y1 = jnp.dot(im2col(x_ref), w1_ref[...], preferred_element_type=jnp.float32)
    y1 = jnp.maximum(_bn_affine(y1, g1_ref[...], b1_ref[...]), 0.0)

    _stage_padded(y1, y1p_ref, N, H, W, Hp, Wp, Cp)

    y2 = jnp.dot(im2col(y1p_ref), w2_ref[...], preferred_element_type=jnp.float32)
    y2 = _bn_affine(y2, g2_ref[...], b2_ref[...])
    identity = x_ref[:, 1:H + 1, 1:W + 1, :].reshape(M, Cp)
    o_ref[...] = jnp.maximum(y2 + identity, 0.0).reshape(N, H, W, Cp)


@jax.jit
def basic_block_forward(x_nchw, w1, g1, b1, w2, g2, b2):
    """NCHW in / NCHW out.  Conv weights are HWIO, BN in training mode."""
    x = jnp.transpose(x_nchw, (0, 2, 3, 1)).astype(jnp.float32)    # NHWC
    N, H, W, Cin = x.shape
    Cmid, Cout = w1.shape[3], w2.shape[3]
    assert Cin == Cmid == Cout, (
        "BasicBlock with stride=1, downsample=None needs equal channel counts")
    C = Cin

    Cp = ((C + LANE - 1) // LANE) * LANE          # lane-dense channel padding
    Hp, Wp = H + 2, W + 2
    M = N * H * W
    packed = (9 * C <= LANE)                      # all 9 taps fit one K block

    # Single pad op: 1-pixel spatial halo + zero channel padding.
    x_pad = jnp.pad(x, ((0, 0), (1, 1), (1, 1), (0, Cp - C)))
    # BN params padded with zeros so padded channels stay exactly zero.
    g1p = jnp.pad(g1.astype(jnp.float32), (0, Cp - C)).reshape(1, Cp)
    b1p = jnp.pad(b1.astype(jnp.float32), (0, Cp - C)).reshape(1, Cp)
    g2p = jnp.pad(g2.astype(jnp.float32), (0, Cp - C)).reshape(1, Cp)
    b2p = jnp.pad(b2.astype(jnp.float32), (0, Cp - C)).reshape(1, Cp)

    if packed:
        # Packed im2col weight layout: row k = tap*C + c_in.
        Kp = LANE

        def prep_w(w):
            return jnp.pad(w.astype(jnp.float32).reshape(9 * C, C),
                           ((0, Kp - 9 * C), (0, Cp - C)))

        kernel = _make_packed_kernel(C)
        scratch = [pltpu.VMEM((N, Hp, Wp, Cp), jnp.float32)]   # padded bn1 act
    else:
        # Tap-striped im2col weight layout: row k = tap*Cp + c_in.
        Kp = 9 * Cp

        def prep_w(w):
            return jnp.pad(w.astype(jnp.float32),
                           ((0, 0), (0, 0), (0, Cp - C), (0, Cp - C))
                           ).reshape(Kp, Cp)

        kernel = _striped_kernel
        scratch = [pltpu.VMEM((N, Hp, Wp, Cp), jnp.float32),   # padded bn1 act
                   pltpu.VMEM((M, Kp), jnp.float32)]           # im2col scratch

    w1p, w2p = prep_w(w1), prep_w(w2)

    out = pl.pallas_call(
        kernel,
        out_shape=jax.ShapeDtypeStruct((N, H, W, Cp), jnp.float32),
        grid=(1,),
        in_specs=[
            pl.BlockSpec((N, Hp, Wp, Cp), lambda i: (0, 0, 0, 0)),
            pl.BlockSpec((Kp, Cp), lambda i: (0, 0)),
            pl.BlockSpec((Kp, Cp), lambda i: (0, 0)),
            pl.BlockSpec((1, Cp), lambda i: (0, 0)),
            pl.BlockSpec((1, Cp), lambda i: (0, 0)),
            pl.BlockSpec((1, Cp), lambda i: (0, 0)),
            pl.BlockSpec((1, Cp), lambda i: (0, 0)),
        ],
        out_specs=pl.BlockSpec((N, H, W, Cp), lambda i: (0, 0, 0, 0)),
        scratch_shapes=scratch,
        compiler_params=pltpu.CompilerParams(
            dimension_semantics=("arbitrary",),
            vmem_limit_bytes=64 * 1024 * 1024),
    )(x_pad, w1p, w2p, g1p, b1p, g2p, b2p)

    out = out[:, :, :, :Cout]                       # drop channel padding
    return jnp.transpose(out, (0, 3, 1, 2))         # back to NCHW


def ref_forward(x_nchw, w1, g1, b1, w2, g2, b2):
    """Pure-JAX reference (same semantics as the PyTorch module in train mode)."""
    x = jnp.transpose(x_nchw, (0, 2, 3, 1)).astype(jnp.float32)

    def bn(y, g, b):
        m = jnp.mean(y, axis=(0, 1, 2))
        v = jnp.var(y, axis=(0, 1, 2))   # biased, like PyTorch BN normalization
        return (y - m) * jax.lax.rsqrt(v + EPS) * g + b

    dn = jax.lax.conv_dimension_numbers(x.shape, w1.shape,
                                        ('NHWC', 'HWIO', 'NHWC'))
    y = jax.lax.conv_general_dilated(x, w1, (1, 1), 'SAME',
                                     dimension_numbers=dn)
    y = jnp.maximum(bn(y, g1, b1), 0.0)
    dn2 = jax.lax.conv_dimension_numbers(y.shape, w2.shape,
                                         ('NHWC', 'HWIO', 'NHWC'))
    y = jax.lax.conv_general_dilated(y, w2, (1, 1), 'SAME',
                                     dimension_numbers=dn2)
    y = jnp.maximum(bn(y, g2, b2) + x, 0.0)
    return jnp.transpose(y, (0, 3, 1, 2))


if __name__ == "__main__":
    # Small shapes consistent with BasicBlock(inplanes=8, planes=8, stride=1,
    # downsample=None): residual path requires Cin == Cout.
    N, C, H, W = 2, 8, 16, 16
    inplanes, planes = C, C

    key = jax.random.PRNGKey(0)
    kx, k1, k2, kg1, kb1, kg2, kb2 = jax.random.split(key, 7)

    x = jax.random.normal(kx, (N, C, H, W), dtype=jnp.float32)
    # Conv weights in HWIO (PyTorch OIHW -> HWIO transpose is implicit in init).
    w1 = 0.1 * jax.random.normal(k1, (3, 3, inplanes, planes), dtype=jnp.float32)
    w2 = 0.1 * jax.random.normal(k2, (3, 3, planes, planes), dtype=jnp.float32)
    g1 = 1.0 + 0.1 * jax.random.normal(kg1, (planes,), dtype=jnp.float32)
    b1 = 0.1 * jax.random.normal(kb1, (planes,), dtype=jnp.float32)
    g2 = 1.0 + 0.1 * jax.random.normal(kg2, (planes,), dtype=jnp.float32)
    b2 = 0.1 * jax.random.normal(kb2, (planes,), dtype=jnp.float32)

    out = basic_block_forward(x, w1, g1, b1, w2, g2, b2)
    out = jax.block_until_ready(out)

    ref = jax.block_until_ready(ref_forward(x, w1, g1, b1, w2, g2, b2))
    assert out.shape == (N, C, H, W)
    assert jnp.allclose(out, ref, atol=1e-4, rtol=1e-4), float(
        jnp.max(jnp.abs(out - ref)))

    print("KERNEL_OK")
</pallas_src>

<mosaic_0001>
module attributes {stable_mosaic.version = 11 : i64} {
  func.func @kernel(%arg0: i32, %arg1: memref<2x18x18x128xf32, #tpu.memory_space<vmem>>, %arg2: memref<128x128xf32, #tpu.memory_space<vmem>>, %arg3: memref<128x128xf32, #tpu.memory_space<vmem>>, %arg4: memref<1x128xf32, #tpu.memory_space<vmem>>, %arg5: memref<1x128xf32, #tpu.memory_space<vmem>>, %arg6: memref<1x128xf32, #tpu.memory_space<vmem>>, %arg7: memref<1x128xf32, #tpu.memory_space<vmem>>, %arg8: memref<2x16x16x128xf32, #tpu.memory_space<vmem>>, %arg9: memref<2x18x18x128xf32, #tpu.memory_space<vmem>>) attributes {dimension_semantics = [#tpu.dimension_semantics<arbitrary>], iteration_bounds = array<i64: 1>, scalar_prefetch = 0 : i64, scratch_operands = 1 : i64, tpu.core_type = #tpu.core_type<tc>, window_params = [{pipeline_mode = #tpu.pipeline_mode<synchronous>, transform_indices = @transform_0, window_bounds = array<i64: 2, 18, 18, 128>}, {pipeline_mode = #tpu.pipeline_mode<synchronous>, transform_indices = @transform_1, window_bounds = array<i64: 128, 128>}, {pipeline_mode = #tpu.pipeline_mode<synchronous>, transform_indices = @transform_2, window_bounds = array<i64: 128, 128>}, {pipeline_mode = #tpu.pipeline_mode<synchronous>, transform_indices = @transform_3, window_bounds = array<i64: 1, 128>}, {pipeline_mode = #tpu.pipeline_mode<synchronous>, transform_indices = @transform_4, window_bounds = array<i64: 1, 128>}, {pipeline_mode = #tpu.pipeline_mode<synchronous>, transform_indices = @transform_5, window_bounds = array<i64: 1, 128>}, {pipeline_mode = #tpu.pipeline_mode<synchronous>, transform_indices = @transform_6, window_bounds = array<i64: 1, 128>}, {pipeline_mode = #tpu.pipeline_mode<synchronous>, transform_indices = @transform_7, window_bounds = array<i64: 2, 16, 16, 128>}]} {
    %c0 = arith.constant 0 : index
    %c0_0 = arith.constant 0 : index
    %c0_1 = arith.constant 0 : index
    %c0_2 = arith.constant 0 : index
    %0 = vector.load %arg1[%c0, %c0_0, %c0_1, %c0_2] : memref<2x18x18x128xf32, #tpu.memory_space<vmem>>, vector<2x16x16x128xf32>
    %1 = vector.shape_cast %0 : vector<2x16x16x128xf32> to vector<512x128xf32>
    %c0_3 = arith.constant 0 : index
    %c0_4 = arith.constant 0 : index
    %c1 = arith.constant 1 : index
    %c0_5 = arith.constant 0 : index
    %2 = vector.load %arg1[%c0_3, %c0_4, %c1, %c0_5] : memref<2x18x18x128xf32, #tpu.memory_space<vmem>>, vector<2x16x16x128xf32>
    %3 = vector.shape_cast %2 : vector<2x16x16x128xf32> to vector<512x128xf32>
    %c8_i32 = arith.constant 8 : i32
    %4 = tpu.dynamic_rotate %3 by %c8_i32 dim 1 : vector<512x128xf32>, i32 -> vector<512x128xf32>
    %5 = arith.addf %1, %4 : vector<512x128xf32>
    %c0_6 = arith.constant 0 : index
    %c0_7 = arith.constant 0 : index
    %c2 = arith.constant 2 : index
    %c0_8 = arith.constant 0 : index
    %6 = vector.load %arg1[%c0_6, %c0_7, %c2, %c0_8] : memref<2x18x18x128xf32, #tpu.memory_space<vmem>>, vector<2x16x16x128xf32>
    %7 = vector.shape_cast %6 : vector<2x16x16x128xf32> to vector<512x128xf32>
    %c16_i32 = arith.constant 16 : i32
    %8 = tpu.dynamic_rotate %7 by %c16_i32 dim 1 : vector<512x128xf32>, i32 -> vector<512x128xf32>
    %9 = arith.addf %5, %8 : vector<512x128xf32>
    %c0_9 = arith.constant 0 : index
    %c1_10 = arith.constant 1 : index
    %c0_11 = arith.constant 0 : index
    %c0_12 = arith.constant 0 : index
    %10 = vector.load %arg1[%c0_9, %c1_10, %c0_11, %c0_12] : memref<2x18x18x128xf32, #tpu.memory_space<vmem>>, vector<2x16x16x128xf32>
    %11 = vector.shape_cast %10 : vector<2x16x16x128xf32> to vector<512x128xf32>
    %c24_i32 = arith.constant 24 : i32
    %12 = tpu.dynamic_rotate %11 by %c24_i32 dim 1 : vector<512x128xf32>, i32 -> vector<512x128xf32>
    %13 = arith.addf %9, %12 : vector<512x128xf32>
    %c0_13 = arith.constant 0 : index
    %c1_14 = arith.constant 1 : index
    %c1_15 = arith.constant 1 : index
    %c0_16 = arith.constant 0 : index
    %14 = vector.load %arg1[%c0_13, %c1_14, %c1_15, %c0_16] : memref<2x18x18x128xf32, #tpu.memory_space<vmem>>, vector<2x16x16x128xf32>
    %15 = vector.shape_cast %14 : vector<2x16x16x128xf32> to vector<512x128xf32>
    %c32_i32 = arith.constant 32 : i32
    %16 = tpu.dynamic_rotate %15 by %c32_i32 dim 1 : vector<512x128xf32>, i32 -> vector<512x128xf32>
    %17 = arith.addf %13, %16 : vector<512x128xf32>
    %c0_17 = arith.constant 0 : index
    %c1_18 = arith.constant 1 : index
    %c2_19 = arith.constant 2 : index
    %c0_20 = arith.constant 0 : index
    %18 = vector.load %arg1[%c0_17, %c1_18, %c2_19, %c0_20] : memref<2x18x18x128xf32, #tpu.memory_space<vmem>>, vector<2x16x16x128xf32>
    %19 = vector.shape_cast %18 : vector<2x16x16x128xf32> to vector<512x128xf32>
    %c40_i32 = arith.constant 40 : i32
    %20 = tpu.dynamic_rotate %19 by %c40_i32 dim 1 : vector<512x128xf32>, i32 -> vector<512x128xf32>
    %21 = arith.addf %17, %20 : vector<512x128xf32>
    %c0_21 = arith.constant 0 : index
    %c2_22 = arith.constant 2 : index
    %c0_23 = arith.constant 0 : index
    %c0_24 = arith.constant 0 : index
    %22 = vector.load %arg1[%c0_21, %c2_22, %c0_23, %c0_24] : memref<2x18x18x128xf32, #tpu.memory_space<vmem>>, vector<2x16x16x128xf32>
    %23 = vector.shape_cast %22 : vector<2x16x16x128xf32> to vector<512x128xf32>
    %c48_i32 = arith.constant 48 : i32
    %24 = tpu.dynamic_rotate %23 by %c48_i32 dim 1 : vector<512x128xf32>, i32 -> vector<512x128xf32>
    %25 = arith.addf %21, %24 : vector<512x128xf32>
    %c0_25 = arith.constant 0 : index
    %c2_26 = arith.constant 2 : index
    %c1_27 = arith.constant 1 : index
    %c0_28 = arith.constant 0 : index
    %26 = vector.load %arg1[%c0_25, %c2_26, %c1_27, %c0_28] : memref<2x18x18x128xf32, #tpu.memory_space<vmem>>, vector<2x16x16x128xf32>
    %27 = vector.shape_cast %26 : vector<2x16x16x128xf32> to vector<512x128xf32>
    %c56_i32 = arith.constant 56 : i32
    %28 = tpu.dynamic_rotate %27 by %c56_i32 dim 1 : vector<512x128xf32>, i32 -> vector<512x128xf32>
    %29 = arith.addf %25, %28 : vector<512x128xf32>
    %c0_29 = arith.constant 0 : index
    %c2_30 = arith.constant 2 : index
    %c2_31 = arith.constant 2 : index
    %c0_32 = arith.constant 0 : index
    %30 = vector.load %arg1[%c0_29, %c2_30, %c2_31, %c0_32] : memref<2x18x18x128xf32, #tpu.memory_space<vmem>>, vector<2x16x16x128xf32>
    %31 = vector.shape_cast %30 : vector<2x16x16x128xf32> to vector<512x128xf32>
    %c64_i32 = arith.constant 64 : i32
    %32 = tpu.dynamic_rotate %31 by %c64_i32 dim 1 : vector<512x128xf32>, i32 -> vector<512x128xf32>
    %33 = arith.addf %29, %32 : vector<512x128xf32>
    %c0_33 = arith.constant 0 : index
    %c0_34 = arith.constant 0 : index
    %34 = vector.load %arg2[%c0_33, %c0_34] : memref<128x128xf32, #tpu.memory_space<vmem>>, vector<128x128xf32>
    %cst = arith.constant dense<0.000000e+00> : vector<512x128xf32>
    %35 = tpu.matmul %33, %34, %cst {dimension_numbers = #tpu.dot_dimension_numbers<[1], [0], [0], [1], [0, 0, 1, 1], [], []>} : vector<512x128xf32>, vector<128x128xf32>, vector<512x128xf32> -> vector<512x128xf32>
    %c0_35 = arith.constant 0 : index
    %c0_36 = arith.constant 0 : index
    %36 = vector.load %arg4[%c0_35, %c0_36] : memref<1x128xf32, #tpu.memory_space<vmem>>, vector<1x128xf32>
    %c0_37 = arith.constant 0 : index
    %c0_38 = arith.constant 0 : index
    %37 = vector.load %arg5[%c0_37, %c0_38] : memref<1x128xf32, #tpu.memory_space<vmem>>, vector<1x128xf32>
    %cst_39 = arith.constant dense<0.000000e+00> : vector<128xf32>
    %38 = vector.multi_reduction <add>, %35, %cst_39 [0] : vector<512x128xf32> to vector<128xf32>
    %39 = vector.shape_cast %38 : vector<128xf32> to vector<1x128xf32>
    %cst_40 = arith.constant 5.120000e+02 : f32
    %40 = vector.broadcast %cst_40 : f32 to vector<1x128xf32>
    %41 = arith.divf %39, %40 : vector<1x128xf32>
    %42 = vector.broadcast %41 : vector<1x128xf32> to vector<512x128xf32>
    %43 = arith.subf %35, %42 : vector<512x128xf32>
    %44 = arith.mulf %43, %43 : vector<512x128xf32>
    %cst_41 = arith.constant dense<0.000000e+00> : vector<128xf32>
    %45 = vector.multi_reduction <add>, %44, %cst_41 [0] : vector<512x128xf32> to vector<128xf32>
    %46 = vector.shape_cast %45 : vector<128xf32> to vector<1x128xf32>
    %cst_42 = arith.constant 5.120000e+02 : f32
    %47 = vector.broadcast %cst_42 : f32 to vector<1x128xf32>
    %48 = arith.divf %46, %47 : vector<1x128xf32>
    %cst_43 = arith.constant 9.99999974E-6 : f32
    %49 = vector.broadcast %cst_43 : f32 to vector<1x128xf32>
    %50 = arith.addf %48, %49 : vector<1x128xf32>
    %51 = math.rsqrt %50 : vector<1x128xf32>
    %52 = vector.broadcast %51 : vector<1x128xf32> to vector<512x128xf32>
    %53 = arith.mulf %43, %52 : vector<512x128xf32>
    %54 = vector.broadcast %36 : vector<1x128xf32> to vector<512x128xf32>
    %55 = arith.mulf %53, %54 : vector<512x128xf32>
    %56 = vector.broadcast %37 : vector<1x128xf32> to vector<512x128xf32>
    %57 = arith.addf %55, %56 : vector<512x128xf32>
    %cst_44 = arith.constant 0.000000e+00 : f32
    %58 = vector.broadcast %cst_44 : f32 to vector<512x128xf32>
    %59 = arith.maximumf %57, %58 : vector<512x128xf32>
    %cst_45 = arith.constant 0.000000e+00 : f32
    %60 = vector.broadcast %cst_45 : f32 to vector<2x1x18x128xf32>
    %cst_46 = arith.constant 0.000000e+00 : f32
    %61 = vector.broadcast %cst_46 : f32 to vector<2x18x1x128xf32>
    %c0_47 = arith.constant 0 : index
    %c0_48 = arith.constant 0 : index
    %c0_49 = arith.constant 0 : index
    %c0_50 = arith.constant 0 : index
    %62 = vector.load %arg9[%c0_47, %c0_48, %c0_49, %c0_50] : memref<2x18x18x128xf32, #tpu.memory_space<vmem>>, vector<2x1x18x128xf32>
    tpu.vector_store %arg9[%c0_47, %c0_48, %c0_49, %c0_50], %60 {strides = array<i32>} : memref<2x18x18x128xf32, #tpu.memory_space<vmem>>, vector<2x1x18x128xf32>,
    %c0_51 = arith.constant 0 : index
    %c17 = arith.constant 17 : index
    %c0_52 = arith.constant 0 : index
    %c0_53 = arith.constant 0 : index
    %63 = vector.load %arg9[%c0_51, %c17, %c0_52, %c0_53] : memref<2x18x18x128xf32, #tpu.memory_space<vmem>>, vector<2x1x18x128xf32>
    tpu.vector_store %arg9[%c0_51, %c17, %c0_52, %c0_53], %60 {strides = array<i32>} : memref<2x18x18x128xf32, #tpu.memory_space<vmem>>, vector<2x1x18x128xf32>,
    %c0_54 = arith.constant 0 : index
    %c0_55 = arith.constant 0 : index
    %c0_56 = arith.constant 0 : index
    %c0_57 = arith.constant 0 : index
    %64 = vector.load %arg9[%c0_54, %c0_55, %c0_56, %c0_57] : memref<2x18x18x128xf32, #tpu.memory_space<vmem>>, vector<2x18x1x128xf32>
    tpu.vector_store %arg9[%c0_54, %c0_55, %c0_56, %c0_57], %61 {strides = array<i32>} : memref<2x18x18x128xf32, #tpu.memory_space<vmem>>, vector<2x18x1x128xf32>,
    %c0_58 = arith.constant 0 : index
    %c0_59 = arith.constant 0 : index
    %c17_60 = arith.constant 17 : index
    %c0_61 = arith.constant 0 : index
    %65 = vector.load %arg9[%c0_58, %c0_59, %c17_60, %c0_61] : memref<2x18x18x128xf32, #tpu.memory_space<vmem>>, vector<2x18x1x128xf32>
    tpu.vector_store %arg9[%c0_58, %c0_59, %c17_60, %c0_61], %61 {strides = array<i32>} : memref<2x18x18x128xf32, #tpu.memory_space<vmem>>, vector<2x18x1x128xf32>,
    %66 = vector.shape_cast %59 : vector<512x128xf32> to vector<2x16x16x128xf32>
    %c0_62 = arith.constant 0 : index
    %c1_63 = arith.constant 1 : index
    %c1_64 = arith.constant 1 : index
    %c0_65 = arith.constant 0 : index
    %67 = vector.load %arg9[%c0_62, %c1_63, %c1_64, %c0_65] : memref<2x18x18x128xf32, #tpu.memory_space<vmem>>, vector<2x16x16x128xf32>
    tpu.vector_store %arg9[%c0_62, %c1_63, %c1_64, %c0_65], %66 {strides = array<i32>} : memref<2x18x18x128xf32, #tpu.memory_space<vmem>>, vector<2x16x16x128xf32>,
    %c0_66 = arith.constant 0 : index
    %c0_67 = arith.constant 0 : index
    %c0_68 = arith.constant 0 : index
    %c0_69 = arith.constant 0 : index
    %68 = vector.load %arg9[%c0_66, %c0_67, %c0_68, %c0_69] : memref<2x18x18x128xf32, #tpu.memory_space<vmem>>, vector<2x16x16x128xf32>
    %69 = vector.shape_cast %68 : vector<2x16x16x128xf32> to vector<512x128xf32>
    %c0_70 = arith.constant 0 : index
    %c0_71 = arith.constant 0 : index
    %c1_72 = arith.constant 1 : index
    %c0_73 = arith.constant 0 : index
    %70 = vector.load %arg9[%c0_70, %c0_71, %c1_72, %c0_73] : memref<2x18x18x128xf32, #tpu.memory_space<vmem>>, vector<2x16x16x128xf32>
    %71 = vector.shape_cast %70 : vector<2x16x16x128xf32> to vector<512x128xf32>
    %c8_i32_74 = arith.constant 8 : i32
    %72 = tpu.dynamic_rotate %71 by %c8_i32_74 dim 1 : vector<512x128xf32>, i32 -> vector<512x128xf32>
    %73 = arith.addf %69, %72 : vector<512x128xf32>
    %c0_75 = arith.constant 0 : index
    %c0_76 = arith.constant 0 : index
    %c2_77 = arith.constant 2 : index
    %c0_78 = arith.constant 0 : index
    %74 = vector.load %arg9[%c0_75, %c0_76, %c2_77, %c0_78] : memref<2x18x18x128xf32, #tpu.memory_space<vmem>>, vector<2x16x16x128xf32>
    %75 = vector.shape_cast %74 : vector<2x16x16x128xf32> to vector<512x128xf32>
    %c16_i32_79 = arith.constant 16 : i32
    %76 = tpu.dynamic_rotate %75 by %c16_i32_79 dim 1 : vector<512x128xf32>, i32 -> vector<512x128xf32>
    %77 = arith.addf %73, %76 : vector<512x128xf32>
    %c0_80 = arith.constant 0 : index
    %c1_81 = arith.constant 1 : index
    %c0_82 = arith.constant 0 : index
    %c0_83 = arith.constant 0 : index
    %78 = vector.load %arg9[%c0_80, %c1_81, %c0_82, %c0_83] : memref<2x18x18x128xf32, #tpu.memory_space<vmem>>, vector<2x16x16x128xf32>
    %79 = vector.shape_cast %78 : vector<2x16x16x128xf32> to vector<512x128xf32>
    %c24_i32_84 = arith.constant 24 : i32
    %80 = tpu.dynamic_rotate %79 by %c24_i32_84 dim 1 : vector<512x128xf32>, i32 -> vector<512x128xf32>
    %81 = arith.addf %77, %80 : vector<512x128xf32>
    %c0_85 = arith.constant 0 : index
    %c1_86 = arith.constant 1 : index
    %c1_87 = arith.constant 1 : index
    %c0_88 = arith.constant 0 : index
    %82 = vector.load %arg9[%c0_85, %c1_86, %c1_87, %c0_88] : memref<2x18x18x128xf32, #tpu.memory_space<vmem>>, vector<2x16x16x128xf32>
    %83 = vector.shape_cast %82 : vector<2x16x16x128xf32> to vector<512x128xf32>
    %c32_i32_89 = arith.constant 32 : i32
    %84 = tpu.dynamic_rotate %83 by %c32_i32_89 dim 1 : vector<512x128xf32>, i32 -> vector<512x128xf32>
    %85 = arith.addf %81, %84 : vector<512x128xf32>
    %c0_90 = arith.constant 0 : index
    %c1_91 = arith.constant 1 : index
    %c2_92 = arith.constant 2 : index
    %c0_93 = arith.constant 0 : index
    %86 = vector.load %arg9[%c0_90, %c1_91, %c2_92, %c0_93] : memref<2x18x18x128xf32, #tpu.memory_space<vmem>>, vector<2x16x16x128xf32>
    %87 = vector.shape_cast %86 : vector<2x16x16x128xf32> to vector<512x128xf32>
    %c40_i32_94 = arith.constant 40 : i32
    %88 = tpu.dynamic_rotate %87 by %c40_i32_94 dim 1 : vector<512x128xf32>, i32 -> vector<512x128xf32>
    %89 = arith.addf %85, %88 : vector<512x128xf32>
    %c0_95 = arith.constant 0 : index
    %c2_96 = arith.constant 2 : index
    %c0_97 = arith.constant 0 : index
    %c0_98 = arith.constant 0 : index
    %90 = vector.load %arg9[%c0_95, %c2_96, %c0_97, %c0_98] : memref<2x18x18x128xf32, #tpu.memory_space<vmem>>, vector<2x16x16x128xf32>
    %91 = vector.shape_cast %90 : vector<2x16x16x128xf32> to vector<512x128xf32>
    %c48_i32_99 = arith.constant 48 : i32
    %92 = tpu.dynamic_rotate %91 by %c48_i32_99 dim 1 : vector<512x128xf32>, i32 -> vector<512x128xf32>
    %93 = arith.addf %89, %92 : vector<512x128xf32>
    %c0_100 = arith.constant 0 : index
    %c2_101 = arith.constant 2 : index
    %c1_102 = arith.constant 1 : index
    %c0_103 = arith.constant 0 : index
    %94 = vector.load %arg9[%c0_100, %c2_101, %c1_102, %c0_103] : memref<2x18x18x128xf32, #tpu.memory_space<vmem>>, vector<2x16x16x128xf32>
    %95 = vector.shape_cast %94 : vector<2x16x16x128xf32> to vector<512x128xf32>
    %c56_i32_104 = arith.constant 56 : i32
    %96 = tpu.dynamic_rotate %95 by %c56_i32_104 dim 1 : vector<512x128xf32>, i32 -> vector<512x128xf32>
    %97 = arith.addf %93, %96 : vector<512x128xf32>
    %c0_105 = arith.constant 0 : index
    %c2_106 = arith.constant 2 : index
    %c2_107 = arith.constant 2 : index
    %c0_108 = arith.constant 0 : index
    %98 = vector.load %arg9[%c0_105, %c2_106, %c2_107, %c0_108] : memref<2x18x18x128xf32, #tpu.memory_space<vmem>>, vector<2x16x16x128xf32>
    %99 = vector.shape_cast %98 : vector<2x16x16x128xf32> to vector<512x128xf32>
    %c64_i32_109 = arith.constant 64 : i32
    %100 = tpu.dynamic_rotate %99 by %c64_i32_109 dim 1 : vector<512x128xf32>, i32 -> vector<512x128xf32>
    %101 = arith.addf %97, %100 : vector<512x128xf32>
    %c0_110 = arith.constant 0 : index
    %c0_111 = arith.constant 0 : index
    %102 = vector.load %arg3[%c0_110, %c0_111] : memref<128x128xf32, #tpu.memory_space<vmem>>, vector<128x128xf32>
    %cst_112 = arith.constant dense<0.000000e+00> : vector<512x128xf32>
    %103 = tpu.matmul %101, %102, %cst_112 {dimension_numbers = #tpu.dot_dimension_numbers<[1], [0], [0], [1], [0, 0, 1, 1], [], []>} : vector<512x128xf32>, vector<128x128xf32>, vector<512x128xf32> -> vector<512x128xf32>
    %c0_113 = arith.constant 0 : index
    %c0_114 = arith.constant 0 : index
    %104 = vector.load %arg6[%c0_113, %c0_114] : memref<1x128xf32, #tpu.memory_space<vmem>>, vector<1x128xf32>
    %c0_115 = arith.constant 0 : index
    %c0_116 = arith.constant 0 : index
    %105 = vector.load %arg7[%c0_115, %c0_116] : memref<1x128xf32, #tpu.memory_space<vmem>>, vector<1x128xf32>
    %cst_117 = arith.constant dense<0.000000e+00> : vector<128xf32>
    %106 = vector.multi_reduction <add>, %103, %cst_117 [0] : vector<512x128xf32> to vector<128xf32>
    %107 = vector.shape_cast %106 : vector<128xf32> to vector<1x128xf32>
    %cst_118 = arith.constant 5.120000e+02 : f32
    %108 = vector.broadcast %cst_118 : f32 to vector<1x128xf32>
    %109 = arith.divf %107, %108 : vector<1x128xf32>
    %110 = vector.broadcast %109 : vector<1x128xf32> to vector<512x128xf32>
    %111 = arith.subf %103, %110 : vector<512x128xf32>
    %112 = arith.mulf %111, %111 : vector<512x128xf32>
    %cst_119 = arith.constant dense<0.000000e+00> : vector<128xf32>
    %113 = vector.multi_reduction <add>, %112, %cst_119 [0] : vector<512x128xf32> to vector<128xf32>
    %114 = vector.shape_cast %113 : vector<128xf32> to vector<1x128xf32>
    %cst_120 = arith.constant 5.120000e+02 : f32
    %115 = vector.broadcast %cst_120 : f32 to vector<1x128xf32>
    %116 = arith.divf %114, %115 : vector<1x128xf32>
    %cst_121 = arith.constant 9.99999974E-6 : f32
    %117 = vector.broadcast %cst_121 : f32 to vector<1x128xf32>
    %118 = arith.addf %116, %117 : vector<1x128xf32>
    %119 = math.rsqrt %118 : vector<1x128xf32>
    %120 = vector.broadcast %119 : vector<1x128xf32> to vector<512x128xf32>
    %121 = arith.mulf %111, %120 : vector<512x128xf32>
    %122 = vector.broadcast %104 : vector<1x128xf32> to vector<512x128xf32>
    %123 = arith.mulf %121, %122 : vector<512x128xf32>
    %124 = vector.broadcast %105 : vector<1x128xf32> to vector<512x128xf32>
    %125 = arith.addf %123, %124 : vector<512x128xf32>
    %c0_122 = arith.constant 0 : index
    %c1_123 = arith.constant 1 : index
    %c1_124 = arith.constant 1 : index
    %c0_125 = arith.constant 0 : index
    %126 = vector.load %arg1[%c0_122, %c1_123, %c1_124, %c0_125] : memref<2x18x18x128xf32, #tpu.memory_space<vmem>>, vector<2x16x16x128xf32>
    %127 = vector.shape_cast %126 : vector<2x16x16x128xf32> to vector<512x128xf32>
    %128 = arith.addf %125, %127 : vector<512x128xf32>
    %cst_126 = arith.constant 0.000000e+00 : f32
    %129 = vector.broadcast %cst_126 : f32 to vector<512x128xf32>
    %130 = arith.maximumf %128, %129 : vector<512x128xf32>
    %131 = vector.shape_cast %130 : vector<512x128xf32> to vector<2x16x16x128xf32>
    %c0_127 = arith.constant 0 : index
    %c0_128 = arith.constant 0 : index
    %c0_129 = arith.constant 0 : index
    %c0_130 = arith.constant 0 : index
    %132 = vector.load %arg8[%c0_127, %c0_128, %c0_129, %c0_130] : memref<2x16x16x128xf32, #tpu.memory_space<vmem>>, vector<2x16x16x128xf32>
    tpu.vector_store %arg8[%c0_127, %c0_128, %c0_129, %c0_130], %131 {strides = array<i32>} : memref<2x16x16x128xf32, #tpu.memory_space<vmem>>, vector<2x16x16x128xf32>,
    return
  }
  func.func @transform_0(%arg0: i32) -> (i32, i32, i32, i32) {
    %c0_i32 = arith.constant 0 : i32
    %c0_i32_0 = arith.constant 0 : i32
    %c0_i32_1 = arith.constant 0 : i32
    %c0_i32_2 = arith.constant 0 : i32
    %c0_i32_3 = arith.constant 0 : i32
    return %c0_i32, %c0_i32_0, %c0_i32_1, %c0_i32_2 : i32, i32, i32, i32
  }
  func.func @transform_1(%arg0: i32) -> (i32, i32) {
    %c0_i32 = arith.constant 0 : i32
    %c0_i32_0 = arith.constant 0 : i32
    %c0_i32_1 = arith.constant 0 : i32
    return %c0_i32, %c0_i32_0 : i32, i32
  }
  func.func @transform_2(%arg0: i32) -> (i32, i32) {
    %c0_i32 = arith.constant 0 : i32
    %c0_i32_0 = arith.constant 0 : i32
    %c0_i32_1 = arith.constant 0 : i32
    return %c0_i32, %c0_i32_0 : i32, i32
  }
  func.func @transform_3(%arg0: i32) -> (i32, i32) {
    %c0_i32 = arith.constant 0 : i32
    %c0_i32_0 = arith.constant 0 : i32
    %c0_i32_1 = arith.constant 0 : i32
    return %c0_i32, %c0_i32_0 : i32, i32
  }
  func.func @transform_4(%arg0: i32) -> (i32, i32) {
    %c0_i32 = arith.constant 0 : i32
    %c0_i32_0 = arith.constant 0 : i32
    %c0_i32_1 = arith.constant 0 : i32
    return %c0_i32, %c0_i32_0 : i32, i32
  }
  func.func @transform_5(%arg0: i32) -> (i32, i32) {
    %c0_i32 = arith.constant 0 : i32
    %c0_i32_0 = arith.constant 0 : i32
    %c0_i32_1 = arith.constant 0 : i32
    return %c0_i32, %c0_i32_0 : i32, i32
  }
  func.func @transform_6(%arg0: i32) -> (i32, i32) {
    %c0_i32 = arith.constant 0 : i32
    %c0_i32_0 = arith.constant 0 : i32
    %c0_i32_1 = arith.constant 0 : i32
    return %c0_i32, %c0_i32_0 : i32, i32
  }
  func.func @transform_7(%arg0: i32) -> (i32, i32, i32, i32) {
    %c0_i32 = arith.constant 0 : i32
    %c0_i32_0 = arith.constant 0 : i32
    %c0_i32_1 = arith.constant 0 : i32
    %c0_i32_2 = arith.constant 0 : i32
    %c0_i32_3 = arith.constant 0 : i32
    return %c0_i32, %c0_i32_0, %c0_i32_1, %c0_i32_2 : i32, i32, i32, i32
  }
}

</mosaic_0001>

<llo_original>
// kernel: basic_block_forward.1
$region0: #{basic_block_forward.1}
  #allocation0 [shape = 'u32[]', space=smem, size = 0x4, offset = 0x4, fixed_abs, tag = 'smem constant byte address 0x4 - core index']
  #allocation1 [shape = 'u32[72,128]{1,0:T(1,128)}', space=vmem, size = 0x9000, scoped, tag = 'internal scratch']
  #allocation2 [shape = 'f32[2,18,18,128]{3,2,1,0:T(8,128)}', space=vmem, size = 0x6c000, scoped, tag = 'scratch operand']
  %s0 = inlined_call_operand.vmem [shape: f32[2,18,18,128], index: 0, kind: input, shape index: {}]
  %s1 = inlined_call_operand.vmem [shape: f32[128,128], index: 1, kind: input, shape index: {}]
  %s2 = inlined_call_operand.vmem [shape: f32[128,128], index: 2, kind: input, shape index: {}]
  %s3 = inlined_call_operand.vmem [shape: f32[1,128], index: 3, kind: input, shape index: {}]
  %s4 = inlined_call_operand.vmem [shape: f32[1,128], index: 4, kind: input, shape index: {}]
  %s5 = inlined_call_operand.vmem [shape: f32[1,128], index: 5, kind: input, shape index: {}]
  %s6 = inlined_call_operand.vmem [shape: f32[1,128], index: 6, kind: input, shape index: {}]
  %s7 = inlined_call_operand.vmem [shape: f32[2,16,16,128], index: 7, kind: output, shape index: {}]
  %s8 = sld [smem:[#allocation0]]
  $region38: #{basic_block_forward.1} parent=0
    _
  %s10 = ssub.s32 1, %s8
  %s11 = scalar_select 0, %s10, %s8
  // Predicated region
  $region2: #{basic_block_forward.1} parent=0 // pred_check
    _
  $region3: #{basic_block_forward.1} parent=0 // pred_check_branch
    %13 = sbr.rel (0) target = $region5
  $region4: #{basic_block_forward.1} parent=0 // pred_region
    _
  $region5: #{basic_block_forward.1} parent=0 // pred_fallthru
    _
  // Predicated region
  $region6: #{basic_block_forward.1} parent=0 // pred_check
    _
  $region7: #{basic_block_forward.1} parent=0 // pred_check_branch
    %15 = sbr.rel (0) target = $region9
  $region8: #{basic_block_forward.1} parent=0 // pred_region
    _
  $region9: #{basic_block_forward.1} parent=0 // pred_fallthru
    _
  // Predicated region
  $region10: #{basic_block_forward.1} parent=0 // pred_check
    _
  $region11: #{basic_block_forward.1} parent=0 // pred_check_branch
    %17 = sbr.rel (0) target = $region13
  $region12: #{basic_block_forward.1} parent=0 // pred_region
    _
  $region13: #{basic_block_forward.1} parent=0 // pred_fallthru
    _
  // Predicated region
  $region14: #{basic_block_forward.1} parent=0 // pred_check
    _
  $region15: #{basic_block_forward.1} parent=0 // pred_check_branch
    %19 = sbr.rel (0) target = $region17
  $region16: #{basic_block_forward.1} parent=0 // pred_region
    _
  $region17: #{basic_block_forward.1} parent=0 // pred_fallthru
    _
  // Predicated region
  $region18: #{basic_block_forward.1} parent=0 // pred_check
    _
  $region19: #{basic_block_forward.1} parent=0 // pred_check_branch
    %21 = sbr.rel (0) target = $region21
  $region20: #{basic_block_forward.1} parent=0 // pred_region
    _
  $region21: #{basic_block_forward.1} parent=0 // pred_fallthru
    _
  // Predicated region
  $region22: #{basic_block_forward.1} parent=0 // pred_check
    _
  $region23: #{basic_block_forward.1} parent=0 // pred_check_branch
    %23 = sbr.rel (0) target = $region25
  $region24: #{basic_block_forward.1} parent=0 // pred_region
    _
  $region25: #{basic_block_forward.1} parent=0 // pred_fallthru
    _
  // Predicated region
  $region26: #{basic_block_forward.1} parent=0 // pred_check
    _
  $region27: #{basic_block_forward.1} parent=0 // pred_check_branch
    %25 = sbr.rel (0) target = $region29
  $region28: #{basic_block_forward.1} parent=0 // pred_region
    _
  $region29: #{basic_block_forward.1} parent=0 // pred_fallthru
    _
  %v26 = vld [vmem:[%s0] sm:$0xff]
  %v27 = vld [vmem:[%s0 + $0x8] sm:$0xff]
  %v28 = vld [vmem:[%s0 + $0x18] sm:$0xff]
  %v29 = vld [vmem:[%s0 + $0x20] sm:$0xff]
  %v30 = vld [vmem:[%s0 + $0x30] sm:$0xff]
  %v31 = vld [vmem:[%s0 + $0x38] sm:$0xff]
  %v32 = vld [vmem:[%s0 + $0x48] sm:$0xff]
  %v33 = vld [vmem:[%s0 + $0x50] sm:$0xff]
  %v34 = vld [vmem:[%s0 + $0x60] sm:$0xff]
  %v35 = vld [vmem:[%s0 + $0x68] sm:$0xff]
  %v36 = vld [vmem:[%s0 + $0x78] sm:$0xff]
  %v37 = vld [vmem:[%s0 + $0x80] sm:$0xff]
  %v38 = vld [vmem:[%s0 + $0x90] sm:$0xff]
  %v39 = vld [vmem:[%s0 + $0x98] sm:$0xff]
  %v40 = vld [vmem:[%s0 + $0xa8] sm:$0xff]
  %v41 = vld [vmem:[%s0 + $0xb0] sm:$0xff]
  %v42 = vld [vmem:[%s0 + $0xc0] sm:$0xff]
  %v43 = vld [vmem:[%s0 + $0xc8] sm:$0xff]
  %v44 = vld [vmem:[%s0 + $0xd8] sm:$0xff]
  %v45 = vld [vmem:[%s0 + $0xe0] sm:$0xff]
  %v46 = vld [vmem:[%s0 + $0xf0] sm:$0xff]
  %v47 = vld [vmem:[%s0 + $0xf8] sm:$0xff]
  %v48 = vld [vmem:[%s0 + $0x108] sm:$0xff]
  %v49 = vld [vmem:[%s0 + $0x110] sm:$0xff]
  %v50 = vld [vmem:[%s0 + $0x120] sm:$0xff]
  %v51 = vld [vmem:[%s0 + $0x128] sm:$0xff]
  %v52 = vld [vmem:[%s0 + $0x138] sm:$0xff]
  %v53 = vld [vmem:[%s0 + $0x140] sm:$0xff]
  %v54 = vld [vmem:[%s0 + $0x150] sm:$0xff]
  %v55 = vld [vmem:[%s0 + $0x158] sm:$0xff]
  %v56 = vld [vmem:[%s0 + $0x168] sm:$0xff]
  %v57 = vld [vmem:[%s0 + $0x170] sm:$0xff]
  %v58 = vld [vmem:[%s0 + $0x1b0] sm:$0xff]
  %v59 = vld [vmem:[%s0 + $0x1b8] sm:$0xff]
  %v60 = vld [vmem:[%s0 + $0x1c8] sm:$0xff]
  %v61 = vld [vmem:[%s0 + $0x1d0] sm:$0xff]
  %v62 = vld [vmem:[%s0 + $0x1e0] sm:$0xff]
  %v63 = vld [vmem:[%s0 + $0x1e8] sm:$0xff]
  %v64 = vld [vmem:[%s0 + $0x1f8] sm:$0xff]
  %v65 = vld [vmem:[%s0 + $0x200] sm:$0xff]
  %v66 = vld [vmem:[%s0 + $0x210] sm:$0xff]
  %v67 = vld [vmem:[%s0 + $0x218] sm:$0xff]
  %v68 = vld [vmem:[%s0 + $0x228] sm:$0xff]
  %v69 = vld [vmem:[%s0 + $0x230] sm:$0xff]
  %v70 = vld [vmem:[%s0 + $0x240] sm:$0xff]
  %v71 = vld [vmem:[%s0 + $0x248] sm:$0xff]
  %v72 = vld [vmem:[%s0 + $0x258] sm:$0xff]
  %v73 = vld [vmem:[%s0 + $0x260] sm:$0xff]
  %v74 = vld [vmem:[%s0 + $0x270] sm:$0xff]
  %v75 = vld [vmem:[%s0 + $0x278] sm:$0xff]
  %v76 = vld [vmem:[%s0 + $0x288] sm:$0xff]
  %v77 = vld [vmem:[%s0 + $0x290] sm:$0xff]
  %v78 = vld [vmem:[%s0 + $0x2a0] sm:$0xff]
  %v79 = vld [vmem:[%s0 + $0x2a8] sm:$0xff]
  %v80 = vld [vmem:[%s0 + $0x2b8] sm:$0xff]
  %v81 = vld [vmem:[%s0 + $0x2c0] sm:$0xff]
  %v82 = vld [vmem:[%s0 + $0x2d0] sm:$0xff]
  %v83 = vld [vmem:[%s0 + $0x2d8] sm:$0xff]
  %v84 = vld [vmem:[%s0 + $0x2e8] sm:$0xff]
  %v85 = vld [vmem:[%s0 + $0x2f0] sm:$0xff]
  %v86 = vld [vmem:[%s0 + $0x300] sm:$0xff]
  %v87 = vld [vmem:[%s0 + $0x308] sm:$0xff]
  %v88 = vld [vmem:[%s0 + $0x318] sm:$0xff]
  %v89 = vld [vmem:[%s0 + $0x320] sm:$0xff]
  %v90 = vld [vmem:[%s0 + $0x1] sm:$0xff]
  %v91 = vld [vmem:[%s0 + $0x9] sm:$0xff]
  %v92 = vld [vmem:[%s0 + $0x19] sm:$0xff]
  %v93 = vld [vmem:[%s0 + $0x21] sm:$0xff]
  %v94 = vld [vmem:[%s0 + $0x31] sm:$0xff]
  %v95 = vld [vmem:[%s0 + $0x39] sm:$0xff]
  %v96 = vld [vmem:[%s0 + $0x49] sm:$0xff]
  %v97 = vld [vmem:[%s0 + $0x51] sm:$0xff]
  %v98 = vld [vmem:[%s0 + $0x61] sm:$0xff]
  %v99 = vld [vmem:[%s0 + $0x69] sm:$0xff]
  %v100 = vld [vmem:[%s0 + $0x79] sm:$0xff]
  %v101 = vld [vmem:[%s0 + $0x81] sm:$0xff]
  %v102 = vld [vmem:[%s0 + $0x91] sm:$0xff]
  %v103 = vld [vmem:[%s0 + $0x99] sm:$0xff]
  %v104 = vld [vmem:[%s0 + $0xa9] sm:$0xff]
  %v105 = vld [vmem:[%s0 + $0xb1] sm:$0xff]
  %v106 = vld [vmem:[%s0 + $0xc1] sm:$0xff]
  %v107 = vld [vmem:[%s0 + $0xc9] sm:$0xff]
  %v108 = vld [vmem:[%s0 + $0xd9] sm:$0xff]
  %v109 = vld [vmem:[%s0 + $0xe1] sm:$0xff]
  %v110 = vld [vmem:[%s0 + $0xf1] sm:$0xff]
  %v111 = vld [vmem:[%s0 + $0xf9] sm:$0xff]
  %v112 = vld [vmem:[%s0 + $0x109] sm:$0xff]
  %v113 = vld [vmem:[%s0 + $0x111] sm:$0xff]
  %v114 = vld [vmem:[%s0 + $0x121] sm:$0xff]
  %v115 = vld [vmem:[%s0 + $0x129] sm:$0xff]
  %v116 = vld [vmem:[%s0 + $0x139] sm:$0xff]
  %v117 = vld [vmem:[%s0 + $0x141] sm:$0xff]
  %v118 = vld [vmem:[%s0 + $0x151] sm:$0xff]
  %v119 = vld [vmem:[%s0 + $0x159] sm:$0xff]
  %v120 = vld [vmem:[%s0 + $0x169] sm:$0xff]
  %v121 = vld [vmem:[%s0 + $0x171] sm:$0xff]
  %v122 = vld [vmem:[%s0 + $0x1b1] sm:$0xff]
  %v123 = vld [vmem:[%s0 + $0x1b9] sm:$0xff]
  %v124 = vld [vmem:[%s0 + $0x1c9] sm:$0xff]
  %v125 = vld [vmem:[%s0 + $0x1d1] sm:$0xff]
  %v126 = vld [vmem:[%s0 + $0x1e1] sm:$0xff]
  %v127 = vld [vmem:[%s0 + $0x1e9] sm:$0xff]
  %v128 = vld [vmem:[%s0 + $0x1f9] sm:$0xff]
  %v129 = vld [vmem:[%s0 + $0x201] sm:$0xff]
  %v130 = vld [vmem:[%s0 + $0x211] sm:$0xff]
  %v131 = vld [vmem:[%s0 + $0x219] sm:$0xff]
  %v132 = vld [vmem:[%s0 + $0x229] sm:$0xff]
  %v133 = vld [vmem:[%s0 + $0x231] sm:$0xff]
  %v134 = vld [vmem:[%s0 + $0x241] sm:$0xff]
  %v135 = vld [vmem:[%s0 + $0x249] sm:$0xff]
  %v136 = vld [vmem:[%s0 + $0x259] sm:$0xff]
  %v137 = vld [vmem:[%s0 + $0x261] sm:$0xff]
  %v138 = vld [vmem:[%s0 + $0x271] sm:$0xff]
  %v139 = vld [vmem:[%s0 + $0x279] sm:$0xff]
  %v140 = vld [vmem:[%s0 + $0x289] sm:$0xff]
  %v141 = vld [vmem:[%s0 + $0x291] sm:$0xff]
  %v142 = vld [vmem:[%s0 + $0x2a1] sm:$0xff]
  %v143 = vld [vmem:[%s0 + $0x2a9] sm:$0xff]
  %v144 = vld [vmem:[%s0 + $0x2b9] sm:$0xff]
  %v145 = vld [vmem:[%s0 + $0x2c1] sm:$0xff]
  %v146 = vld [vmem:[%s0 + $0x2d1] sm:$0xff]
  %v147 = vld [vmem:[%s0 + $0x2d9] sm:$0xff]
  %v148 = vld [vmem:[%s0 + $0x2e9] sm:$0xff]
  %v149 = vld [vmem:[%s0 + $0x2f1] sm:$0xff]
  %v150 = vld [vmem:[%s0 + $0x301] sm:$0xff]
  %v151 = vld [vmem:[%s0 + $0x309] sm:$0xff]
  %v152 = vld [vmem:[%s0 + $0x319] sm:$0xff]
  %v153 = vld [vmem:[%s0 + $0x321] sm:$0xff]
  %154 = vrot.lane.b32.xlu0 %v90, 8
  %v155 = vpop.permute.xlu0 %154
  %156 = vrot.lane.b32.xlu0 %v91, 8
  %v157 = vpop.permute.xlu0 %156
  %158 = vrot.lane.b32.xlu0 %v92, 8
  %v159 = vpop.permute.xlu0 %158
  %160 = vrot.lane.b32.xlu0 %v93, 8
  %v161 = vpop.permute.xlu0 %160
  %162 = vrot.lane.b32.xlu0 %v94, 8
  %v163 = vpop.permute.xlu0 %162
  %164 = vrot.lane.b32.xlu0 %v95, 8
  %v165 = vpop.permute.xlu0 %164
  %166 = vrot.lane.b32.xlu0 %v96, 8
  %v167 = vpop.permute.xlu0 %166
  %168 = vrot.lane.b32.xlu0 %v97, 8
  %v169 = vpop.permute.xlu0 %168
  %170 = vrot.lane.b32.xlu0 %v98, 8
  %v171 = vpop.permute.xlu0 %170
  %172 = vrot.lane.b32.xlu0 %v99, 8
  %v173 = vpop.permute.xlu0 %172
  %174 = vrot.lane.b32.xlu0 %v100, 8
  %v175 = vpop.permute.xlu0 %174
  %176 = vrot.lane.b32.xlu0 %v101, 8
  %v177 = vpop.permute.xlu0 %176
  %178 = vrot.lane.b32.xlu0 %v102, 8
  %v179 = vpop.permute.xlu0 %178
  %180 = vrot.lane.b32.xlu0 %v103, 8
  %v181 = vpop.permute.xlu0 %180
  %182 = vrot.lane.b32.xlu0 %v104, 8
  %v183 = vpop.permute.xlu0 %182
  %184 = vrot.lane.b32.xlu0 %v105, 8
  %v185 = vpop.permute.xlu0 %184
  %186 = vrot.lane.b32.xlu0 %v106, 8
  %v187 = vpop.permute.xlu0 %186
  %188 = vrot.lane.b32.xlu0 %v107, 8
  %v189 = vpop.permute.xlu0 %188
  %190 = vrot.lane.b32.xlu0 %v108, 8
  %v191 = vpop.permute.xlu0 %190
  %192 = vrot.lane.b32.xlu0 %v109, 8
  %v193 = vpop.permute.xlu0 %192
  %194 = vrot.lane.b32.xlu0 %v110, 8
  %v195 = vpop.permute.xlu0 %194
  %196 = vrot.lane.b32.xlu0 %v111, 8
  %v197 = vpop.permute.xlu0 %196
  %198 = vrot.lane.b32.xlu0 %v112, 8
  %v199 = vpop.permute.xlu0 %198
  %200 = vrot.lane.b32.xlu0 %v113, 8
  %v201 = vpop.permute.xlu0 %200
  %202 = vrot.lane.b32.xlu0 %v114, 8
  %v203 = vpop.permute.xlu0 %202
  %204 = vrot.lane.b32.xlu0 %v115, 8
  %v205 = vpop.permute.xlu0 %204
  %206 = vrot.lane.b32.xlu0 %v116, 8
  %v207 = vpop.permute.xlu0 %206
  %208 = vrot.lane.b32.xlu0 %v117, 8
  %v209 = vpop.permute.xlu0 %208
  %210 = vrot.lane.b32.xlu0 %v118, 8
  %v211 = vpop.permute.xlu0 %210
  %212 = vrot.lane.b32.xlu0 %v119, 8
  %v213 = vpop.permute.xlu0 %212
  %214 = vrot.lane.b32.xlu0 %v120, 8
  %v215 = vpop.permute.xlu0 %214
  %216 = vrot.lane.b32.xlu0 %v121, 8
  %v217 = vpop.permute.xlu0 %216
  %218 = vrot.lane.b32.xlu0 %v122, 8
  %v219 = vpop.permute.xlu0 %218
  %220 = vrot.lane.b32.xlu0 %v123, 8
  %v221 = vpop.permute.xlu0 %220
  %222 = vrot.lane.b32.xlu0 %v124, 8
  %v223 = vpop.permute.xlu0 %222
  %224 = vrot.lane.b32.xlu0 %v125, 8
  %v225 = vpop.permute.xlu0 %224
  %226 = vrot.lane.b32.xlu0 %v126, 8
  %v227 = vpop.permute.xlu0 %226
  %228 = vrot.lane.b32.xlu0 %v127, 8
  %v229 = vpop.permute.xlu0 %228
  %230 = vrot.lane.b32.xlu0 %v128, 8
  %v231 = vpop.permute.xlu0 %230
  %232 = vrot.lane.b32.xlu0 %v129, 8
  %v233 = vpop.permute.xlu0 %232
  %234 = vrot.lane.b32.xlu0 %v130, 8
  %v235 = vpop.permute.xlu0 %234
  %236 = vrot.lane.b32.xlu0 %v131, 8
  %v237 = vpop.permute.xlu0 %236
  %238 = vrot.lane.b32.xlu0 %v132, 8
  %v239 = vpop.permute.xlu0 %238
  %240 = vrot.lane.b32.xlu0 %v133, 8
  %v241 = vpop.permute.xlu0 %240
  %242 = vrot.lane.b32.xlu0 %v134, 8
  %v243 = vpop.permute.xlu0 %242
  %244 = vrot.lane.b32.xlu0 %v135, 8
  %v245 = vpop.permute.xlu0 %244
  %246 = vrot.lane.b32.xlu0 %v136, 8
  %v247 = vpop.permute.xlu0 %246
  %248 = vrot.lane.b32.xlu0 %v137, 8
  %v249 = vpop.permute.xlu0 %248
  %250 = vrot.lane.b32.xlu0 %v138, 8
  %v251 = vpop.permute.xlu0 %250
  %252 = vrot.lane.b32.xlu0 %v139, 8
  %v253 = vpop.permute.xlu0 %252
  %254 = vrot.lane.b32.xlu0 %v140, 8
  %v255 = vpop.permute.xlu0 %254
  %256 = vrot.lane.b32.xlu0 %v141, 8
  %v257 = vpop.permute.xlu0 %256
  %258 = vrot.lane.b32.xlu0 %v142, 8
  %v259 = vpop.permute.xlu0 %258
  %260 = vrot.lane.b32.xlu0 %v143, 8
  %v261 = vpop.permute.xlu0 %260
  %262 = vrot.lane.b32.xlu0 %v144, 8
  %v263 = vpop.permute.xlu0 %262
  %264 = vrot.lane.b32.xlu0 %v145, 8
  %v265 = vpop.permute.xlu0 %264
  %266 = vrot.lane.b32.xlu0 %v146, 8
  %v267 = vpop.permute.xlu0 %266
  %268 = vrot.lane.b32.xlu0 %v147, 8
  %v269 = vpop.permute.xlu0 %268
  %270 = vrot.lane.b32.xlu0 %v148, 8
  %v271 = vpop.permute.xlu0 %270
  %272 = vrot.lane.b32.xlu0 %v149, 8
  %v273 = vpop.permute.xlu0 %272
  %274 = vrot.lane.b32.xlu0 %v150, 8
  %v275 = vpop.permute.xlu0 %274
  %276 = vrot.lane.b32.xlu0 %v151, 8
  %v277 = vpop.permute.xlu0 %276
  %278 = vrot.lane.b32.xlu0 %v152, 8
  %v279 = vpop.permute.xlu0 %278
  %280 = vrot.lane.b32.xlu0 %v153, 8
  %v281 = vpop.permute.xlu0 %280
  %v282 = vadd.f32 %v26, %v155
  %v283 = vadd.f32 %v27, %v157
  %v284 = vadd.f32 %v28, %v159
  %v285 = vadd.f32 %v29, %v161
  %v286 = vadd.f32 %v30, %v163
  %v287 = vadd.f32 %v31, %v165
  %v288 = vadd.f32 %v32, %v167
  %v289 = vadd.f32 %v33, %v169
  %v290 = vadd.f32 %v34, %v171
  %v291 = vadd.f32 %v35, %v173
  %v292 = vadd.f32 %v36, %v175
  %v293 = vadd.f32 %v37, %v177
  %v294 = vadd.f32 %v38, %v179
  %v295 = vadd.f32 %v39, %v181
  %v296 = vadd.f32 %v40, %v183
  %v297 = vadd.f32 %v41, %v185
  %v298 = vadd.f32 %v42, %v187
  %v299 = vadd.f32 %v43, %v189
  %v300 = vadd.f32 %v44, %v191
  %v301 = vadd.f32 %v45, %v193
  %v302 = vadd.f32 %v46, %v195
  %v303 = vadd.f32 %v47, %v197
  %v304 = vadd.f32 %v48, %v199
  %v305 = vadd.f32 %v49, %v201
  %v306 = vadd.f32 %v50, %v203
  %v307 = vadd.f32 %v51, %v205
  %v308 = vadd.f32 %v52, %v207
  %v309 = vadd.f32 %v53, %v209
  %v310 = vadd.f32 %v54, %v211
  %v311 = vadd.f32 %v55, %v213
  %v312 = vadd.f32 %v56, %v215
  %v313 = vadd.f32 %v57, %v217
  %v314 = vadd.f32 %v58, %v219
  %v315 = vadd.f32 %v59, %v221
  %v316 = vadd.f32 %v60, %v223
  %v317 = vadd.f32 %v61, %v225
  %v318 = vadd.f32 %v62, %v227
  %v319 = vadd.f32 %v63, %v229
  %v320 = vadd.f32 %v64, %v231
  %v321 = vadd.f32 %v65, %v233
  %v322 = vadd.f32 %v66, %v235
  %v323 = vadd.f32 %v67, %v237
  %v324 = vadd.f32 %v68, %v239
  %v325 = vadd.f32 %v69, %v241
  %v326 = vadd.f32 %v70, %v243
  %v327 = vadd.f32 %v71, %v245
  %v328 = vadd.f32 %v72, %v247
  %v329 = vadd.f32 %v73, %v249
  %v330 = vadd.f32 %v74, %v251
  %v331 = vadd.f32 %v75, %v253
  %v332 = vadd.f32 %v76, %v255
  %v333 = vadd.f32 %v77, %v257
  %v334 = vadd.f32 %v78, %v259
  %v335 = vadd.f32 %v79, %v261
  %v336 = vadd.f32 %v80, %v263
  %v337 = vadd.f32 %v81, %v265
  %v338 = vadd.f32 %v82, %v267
  %v339 = vadd.f32 %v83, %v269
  %v340 = vadd.f32 %v84, %v271
  %v341 = vadd.f32 %v85, %v273
  %v342 = vadd.f32 %v86, %v275
  %v343 = vadd.f32 %v87, %v277
  %v344 = vadd.f32 %v88, %v279
  %v345 = vadd.f32 %v89, %v281
  %v346 = vld [vmem:[%s0 + $0x2] sm:$0xff]
  %v347 = vld [vmem:[%s0 + $0xa] sm:$0xff]
  %v348 = vld [vmem:[%s0 + $0x1a] sm:$0xff]
  %v349 = vld [vmem:[%s0 + $0x22] sm:$0xff]
  %v350 = vld [vmem:[%s0 + $0x32] sm:$0xff]
  %v351 = vld [vmem:[%s0 + $0x3a] sm:$0xff]
  %v352 = vld [vmem:[%s0 + $0x4a] sm:$0xff]
  %v353 = vld [vmem:[%s0 + $0x52] sm:$0xff]
  %v354 = vld [vmem:[%s0 + $0x62] sm:$0xff]
  %v355 = vld [vmem:[%s0 + $0x6a] sm:$0xff]
  %v356 = vld [vmem:[%s0 + $0x7a] sm:$0xff]
  %v357 = vld [vmem:[%s0 + $0x82] sm:$0xff]
  %v358 = vld [vmem:[%s0 + $0x92] sm:$0xff]
  %v359 = vld [vmem:[%s0 + $0x9a] sm:$0xff]
  %v360 = vld [vmem:[%s0 + $0xaa] sm:$0xff]
  %v361 = vld [vmem:[%s0 + $0xb2] sm:$0xff]
  %v362 = vld [vmem:[%s0 + $0xc2] sm:$0xff]
  %v363 = vld [vmem:[%s0 + $0xca] sm:$0xff]
  %v364 = vld [vmem:[%s0 + $0xda] sm:$0xff]
  %v365 = vld [vmem:[%s0 + $0xe2] sm:$0xff]
  %v366 = vld [vmem:[%s0 + $0xf2] sm:$0xff]
  %v367 = vld [vmem:[%s0 + $0xfa] sm:$0xff]
  %v368 = vld [vmem:[%s0 + $0x10a] sm:$0xff]
  %v369 = vld [vmem:[%s0 + $0x112] sm:$0xff]
  %v370 = vld [vmem:[%s0 + $0x122] sm:$0xff]
  %v371 = vld [vmem:[%s0 + $0x12a] sm:$0xff]
  %v372 = vld [vmem:[%s0 + $0x13a] sm:$0xff]
  %v373 = vld [vmem:[%s0 + $0x142] sm:$0xff]
  %v374 = vld [vmem:[%s0 + $0x152] sm:$0xff]
  %v375 = vld [vmem:[%s0 + $0x15a] sm:$0xff]
  %v376 = vld [vmem:[%s0 + $0x16a] sm:$0xff]
  %v377 = vld [vmem:[%s0 + $0x172] sm:$0xff]
  %v378 = vld [vmem:[%s0 + $0x1b2] sm:$0xff]
  %v379 = vld [vmem:[%s0 + $0x1ba] sm:$0xff]
  %v380 = vld [vmem:[%s0 + $0x1ca] sm:$0xff]
  %v381 = vld [vmem:[%s0 + $0x1d2] sm:$0xff]
  %v382 = vld [vmem:[%s0 + $0x1e2] sm:$0xff]
  %v383 = vld [vmem:[%s0 + $0x1ea] sm:$0xff]
  %v384 = vld [vmem:[%s0 + $0x1fa] sm:$0xff]
  %v385 = vld [vmem:[%s0 + $0x202] sm:$0xff]
  %v386 = vld [vmem:[%s0 + $0x212] sm:$0xff]
  %v387 = vld [vmem:[%s0 + $0x21a] sm:$0xff]
  %v388 = vld [vmem:[%s0 + $0x22a] sm:$0xff]
  %v389 = vld [vmem:[%s0 + $0x232] sm:$0xff]
  %v390 = vld [vmem:[%s0 + $0x242] sm:$0xff]
  %v391 = vld [vmem:[%s0 + $0x24a] sm:$0xff]
  %v392 = vld [vmem:[%s0 + $0x25a] sm:$0xff]
  %v393 = vld [vmem:[%s0 + $0x262] sm:$0xff]
  %v394 = vld [vmem:[%s0 + $0x272] sm:$0xff]
  %v395 = vld [vmem:[%s0 + $0x27a] sm:$0xff]
  %v396 = vld [vmem:[%s0 + $0x28a] sm:$0xff]
  %v397 = vld [vmem:[%s0 + $0x292] sm:$0xff]
  %v398 = vld [vmem:[%s0 + $0x2a2] sm:$0xff]
  %v399 = vld [vmem:[%s0 + $0x2aa] sm:$0xff]
  %v400 = vld [vmem:[%s0 + $0x2ba] sm:$0xff]
  %v401 = vld [vmem:[%s0 + $0x2c2] sm:$0xff]
  %v402 = vld [vmem:[%s0 + $0x2d2] sm:$0xff]
  %v403 = vld [vmem:[%s0 + $0x2da] sm:$0xff]
  %v404 = vld [vmem:[%s0 + $0x2ea] sm:$0xff]
  %v405 = vld [vmem:[%s0 + $0x2f2] sm:$0xff]
  %v406 = vld [vmem:[%s0 + $0x302] sm:$0xff]
  %v407 = vld [vmem:[%s0 + $0x30a] sm:$0xff]
  %v408 = vld [vmem:[%s0 + $0x31a] sm:$0xff]
  %v409 = vld [vmem:[%s0 + $0x322] sm:$0xff]
  %410 = vrot.lane.b32.xlu0 %v346, 16
  %v411 = vpop.permute.xlu0 %410
  %412 = vrot.lane.b32.xlu0 %v347, 16
  %v413 = vpop.permute.xlu0 %412
  %414 = vrot.lane.b32.xlu0 %v348, 16
  %v415 = vpop.permute.xlu0 %414
  %416 = vrot.lane.b32.xlu0 %v349, 16
  %v417 = vpop.permute.xlu0 %416
  %418 = vrot.lane.b32.xlu0 %v350, 16
  %v419 = vpop.permute.xlu0 %418
  %420 = vrot.lane.b32.xlu0 %v351, 16
  %v421 = vpop.permute.xlu0 %420
  %422 = vrot.lane.b32.xlu0 %v352, 16
  %v423 = vpop.permute.xlu0 %422
  %424 = vrot.lane.b32.xlu0 %v353, 16
  %v425 = vpop.permute.xlu0 %424
  %426 = vrot.lane.b32.xlu0 %v354, 16
  %v427 = vpop.permute.xlu0 %426
  %428 = vrot.lane.b32.xlu0 %v355, 16
  %v429 = vpop.permute.xlu0 %428
  %430 = vrot.lane.b32.xlu0 %v356, 16
  %v431 = vpop.permute.xlu0 %430
  %432 = vrot.lane.b32.xlu0 %v357, 16
  %v433 = vpop.permute.xlu0 %432
  %434 = vrot.lane.b32.xlu0 %v358, 16
  %v435 = vpop.permute.xlu0 %434
  %436 = vrot.lane.b32.xlu0 %v359, 16
  %v437 = vpop.permute.xlu0 %436
  %438 = vrot.lane.b32.xlu0 %v360, 16
  %v439 = vpop.permute.xlu0 %438
  %440 = vrot.lane.b32.xlu0 %v361, 16
  %v441 = vpop.permute.xlu0 %440
  %442 = vrot.lane.b32.xlu0 %v362, 16
  %v443 = vpop.permute.xlu0 %442
  %444 = vrot.lane.b32.xlu0 %v363, 16
  %v445 = vpop.permute.xlu0 %444
  %446 = vrot.lane.b32.xlu0 %v364, 16
  %v447 = vpop.permute.xlu0 %446
  %448 = vrot.lane.b32.xlu0 %v365, 16
  %v449 = vpop.permute.xlu0 %448
  %450 = vrot.lane.b32.xlu0 %v366, 16
  %v451 = vpop.permute.xlu0 %450
  %452 = vrot.lane.b32.xlu0 %v367, 16
  %v453 = vpop.permute.xlu0 %452
  %454 = vrot.lane.b32.xlu0 %v368, 16
  %v455 = vpop.permute.xlu0 %454
  %456 = vrot.lane.b32.xlu0 %v369, 16
  %v457 = vpop.permute.xlu0 %456
  %458 = vrot.lane.b32.xlu0 %v370, 16
  %v459 = vpop.permute.xlu0 %458
  %460 = vrot.lane.b32.xlu0 %v371, 16
  %v461 = vpop.permute.xlu0 %460
  %462 = vrot.lane.b32.xlu0 %v372, 16
  %v463 = vpop.permute.xlu0 %462
  %464 = vrot.lane.b32.xlu0 %v373, 16
  %v465 = vpop.permute.xlu0 %464
  %466 = vrot.lane.b32.xlu0 %v374, 16
  %v467 = vpop.permute.xlu0 %466
  %468 = vrot.lane.b32.xlu0 %v375, 16
  %v469 = vpop.permute.xlu0 %468
  %470 = vrot.lane.b32.xlu0 %v376, 16
  %v471 = vpop.permute.xlu0 %470
  %472 = vrot.lane.b32.xlu0 %v377, 16
  %v473 = vpop.permute.xlu0 %472
  %474 = vrot.lane.b32.xlu0 %v378, 16
  %v475 = vpop.permute.xlu0 %474
  %476 = vrot.lane.b32.xlu0 %v379, 16
  %v477 = vpop.permute.xlu0 %476
  %478 = vrot.lane.b32.xlu0 %v380, 16
  %v479 = vpop.permute.xlu0 %478
  %480 = vrot.lane.b32.xlu0 %v381, 16
  %v481 = vpop.permute.xlu0 %480
  %482 = vrot.lane.b32.xlu0 %v382, 16
  %v483 = vpop.permute.xlu0 %482
  %484 = vrot.lane.b32.xlu0 %v383, 16
  %v485 = vpop.permute.xlu0 %484
  %486 = vrot.lane.b32.xlu0 %v384, 16
  %v487 = vpop.permute.xlu0 %486
  %488 = vrot.lane.b32.xlu0 %v385, 16
  %v489 = vpop.permute.xlu0 %488
  %490 = vrot.lane.b32.xlu0 %v386, 16
  %v491 = vpop.permute.xlu0 %490
  %492 = vrot.lane.b32.xlu0 %v387, 16
  %v493 = vpop.permute.xlu0 %492
  %494 = vrot.lane.b32.xlu0 %v388, 16
  %v495 = vpop.permute.xlu0 %494
  %496 = vrot.lane.b32.xlu0 %v389, 16
  %v497 = vpop.permute.xlu0 %496
  %498 = vrot.lane.b32.xlu0 %v390, 16
  %v499 = vpop.permute.xlu0 %498
  %500 = vrot.lane.b32.xlu0 %v391, 16
  %v501 = vpop.permute.xlu0 %500
  %502 = vrot.lane.b32.xlu0 %v392, 16
  %v503 = vpop.permute.xlu0 %502
  %504 = vrot.lane.b32.xlu0 %v393, 16
  %v505 = vpop.permute.xlu0 %504
  %506 = vrot.lane.b32.xlu0 %v394, 16
  %v507 = vpop.permute.xlu0 %506
  %508 = vrot.lane.b32.xlu0 %v395, 16
  %v509 = vpop.permute.xlu0 %508
  %510 = vrot.lane.b32.xlu0 %v396, 16
  %v511 = vpop.permute.xlu0 %510
  %512 = vrot.lane.b32.xlu0 %v397, 16
  %v513 = vpop.permute.xlu0 %512
  %514 = vrot.lane.b32.xlu0 %v398, 16
  %v515 = vpop.permute.xlu0 %514
  %516 = vrot.lane.b32.xlu0 %v399, 16
  %v517 = vpop.permute.xlu0 %516
  %518 = vrot.lane.b32.xlu0 %v400, 16
  %v519 = vpop.permute.xlu0 %518
  %520 = vrot.lane.b32.xlu0 %v401, 16
  %v521 = vpop.permute.xlu0 %520
  %522 = vrot.lane.b32.xlu0 %v402, 16
  %v523 = vpop.permute.xlu0 %522
  %524 = vrot.lane.b32.xlu0 %v403, 16
  %v525 = vpop.permute.xlu0 %524
  %526 = vrot.lane.b32.xlu0 %v404, 16
  %v527 = vpop.permute.xlu0 %526
  %528 = vrot.lane.b32.xlu0 %v405, 16
  %v529 = vpop.permute.xlu0 %528
  %530 = vrot.lane.b32.xlu0 %v406, 16
  %v531 = vpop.permute.xlu0 %530
  %532 = vrot.lane.b32.xlu0 %v407, 16
  %v533 = vpop.permute.xlu0 %532
  %534 = vrot.lane.b32.xlu0 %v408, 16
  %v535 = vpop.permute.xlu0 %534
  %536 = vrot.lane.b32.xlu0 %v409, 16
  %v537 = vpop.permute.xlu0 %536
  %v538 = vadd.f32 %v282, %v411
  %v539 = vadd.f32 %v283, %v413
  %v540 = vadd.f32 %v284, %v415
  %v541 = vadd.f32 %v285, %v417
  %v542 = vadd.f32 %v286, %v419
  %v543 = vadd.f32 %v287, %v421
  %v544 = vadd.f32 %v288, %v423
  %v545 = vadd.f32 %v289, %v425
  %v546 = vadd.f32 %v290, %v427
  %v547 = vadd.f32 %v291, %v429
  %v548 = vadd.f32 %v292, %v431
  %v549 = vadd.f32 %v293, %v433
  %v550 = vadd.f32 %v294, %v435
  %v551 = vadd.f32 %v295, %v437
  %v552 = vadd.f32 %v296, %v439
  %v553 = vadd.f32 %v297, %v441
  %v554 = vadd.f32 %v298, %v443
  %v555 = vadd.f32 %v299, %v445
  %v556 = vadd.f32 %v300, %v447
  %v557 = vadd.f32 %v301, %v449
  %v558 = vadd.f32 %v302, %v451
  %v559 = vadd.f32 %v303, %v453
  %v560 = vadd.f32 %v304, %v455
  %v561 = vadd.f32 %v305, %v457
  %v562 = vadd.f32 %v306, %v459
  %v563 = vadd.f32 %v307, %v461
  %v564 = vadd.f32 %v308, %v463
  %v565 = vadd.f32 %v309, %v465
  %v566 = vadd.f32 %v310, %v467
  %v567 = vadd.f32 %v311, %v469
  %v568 = vadd.f32 %v312, %v471
  %v569 = vadd.f32 %v313, %v473
  %v570 = vadd.f32 %v314, %v475
  %v571 = vadd.f32 %v315, %v477
  %v572 = vadd.f32 %v316, %v479
  %v573 = vadd.f32 %v317, %v481
  %v574 = vadd.f32 %v318, %v483
  %v575 = vadd.f32 %v319, %v485
  %v576 = vadd.f32 %v320, %v487
  %v577 = vadd.f32 %v321, %v489
  %v578 = vadd.f32 %v322, %v491
  %v579 = vadd.f32 %v323, %v493
  %v580 = vadd.f32 %v324, %v495
  %v581 = vadd.f32 %v325, %v497
  %v582 = vadd.f32 %v326, %v499
  %v583 = vadd.f32 %v327, %v501
  %v584 = vadd.f32 %v328, %v503
  %v585 = vadd.f32 %v329, %v505
  %v586 = vadd.f32 %v330, %v507
  %v587 = vadd.f32 %v331, %v509
  %v588 = vadd.f32 %v332, %v511
  %v589 = vadd.f32 %v333, %v513
  %v590 = vadd.f32 %v334, %v515
  %v591 = vadd.f32 %v335, %v517
  %v592 = vadd.f32 %v336, %v519
  %v593 = vadd.f32 %v337, %v521
  %v594 = vadd.f32 %v338, %v523
  %v595 = vadd.f32 %v339, %v525
  %v596 = vadd.f32 %v340, %v527
  %v597 = vadd.f32 %v341, %v529
  %v598 = vadd.f32 %v342, %v531
  %v599 = vadd.f32 %v343, %v533
  %v600 = vadd.f32 %v344, %v535
  %v601 = vadd.f32 %v345, %v537
  %s602 = scalar_lea.vmem %s0, 24
  %v603 = vld [vmem:[%s602] sm:$0xff]
  %v604 = vld [vmem:[%s602 + $0x8] sm:$0xff]
  %v605 = vld [vmem:[%s602 + $0x18] sm:$0xff]
  %v606 = vld [vmem:[%s602 + $0x20] sm:$0xff]
  %v607 = vld [vmem:[%s602 + $0x30] sm:$0xff]
  %v608 = vld [vmem:[%s602 + $0x38] sm:$0xff]
  %v609 = vld [vmem:[%s602 + $0x48] sm:$0xff]
  %v610 = vld [vmem:[%s602 + $0x50] sm:$0xff]
  %v611 = vld [vmem:[%s602 + $0x60] sm:$0xff]
  %v612 = vld [vmem:[%s602 + $0x68] sm:$0xff]
  %v613 = vld [vmem:[%s602 + $0x78] sm:$0xff]
  %v614 = vld [vmem:[%s602 + $0x80] sm:$0xff]
  %v615 = vld [vmem:[%s602 + $0x90] sm:$0xff]
  %v616 = vld [vmem:[%s602 + $0x98] sm:$0xff]
  %v617 = vld [vmem:[%s602 + $0xa8] sm:$0xff]
  %v618 = vld [vmem:[%s602 + $0xb0] sm:$0xff]
  %v619 = vld [vmem:[%s602 + $0xc0] sm:$0xff]
  %v620 = vld [vmem:[%s602 + $0xc8] sm:$0xff]
  %v621 = vld [vmem:[%s602 + $0xd8] sm:$0xff]
  %v622 = vld [vmem:[%s602 + $0xe0] sm:$0xff]
  %v623 = vld [vmem:[%s602 + $0xf0] sm:$0xff]
  %v624 = vld [vmem:[%s602 + $0xf8] sm:$0xff]
  %v625 = vld [vmem:[%s602 + $0x108] sm:$0xff]
  %v626 = vld [vmem:[%s602 + $0x110] sm:$0xff]
  %v627 = vld [vmem:[%s602 + $0x120] sm:$0xff]
  %v628 = vld [vmem:[%s602 + $0x128] sm:$0xff]
  %v629 = vld [vmem:[%s602 + $0x138] sm:$0xff]
  %v630 = vld [vmem:[%s602 + $0x140] sm:$0xff]
  %v631 = vld [vmem:[%s602 + $0x150] sm:$0xff]
  %v632 = vld [vmem:[%s602 + $0x158] sm:$0xff]
  %v633 = vld [vmem:[%s602 + $0x168] sm:$0xff]
  %v634 = vld [vmem:[%s602 + $0x170] sm:$0xff]
  %v635 = vld [vmem:[%s602 + $0x1b0] sm:$0xff]
  %v636 = vld [vmem:[%s602 + $0x1b8] sm:$0xff]
  %v637 = vld [vmem:[%s602 + $0x1c8] sm:$0xff]
  %v638 = vld [vmem:[%s602 + $0x1d0] sm:$0xff]
  %v639 = vld [vmem:[%s602 + $0x1e0] sm:$0xff]
  %v640 = vld [vmem:[%s602 + $0x1e8] sm:$0xff]
  %v641 = vld [vmem:[%s602 + $0x1f8] sm:$0xff]
  %v642 = vld [vmem:[%s602 + $0x200] sm:$0xff]
  %v643 = vld [vmem:[%s602 + $0x210] sm:$0xff]
  %v644 = vld [vmem:[%s602 + $0x218] sm:$0xff]
  %v645 = vld [vmem:[%s602 + $0x228] sm:$0xff]
  %v646 = vld [vmem:[%s602 + $0x230] sm:$0xff]
  %v647 = vld [vmem:[%s602 + $0x240] sm:$0xff]
  %v648 = vld [vmem:[%s602 + $0x248] sm:$0xff]
  %v649 = vld [vmem:[%s602 + $0x258] sm:$0xff]
  %v650 = vld [vmem:[%s602 + $0x260] sm:$0xff]
  %v651 = vld [vmem:[%s602 + $0x270] sm:$0xff]
  %v652 = vld [vmem:[%s602 + $0x278] sm:$0xff]
  %v653 = vld [vmem:[%s602 + $0x288] sm:$0xff]
  %v654 = vld [vmem:[%s602 + $0x290] sm:$0xff]
  %v655 = vld [vmem:[%s602 + $0x2a0] sm:$0xff]
  %v656 = vld [vmem:[%s602 + $0x2a8] sm:$0xff]
  %v657 = vld [vmem:[%s602 + $0x2b8] sm:$0xff]
  %v658 = vld [vmem:[%s602 + $0x2c0] sm:$0xff]
  %v659 = vld [vmem:[%s602 + $0x2d0] sm:$0xff]
  %v660 = vld [vmem:[%s602 + $0x2d8] sm:$0xff]
  %v661 = vld [vmem:[%s602 + $0x2e8] sm:$0xff]
  %v662 = vld [vmem:[%s602 + $0x2f0] sm:$0xff]
  %v663 = vld [vmem:[%s602 + $0x300] sm:$0xff]
  %v664 = vld [vmem:[%s602 + $0x308] sm:$0xff]
  %v665 = vld [vmem:[%s602 + $0x318] sm:$0xff]
  %v666 = vld [vmem:[%s602 + $0x320] sm:$0xff]
  %667 = vrot.lane.b32.xlu0 %v603, 24
  %v668 = vpop.permute.xlu0 %667
  %669 = vrot.lane.b32.xlu0 %v604, 24
  %v670 = vpop.permute.xlu0 %669
  %671 = vrot.lane.b32.xlu0 %v605, 24
  %v672 = vpop.permute.xlu0 %671
  %673 = vrot.lane.b32.xlu0 %v606, 24
  %v674 = vpop.permute.xlu0 %673
  %675 = vrot.lane.b32.xlu0 %v607, 24
  %v676 = vpop.permute.xlu0 %675
  %677 = vrot.lane.b32.xlu0 %v608, 24
  %v678 = vpop.permute.xlu0 %677
  %679 = vrot.lane.b32.xlu0 %v609, 24
  %v680 = vpop.permute.xlu0 %679
  %681 = vrot.lane.b32.xlu0 %v610, 24
  %v682 = vpop.permute.xlu0 %681
  %683 = vrot.lane.b32.xlu0 %v611, 24
  %v684 = vpop.permute.xlu0 %683
  %685 = vrot.lane.b32.xlu0 %v612, 24
  %v686 = vpop.permute.xlu0 %685
  %687 = vrot.lane.b32.xlu0 %v613, 24
  %v688 = vpop.permute.xlu0 %687
  %689 = vrot.lane.b32.xlu0 %v614, 24
  %v690 = vpop.permute.xlu0 %689
  %691 = vrot.lane.b32.xlu0 %v615, 24
  %v692 = vpop.permute.xlu0 %691
  %693 = vrot.lane.b32.xlu0 %v616, 24
  %v694 = vpop.permute.xlu0 %693
  %695 = vrot.lane.b32.xlu0 %v617, 24
  %v696 = vpop.permute.xlu0 %695
  %697 = vrot.lane.b32.xlu0 %v618, 24
  %v698 = vpop.permute.xlu0 %697
  %699 = vrot.lane.b32.xlu0 %v619, 24
  %v700 = vpop.permute.xlu0 %699
  %701 = vrot.lane.b32.xlu0 %v620, 24
  %v702 = vpop.permute.xlu0 %701
  %703 = vrot.lane.b32.xlu0 %v621, 24
  %v704 = vpop.permute.xlu0 %703
  %705 = vrot.lane.b32.xlu0 %v622, 24
  %v706 = vpop.permute.xlu0 %705
  %707 = vrot.lane.b32.xlu0 %v623, 24
  %v708 = vpop.permute.xlu0 %707
  %709 = vrot.lane.b32.xlu0 %v624, 24
  %v710 = vpop.permute.xlu0 %709
  %711 = vrot.lane.b32.xlu0 %v625, 24
  %v712 = vpop.permute.xlu0 %711
  %713 = vrot.lane.b32.xlu0 %v626, 24
  %v714 = vpop.permute.xlu0 %713
  %715 = vrot.lane.b32.xlu0 %v627, 24
  %v716 = vpop.permute.xlu0 %715
  %717 = vrot.lane.b32.xlu0 %v628, 24
  %v718 = vpop.permute.xlu0 %717
  %719 = vrot.lane.b32.xlu0 %v629, 24
  %v720 = vpop.permute.xlu0 %719
  %721 = vrot.lane.b32.xlu0 %v630, 24
  %v722 = vpop.permute.xlu0 %721
  %723 = vrot.lane.b32.xlu0 %v631, 24
  %v724 = vpop.permute.xlu0 %723
  %725 = vrot.lane.b32.xlu0 %v632, 24
  %v726 = vpop.permute.xlu0 %725
  %727 = vrot.lane.b32.xlu0 %v633, 24
  %v728 = vpop.permute.xlu0 %727
  %729 = vrot.lane.b32.xlu0 %v634, 24
  %v730 = vpop.permute.xlu0 %729
  %731 = vrot.lane.b32.xlu0 %v635, 24
  %v732 = vpop.permute.xlu0 %731
  %733 = vrot.lane.b32.xlu0 %v636, 24
  %v734 = vpop.permute.xlu0 %733
  %735 = vrot.lane.b32.xlu0 %v637, 24
  %v736 = vpop.permute.xlu0 %735
  %737 = vrot.lane.b32.xlu0 %v638, 24
  %v738 = vpop.permute.xlu0 %737
  %739 = vrot.lane.b32.xlu0 %v639, 24
  %v740 = vpop.permute.xlu0 %739
  %741 = vrot.lane.b32.xlu0 %v640, 24
  %v742 = vpop.permute.xlu0 %741
  %743 = vrot.lane.b32.xlu0 %v641, 24
  %v744 = vpop.permute.xlu0 %743
  %745 = vrot.lane.b32.xlu0 %v642, 24
  %v746 = vpop.permute.xlu0 %745
  %747 = vrot.lane.b32.xlu0 %v643, 24
  %v748 = vpop.permute.xlu0 %747
  %749 = vrot.lane.b32.xlu0 %v644, 24
  %v750 = vpop.permute.xlu0 %749
  %751 = vrot.lane.b32.xlu0 %v645, 24
  %v752 = vpop.permute.xlu0 %751
  %753 = vrot.lane.b32.xlu0 %v646, 24
  %v754 = vpop.permute.xlu0 %753
  %755 = vrot.lane.b32.xlu0 %v647, 24
  %v756 = vpop.permute.xlu0 %755
  %757 = vrot.lane.b32.xlu0 %v648, 24
  %v758 = vpop.permute.xlu0 %757
  %759 = vrot.lane.b32.xlu0 %v649, 24
  %v760 = vpop.permute.xlu0 %759
  %761 = vrot.lane.b32.xlu0 %v650, 24
  %v762 = vpop.permute.xlu0 %761
  %763 = vrot.lane.b32.xlu0 %v651, 24
  %v764 = vpop.permute.xlu0 %763
  %765 = vrot.lane.b32.xlu0 %v652, 24
  %v766 = vpop.permute.xlu0 %765
  %767 = vrot.lane.b32.xlu0 %v653, 24
  %v768 = vpop.permute.xlu0 %767
  %769 = vrot.lane.b32.xlu0 %v654, 24
  %v770 = vpop.permute.xlu0 %769
  %771 = vrot.lane.b32.xlu0 %v655, 24
  %v772 = vpop.permute.xlu0 %771
  %773 = vrot.lane.b32.xlu0 %v656, 24
  %v774 = vpop.permute.xlu0 %773
  %775 = vrot.lane.b32.xlu0 %v657, 24
  %v776 = vpop.permute.xlu0 %775
  %777 = vrot.lane.b32.xlu0 %v658, 24
  %v778 = vpop.permute.xlu0 %777
  %779 = vrot.lane.b32.xlu0 %v659, 24
  %v780 = vpop.permute.xlu0 %779
  %781 = vrot.lane.b32.xlu0 %v660, 24
  %v782 = vpop.permute.xlu0 %781
  %783 = vrot.lane.b32.xlu0 %v661, 24
  %v784 = vpop.permute.xlu0 %783
  %785 = vrot.lane.b32.xlu0 %v662, 24
  %v786 = vpop.permute.xlu0 %785
  %787 = vrot.lane.b32.xlu0 %v663, 24
  %v788 = vpop.permute.xlu0 %787
  %789 = vrot.lane.b32.xlu0 %v664, 24
  %v790 = vpop.permute.xlu0 %789
  %791 = vrot.lane.b32.xlu0 %v665, 24
  %v792 = vpop.permute.xlu0 %791
  %793 = vrot.lane.b32.xlu0 %v666, 24
  %v794 = vpop.permute.xlu0 %793
  %v795 = vadd.f32 %v538, %v668
  %v796 = vadd.f32 %v539, %v670
  %v797 = vadd.f32 %v540, %v672
  %v798 = vadd.f32 %v541, %v674
  %v799 = vadd.f32 %v542, %v676
  %v800 = vadd.f32 %v543, %v678
  %v801 = vadd.f32 %v544, %v680
  %v802 = vadd.f32 %v545, %v682
  %v803 = vadd.f32 %v546, %v684
  %v804 = vadd.f32 %v547, %v686
  %v805 = vadd.f32 %v548, %v688
  %v806 = vadd.f32 %v549, %v690
  %v807 = vadd.f32 %v550, %v692
  %v808 = vadd.f32 %v551, %v694
  %v809 = vadd.f32 %v552, %v696
  %v810 = vadd.f32 %v553, %v698
  %v811 = vadd.f32 %v554, %v700
  %v812 = vadd.f32 %v555, %v702
  %v813 = vadd.f32 %v556, %v704
  %v814 = vadd.f32 %v557, %v706
  %v815 = vadd.f32 %v558, %v708
  %v816 = vadd.f32 %v559, %v710
  %v817 = vadd.f32 %v560, %v712
  %v818 = vadd.f32 %v561, %v714
  %v819 = vadd.f32 %v562, %v716
  %v820 = vadd.f32 %v563, %v718
  %v821 = vadd.f32 %v564, %v720
  %v822 = vadd.f32 %v565, %v722
  %v823 = vadd.f32 %v566, %v724
  %v824 = vadd.f32 %v567, %v726
  %v825 = vadd.f32 %v568, %v728
  %v826 = vadd.f32 %v569, %v730
  %v827 = vadd.f32 %v570, %v732
  %v828 = vadd.f32 %v571, %v734
  %v829 = vadd.f32 %v572, %v736
  %v830 = vadd.f32 %v573, %v738
  %v831 = vadd.f32 %v574, %v740
  %v832 = vadd.f32 %v575, %v742
  %v833 = vadd.f32 %v576, %v744
  %v834 = vadd.f32 %v577, %v746
  %v835 = vadd.f32 %v578, %v748
  %v836 = vadd.f32 %v579, %v750
  %v837 = vadd.f32 %v580, %v752
  %v838 = vadd.f32 %v581, %v754
  %v839 = vadd.f32 %v582, %v756
  %v840 = vadd.f32 %v583, %v758
  %v841 = vadd.f32 %v584, %v760
  %v842 = vadd.f32 %v585, %v762
  %v843 = vadd.f32 %v586, %v764
  %v844 = vadd.f32 %v587, %v766
  %v845 = vadd.f32 %v588, %v768
  %v846 = vadd.f32 %v589, %v770
  %v847 = vadd.f32 %v590, %v772
  %v848 = vadd.f32 %v591, %v774
  %v849 = vadd.f32 %v592, %v776
  %v850 = vadd.f32 %v593, %v778
  %v851 = vadd.f32 %v594, %v780
  %v852 = vadd.f32 %v595, %v782
  %v853 = vadd.f32 %v596, %v784
  %v854 = vadd.f32 %v597, %v786
  %v855 = vadd.f32 %v598, %v788
  %v856 = vadd.f32 %v599, %v790
  %v857 = vadd.f32 %v600, %v792
  %v858 = vadd.f32 %v601, %v794
  %v859 = vld [vmem:[%s602 + $0x1] sm:$0xff]
  %v860 = vld [vmem:[%s602 + $0x9] sm:$0xff]
  %v861 = vld [vmem:[%s602 + $0x19] sm:$0xff]
  %v862 = vld [vmem:[%s602 + $0x21] sm:$0xff]
  %v863 = vld [vmem:[%s602 + $0x31] sm:$0xff]
  %v864 = vld [vmem:[%s602 + $0x39] sm:$0xff]
  %v865 = vld [vmem:[%s602 + $0x49] sm:$0xff]
  %v866 = vld [vmem:[%s602 + $0x51] sm:$0xff]
  %v867 = vld [vmem:[%s602 + $0x61] sm:$0xff]
  %v868 = vld [vmem:[%s602 + $0x69] sm:$0xff]
  %v869 = vld [vmem:[%s602 + $0x79] sm:$0xff]
  %v870 = vld [vmem:[%s602 + $0x81] sm:$0xff]
  %v871 = vld [vmem:[%s602 + $0x91] sm:$0xff]
  %v872 = vld [vmem:[%s602 + $0x99] sm:$0xff]
  %v873 = vld [vmem:[%s602 + $0xa9] sm:$0xff]
  %v874 = vld [vmem:[%s602 + $0xb1] sm:$0xff]
  %v875 = vld [vmem:[%s602 + $0xc1] sm:$0xff]
  %v876 = vld [vmem:[%s602 + $0xc9] sm:$0xff]
  %v877 = vld [vmem:[%s602 + $0xd9] sm:$0xff]
  %v878 = vld [vmem:[%s602 + $0xe1] sm:$0xff]
  %v879 = vld [vmem:[%s602 + $0xf1] sm:$0xff]
  %v880 = vld [vmem:[%s602 + $0xf9] sm:$0xff]
  %v881 = vld [vmem:[%s602 + $0x109] sm:$0xff]
  %v882 = vld [vmem:[%s602 + $0x111] sm:$0xff]
  %v883 = vld [vmem:[%s602 + $0x121] sm:$0xff]
  %v884 = vld [vmem:[%s602 + $0x129] sm:$0xff]
  %v885 = vld [vmem:[%s602 + $0x139] sm:$0xff]
  %v886 = vld [vmem:[%s602 + $0x141] sm:$0xff]
  %v887 = vld [vmem:[%s602 + $0x151] sm:$0xff]
  %v888 = vld [vmem:[%s602 + $0x159] sm:$0xff]
  %v889 = vld [vmem:[%s602 + $0x169] sm:$0xff]
  %v890 = vld [vmem:[%s602 + $0x171] sm:$0xff]
  %v891 = vld [vmem:[%s602 + $0x1b1] sm:$0xff]
  %v892 = vld [vmem:[%s602 + $0x1b9] sm:$0xff]
  %v893 = vld [vmem:[%s602 + $0x1c9] sm:$0xff]
  %v894 = vld [vmem:[%s602 + $0x1d1] sm:$0xff]
  %v895 = vld [vmem:[%s602 + $0x1e1] sm:$0xff]
  %v896 = vld [vmem:[%s602 + $0x1e9] sm:$0xff]
  %v897 = vld [vmem:[%s602 + $0x1f9] sm:$0xff]
  %v898 = vld [vmem:[%s602 + $0x201] sm:$0xff]
  %v899 = vld [vmem:[%s602 + $0x211] sm:$0xff]
  %v900 = vld [vmem:[%s602 + $0x219] sm:$0xff]
  %v901 = vld [vmem:[%s602 + $0x229] sm:$0xff]
  %v902 = vld [vmem:[%s602 + $0x231] sm:$0xff]
  %v903 = vld [vmem:[%s602 + $0x241] sm:$0xff]
  %v904 = vld [vmem:[%s602 + $0x249] sm:$0xff]
  %v905 = vld [vmem:[%s602 + $0x259] sm:$0xff]
  %v906 = vld [vmem:[%s602 + $0x261] sm:$0xff]
  %v907 = vld [vmem:[%s602 + $0x271] sm:$0xff]
  %v908 = vld [vmem:[%s602 + $0x279] sm:$0xff]
  %v909 = vld [vmem:[%s602 + $0x289] sm:$0xff]
  %v910 = vld [vmem:[%s602 + $0x291] sm:$0xff]
  %v911 = vld [vmem:[%s602 + $0x2a1] sm:$0xff]
  %v912 = vld [vmem:[%s602 + $0x2a9] sm:$0xff]
  %v913 = vld [vmem:[%s602 + $0x2b9] sm:$0xff]
  %v914 = vld [vmem:[%s602 + $0x2c1] sm:$0xff]
  %v915 = vld [vmem:[%s602 + $0x2d1] sm:$0xff]
  %v916 = vld [vmem:[%s602 + $0x2d9] sm:$0xff]
  %v917 = vld [vmem:[%s602 + $0x2e9] sm:$0xff]
  %v918 = vld [vmem:[%s602 + $0x2f1] sm:$0xff]
  %v919 = vld [vmem:[%s602 + $0x301] sm:$0xff]
  %v920 = vld [vmem:[%s602 + $0x309] sm:$0xff]
  %v921 = vld [vmem:[%s602 + $0x319] sm:$0xff]
  %v922 = vld [vmem:[%s602 + $0x321] sm:$0xff]
  %923 = vrot.lane.b32.xlu0 %v859, 32
  %v924 = vpop.permute.xlu0 %923
  %925 = vrot.lane.b32.xlu0 %v860, 32
  %v926 = vpop.permute.xlu0 %925
  %927 = vrot.lane.b32.xlu0 %v861, 32
  %v928 = vpop.permute.xlu0 %927
  %929 = vrot.lane.b32.xlu0 %v862, 32
  %v930 = vpop.permute.xlu0 %929
  %931 = vrot.lane.b32.xlu0 %v863, 32
  %v932 = vpop.permute.xlu0 %931
  %933 = vrot.lane.b32.xlu0 %v864, 32
  %v934 = vpop.permute.xlu0 %933
  %935 = vrot.lane.b32.xlu0 %v865, 32
  %v936 = vpop.permute.xlu0 %935
  %937 = vrot.lane.b32.xlu0 %v866, 32
  %v938 = vpop.permute.xlu0 %937
  %939 = vrot.lane.b32.xlu0 %v867, 32
  %v940 = vpop.permute.xlu0 %939
  %941 = vrot.lane.b32.xlu0 %v868, 32
  %v942 = vpop.permute.xlu0 %941
  %943 = vrot.lane.b32.xlu0 %v869, 32
  %v944 = vpop.permute.xlu0 %943
  %945 = vrot.lane.b32.xlu0 %v870, 32
  %v946 = vpop.permute.xlu0 %945
  %947 = vrot.lane.b32.xlu0 %v871, 32
  %v948 = vpop.permute.xlu0 %947
  %949 = vrot.lane.b32.xlu0 %v872, 32
  %v950 = vpop.permute.xlu0 %949
  %951 = vrot.lane.b32.xlu0 %v873, 32
  %v952 = vpop.permute.xlu0 %951
  %953 = vrot.lane.b32.xlu0 %v874, 32
  %v954 = vpop.permute.xlu0 %953
  %955 = vrot.lane.b32.xlu0 %v875, 32
  %v956 = vpop.permute.xlu0 %955
  %957 = vrot.lane.b32.xlu0 %v876, 32
  %v958 = vpop.permute.xlu0 %957
  %959 = vrot.lane.b32.xlu0 %v877, 32
  %v960 = vpop.permute.xlu0 %959
  %961 = vrot.lane.b32.xlu0 %v878, 32
  %v962 = vpop.permute.xlu0 %961
  %963 = vrot.lane.b32.xlu0 %v879, 32
  %v964 = vpop.permute.xlu0 %963
  %965 = vrot.lane.b32.xlu0 %v880, 32
  %v966 = vpop.permute.xlu0 %965
  %967 = vrot.lane.b32.xlu0 %v881, 32
  %v968 = vpop.permute.xlu0 %967
  %969 = vrot.lane.b32.xlu0 %v882, 32
  %v970 = vpop.permute.xlu0 %969
  %971 = vrot.lane.b32.xlu0 %v883, 32
  %v972 = vpop.permute.xlu0 %971
  %973 = vrot.lane.b32.xlu0 %v884, 32
  %v974 = vpop.permute.xlu0 %973
  %975 = vrot.lane.b32.xlu0 %v885, 32
  %v976 = vpop.permute.xlu0 %975
  %977 = vrot.lane.b32.xlu0 %v886, 32
  %v978 = vpop.permute.xlu0 %977
  %979 = vrot.lane.b32.xlu0 %v887, 32
  %v980 = vpop.permute.xlu0 %979
  %981 = vrot.lane.b32.xlu0 %v888, 32
  %v982 = vpop.permute.xlu0 %981
  %983 = vrot.lane.b32.xlu0 %v889, 32
  %v984 = vpop.permute.xlu0 %983
  %985 = vrot.lane.b32.xlu0 %v890, 32
  %v986 = vpop.permute.xlu0 %985
  %987 = vrot.lane.b32.xlu0 %v891, 32
  %v988 = vpop.permute.xlu0 %987
  %989 = vrot.lane.b32.xlu0 %v892, 32
  %v990 = vpop.permute.xlu0 %989
  %991 = vrot.lane.b32.xlu0 %v893, 32
  %v992 = vpop.permute.xlu0 %991
  %993 = vrot.lane.b32.xlu0 %v894, 32
  %v994 = vpop.permute.xlu0 %993
  %995 = vrot.lane.b32.xlu0 %v895, 32
  %v996 = vpop.permute.xlu0 %995
  %997 = vrot.lane.b32.xlu0 %v896, 32
  %v998 = vpop.permute.xlu0 %997
  %999 = vrot.lane.b32.xlu0 %v897, 32
  %v1000 = vpop.permute.xlu0 %999
  %1001 = vrot.lane.b32.xlu0 %v898, 32
  %v1002 = vpop.permute.xlu0 %1001
  %1003 = vrot.lane.b32.xlu0 %v899, 32
  %v1004 = vpop.permute.xlu0 %1003
  %1005 = vrot.lane.b32.xlu0 %v900, 32
  %v1006 = vpop.permute.xlu0 %1005
  %1007 = vrot.lane.b32.xlu0 %v901, 32
  %v1008 = vpop.permute.xlu0 %1007
  %1009 = vrot.lane.b32.xlu0 %v902, 32
  %v1010 = vpop.permute.xlu0 %1009
  %1011 = vrot.lane.b32.xlu0 %v903, 32
  %v1012 = vpop.permute.xlu0 %1011
  %1013 = vrot.lane.b32.xlu0 %v904, 32
  %v1014 = vpop.permute.xlu0 %1013
  %1015 = vrot.lane.b32.xlu0 %v905, 32
  %v1016 = vpop.permute.xlu0 %1015
  %1017 = vrot.lane.b32.xlu0 %v906, 32
  %v1018 = vpop.permute.xlu0 %1017
  %1019 = vrot.lane.b32.xlu0 %v907, 32
  %v1020 = vpop.permute.xlu0 %1019
  %1021 = vrot.lane.b32.xlu0 %v908, 32
  %v1022 = vpop.permute.xlu0 %1021
  %1023 = vrot.lane.b32.xlu0 %v909, 32
  %v1024 = vpop.permute.xlu0 %1023
  %1025 = vrot.lane.b32.xlu0 %v910, 32
  %v1026 = vpop.permute.xlu0 %1025
  %1027 = vrot.lane.b32.xlu0 %v911, 32
  %v1028 = vpop.permute.xlu0 %1027
  %1029 = vrot.lane.b32.xlu0 %v912, 32
  %v1030 = vpop.permute.xlu0 %1029
  %1031 = vrot.lane.b32.xlu0 %v913, 32
  %v1032 = vpop.permute.xlu0 %1031
  %1033 = vrot.lane.b32.xlu0 %v914, 32
  %v1034 = vpop.permute.xlu0 %1033
  %1035 = vrot.lane.b32.xlu0 %v915, 32
  %v1036 = vpop.permute.xlu0 %1035
  %1037 = vrot.lane.b32.xlu0 %v916, 32
  %v1038 = vpop.permute.xlu0 %1037
  %1039 = vrot.lane.b32.xlu0 %v917, 32
  %v1040 = vpop.permute.xlu0 %1039
  %1041 = vrot.lane.b32.xlu0 %v918, 32
  %v1042 = vpop.permute.xlu0 %1041
  %1043 = vrot.lane.b32.xlu0 %v919, 32
  %v1044 = vpop.permute.xlu0 %1043
  %1045 = vrot.lane.b32.xlu0 %v920, 32
  %v1046 = vpop.permute.xlu0 %1045
  %1047 = vrot.lane.b32.xlu0 %v921, 32
  %v1048 = vpop.permute.xlu0 %1047
  %1049 = vrot.lane.b32.xlu0 %v922, 32
  %v1050 = vpop.permute.xlu0 %1049
  %v1051 = vadd.f32 %v795, %v924
  %v1052 = vadd.f32 %v796, %v926
  %v1053 = vadd.f32 %v797, %v928
  %v1054 = vadd.f32 %v798, %v930
  %v1055 = vadd.f32 %v799, %v932
  %v1056 = vadd.f32 %v800, %v934
  %v1057 = vadd.f32 %v801, %v936
  %v1058 = vadd.f32 %v802, %v938
  %v1059 = vadd.f32 %v803, %v940
  %v1060 = vadd.f32 %v804, %v942
  %v1061 = vadd.f32 %v805, %v944
  %v1062 = vadd.f32 %v806, %v946
  %v1063 = vadd.f32 %v807, %v948
  %v1064 = vadd.f32 %v808, %v950
  %v1065 = vadd.f32 %v809, %v952
  %v1066 = vadd.f32 %v810, %v954
  %v1067 = vadd.f32 %v811, %v956
  %v1068 = vadd.f32 %v812, %v958
  %v1069 = vadd.f32 %v813, %v960
  %v1070 = vadd.f32 %v814, %v962
  %v1071 = vadd.f32 %v815, %v964
  %v1072 = vadd.f32 %v816, %v966
  %v1073 = vadd.f32 %v817, %v968
  %v1074 = vadd.f32 %v818, %v970
  %v1075 = vadd.f32 %v819, %v972
  %v1076 = vadd.f32 %v820, %v974
  %v1077 = vadd.f32 %v821, %v976
  %v1078 = vadd.f32 %v822, %v978
  %v1079 = vadd.f32 %v823, %v980
  %v1080 = vadd.f32 %v824, %v982
  %v1081 = vadd.f32 %v825, %v984
  %v1082 = vadd.f32 %v826, %v986
  %v1083 = vadd.f32 %v827, %v988
  %v1084 = vadd.f32 %v828, %v990
  %v1085 = vadd.f32 %v829, %v992
  %v1086 = vadd.f32 %v830, %v994
  %v1087 = vadd.f32 %v831, %v996
  %v1088 = vadd.f32 %v832, %v998
  %v1089 = vadd.f32 %v833, %v1000
  %v1090 = vadd.f32 %v834, %v1002
  %v1091 = vadd.f32 %v835, %v1004
  %v1092 = vadd.f32 %v836, %v1006
  %v1093 = vadd.f32 %v837, %v1008
  %v1094 = vadd.f32 %v838, %v1010
  %v1095 = vadd.f32 %v839, %v1012
  %v1096 = vadd.f32 %v840, %v1014
  %v1097 = vadd.f32 %v841, %v1016
  %v1098 = vadd.f32 %v842, %v1018
  %v1099 = vadd.f32 %v843, %v1020
  %v1100 = vadd.f32 %v844, %v1022
  %v1101 = vadd.f32 %v845, %v1024
  %v1102 = vadd.f32 %v846, %v1026
  %v1103 = vadd.f32 %v847, %v1028
  %v1104 = vadd.f32 %v848, %v1030
  %v1105 = vadd.f32 %v849, %v1032
  %v1106 = vadd.f32 %v850, %v1034
  %v1107 = vadd.f32 %v851, %v1036
  %v1108 = vadd.f32 %v852, %v1038
  %v1109 = vadd.f32 %v853, %v1040
  %v1110 = vadd.f32 %v854, %v1042
  %v1111 = vadd.f32 %v855, %v1044
  %v1112 = vadd.f32 %v856, %v1046
  %v1113 = vadd.f32 %v857, %v1048
  %v1114 = vadd.f32 %v858, %v1050
  %v1115 = vld [vmem:[%s602 + $0x2] sm:$0xff]
  %v1116 = vld [vmem:[%s602 + $0xa] sm:$0xff]
  %v1117 = vld [vmem:[%s602 + $0x1a] sm:$0xff]
  %v1118 = vld [vmem:[%s602 + $0x22] sm:$0xff]
  %v1119 = vld [vmem:[%s602 + $0x32] sm:$0xff]
  %v1120 = vld [vmem:[%s602 + $0x3a] sm:$0xff]
  %v1121 = vld [vmem:[%s602 + $0x4a] sm:$0xff]
  %v1122 = vld [vmem:[%s602 + $0x52] sm:$0xff]
  %v1123 = vld [vmem:[%s602 + $0x62] sm:$0xff]
  %v1124 = vld [vmem:[%s602 + $0x6a] sm:$0xff]
  %v1125 = vld [vmem:[%s602 + $0x7a] sm:$0xff]
  %v1126 = vld [vmem:[%s602 + $0x82] sm:$0xff]
  %v1127 = vld [vmem:[%s602 + $0x92] sm:$0xff]
  %v1128 = vld [vmem:[%s602 + $0x9a] sm:$0xff]
  %v1129 = vld [vmem:[%s602 + $0xaa] sm:$0xff]
  %v1130 = vld [vmem:[%s602 + $0xb2] sm:$0xff]
  %v1131 = vld [vmem:[%s602 + $0xc2] sm:$0xff]
  %v1132 = vld [vmem:[%s602 + $0xca] sm:$0xff]
  %v1133 = vld [vmem:[%s602 + $0xda] sm:$0xff]
  %v1134 = vld [vmem:[%s602 + $0xe2] sm:$0xff]
  %v1135 = vld [vmem:[%s602 + $0xf2] sm:$0xff]
  %v1136 = vld [vmem:[%s602 + $0xfa] sm:$0xff]
  %v1137 = vld [vmem:[%s602 + $0x10a] sm:$0xff]
  %v1138 = vld [vmem:[%s602 + $0x112] sm:$0xff]
  %v1139 = vld [vmem:[%s602 + $0x122] sm:$0xff]
  %v1140 = vld [vmem:[%s602 + $0x12a] sm:$0xff]
  %v1141 = vld [vmem:[%s602 + $0x13a] sm:$0xff]
  %v1142 = vld [vmem:[%s602 + $0x142] sm:$0xff]
  %v1143 = vld [vmem:[%s602 + $0x152] sm:$0xff]
  %v1144 = vld [vmem:[%s602 + $0x15a] sm:$0xff]
  %v1145 = vld [vmem:[%s602 + $0x16a] sm:$0xff]
  %v1146 = vld [vmem:[%s602 + $0x172] sm:$0xff]
  %v1147 = vld [vmem:[%s602 + $0x1b2] sm:$0xff]
  %v1148 = vld [vmem:[%s602 + $0x1ba] sm:$0xff]
  %v1149 = vld [vmem:[%s602 + $0x1ca] sm:$0xff]
  %v1150 = vld [vmem:[%s602 + $0x1d2] sm:$0xff]
  %v1151 = vld [vmem:[%s602 + $0x1e2] sm:$0xff]
  %v1152 = vld [vmem:[%s602 + $0x1ea] sm:$0xff]
  %v1153 = vld [vmem:[%s602 + $0x1fa] sm:$0xff]
  %v1154 = vld [vmem:[%s602 + $0x202] sm:$0xff]
  %v1155 = vld [vmem:[%s602 + $0x212] sm:$0xff]
  %v1156 = vld [vmem:[%s602 + $0x21a] sm:$0xff]
  %v1157 = vld [vmem:[%s602 + $0x22a] sm:$0xff]
  %v1158 = vld [vmem:[%s602 + $0x232] sm:$0xff]
  %v1159 = vld [vmem:[%s602 + $0x242] sm:$0xff]
  %v1160 = vld [vmem:[%s602 + $0x24a] sm:$0xff]
  %v1161 = vld [vmem:[%s602 + $0x25a] sm:$0xff]
  %v1162 = vld [vmem:[%s602 + $0x262] sm:$0xff]
  %v1163 = vld [vmem:[%s602 + $0x272] sm:$0xff]
  %v1164 = vld [vmem:[%s602 + $0x27a] sm:$0xff]
  %v1165 = vld [vmem:[%s602 + $0x28a] sm:$0xff]
  %v1166 = vld [vmem:[%s602 + $0x292] sm:$0xff]
  %v1167 = vld [vmem:[%s602 + $0x2a2] sm:$0xff]
  %v1168 = vld [vmem:[%s602 + $0x2aa] sm:$0xff]
  %v1169 = vld [vmem:[%s602 + $0x2ba] sm:$0xff]
  %v1170 = vld [vmem:[%s602 + $0x2c2] sm:$0xff]
  %v1171 = vld [vmem:[%s602 + $0x2d2] sm:$0xff]
  %v1172 = vld [vmem:[%s602 + $0x2da] sm:$0xff]
  %v1173 = vld [vmem:[%s602 + $0x2ea] sm:$0xff]
  %v1174 = vld [vmem:[%s602 + $0x2f2] sm:$0xff]
  %v1175 = vld [vmem:[%s602 + $0x302] sm:$0xff]
  %v1176 = vld [vmem:[%s602 + $0x30a] sm:$0xff]
  %v1177 = vld [vmem:[%s602 + $0x31a] sm:$0xff]
  %v1178 = vld [vmem:[%s602 + $0x322] sm:$0xff]
  %1179 = vrot.lane.b32.xlu0 %v1115, 40
  %v1180 = vpop.permute.xlu0 %1179
  %1181 = vrot.lane.b32.xlu0 %v1116, 40
  %v1182 = vpop.permute.xlu0 %1181
  %1183 = vrot.lane.b32.xlu0 %v1117, 40
  %v1184 = vpop.permute.xlu0 %1183
  %1185 = vrot.lane.b32.xlu0 %v1118, 40
  %v1186 = vpop.permute.xlu0 %1185
  %1187 = vrot.lane.b32.xlu0 %v1119, 40
  %v1188 = vpop.permute.xlu0 %1187
  %1189 = vrot.lane.b32.xlu0 %v1120, 40
  %v1190 = vpop.permute.xlu0 %1189
  %1191 = vrot.lane.b32.xlu0 %v1121, 40
  %v1192 = vpop.permute.xlu0 %1191
  %1193 = vrot.lane.b32.xlu0 %v1122, 40
  %v1194 = vpop.permute.xlu0 %1193
  %1195 = vrot.lane.b32.xlu0 %v1123, 40
  %v1196 = vpop.permute.xlu0 %1195
  %1197 = vrot.lane.b32.xlu0 %v1124, 40
  %v1198 = vpop.permute.xlu0 %1197
  %1199 = vrot.lane.b32.xlu0 %v1125, 40
  %v1200 = vpop.permute.xlu0 %1199
  %1201 = vrot.lane.b32.xlu0 %v1126, 40
  %v1202 = vpop.permute.xlu0 %1201
  %1203 = vrot.lane.b32.xlu0 %v1127, 40
  %v1204 = vpop.permute.xlu0 %1203
  %1205 = vrot.lane.b32.xlu0 %v1128, 40
  %v1206 = vpop.permute.xlu0 %1205
  %1207 = vrot.lane.b32.xlu0 %v1129, 40
  %v1208 = vpop.permute.xlu0 %1207
  %1209 = vrot.lane.b32.xlu0 %v1130, 40
  %v1210 = vpop.permute.xlu0 %1209
  %1211 = vrot.lane.b32.xlu0 %v1131, 40
  %v1212 = vpop.permute.xlu0 %1211
  %1213 = vrot.lane.b32.xlu0 %v1132, 40
  %v1214 = vpop.permute.xlu0 %1213
  %1215 = vrot.lane.b32.xlu0 %v1133, 40
  %v1216 = vpop.permute.xlu0 %1215
  %1217 = vrot.lane.b32.xlu0 %v1134, 40
  %v1218 = vpop.permute.xlu0 %1217
  %1219 = vrot.lane.b32.xlu0 %v1135, 40
  %v1220 = vpop.permute.xlu0 %1219
  %1221 = vrot.lane.b32.xlu0 %v1136, 40
  %v1222 = vpop.permute.xlu0 %1221
  %1223 = vrot.lane.b32.xlu0 %v1137, 40
  %v1224 = vpop.permute.xlu0 %1223
  %1225 = vrot.lane.b32.xlu0 %v1138, 40
  %v1226 = vpop.permute.xlu0 %1225
  %1227 = vrot.lane.b32.xlu0 %v1139, 40
  %v1228 = vpop.permute.xlu0 %1227
  %1229 = vrot.lane.b32.xlu0 %v1140, 40
  %v1230 = vpop.permute.xlu0 %1229
  %1231 = vrot.lane.b32.xlu0 %v1141, 40
  %v1232 = vpop.permute.xlu0 %1231
  %1233 = vrot.lane.b32.xlu0 %v1142, 40
  %v1234 = vpop.permute.xlu0 %1233
  %1235 = vrot.lane.b32.xlu0 %v1143, 40
  %v1236 = vpop.permute.xlu0 %1235
  %1237 = vrot.lane.b32.xlu0 %v1144, 40
  %v1238 = vpop.permute.xlu0 %1237
  %1239 = vrot.lane.b32.xlu0 %v1145, 40
  %v1240 = vpop.permute.xlu0 %1239
  %1241 = vrot.lane.b32.xlu0 %v1146, 40
  %v1242 = vpop.permute.xlu0 %1241
  %1243 = vrot.lane.b32.xlu0 %v1147, 40
  %v1244 = vpop.permute.xlu0 %1243
  %1245 = vrot.lane.b32.xlu0 %v1148, 40
  %v1246 = vpop.permute.xlu0 %1245
  %1247 = vrot.lane.b32.xlu0 %v1149, 40
  %v1248 = vpop.permute.xlu0 %1247
  %1249 = vrot.lane.b32.xlu0 %v1150, 40
  %v1250 = vpop.permute.xlu0 %1249
  %1251 = vrot.lane.b32.xlu0 %v1151, 40
  %v1252 = vpop.permute.xlu0 %1251
  %1253 = vrot.lane.b32.xlu0 %v1152, 40
  %v1254 = vpop.permute.xlu0 %1253
  %1255 = vrot.lane.b32.xlu0 %v1153, 40
  %v1256 = vpop.permute.xlu0 %1255
  %1257 = vrot.lane.b32.xlu0 %v1154, 40
  %v1258 = vpop.permute.xlu0 %1257
  %1259 = vrot.lane.b32.xlu0 %v1155, 40
  %v1260 = vpop.permute.xlu0 %1259
  %1261 = vrot.lane.b32.xlu0 %v1156, 40
  %v1262 = vpop.permute.xlu0 %1261
  %1263 = vrot.lane.b32.xlu0 %v1157, 40
  %v1264 = vpop.permute.xlu0 %1263
  %1265 = vrot.lane.b32.xlu0 %v1158, 40
  %v1266 = vpop.permute.xlu0 %1265
  %1267 = vrot.lane.b32.xlu0 %v1159, 40
  %v1268 = vpop.permute.xlu0 %1267
  %1269 = vrot.lane.b32.xlu0 %v1160, 40
  %v1270 = vpop.permute.xlu0 %1269
  %1271 = vrot.lane.b32.xlu0 %v1161, 40
  %v1272 = vpop.permute.xlu0 %1271
  %1273 = vrot.lane.b32.xlu0 %v1162, 40
  %v1274 = vpop.permute.xlu0 %1273
  %1275 = vrot.lane.b32.xlu0 %v1163, 40
  %v1276 = vpop.permute.xlu0 %1275
  %1277 = vrot.lane.b32.xlu0 %v1164, 40
  %v1278 = vpop.permute.xlu0 %1277
  %1279 = vrot.lane.b32.xlu0 %v1165, 40
  %v1280 = vpop.permute.xlu0 %1279
  %1281 = vrot.lane.b32.xlu0 %v1166, 40
  %v1282 = vpop.permute.xlu0 %1281
  %1283 = vrot.lane.b32.xlu0 %v1167, 40
  %v1284 = vpop.permute.xlu0 %1283
  %1285 = vrot.lane.b32.xlu0 %v1168, 40
  %v1286 = vpop.permute.xlu0 %1285
  %1287 = vrot.lane.b32.xlu0 %v1169, 40
  %v1288 = vpop.permute.xlu0 %1287
  %1289 = vrot.lane.b32.xlu0 %v1170, 40
  %v1290 = vpop.permute.xlu0 %1289
  %1291 = vrot.lane.b32.xlu0 %v1171, 40
  %v1292 = vpop.permute.xlu0 %1291
  %1293 = vrot.lane.b32.xlu0 %v1172, 40
  %v1294 = vpop.permute.xlu0 %1293
  %1295 = vrot.lane.b32.xlu0 %v1173, 40
  %v1296 = vpop.permute.xlu0 %1295
  %1297 = vrot.lane.b32.xlu0 %v1174, 40
  %v1298 = vpop.permute.xlu0 %1297
  %1299 = vrot.lane.b32.xlu0 %v1175, 40
  %v1300 = vpop.permute.xlu0 %1299
  %1301 = vrot.lane.b32.xlu0 %v1176, 40
  %v1302 = vpop.permute.xlu0 %1301
  %1303 = vrot.lane.b32.xlu0 %v1177, 40
  %v1304 = vpop.permute.xlu0 %1303
  %1305 = vrot.lane.b32.xlu0 %v1178, 40
  %v1306 = vpop.permute.xlu0 %1305
  %v1307 = vadd.f32 %v1051, %v1180
  %v1308 = vadd.f32 %v1052, %v1182
  %v1309 = vadd.f32 %v1053, %v1184
  %v1310 = vadd.f32 %v1054, %v1186
  %v1311 = vadd.f32 %v1055, %v1188
  %v1312 = vadd.f32 %v1056, %v1190
  %v1313 = vadd.f32 %v1057, %v1192
  %v1314 = vadd.f32 %v1058, %v1194
  %v1315 = vadd.f32 %v1059, %v1196
  %v1316 = vadd.f32 %v1060, %v1198
  %v1317 = vadd.f32 %v1061, %v1200
  %v1318 = vadd.f32 %v1062, %v1202
  %v1319 = vadd.f32 %v1063, %v1204
  %v1320 = vadd.f32 %v1064, %v1206
  %v1321 = vadd.f32 %v1065, %v1208
  %v1322 = vadd.f32 %v1066, %v1210
  %v1323 = vadd.f32 %v1067, %v1212
  %v1324 = vadd.f32 %v1068, %v1214
  %v1325 = vadd.f32 %v1069, %v1216
  %v1326 = vadd.f32 %v1070, %v1218
  %v1327 = vadd.f32 %v1071, %v1220
  %v1328 = vadd.f32 %v1072, %v1222
  %v1329 = vadd.f32 %v1073, %v1224
  %v1330 = vadd.f32 %v1074, %v1226
  %v1331 = vadd.f32 %v1075, %v1228
  %v1332 = vadd.f32 %v1076, %v1230
  %v1333 = vadd.f32 %v1077, %v1232
  %v1334 = vadd.f32 %v1078, %v1234
  %v1335 = vadd.f32 %v1079, %v1236
  %v1336 = vadd.f32 %v1080, %v1238
  %v1337 = vadd.f32 %v1081, %v1240
  %v1338 = vadd.f32 %v1082, %v1242
  %v1339 = vadd.f32 %v1083, %v1244
  %v1340 = vadd.f32 %v1084, %v1246
  %v1341 = vadd.f32 %v1085, %v1248
  %v1342 = vadd.f32 %v1086, %v1250
  %v1343 = vadd.f32 %v1087, %v1252
  %v1344 = vadd.f32 %v1088, %v1254
  %v1345 = vadd.f32 %v1089, %v1256
  %v1346 = vadd.f32 %v1090, %v1258
  %v1347 = vadd.f32 %v1091, %v1260
  %v1348 = vadd.f32 %v1092, %v1262
  %v1349 = vadd.f32 %v1093, %v1264
  %v1350 = vadd.f32 %v1094, %v1266
  %v1351 = vadd.f32 %v1095, %v1268
  %v1352 = vadd.f32 %v1096, %v1270
  %v1353 = vadd.f32 %v1097, %v1272
  %v1354 = vadd.f32 %v1098, %v1274
  %v1355 = vadd.f32 %v1099, %v1276
  %v1356 = vadd.f32 %v1100, %v1278
  %v1357 = vadd.f32 %v1101, %v1280
  %v1358 = vadd.f32 %v1102, %v1282
  %v1359 = vadd.f32 %v1103, %v1284
  %v1360 = vadd.f32 %v1104, %v1286
  %v1361 = vadd.f32 %v1105, %v1288
  %v1362 = vadd.f32 %v1106, %v1290
  %v1363 = vadd.f32 %v1107, %v1292
  %v1364 = vadd.f32 %v1108, %v1294
  %v1365 = vadd.f32 %v1109, %v1296
  %v1366 = vadd.f32 %v1110, %v1298
  %v1367 = vadd.f32 %v1111, %v1300
  %v1368 = vadd.f32 %v1112, %v1302
  %v1369 = vadd.f32 %v1113, %v1304
  %v1370 = vadd.f32 %v1114, %v1306
  %s1371 = scalar_lea.vmem %s0, 48
  %v1372 = vld [vmem:[%s1371] sm:$0xff]
  %v1373 = vld [vmem:[%s1371 + $0x8] sm:$0xff]
  %v1374 = vld [vmem:[%s1371 + $0x18] sm:$0xff]
  %v1375 = vld [vmem:[%s1371 + $0x20] sm:$0xff]
  %v1376 = vld [vmem:[%s1371 + $0x30] sm:$0xff]
  %v1377 = vld [vmem:[%s1371 + $0x38] sm:$0xff]
  %v1378 = vld [vmem:[%s1371 + $0x48] sm:$0xff]
  %v1379 = vld [vmem:[%s1371 + $0x50] sm:$0xff]
  %v1380 = vld [vmem:[%s1371 + $0x60] sm:$0xff]
  %v1381 = vld [vmem:[%s1371 + $0x68] sm:$0xff]
  %v1382 = vld [vmem:[%s1371 + $0x78] sm:$0xff]
  %v1383 = vld [vmem:[%s1371 + $0x80] sm:$0xff]
  %v1384 = vld [vmem:[%s1371 + $0x90] sm:$0xff]
  %v1385 = vld [vmem:[%s1371 + $0x98] sm:$0xff]
  %v1386 = vld [vmem:[%s1371 + $0xa8] sm:$0xff]
  %v1387 = vld [vmem:[%s1371 + $0xb0] sm:$0xff]
  %v1388 = vld [vmem:[%s1371 + $0xc0] sm:$0xff]
  %v1389 = vld [vmem:[%s1371 + $0xc8] sm:$0xff]
  %v1390 = vld [vmem:[%s1371 + $0xd8] sm:$0xff]
  %v1391 = vld [vmem:[%s1371 + $0xe0] sm:$0xff]
  %v1392 = vld [vmem:[%s1371 + $0xf0] sm:$0xff]
  %v1393 = vld [vmem:[%s1371 + $0xf8] sm:$0xff]
  %v1394 = vld [vmem:[%s1371 + $0x108] sm:$0xff]
  %v1395 = vld [vmem:[%s1371 + $0x110] sm:$0xff]
  %v1396 = vld [vmem:[%s1371 + $0x120] sm:$0xff]
  %v1397 = vld [vmem:[%s1371 + $0x128] sm:$0xff]
  %v1398 = vld [vmem:[%s1371 + $0x138] sm:$0xff]
  %v1399 = vld [vmem:[%s1371 + $0x140] sm:$0xff]
  %v1400 = vld [vmem:[%s1371 + $0x150] sm:$0xff]
  %v1401 = vld [vmem:[%s1371 + $0x158] sm:$0xff]
  %v1402 = vld [vmem:[%s1371 + $0x168] sm:$0xff]
  %v1403 = vld [vmem:[%s1371 + $0x170] sm:$0xff]
  %v1404 = vld [vmem:[%s1371 + $0x1b0] sm:$0xff]
  %v1405 = vld [vmem:[%s1371 + $0x1b8] sm:$0xff]
  %v1406 = vld [vmem:[%s1371 + $0x1c8] sm:$0xff]
  %v1407 = vld [vmem:[%s1371 + $0x1d0] sm:$0xff]
  %v1408 = vld [vmem:[%s1371 + $0x1e0] sm:$0xff]
  %v1409 = vld [vmem:[%s1371 + $0x1e8] sm:$0xff]
  %v1410 = vld [vmem:[%s1371 + $0x1f8] sm:$0xff]
  %v1411 = vld [vmem:[%s1371 + $0x200] sm:$0xff]
  %v1412 = vld [vmem:[%s1371 + $0x210] sm:$0xff]
  %v1413 = vld [vmem:[%s1371 + $0x218] sm:$0xff]
  %v1414 = vld [vmem:[%s1371 + $0x228] sm:$0xff]
  %v1415 = vld [vmem:[%s1371 + $0x230] sm:$0xff]
  %v1416 = vld [vmem:[%s1371 + $0x240] sm:$0xff]
  %v1417 = vld [vmem:[%s1371 + $0x248] sm:$0xff]
  %v1418 = vld [vmem:[%s1371 + $0x258] sm:$0xff]
  %v1419 = vld [vmem:[%s1371 + $0x260] sm:$0xff]
  %v1420 = vld [vmem:[%s1371 + $0x270] sm:$0xff]
  %v1421 = vld [vmem:[%s1371 + $0x278] sm:$0xff]
  %v1422 = vld [vmem:[%s1371 + $0x288] sm:$0xff]
  %v1423 = vld [vmem:[%s1371 + $0x290] sm:$0xff]
  %v1424 = vld [vmem:[%s1371 + $0x2a0] sm:$0xff]
  %v1425 = vld [vmem:[%s1371 + $0x2a8] sm:$0xff]
  %v1426 = vld [vmem:[%s1371 + $0x2b8] sm:$0xff]
  %v1427 = vld [vmem:[%s1371 + $0x2c0] sm:$0xff]
  %v1428 = vld [vmem:[%s1371 + $0x2d0] sm:$0xff]
  %v1429 = vld [vmem:[%s1371 + $0x2d8] sm:$0xff]
  %v1430 = vld [vmem:[%s1371 + $0x2e8] sm:$0xff]
  %v1431 = vld [vmem:[%s1371 + $0x2f0] sm:$0xff]
  %v1432 = vld [vmem:[%s1371 + $0x300] sm:$0xff]
  %v1433 = vld [vmem:[%s1371 + $0x308] sm:$0xff]
  %v1434 = vld [vmem:[%s1371 + $0x318] sm:$0xff]
  %v1435 = vld [vmem:[%s1371 + $0x320] sm:$0xff]
  %1436 = vrot.lane.b32.xlu0 %v1372, 48
  %v1437 = vpop.permute.xlu0 %1436
  %1438 = vrot.lane.b32.xlu0 %v1373, 48
  %v1439 = vpop.permute.xlu0 %1438
  %1440 = vrot.lane.b32.xlu0 %v1374, 48
  %v1441 = vpop.permute.xlu0 %1440
  %1442 = vrot.lane.b32.xlu0 %v1375, 48
  %v1443 = vpop.permute.xlu0 %1442
  %1444 = vrot.lane.b32.xlu0 %v1376, 48
  %v1445 = vpop.permute.xlu0 %1444
  %1446 = vrot.lane.b32.xlu0 %v1377, 48
  %v1447 = vpop.permute.xlu0 %1446
  %1448 = vrot.lane.b32.xlu0 %v1378, 48
  %v1449 = vpop.permute.xlu0 %1448
  %1450 = vrot.lane.b32.xlu0 %v1379, 48
  %v1451 = vpop.permute.xlu0 %1450
  %1452 = vrot.lane.b32.xlu0 %v1380, 48
  %v1453 = vpop.permute.xlu0 %1452
  %1454 = vrot.lane.b32.xlu0 %v1381, 48
  %v1455 = vpop.permute.xlu0 %1454
  %1456 = vrot.lane.b32.xlu0 %v1382, 48
  %v1457 = vpop.permute.xlu0 %1456
  %1458 = vrot.lane.b32.xlu0 %v1383, 48
  %v1459 = vpop.permute.xlu0 %1458
  %1460 = vrot.lane.b32.xlu0 %v1384, 48
  %v1461 = vpop.permute.xlu0 %1460
  %1462 = vrot.lane.b32.xlu0 %v1385, 48
  %v1463 = vpop.permute.xlu0 %1462
  %1464 = vrot.lane.b32.xlu0 %v1386, 48
  %v1465 = vpop.permute.xlu0 %1464
  %1466 = vrot.lane.b32.xlu0 %v1387, 48
  %v1467 = vpop.permute.xlu0 %1466
  %1468 = vrot.lane.b32.xlu0 %v1388, 48
  %v1469 = vpop.permute.xlu0 %1468
  %1470 = vrot.lane.b32.xlu0 %v1389, 48
  %v1471 = vpop.permute.xlu0 %1470
  %1472 = vrot.lane.b32.xlu0 %v1390, 48
  %v1473 = vpop.permute.xlu0 %1472
  %1474 = vrot.lane.b32.xlu0 %v1391, 48
  %v1475 = vpop.permute.xlu0 %1474
  %1476 = vrot.lane.b32.xlu0 %v1392, 48
  %v1477 = vpop.permute.xlu0 %1476
  %1478 = vrot.lane.b32.xlu0 %v1393, 48
  %v1479 = vpop.permute.xlu0 %1478
  %1480 = vrot.lane.b32.xlu0 %v1394, 48
  %v1481 = vpop.permute.xlu0 %1480
  %1482 = vrot.lane.b32.xlu0 %v1395, 48
  %v1483 = vpop.permute.xlu0 %1482
  %1484 = vrot.lane.b32.xlu0 %v1396, 48
  %v1485 = vpop.permute.xlu0 %1484
  %1486 = vrot.lane.b32.xlu0 %v1397, 48
  %v1487 = vpop.permute.xlu0 %1486
  %1488 = vrot.lane.b32.xlu0 %v1398, 48
  %v1489 = vpop.permute.xlu0 %1488
  %1490 = vrot.lane.b32.xlu0 %v1399, 48
  %v1491 = vpop.permute.xlu0 %1490
  %1492 = vrot.lane.b32.xlu0 %v1400, 48
  %v1493 = vpop.permute.xlu0 %1492
  %1494 = vrot.lane.b32.xlu0 %v1401, 48
  %v1495 = vpop.permute.xlu0 %1494
  %1496 = vrot.lane.b32.xlu0 %v1402, 48
  %v1497 = vpop.permute.xlu0 %1496
  %1498 = vrot.lane.b32.xlu0 %v1403, 48
  %v1499 = vpop.permute.xlu0 %1498
  %1500 = vrot.lane.b32.xlu0 %v1404, 48
  %v1501 = vpop.permute.xlu0 %1500
  %1502 = vrot.lane.b32.xlu0 %v1405, 48
  %v1503 = vpop.permute.xlu0 %1502
  %1504 = vrot.lane.b32.xlu0 %v1406, 48
  %v1505 = vpop.permute.xlu0 %1504
  %1506 = vrot.lane.b32.xlu0 %v1407, 48
  %v1507 = vpop.permute.xlu0 %1506
  %1508 = vrot.lane.b32.xlu0 %v1408, 48
  %v1509 = vpop.permute.xlu0 %1508
  %1510 = vrot.lane.b32.xlu0 %v1409, 48
  %v1511 = vpop.permute.xlu0 %1510
  %1512 = vrot.lane.b32.xlu0 %v1410, 48
  %v1513 = vpop.permute.xlu0 %1512
  %1514 = vrot.lane.b32.xlu0 %v1411, 48
  %v1515 = vpop.permute.xlu0 %1514
  %1516 = vrot.lane.b32.xlu0 %v1412, 48
  %v1517 = vpop.permute.xlu0 %1516
  %1518 = vrot.lane.b32.xlu0 %v1413, 48
  %v1519 = vpop.permute.xlu0 %1518
  %1520 = vrot.lane.b32.xlu0 %v1414, 48
  %v1521 = vpop.permute.xlu0 %1520
  %1522 = vrot.lane.b32.xlu0 %v1415, 48
  %v1523 = vpop.permute.xlu0 %1522
  %1524 = vrot.lane.b32.xlu0 %v1416, 48
  %v1525 = vpop.permute.xlu0 %1524
  %1526 = vrot.lane.b32.xlu0 %v1417, 48
  %v1527 = vpop.permute.xlu0 %1526
  %1528 = vrot.lane.b32.xlu0 %v1418, 48
  %v1529 = vpop.permute.xlu0 %1528
  %1530 = vrot.lane.b32.xlu0 %v1419, 48
  %v1531 = vpop.permute.xlu0 %1530
  %1532 = vrot.lane.b32.xlu0 %v1420, 48
  %v1533 = vpop.permute.xlu0 %1532
  %1534 = vrot.lane.b32.xlu0 %v1421, 48
  %v1535 = vpop.permute.xlu0 %1534
  %1536 = vrot.lane.b32.xlu0 %v1422, 48
  %v1537 = vpop.permute.xlu0 %1536
  %1538 = vrot.lane.b32.xlu0 %v1423, 48
  %v1539 = vpop.permute.xlu0 %1538
  %1540 = vrot.lane.b32.xlu0 %v1424, 48
  %v1541 = vpop.permute.xlu0 %1540
  %1542 = vrot.lane.b32.xlu0 %v1425, 48
  %v1543 = vpop.permute.xlu0 %1542
  %1544 = vrot.lane.b32.xlu0 %v1426, 48
  %v1545 = vpop.permute.xlu0 %1544
  %1546 = vrot.lane.b32.xlu0 %v1427, 48
  %v1547 = vpop.permute.xlu0 %1546
  %1548 = vrot.lane.b32.xlu0 %v1428, 48
  %v1549 = vpop.permute.xlu0 %1548
  %1550 = vrot.lane.b32.xlu0 %v1429, 48
  %v1551 = vpop.permute.xlu0 %1550
  %1552 = vrot.lane.b32.xlu0 %v1430, 48
  %v1553 = vpop.permute.xlu0 %1552
  %1554 = vrot.lane.b32.xlu0 %v1431, 48
  %v1555 = vpop.permute.xlu0 %1554
  %1556 = vrot.lane.b32.xlu0 %v1432, 48
  %v1557 = vpop.permute.xlu0 %1556
  %1558 = vrot.lane.b32.xlu0 %v1433, 48
  %v1559 = vpop.permute.xlu0 %1558
  %1560 = vrot.lane.b32.xlu0 %v1434, 48
  %v1561 = vpop.permute.xlu0 %1560
  %1562 = vrot.lane.b32.xlu0 %v1435, 48
  %v1563 = vpop.permute.xlu0 %1562
  %v1564 = vadd.f32 %v1307, %v1437
  %v1565 = vadd.f32 %v1308, %v1439
  %v1566 = vadd.f32 %v1309, %v1441
  %v1567 = vadd.f32 %v1310, %v1443
  %v1568 = vadd.f32 %v1311, %v1445
  %v1569 = vadd.f32 %v1312, %v1447
  %v1570 = vadd.f32 %v1313, %v1449
  %v1571 = vadd.f32 %v1314, %v1451
  %v1572 = vadd.f32 %v1315, %v1453
  %v1573 = vadd.f32 %v1316, %v1455
  %v1574 = vadd.f32 %v1317, %v1457
  %v1575 = vadd.f32 %v1318, %v1459
  %v1576 = vadd.f32 %v1319, %v1461
  %v1577 = vadd.f32 %v1320, %v1463
  %v1578 = vadd.f32 %v1321, %v1465
  %v1579 = vadd.f32 %v1322, %v1467
  %v1580 = vadd.f32 %v1323, %v1469
  %v1581 = vadd.f32 %v1324, %v1471
  %v1582 = vadd.f32 %v1325, %v1473
  %v1583 = vadd.f32 %v1326, %v1475
  %v1584 = vadd.f32 %v1327, %v1477
  %v1585 = vadd.f32 %v1328, %v1479
  %v1586 = vadd.f32 %v1329, %v1481
  %v1587 = vadd.f32 %v1330, %v1483
  %v1588 = vadd.f32 %v1331, %v1485
  %v1589 = vadd.f32 %v1332, %v1487
  %v1590 = vadd.f32 %v1333, %v1489
  %v1591 = vadd.f32 %v1334, %v1491
  %v1592 = vadd.f32 %v1335, %v1493
  %v1593 = vadd.f32 %v1336, %v1495
  %v1594 = vadd.f32 %v1337, %v1497
  %v1595 = vadd.f32 %v1338, %v1499
  %v1596 = vadd.f32 %v1339, %v1501
  %v1597 = vadd.f32 %v1340, %v1503
  %v1598 = vadd.f32 %v1341, %v1505
  %v1599 = vadd.f32 %v1342, %v1507
  %v1600 = vadd.f32 %v1343, %v1509
  %v1601 = vadd.f32 %v1344, %v1511
  %v1602 = vadd.f32 %v1345, %v1513
  %v1603 = vadd.f32 %v1346, %v1515
  %v1604 = vadd.f32 %v1347, %v1517
  %v1605 = vadd.f32 %v1348, %v1519
  %v1606 = vadd.f32 %v1349, %v1521
  %v1607 = vadd.f32 %v1350, %v1523
  %v1608 = vadd.f32 %v1351, %v1525
  %v1609 = vadd.f32 %v1352, %v1527
  %v1610 = vadd.f32 %v1353, %v1529
  %v1611 = vadd.f32 %v1354, %v1531
  %v1612 = vadd.f32 %v1355, %v1533
  %v1613 = vadd.f32 %v1356, %v1535
  %v1614 = vadd.f32 %v1357, %v1537
  %v1615 = vadd.f32 %v1358, %v1539
  %v1616 = vadd.f32 %v1359, %v1541
  %v1617 = vadd.f32 %v1360, %v1543
  %v1618 = vadd.f32 %v1361, %v1545
  %v1619 = vadd.f32 %v1362, %v1547
  %v1620 = vadd.f32 %v1363, %v1549
  %v1621 = vadd.f32 %v1364, %v1551
  %v1622 = vadd.f32 %v1365, %v1553
  %v1623 = vadd.f32 %v1366, %v1555
  %v1624 = vadd.f32 %v1367, %v1557
  %v1625 = vadd.f32 %v1368, %v1559
  %v1626 = vadd.f32 %v1369, %v1561
  %v1627 = vadd.f32 %v1370, %v1563
  %v1628 = vld [vmem:[%s1371 + $0x1] sm:$0xff]
  %v1629 = vld [vmem:[%s1371 + $0x9] sm:$0xff]
  %v1630 = vld [vmem:[%s1371 + $0x19] sm:$0xff]
  %v1631 = vld [vmem:[%s1371 + $0x21] sm:$0xff]
  %v1632 = vld [vmem:[%s1371 + $0x31] sm:$0xff]
  %v1633 = vld [vmem:[%s1371 + $0x39] sm:$0xff]
  %v1634 = vld [vmem:[%s1371 + $0x49] sm:$0xff]
  %v1635 = vld [vmem:[%s1371 + $0x51] sm:$0xff]
  %v1636 = vld [vmem:[%s1371 + $0x61] sm:$0xff]
  %v1637 = vld [vmem:[%s1371 + $0x69] sm:$0xff]
  %v1638 = vld [vmem:[%s1371 + $0x79] sm:$0xff]
  %v1639 = vld [vmem:[%s1371 + $0x81] sm:$0xff]
  %v1640 = vld [vmem:[%s1371 + $0x91] sm:$0xff]
  %v1641 = vld [vmem:[%s1371 + $0x99] sm:$0xff]
  %v1642 = vld [vmem:[%s1371 + $0xa9] sm:$0xff]
  %v1643 = vld [vmem:[%s1371 + $0xb1] sm:$0xff]
  %v1644 = vld [vmem:[%s1371 + $0xc1] sm:$0xff]
  %v1645 = vld [vmem:[%s1371 + $0xc9] sm:$0xff]
  %v1646 = vld [vmem:[%s1371 + $0xd9] sm:$0xff]
  %v1647 = vld [vmem:[%s1371 + $0xe1] sm:$0xff]
  %v1648 = vld [vmem:[%s1371 + $0xf1] sm:$0xff]
  %v1649 = vld [vmem:[%s1371 + $0xf9] sm:$0xff]
  %v1650 = vld [vmem:[%s1371 + $0x109] sm:$0xff]
  %v1651 = vld [vmem:[%s1371 + $0x111] sm:$0xff]
  %v1652 = vld [vmem:[%s1371 + $0x121] sm:$0xff]
  %v1653 = vld [vmem:[%s1371 + $0x129] sm:$0xff]
  %v1654 = vld [vmem:[%s1371 + $0x139] sm:$0xff]
  %v1655 = vld [vmem:[%s1371 + $0x141] sm:$0xff]
  %v1656 = vld [vmem:[%s1371 + $0x151] sm:$0xff]
  %v1657 = vld [vmem:[%s1371 + $0x159] sm:$0xff]
  %v1658 = vld [vmem:[%s1371 + $0x169] sm:$0xff]
  %v1659 = vld [vmem:[%s1371 + $0x171] sm:$0xff]
  %v1660 = vld [vmem:[%s1371 + $0x1b1] sm:$0xff]
  %v1661 = vld [vmem:[%s1371 + $0x1b9] sm:$0xff]
  %v1662 = vld [vmem:[%s1371 + $0x1c9] sm:$0xff]
  %v1663 = vld [vmem:[%s1371 + $0x1d1] sm:$0xff]
  %v1664 = vld [vmem:[%s1371 + $0x1e1] sm:$0xff]
  %v1665 = vld [vmem:[%s1371 + $0x1e9] sm:$0xff]
  %v1666 = vld [vmem:[%s1371 + $0x1f9] sm:$0xff]
  %v1667 = vld [vmem:[%s1371 + $0x201] sm:$0xff]
  %v1668 = vld [vmem:[%s1371 + $0x211] sm:$0xff]
  %v1669 = vld [vmem:[%s1371 + $0x219] sm:$0xff]
  %v1670 = vld [vmem:[%s1371 + $0x229] sm:$0xff]
  %v1671 = vld [vmem:[%s1371 + $0x231] sm:$0xff]
  %v1672 = vld [vmem:[%s1371 + $0x241] sm:$0xff]
  %v1673 = vld [vmem:[%s1371 + $0x249] sm:$0xff]
  %v1674 = vld [vmem:[%s1371 + $0x259] sm:$0xff]
  %v1675 = vld [vmem:[%s1371 + $0x261] sm:$0xff]
  %v1676 = vld [vmem:[%s1371 + $0x271] sm:$0xff]
  %v1677 = vld [vmem:[%s1371 + $0x279] sm:$0xff]
  %v1678 = vld [vmem:[%s1371 + $0x289] sm:$0xff]
  %v1679 = vld [vmem:[%s1371 + $0x291] sm:$0xff]
  %v1680 = vld [vmem:[%s1371 + $0x2a1] sm:$0xff]
  %v1681 = vld [vmem:[%s1371 + $0x2a9] sm:$0xff]
  %v1682 = vld [vmem:[%s1371 + $0x2b9] sm:$0xff]
  %v1683 = vld [vmem:[%s1371 + $0x2c1] sm:$0xff]
  %v1684 = vld [vmem:[%s1371 + $0x2d1] sm:$0xff]
  %v1685 = vld [vmem:[%s1371 + $0x2d9] sm:$0xff]
  %v1686 = vld [vmem:[%s1371 + $0x2e9] sm:$0xff]
  %v1687 = vld [vmem:[%s1371 + $0x2f1] sm:$0xff]
  %v1688 = vld [vmem:[%s1371 + $0x301] sm:$0xff]
  %v1689 = vld [vmem:[%s1371 + $0x309] sm:$0xff]
  %v1690 = vld [vmem:[%s1371 + $0x319] sm:$0xff]
  %v1691 = vld [vmem:[%s1371 + $0x321] sm:$0xff]
  %1692 = vrot.lane.b32.xlu0 %v1628, 56
  %v1693 = vpop.permute.xlu0 %1692
  %1694 = vrot.lane.b32.xlu0 %v1629, 56
  %v1695 = vpop.permute.xlu0 %1694
  %1696 = vrot.lane.b32.xlu0 %v1630, 56
  %v1697 = vpop.permute.xlu0 %1696
  %1698 = vrot.lane.b32.xlu0 %v1631, 56
  %v1699 = vpop.permute.xlu0 %1698
  %1700 = vrot.lane.b32.xlu0 %v1632, 56
  %v1701 = vpop.permute.xlu0 %1700
  %1702 = vrot.lane.b32.xlu0 %v1633, 56
  %v1703 = vpop.permute.xlu0 %1702
  %1704 = vrot.lane.b32.xlu0 %v1634, 56
  %v1705 = vpop.permute.xlu0 %1704
  %1706 = vrot.lane.b32.xlu0 %v1635, 56
  %v1707 = vpop.permute.xlu0 %1706
  %1708 = vrot.lane.b32.xlu0 %v1636, 56
  %v1709 = vpop.permute.xlu0 %1708
  %1710 = vrot.lane.b32.xlu0 %v1637, 56
  %v1711 = vpop.permute.xlu0 %1710
  %1712 = vrot.lane.b32.xlu0 %v1638, 56
  %v1713 = vpop.permute.xlu0 %1712
  %1714 = vrot.lane.b32.xlu0 %v1639, 56
  %v1715 = vpop.permute.xlu0 %1714
  %1716 = vrot.lane.b32.xlu0 %v1640, 56
  %v1717 = vpop.permute.xlu0 %1716
  %1718 = vrot.lane.b32.xlu0 %v1641, 56
  %v1719 = vpop.permute.xlu0 %1718
  %1720 = vrot.lane.b32.xlu0 %v1642, 56
  %v1721 = vpop.permute.xlu0 %1720
  %1722 = vrot.lane.b32.xlu0 %v1643, 56
  %v1723 = vpop.permute.xlu0 %1722
  %1724 = vrot.lane.b32.xlu0 %v1644, 56
  %v1725 = vpop.permute.xlu0 %1724
  %1726 = vrot.lane.b32.xlu0 %v1645, 56
  %v1727 = vpop.permute.xlu0 %1726
  %1728 = vrot.lane.b32.xlu0 %v1646, 56
  %v1729 = vpop.permute.xlu0 %1728
  %1730 = vrot.lane.b32.xlu0 %v1647, 56
  %v1731 = vpop.permute.xlu0 %1730
  %1732 = vrot.lane.b32.xlu0 %v1648, 56
  %v1733 = vpop.permute.xlu0 %1732
  %1734 = vrot.lane.b32.xlu0 %v1649, 56
  %v1735 = vpop.permute.xlu0 %1734
  %1736 = vrot.lane.b32.xlu0 %v1650, 56
  %v1737 = vpop.permute.xlu0 %1736
  %1738 = vrot.lane.b32.xlu0 %v1651, 56
  %v1739 = vpop.permute.xlu0 %1738
  %1740 = vrot.lane.b32.xlu0 %v1652, 56
  %v1741 = vpop.permute.xlu0 %1740
  %1742 = vrot.lane.b32.xlu0 %v1653, 56
  %v1743 = vpop.permute.xlu0 %1742
  %1744 = vrot.lane.b32.xlu0 %v1654, 56
  %v1745 = vpop.permute.xlu0 %1744
  %1746 = vrot.lane.b32.xlu0 %v1655, 56
  %v1747 = vpop.permute.xlu0 %1746
  %1748 = vrot.lane.b32.xlu0 %v1656, 56
  %v1749 = vpop.permute.xlu0 %1748
  %1750 = vrot.lane.b32.xlu0 %v1657, 56
  %v1751 = vpop.permute.xlu0 %1750
  %1752 = vrot.lane.b32.xlu0 %v1658, 56
  %v1753 = vpop.permute.xlu0 %1752
  %1754 = vrot.lane.b32.xlu0 %v1659, 56
  %v1755 = vpop.permute.xlu0 %1754
  %1756 = vrot.lane.b32.xlu0 %v1660, 56
  %v1757 = vpop.permute.xlu0 %1756
  %1758 = vrot.lane.b32.xlu0 %v1661, 56
  %v1759 = vpop.permute.xlu0 %1758
  %1760 = vrot.lane.b32.xlu0 %v1662, 56
  %v1761 = vpop.permute.xlu0 %1760
  %1762 = vrot.lane.b32.xlu0 %v1663, 56
  %v1763 = vpop.permute.xlu0 %1762
  %1764 = vrot.lane.b32.xlu0 %v1664, 56
  %v1765 = vpop.permute.xlu0 %1764
  %1766 = vrot.lane.b32.xlu0 %v1665, 56
  %v1767 = vpop.permute.xlu0 %1766
  %1768 = vrot.lane.b32.xlu0 %v1666, 56
  %v1769 = vpop.permute.xlu0 %1768
  %1770 = vrot.lane.b32.xlu0 %v1667, 56
  %v1771 = vpop.permute.xlu0 %1770
  %1772 = vrot.lane.b32.xlu0 %v1668, 56
  %v1773 = vpop.permute.xlu0 %1772
  %1774 = vrot.lane.b32.xlu0 %v1669, 56
  %v1775 = vpop.permute.xlu0 %1774
  %1776 = vrot.lane.b32.xlu0 %v1670, 56
  %v1777 = vpop.permute.xlu0 %1776
  %1778 = vrot.lane.b32.xlu0 %v1671, 56
  %v1779 = vpop.permute.xlu0 %1778
  %1780 = vrot.lane.b32.xlu0 %v1672, 56
  %v1781 = vpop.permute.xlu0 %1780
  %1782 = vrot.lane.b32.xlu0 %v1673, 56
  %v1783 = vpop.permute.xlu0 %1782
  %1784 = vrot.lane.b32.xlu0 %v1674, 56
  %v1785 = vpop.permute.xlu0 %1784
  %1786 = vrot.lane.b32.xlu0 %v1675, 56
  %v1787 = vpop.permute.xlu0 %1786
  %1788 = vrot.lane.b32.xlu0 %v1676, 56
  %v1789 = vpop.permute.xlu0 %1788
  %1790 = vrot.lane.b32.xlu0 %v1677, 56
  %v1791 = vpop.permute.xlu0 %1790
  %1792 = vrot.lane.b32.xlu0 %v1678, 56
  %v1793 = vpop.permute.xlu0 %1792
  %1794 = vrot.lane.b32.xlu0 %v1679, 56
  %v1795 = vpop.permute.xlu0 %1794
  %1796 = vrot.lane.b32.xlu0 %v1680, 56
  %v1797 = vpop.permute.xlu0 %1796
  %1798 = vrot.lane.b32.xlu0 %v1681, 56
  %v1799 = vpop.permute.xlu0 %1798
  %1800 = vrot.lane.b32.xlu0 %v1682, 56
  %v1801 = vpop.permute.xlu0 %1800
  %1802 = vrot.lane.b32.xlu0 %v1683, 56
  %v1803 = vpop.permute.xlu0 %1802
  %1804 = vrot.lane.b32.xlu0 %v1684, 56
  %v1805 = vpop.permute.xlu0 %1804
  %1806 = vrot.lane.b32.xlu0 %v1685, 56
  %v1807 = vpop.permute.xlu0 %1806
  %1808 = vrot.lane.b32.xlu0 %v1686, 56
  %v1809 = vpop.permute.xlu0 %1808
  %1810 = vrot.lane.b32.xlu0 %v1687, 56
  %v1811 = vpop.permute.xlu0 %1810
  %1812 = vrot.lane.b32.xlu0 %v1688, 56
  %v1813 = vpop.permute.xlu0 %1812
  %1814 = vrot.lane.b32.xlu0 %v1689, 56
  %v1815 = vpop.permute.xlu0 %1814
  %1816 = vrot.lane.b32.xlu0 %v1690, 56
  %v1817 = vpop.permute.xlu0 %1816
  %1818 = vrot.lane.b32.xlu0 %v1691, 56
  %v1819 = vpop.permute.xlu0 %1818
  %v1820 = vadd.f32 %v1564, %v1693
  %v1821 = vadd.f32 %v1565, %v1695
  %v1822 = vadd.f32 %v1566, %v1697
  %v1823 = vadd.f32 %v1567, %v1699
  %v1824 = vadd.f32 %v1568, %v1701
  %v1825 = vadd.f32 %v1569, %v1703
  %v1826 = vadd.f32 %v1570, %v1705
  %v1827 = vadd.f32 %v1571, %v1707
  %v1828 = vadd.f32 %v1572, %v1709
  %v1829 = vadd.f32 %v1573, %v1711
  %v1830 = vadd.f32 %v1574, %v1713
  %v1831 = vadd.f32 %v1575, %v1715
  %v1832 = vadd.f32 %v1576, %v1717
  %v1833 = vadd.f32 %v1577, %v1719
  %v1834 = vadd.f32 %v1578, %v1721
  %v1835 = vadd.f32 %v1579, %v1723
  %v1836 = vadd.f32 %v1580, %v1725
  %v1837 = vadd.f32 %v1581, %v1727
  %v1838 = vadd.f32 %v1582, %v1729
  %v1839 = vadd.f32 %v1583, %v1731
  %v1840 = vadd.f32 %v1584, %v1733
  %v1841 = vadd.f32 %v1585, %v1735
  %v1842 = vadd.f32 %v1586, %v1737
  %v1843 = vadd.f32 %v1587, %v1739
  %v1844 = vadd.f32 %v1588, %v1741
  %v1845 = vadd.f32 %v1589, %v1743
  %v1846 = vadd.f32 %v1590, %v1745
  %v1847 = vadd.f32 %v1591, %v1747
  %v1848 = vadd.f32 %v1592, %v1749
  %v1849 = vadd.f32 %v1593, %v1751
  %v1850 = vadd.f32 %v1594, %v1753
  %v1851 = vadd.f32 %v1595, %v1755
  %v1852 = vadd.f32 %v1596, %v1757
  %v1853 = vadd.f32 %v1597, %v1759
  %v1854 = vadd.f32 %v1598, %v1761
  %v1855 = vadd.f32 %v1599, %v1763
  %v1856 = vadd.f32 %v1600, %v1765
  %v1857 = vadd.f32 %v1601, %v1767
  %v1858 = vadd.f32 %v1602, %v1769
  %v1859 = vadd.f32 %v1603, %v1771
  %v1860 = vadd.f32 %v1604, %v1773
  %v1861 = vadd.f32 %v1605, %v1775
  %v1862 = vadd.f32 %v1606, %v1777
  %v1863 = vadd.f32 %v1607, %v1779
  %v1864 = vadd.f32 %v1608, %v1781
  %v1865 = vadd.f32 %v1609, %v1783
  %v1866 = vadd.f32 %v1610, %v1785
  %v1867 = vadd.f32 %v1611, %v1787
  %v1868 = vadd.f32 %v1612, %v1789
  %v1869 = vadd.f32 %v1613, %v1791
  %v1870 = vadd.f32 %v1614, %v1793
  %v1871 = vadd.f32 %v1615, %v1795
  %v1872 = vadd.f32 %v1616, %v1797
  %v1873 = vadd.f32 %v1617, %v1799
  %v1874 = vadd.f32 %v1618, %v1801
  %v1875 = vadd.f32 %v1619, %v1803
  %v1876 = vadd.f32 %v1620, %v1805
  %v1877 = vadd.f32 %v1621, %v1807
  %v1878 = vadd.f32 %v1622, %v1809
  %v1879 = vadd.f32 %v1623, %v1811
  %v1880 = vadd.f32 %v1624, %v1813
  %v1881 = vadd.f32 %v1625, %v1815
  %v1882 = vadd.f32 %v1626, %v1817
  %v1883 = vadd.f32 %v1627, %v1819
  %v1884 = vld [vmem:[%s1371 + $0x2] sm:$0xff]
  %v1885 = vld [vmem:[%s1371 + $0xa] sm:$0xff]
  %v1886 = vld [vmem:[%s1371 + $0x1a] sm:$0xff]
  %v1887 = vld [vmem:[%s1371 + $0x22] sm:$0xff]
  %v1888 = vld [vmem:[%s1371 + $0x32] sm:$0xff]
  %v1889 = vld [vmem:[%s1371 + $0x3a] sm:$0xff]
  %v1890 = vld [vmem:[%s1371 + $0x4a] sm:$0xff]
  %v1891 = vld [vmem:[%s1371 + $0x52] sm:$0xff]
  %v1892 = vld [vmem:[%s1371 + $0x62] sm:$0xff]
  %v1893 = vld [vmem:[%s1371 + $0x6a] sm:$0xff]
  %v1894 = vld [vmem:[%s1371 + $0x7a] sm:$0xff]
  %v1895 = vld [vmem:[%s1371 + $0x82] sm:$0xff]
  %v1896 = vld [vmem:[%s1371 + $0x92] sm:$0xff]
  %v1897 = vld [vmem:[%s1371 + $0x9a] sm:$0xff]
  %v1898 = vld [vmem:[%s1371 + $0xaa] sm:$0xff]
  %v1899 = vld [vmem:[%s1371 + $0xb2] sm:$0xff]
  %v1900 = vld [vmem:[%s1371 + $0xc2] sm:$0xff]
  %v1901 = vld [vmem:[%s1371 + $0xca] sm:$0xff]
  %v1902 = vld [vmem:[%s1371 + $0xda] sm:$0xff]
  %v1903 = vld [vmem:[%s1371 + $0xe2] sm:$0xff]
  %v1904 = vld [vmem:[%s1371 + $0xf2] sm:$0xff]
  %v1905 = vld [vmem:[%s1371 + $0xfa] sm:$0xff]
  %v1906 = vld [vmem:[%s1371 + $0x10a] sm:$0xff]
  %v1907 = vld [vmem:[%s1371 + $0x112] sm:$0xff]
  %v1908 = vld [vmem:[%s1371 + $0x122] sm:$0xff]
  %v1909 = vld [vmem:[%s1371 + $0x12a] sm:$0xff]
  %v1910 = vld [vmem:[%s1371 + $0x13a] sm:$0xff]
  %v1911 = vld [vmem:[%s1371 + $0x142] sm:$0xff]
  %v1912 = vld [vmem:[%s1371 + $0x152] sm:$0xff]
  %v1913 = vld [vmem:[%s1371 + $0x15a] sm:$0xff]
  %v1914 = vld [vmem:[%s1371 + $0x16a] sm:$0xff]
  %v1915 = vld [vmem:[%s1371 + $0x172] sm:$0xff]
  %v1916 = vld [vmem:[%s1371 + $0x1b2] sm:$0xff]
  %v1917 = vld [vmem:[%s1371 + $0x1ba] sm:$0xff]
  %v1918 = vld [vmem:[%s1371 + $0x1ca] sm:$0xff]
  %v1919 = vld [vmem:[%s1371 + $0x1d2] sm:$0xff]
  %v1920 = vld [vmem:[%s1371 + $0x1e2] sm:$0xff]
  %v1921 = vld [vmem:[%s1371 + $0x1ea] sm:$0xff]
  %v1922 = vld [vmem:[%s1371 + $0x1fa] sm:$0xff]
  %v1923 = vld [vmem:[%s1371 + $0x202] sm:$0xff]
  %v1924 = vld [vmem:[%s1371 + $0x212] sm:$0xff]
  %v1925 = vld [vmem:[%s1371 + $0x21a] sm:$0xff]
  %v1926 = vld [vmem:[%s1371 + $0x22a] sm:$0xff]
  %v1927 = vld [vmem:[%s1371 + $0x232] sm:$0xff]
  %v1928 = vld [vmem:[%s1371 + $0x242] sm:$0xff]
  %v1929 = vld [vmem:[%s1371 + $0x24a] sm:$0xff]
  %v1930 = vld [vmem:[%s1371 + $0x25a] sm:$0xff]
  %v1931 = vld [vmem:[%s1371 + $0x262] sm:$0xff]
  %v1932 = vld [vmem:[%s1371 + $0x272] sm:$0xff]
  %v1933 = vld [vmem:[%s1371 + $0x27a] sm:$0xff]
  %v1934 = vld [vmem:[%s1371 + $0x28a] sm:$0xff]
  %v1935 = vld [vmem:[%s1371 + $0x292] sm:$0xff]
  %v1936 = vld [vmem:[%s1371 + $0x2a2] sm:$0xff]
  %v1937 = vld [vmem:[%s1371 + $0x2aa] sm:$0xff]
  %v1938 = vld [vmem:[%s1371 + $0x2ba] sm:$0xff]
  %v1939 = vld [vmem:[%s1371 + $0x2c2] sm:$0xff]
  %v1940 = vld [vmem:[%s1371 + $0x2d2] sm:$0xff]
  %v1941 = vld [vmem:[%s1371 + $0x2da] sm:$0xff]
  %v1942 = vld [vmem:[%s1371 + $0x2ea] sm:$0xff]
  %v1943 = vld [vmem:[%s1371 + $0x2f2] sm:$0xff]
  %v1944 = vld [vmem:[%s1371 + $0x302] sm:$0xff]
  %v1945 = vld [vmem:[%s1371 + $0x30a] sm:$0xff]
  %v1946 = vld [vmem:[%s1371 + $0x31a] sm:$0xff]
  %v1947 = vld [vmem:[%s1371 + $0x322] sm:$0xff]
  %1948 = vrot.lane.b32.xlu0 %v1884, 64
  %v1949 = vpop.permute.xlu0 %1948
  %1950 = vrot.lane.b32.xlu0 %v1885, 64
  %v1951 = vpop.permute.xlu0 %1950
  %1952 = vrot.lane.b32.xlu0 %v1886, 64
  %v1953 = vpop.permute.xlu0 %1952
  %1954 = vrot.lane.b32.xlu0 %v1887, 64
  %v1955 = vpop.permute.xlu0 %1954
  %1956 = vrot.lane.b32.xlu0 %v1888, 64
  %v1957 = vpop.permute.xlu0 %1956
  %1958 = vrot.lane.b32.xlu0 %v1889, 64
  %v1959 = vpop.permute.xlu0 %1958
  %1960 = vrot.lane.b32.xlu0 %v1890, 64
  %v1961 = vpop.permute.xlu0 %1960
  %1962 = vrot.lane.b32.xlu0 %v1891, 64
  %v1963 = vpop.permute.xlu0 %1962
  %1964 = vrot.lane.b32.xlu0 %v1892, 64
  %v1965 = vpop.permute.xlu0 %1964
  %1966 = vrot.lane.b32.xlu0 %v1893, 64
  %v1967 = vpop.permute.xlu0 %1966
  %1968 = vrot.lane.b32.xlu0 %v1894, 64
  %v1969 = vpop.permute.xlu0 %1968
  %1970 = vrot.lane.b32.xlu0 %v1895, 64
  %v1971 = vpop.permute.xlu0 %1970
  %1972 = vrot.lane.b32.xlu0 %v1896, 64
  %v1973 = vpop.permute.xlu0 %1972
  %1974 = vrot.lane.b32.xlu0 %v1897, 64
  %v1975 = vpop.permute.xlu0 %1974
  %1976 = vrot.lane.b32.xlu0 %v1898, 64
  %v1977 = vpop.permute.xlu0 %1976
  %1978 = vrot.lane.b32.xlu0 %v1899, 64
  %v1979 = vpop.permute.xlu0 %1978
  %1980 = vrot.lane.b32.xlu0 %v1900, 64
  %v1981 = vpop.permute.xlu0 %1980
  %1982 = vrot.lane.b32.xlu0 %v1901, 64
  %v1983 = vpop.permute.xlu0 %1982
  %1984 = vrot.lane.b32.xlu0 %v1902, 64
  %v1985 = vpop.permute.xlu0 %1984
  %1986 = vrot.lane.b32.xlu0 %v1903, 64
  %v1987 = vpop.permute.xlu0 %1986
  %1988 = vrot.lane.b32.xlu0 %v1904, 64
  %v1989 = vpop.permute.xlu0 %1988
  %1990 = vrot.lane.b32.xlu0 %v1905, 64
  %v1991 = vpop.permute.xlu0 %1990
  %1992 = vrot.lane.b32.xlu0 %v1906, 64
  %v1993 = vpop.permute.xlu0 %1992
  %1994 = vrot.lane.b32.xlu0 %v1907, 64
  %v1995 = vpop.permute.xlu0 %1994
  %1996 = vrot.lane.b32.xlu0 %v1908, 64
  %v1997 = vpop.permute.xlu0 %1996
  %1998 = vrot.lane.b32.xlu0 %v1909, 64
  %v1999 = vpop.permute.xlu0 %1998
  %2000 = vrot.lane.b32.xlu0 %v1910, 64
  %v2001 = vpop.permute.xlu0 %2000
  %2002 = vrot.lane.b32.xlu0 %v1911, 64
  %v2003 = vpop.permute.xlu0 %2002
  %2004 = vrot.lane.b32.xlu0 %v1912, 64
  %v2005 = vpop.permute.xlu0 %2004
  %2006 = vrot.lane.b32.xlu0 %v1913, 64
  %v2007 = vpop.permute.xlu0 %2006
  %2008 = vrot.lane.b32.xlu0 %v1914, 64
  %v2009 = vpop.permute.xlu0 %2008
  %2010 = vrot.lane.b32.xlu0 %v1915, 64
  %v2011 = vpop.permute.xlu0 %2010
  %2012 = vrot.lane.b32.xlu0 %v1916, 64
  %v2013 = vpop.permute.xlu0 %2012
  %2014 = vrot.lane.b32.xlu0 %v1917, 64
  %v2015 = vpop.permute.xlu0 %2014
  %2016 = vrot.lane.b32.xlu0 %v1918, 64
  %v2017 = vpop.permute.xlu0 %2016
  %2018 = vrot.lane.b32.xlu0 %v1919, 64
  %v2019 = vpop.permute.xlu0 %2018
  %2020 = vrot.lane.b32.xlu0 %v1920, 64
  %v2021 = vpop.permute.xlu0 %2020
  %2022 = vrot.lane.b32.xlu0 %v1921, 64
  %v2023 = vpop.permute.xlu0 %2022
  %2024 = vrot.lane.b32.xlu0 %v1922, 64
  %v2025 = vpop.permute.xlu0 %2024
  %2026 = vrot.lane.b32.xlu0 %v1923, 64
  %v2027 = vpop.permute.xlu0 %2026
  %2028 = vrot.lane.b32.xlu0 %v1924, 64
  %v2029 = vpop.permute.xlu0 %2028
  %2030 = vrot.lane.b32.xlu0 %v1925, 64
  %v2031 = vpop.permute.xlu0 %2030
  %2032 = vrot.lane.b32.xlu0 %v1926, 64
  %v2033 = vpop.permute.xlu0 %2032
  %2034 = vrot.lane.b32.xlu0 %v1927, 64
  %v2035 = vpop.permute.xlu0 %2034
  %2036 = vrot.lane.b32.xlu0 %v1928, 64
  %v2037 = vpop.permute.xlu0 %2036
  %2038 = vrot.lane.b32.xlu0 %v1929, 64
  %v2039 = vpop.permute.xlu0 %2038
  %2040 = vrot.lane.b32.xlu0 %v1930, 64
  %v2041 = vpop.permute.xlu0 %2040
  %2042 = vrot.lane.b32.xlu0 %v1931, 64
  %v2043 = vpop.permute.xlu0 %2042
  %2044 = vrot.lane.b32.xlu0 %v1932, 64
  %v2045 = vpop.permute.xlu0 %2044
  %2046 = vrot.lane.b32.xlu0 %v1933, 64
  %v2047 = vpop.permute.xlu0 %2046
  %2048 = vrot.lane.b32.xlu0 %v1934, 64
  %v2049 = vpop.permute.xlu0 %2048
  %2050 = vrot.lane.b32.xlu0 %v1935, 64
  %v2051 = vpop.permute.xlu0 %2050
  %2052 = vrot.lane.b32.xlu0 %v1936, 64
  %v2053 = vpop.permute.xlu0 %2052
  %2054 = vrot.lane.b32.xlu0 %v1937, 64
  %v2055 = vpop.permute.xlu0 %2054
  %2056 = vrot.lane.b32.xlu0 %v1938, 64
  %v2057 = vpop.permute.xlu0 %2056
  %2058 = vrot.lane.b32.xlu0 %v1939, 64
  %v2059 = vpop.permute.xlu0 %2058
  %2060 = vrot.lane.b32.xlu0 %v1940, 64
  %v2061 = vpop.permute.xlu0 %2060
  %2062 = vrot.lane.b32.xlu0 %v1941, 64
  %v2063 = vpop.permute.xlu0 %2062
  %2064 = vrot.lane.b32.xlu0 %v1942, 64
  %v2065 = vpop.permute.xlu0 %2064
  %2066 = vrot.lane.b32.xlu0 %v1943, 64
  %v2067 = vpop.permute.xlu0 %2066
  %2068 = vrot.lane.b32.xlu0 %v1944, 64
  %v2069 = vpop.permute.xlu0 %2068
  %2070 = vrot.lane.b32.xlu0 %v1945, 64
  %v2071 = vpop.permute.xlu0 %2070
  %2072 = vrot.lane.b32.xlu0 %v1946, 64
  %v2073 = vpop.permute.xlu0 %2072
  %2074 = vrot.lane.b32.xlu0 %v1947, 64
  %v2075 = vpop.permute.xlu0 %2074
  %v2076 = vadd.f32 %v1820, %v1949
  %v2077 = vadd.f32 %v1821, %v1951
  %v2078 = vadd.f32 %v1822, %v1953
  %v2079 = vadd.f32 %v1823, %v1955
  %v2080 = vadd.f32 %v1824, %v1957
  %v2081 = vadd.f32 %v1825, %v1959
  %v2082 = vadd.f32 %v1826, %v1961
  %v2083 = vadd.f32 %v1827, %v1963
  %v2084 = vadd.f32 %v1828, %v1965
  %v2085 = vadd.f32 %v1829, %v1967
  %v2086 = vadd.f32 %v1830, %v1969
  %v2087 = vadd.f32 %v1831, %v1971
  %v2088 = vadd.f32 %v1832, %v1973
  %v2089 = vadd.f32 %v1833, %v1975
  %v2090 = vadd.f32 %v1834, %v1977
  %v2091 = vadd.f32 %v1835, %v1979
  %v2092 = vadd.f32 %v1836, %v1981
  %v2093 = vadd.f32 %v1837, %v1983
  %v2094 = vadd.f32 %v1838, %v1985
  %v2095 = vadd.f32 %v1839, %v1987
  %v2096 = vadd.f32 %v1840, %v1989
  %v2097 = vadd.f32 %v1841, %v1991
  %v2098 = vadd.f32 %v1842, %v1993
  %v2099 = vadd.f32 %v1843, %v1995
  %v2100 = vadd.f32 %v1844, %v1997
  %v2101 = vadd.f32 %v1845, %v1999
  %v2102 = vadd.f32 %v1846, %v2001
  %v2103 = vadd.f32 %v1847, %v2003
  %v2104 = vadd.f32 %v1848, %v2005
  %v2105 = vadd.f32 %v1849, %v2007
  %v2106 = vadd.f32 %v1850, %v2009
  %v2107 = vadd.f32 %v1851, %v2011
  %v2108 = vadd.f32 %v1852, %v2013
  %v2109 = vadd.f32 %v1853, %v2015
  %v2110 = vadd.f32 %v1854, %v2017
  %v2111 = vadd.f32 %v1855, %v2019
  %v2112 = vadd.f32 %v1856, %v2021
  %v2113 = vadd.f32 %v1857, %v2023
  %v2114 = vadd.f32 %v1858, %v2025
  %v2115 = vadd.f32 %v1859, %v2027
  %v2116 = vadd.f32 %v1860, %v2029
  %v2117 = vadd.f32 %v1861, %v2031
  %v2118 = vadd.f32 %v1862, %v2033
  %v2119 = vadd.f32 %v1863, %v2035
  %v2120 = vadd.f32 %v1864, %v2037
  %v2121 = vadd.f32 %v1865, %v2039
  %v2122 = vadd.f32 %v1866, %v2041
  %v2123 = vadd.f32 %v1867, %v2043
  %v2124 = vadd.f32 %v1868, %v2045
  %v2125 = vadd.f32 %v1869, %v2047
  %v2126 = vadd.f32 %v1870, %v2049
  %v2127 = vadd.f32 %v1871, %v2051
  %v2128 = vadd.f32 %v1872, %v2053
  %v2129 = vadd.f32 %v1873, %v2055
  %v2130 = vadd.f32 %v1874, %v2057
  %v2131 = vadd.f32 %v1875, %v2059
  %v2132 = vadd.f32 %v1876, %v2061
  %v2133 = vadd.f32 %v1877, %v2063
  %v2134 = vadd.f32 %v1878, %v2065
  %v2135 = vadd.f32 %v1879, %v2067
  %v2136 = vadd.f32 %v1880, %v2069
  %v2137 = vadd.f32 %v1881, %v2071
  %v2138 = vadd.f32 %v1882, %v2073
  %v2139 = vadd.f32 %v1883, %v2075
  %v2140 = vld [vmem:[%s1] sm:$0xff]
  %v2141 = vld [vmem:[%s1 + $0x8] sm:$0xff]
  %v2142 = vld [vmem:[%s1 + $0x10] sm:$0xff]
  %v2143 = vld [vmem:[%s1 + $0x18] sm:$0xff]
  %v2144 = vld [vmem:[%s1 + $0x20] sm:$0xff]
  %v2145 = vld [vmem:[%s1 + $0x28] sm:$0xff]
  %v2146 = vld [vmem:[%s1 + $0x30] sm:$0xff]
  %v2147 = vld [vmem:[%s1 + $0x38] sm:$0xff]
  %v2148 = vld [vmem:[%s1 + $0x40] sm:$0xff]
  %v2149 = vld [vmem:[%s1 + $0x48] sm:$0xff]
  %v2150 = vld [vmem:[%s1 + $0x50] sm:$0xff]
  %v2151 = vld [vmem:[%s1 + $0x58] sm:$0xff]
  %v2152 = vld [vmem:[%s1 + $0x60] sm:$0xff]
  %v2153 = vld [vmem:[%s1 + $0x68] sm:$0xff]
  %v2154 = vld [vmem:[%s1 + $0x70] sm:$0xff]
  %v2155 = vld [vmem:[%s1 + $0x78] sm:$0xff]
  %2156 = vmatpush.msra.mxu0 %v2155
  %2157 = vmatpush.msra.mxu0 %v2154
  %2158 = vmatpush.msra.mxu0 %v2153
  %2159 = vmatpush.msra.mxu0 %v2152
  %2160 = vmatpush.msra.mxu0 %v2151
  %2161 = vmatpush.msra.mxu0 %v2150
  %2162 = vmatpush.msra.mxu0 %v2149
  %2163 = vmatpush.msra.mxu0 %v2148
  %2164 = vmatpush.msra.mxu0 %v2147
  %2165 = vmatpush.msra.mxu0 %v2146
  %2166 = vmatpush.msra.mxu0 %v2145
  %2167 = vmatpush.msra.mxu0 %v2144
  %2168 = vmatpush.msra.mxu0 %v2143
  %2169 = vmatpush.msra.mxu0 %v2142
  %2170 = vmatpush.msra.mxu0 %v2141
  %2171 = vmatpush.msra.mxu0 %v2140
  %2172 = vmatmul.f32.gmra.mxu0 %v2076
  %v2173 = vpop.f32.mrf.mxu0
  %v2174 = vadd.f32 0.0, %v2173
  %2175 = vmatmul.f32.gmra.mxu0 %v2077
  %v2176 = vpop.f32.mrf.mxu0
  %v2177 = vadd.f32 0.0, %v2176
  %2178 = vmatmul.f32.gmra.mxu0 %v2078
  %v2179 = vpop.f32.mrf.mxu0
  %v2180 = vadd.f32 0.0, %v2179
  %2181 = vmatmul.f32.gmra.mxu0 %v2079
  %v2182 = vpop.f32.mrf.mxu0
  %v2183 = vadd.f32 0.0, %v2182
  %2184 = vmatmul.f32.gmra.mxu0 %v2080
  %v2185 = vpop.f32.mrf.mxu0
  %v2186 = vadd.f32 0.0, %v2185
  %2187 = vmatmul.f32.gmra.mxu0 %v2081
  %v2188 = vpop.f32.mrf.mxu0
  %v2189 = vadd.f32 0.0, %v2188
  %2190 = vmatmul.f32.gmra.mxu0 %v2082
  %v2191 = vpop.f32.mrf.mxu0
  %v2192 = vadd.f32 0.0, %v2191
  %2193 = vmatmul.f32.gmra.mxu0 %v2083
  %v2194 = vpop.f32.mrf.mxu0
  %v2195 = vadd.f32 0.0, %v2194
  %2196 = vmatmul.f32.gmra.mxu0 %v2084
  %v2197 = vpop.f32.mrf.mxu0
  %v2198 = vadd.f32 0.0, %v2197
  %2199 = vmatmul.f32.gmra.mxu0 %v2085
  %v2200 = vpop.f32.mrf.mxu0
  %v2201 = vadd.f32 0.0, %v2200
  %2202 = vmatmul.f32.gmra.mxu0 %v2086
  %v2203 = vpop.f32.mrf.mxu0
  %v2204 = vadd.f32 0.0, %v2203
  %2205 = vmatmul.f32.gmra.mxu0 %v2087
  %v2206 = vpop.f32.mrf.mxu0
  %v2207 = vadd.f32 0.0, %v2206
  %2208 = vmatmul.f32.gmra.mxu0 %v2088
  %v2209 = vpop.f32.mrf.mxu0
  %v2210 = vadd.f32 0.0, %v2209
  %2211 = vmatmul.f32.gmra.mxu0 %v2089
  %v2212 = vpop.f32.mrf.mxu0
  %v2213 = vadd.f32 0.0, %v2212
  %2214 = vmatmul.f32.gmra.mxu0 %v2090
  %v2215 = vpop.f32.mrf.mxu0
  %v2216 = vadd.f32 0.0, %v2215
  %2217 = vmatmul.f32.gmra.mxu0 %v2091
  %v2218 = vpop.f32.mrf.mxu0
  %v2219 = vadd.f32 0.0, %v2218
  %2220 = vmatmul.f32.gmra.mxu0 %v2092
  %v2221 = vpop.f32.mrf.mxu0
  %v2222 = vadd.f32 0.0, %v2221
  %2223 = vmatmul.f32.gmra.mxu0 %v2093
  %v2224 = vpop.f32.mrf.mxu0
  %v2225 = vadd.f32 0.0, %v2224
  %2226 = vmatmul.f32.gmra.mxu0 %v2094
  %v2227 = vpop.f32.mrf.mxu0
  %v2228 = vadd.f32 0.0, %v2227
  %2229 = vmatmul.f32.gmra.mxu0 %v2095
  %v2230 = vpop.f32.mrf.mxu0
  %v2231 = vadd.f32 0.0, %v2230
  %2232 = vmatmul.f32.gmra.mxu0 %v2096
  %v2233 = vpop.f32.mrf.mxu0
  %v2234 = vadd.f32 0.0, %v2233
  %2235 = vmatmul.f32.gmra.mxu0 %v2097
  %v2236 = vpop.f32.mrf.mxu0
  %v2237 = vadd.f32 0.0, %v2236
  %2238 = vmatmul.f32.gmra.mxu0 %v2098
  %v2239 = vpop.f32.mrf.mxu0
  %v2240 = vadd.f32 0.0, %v2239
  %2241 = vmatmul.f32.gmra.mxu0 %v2099
  %v2242 = vpop.f32.mrf.mxu0
  %v2243 = vadd.f32 0.0, %v2242
  %2244 = vmatmul.f32.gmra.mxu0 %v2100
  %v2245 = vpop.f32.mrf.mxu0
  %v2246 = vadd.f32 0.0, %v2245
  %2247 = vmatmul.f32.gmra.mxu0 %v2101
  %v2248 = vpop.f32.mrf.mxu0
  %v2249 = vadd.f32 0.0, %v2248
  %2250 = vmatmul.f32.gmra.mxu0 %v2102
  %v2251 = vpop.f32.mrf.mxu0
  %v2252 = vadd.f32 0.0, %v2251
  %2253 = vmatmul.f32.gmra.mxu0 %v2103
  %v2254 = vpop.f32.mrf.mxu0
  %v2255 = vadd.f32 0.0, %v2254
  %2256 = vmatmul.f32.gmra.mxu0 %v2104
  %v2257 = vpop.f32.mrf.mxu0
  %v2258 = vadd.f32 0.0, %v2257
  %2259 = vmatmul.f32.gmra.mxu0 %v2105
  %v2260 = vpop.f32.mrf.mxu0
  %v2261 = vadd.f32 0.0, %v2260
  %2262 = vmatmul.f32.gmra.mxu0 %v2106
  %v2263 = vpop.f32.mrf.mxu0
  %v2264 = vadd.f32 0.0, %v2263
  %2265 = vmatmul.f32.gmra.mxu0 %v2107
  %v2266 = vpop.f32.mrf.mxu0
  %v2267 = vadd.f32 0.0, %v2266
  %2268 = vmatmul.f32.gmra.mxu0 %v2108
  %v2269 = vpop.f32.mrf.mxu0
  %v2270 = vadd.f32 0.0, %v2269
  %2271 = vmatmul.f32.gmra.mxu0 %v2109
  %v2272 = vpop.f32.mrf.mxu0
  %v2273 = vadd.f32 0.0, %v2272
  %2274 = vmatmul.f32.gmra.mxu0 %v2110
  %v2275 = vpop.f32.mrf.mxu0
  %v2276 = vadd.f32 0.0, %v2275
  %2277 = vmatmul.f32.gmra.mxu0 %v2111
  %v2278 = vpop.f32.mrf.mxu0
  %v2279 = vadd.f32 0.0, %v2278
  %2280 = vmatmul.f32.gmra.mxu0 %v2112
  %v2281 = vpop.f32.mrf.mxu0
  %v2282 = vadd.f32 0.0, %v2281
  %2283 = vmatmul.f32.gmra.mxu0 %v2113
  %v2284 = vpop.f32.mrf.mxu0
  %v2285 = vadd.f32 0.0, %v2284
  %2286 = vmatmul.f32.gmra.mxu0 %v2114
  %v2287 = vpop.f32.mrf.mxu0
  %v2288 = vadd.f32 0.0, %v2287
  %2289 = vmatmul.f32.gmra.mxu0 %v2115
  %v2290 = vpop.f32.mrf.mxu0
  %v2291 = vadd.f32 0.0, %v2290
  %2292 = vmatmul.f32.gmra.mxu0 %v2116
  %v2293 = vpop.f32.mrf.mxu0
  %v2294 = vadd.f32 0.0, %v2293
  %2295 = vmatmul.f32.gmra.mxu0 %v2117
  %v2296 = vpop.f32.mrf.mxu0
  %v2297 = vadd.f32 0.0, %v2296
  %2298 = vmatmul.f32.gmra.mxu0 %v2118
  %v2299 = vpop.f32.mrf.mxu0
  %v2300 = vadd.f32 0.0, %v2299
  %2301 = vmatmul.f32.gmra.mxu0 %v2119
  %v2302 = vpop.f32.mrf.mxu0
  %v2303 = vadd.f32 0.0, %v2302
  %2304 = vmatmul.f32.gmra.mxu0 %v2120
  %v2305 = vpop.f32.mrf.mxu0
  %v2306 = vadd.f32 0.0, %v2305
  %2307 = vmatmul.f32.gmra.mxu0 %v2121
  %v2308 = vpop.f32.mrf.mxu0
  %v2309 = vadd.f32 0.0, %v2308
  %2310 = vmatmul.f32.gmra.mxu0 %v2122
  %v2311 = vpop.f32.mrf.mxu0
  %v2312 = vadd.f32 0.0, %v2311
  %2313 = vmatmul.f32.gmra.mxu0 %v2123
  %v2314 = vpop.f32.mrf.mxu0
  %v2315 = vadd.f32 0.0, %v2314
  %2316 = vmatmul.f32.gmra.mxu0 %v2124
  %v2317 = vpop.f32.mrf.mxu0
  %v2318 = vadd.f32 0.0, %v2317
  %2319 = vmatmul.f32.gmra.mxu0 %v2125
  %v2320 = vpop.f32.mrf.mxu0
  %v2321 = vadd.f32 0.0, %v2320
  %2322 = vmatmul.f32.gmra.mxu0 %v2126
  %v2323 = vpop.f32.mrf.mxu0
  %v2324 = vadd.f32 0.0, %v2323
  %2325 = vmatmul.f32.gmra.mxu0 %v2127
  %v2326 = vpop.f32.mrf.mxu0
  %v2327 = vadd.f32 0.0, %v2326
  %2328 = vmatmul.f32.gmra.mxu0 %v2128
  %v2329 = vpop.f32.mrf.mxu0
  %v2330 = vadd.f32 0.0, %v2329
  %2331 = vmatmul.f32.gmra.mxu0 %v2129
  %v2332 = vpop.f32.mrf.mxu0
  %v2333 = vadd.f32 0.0, %v2332
  %2334 = vmatmul.f32.gmra.mxu0 %v2130
  %v2335 = vpop.f32.mrf.mxu0
  %v2336 = vadd.f32 0.0, %v2335
  %2337 = vmatmul.f32.gmra.mxu0 %v2131
  %v2338 = vpop.f32.mrf.mxu0
  %v2339 = vadd.f32 0.0, %v2338
  %2340 = vmatmul.f32.gmra.mxu0 %v2132
  %v2341 = vpop.f32.mrf.mxu0
  %v2342 = vadd.f32 0.0, %v2341
  %2343 = vmatmul.f32.gmra.mxu0 %v2133
  %v2344 = vpop.f32.mrf.mxu0
  %v2345 = vadd.f32 0.0, %v2344
  %2346 = vmatmul.f32.gmra.mxu0 %v2134
  %v2347 = vpop.f32.mrf.mxu0
  %v2348 = vadd.f32 0.0, %v2347
  %2349 = vmatmul.f32.gmra.mxu0 %v2135
  %v2350 = vpop.f32.mrf.mxu0
  %v2351 = vadd.f32 0.0, %v2350
  %2352 = vmatmul.f32.gmra.mxu0 %v2136
  %v2353 = vpop.f32.mrf.mxu0
  %v2354 = vadd.f32 0.0, %v2353
  %2355 = vmatmul.f32.gmra.mxu0 %v2137
  %v2356 = vpop.f32.mrf.mxu0
  %v2357 = vadd.f32 0.0, %v2356
  %2358 = vmatmul.f32.gmra.mxu0 %v2138
  %v2359 = vpop.f32.mrf.mxu0
  %v2360 = vadd.f32 0.0, %v2359
  %2361 = vmatmul.f32.gmra.mxu0 %v2139
  %v2362 = vpop.f32.mrf.mxu0
  %v2363 = vadd.f32 0.0, %v2362
  %2364 = vdwg.mxu0
  %v2365 = vld [vmem:[%s3] sm:$0x1]
  %v2366 = vld [vmem:[%s4] sm:$0x1]
  %v2367 = vadd.f32 %v2174, %v2177
  %v2368 = vadd.f32 %v2367, %v2180
  %v2369 = vadd.f32 %v2368, %v2183
  %v2370 = vadd.f32 %v2369, %v2186
  %v2371 = vadd.f32 %v2370, %v2189
  %v2372 = vadd.f32 %v2371, %v2192
  %v2373 = vadd.f32 %v2372, %v2195
  %v2374 = vadd.f32 %v2373, %v2198
  %v2375 = vadd.f32 %v2374, %v2201
  %v2376 = vadd.f32 %v2375, %v2204
  %v2377 = vadd.f32 %v2376, %v2207
  %v2378 = vadd.f32 %v2377, %v2210
  %v2379 = vadd.f32 %v2378, %v2213
  %v2380 = vadd.f32 %v2379, %v2216
  %v2381 = vadd.f32 %v2380, %v2219
  %v2382 = vadd.f32 %v2381, %v2222
  %v2383 = vadd.f32 %v2382, %v2225
  %v2384 = vadd.f32 %v2383, %v2228
  %v2385 = vadd.f32 %v2384, %v2231
  %v2386 = vadd.f32 %v2385, %v2234
  %v2387 = vadd.f32 %v2386, %v2237
  %v2388 = vadd.f32 %v2387, %v2240
  %v2389 = vadd.f32 %v2388, %v2243
  %v2390 = vadd.f32 %v2389, %v2246
  %v2391 = vadd.f32 %v2390, %v2249
  %v2392 = vadd.f32 %v2391, %v2252
  %v2393 = vadd.f32 %v2392, %v2255
  %v2394 = vadd.f32 %v2393, %v2258
  %v2395 = vadd.f32 %v2394, %v2261
  %v2396 = vadd.f32 %v2395, %v2264
  %v2397 = vadd.f32 %v2396, %v2267
  %v2398 = vadd.f32 %v2397, %v2270
  %v2399 = vadd.f32 %v2398, %v2273
  %v2400 = vadd.f32 %v2399, %v2276
  %v2401 = vadd.f32 %v2400, %v2279
  %v2402 = vadd.f32 %v2401, %v2282
  %v2403 = vadd.f32 %v2402, %v2285
  %v2404 = vadd.f32 %v2403, %v2288
  %v2405 = vadd.f32 %v2404, %v2291
  %v2406 = vadd.f32 %v2405, %v2294
  %v2407 = vadd.f32 %v2406, %v2297
  %v2408 = vadd.f32 %v2407, %v2300
  %v2409 = vadd.f32 %v2408, %v2303
  %v2410 = vadd.f32 %v2409, %v2306
  %v2411 = vadd.f32 %v2410, %v2309
  %v2412 = vadd.f32 %v2411, %v2312
  %v2413 = vadd.f32 %v2412, %v2315
  %v2414 = vadd.f32 %v2413, %v2318
  %v2415 = vadd.f32 %v2414, %v2321
  %v2416 = vadd.f32 %v2415, %v2324
  %v2417 = vadd.f32 %v2416, %v2327
  %v2418 = vadd.f32 %v2417, %v2330
  %v2419 = vadd.f32 %v2418, %v2333
  %v2420 = vadd.f32 %v2419, %v2336
  %v2421 = vadd.f32 %v2420, %v2339
  %v2422 = vadd.f32 %v2421, %v2342
  %v2423 = vadd.f32 %v2422, %v2345
  %v2424 = vadd.f32 %v2423, %v2348
  %v2425 = vadd.f32 %v2424, %v2351
  %v2426 = vadd.f32 %v2425, %v2354
  %v2427 = vadd.f32 %v2426, %v2357
  %v2428 = vadd.f32 %v2427, %v2360
  %v2429 = vadd.f32 %v2428, %v2363
  %v2430 = vrot.slane %v2429, 4
  %v2431 = vadd.f32 %v2429, %v2430
  %v2432 = vrot.slane %v2431, 2
  %v2433 = vadd.f32 %v2431, %v2432
  %v2434 = vrot.slane %v2433, 1
  %v2435 = vadd.f32 %v2433, %v2434
  %v2436 = vrcp.pop 512.0
  %v2437 = vmul.f32 512.0, %v2436
  %v2438 = vsub.f32 1.0, %v2437
  %v2439 = vmul.f32 %v2436, %v2438
  %v2440 = vadd.f32 %v2436, %v2439
  %vm2441 = vweird.f32 %v2436
  %v2442 = vsel %vm2441, %v2436, %v2440
  %v2443 = vmul.f32 %v2435, %v2442
  %v2444 = vsub.f32 %v2174, %v2443
  %v2445 = vsub.f32 %v2177, %v2443
  %v2446 = vsub.f32 %v2180, %v2443
  %v2447 = vsub.f32 %v2183, %v2443
  %v2448 = vsub.f32 %v2186, %v2443
  %v2449 = vsub.f32 %v2189, %v2443
  %v2450 = vsub.f32 %v2192, %v2443
  %v2451 = vsub.f32 %v2195, %v2443
  %v2452 = vsub.f32 %v2198, %v2443
  %v2453 = vsub.f32 %v2201, %v2443
  %v2454 = vsub.f32 %v2204, %v2443
  %v2455 = vsub.f32 %v2207, %v2443
  %v2456 = vsub.f32 %v2210, %v2443
  %v2457 = vsub.f32 %v2213, %v2443
  %v2458 = vsub.f32 %v2216, %v2443
  %v2459 = vsub.f32 %v2219, %v2443
  %v2460 = vsub.f32 %v2222, %v2443
  %v2461 = vsub.f32 %v2225, %v2443
  %v2462 = vsub.f32 %v2228, %v2443
  %v2463 = vsub.f32 %v2231, %v2443
  %v2464 = vsub.f32 %v2234, %v2443
  %v2465 = vsub.f32 %v2237, %v2443
  %v2466 = vsub.f32 %v2240, %v2443
  %v2467 = vsub.f32 %v2243, %v2443
  %v2468 = vsub.f32 %v2246, %v2443
  %v2469 = vsub.f32 %v2249, %v2443
  %v2470 = vsub.f32 %v2252, %v2443
  %v2471 = vsub.f32 %v2255, %v2443
  %v2472 = vsub.f32 %v2258, %v2443
  %v2473 = vsub.f32 %v2261, %v2443
  %v2474 = vsub.f32 %v2264, %v2443
  %v2475 = vsub.f32 %v2267, %v2443
  %v2476 = vsub.f32 %v2270, %v2443
  %v2477 = vsub.f32 %v2273, %v2443
  %v2478 = vsub.f32 %v2276, %v2443
  %v2479 = vsub.f32 %v2279, %v2443
  %v2480 = vsub.f32 %v2282, %v2443
  %v2481 = vsub.f32 %v2285, %v2443
  %v2482 = vsub.f32 %v2288, %v2443
  %v2483 = vsub.f32 %v2291, %v2443
  %v2484 = vsub.f32 %v2294, %v2443
  %v2485 = vsub.f32 %v2297, %v2443
  %v2486 = vsub.f32 %v2300, %v2443
  %v2487 = vsub.f32 %v2303, %v2443
  %v2488 = vsub.f32 %v2306, %v2443
  %v2489 = vsub.f32 %v2309, %v2443
  %v2490 = vsub.f32 %v2312, %v2443
  %v2491 = vsub.f32 %v2315, %v2443
  %v2492 = vsub.f32 %v2318, %v2443
  %v2493 = vsub.f32 %v2321, %v2443
  %v2494 = vsub.f32 %v2324, %v2443
  %v2495 = vsub.f32 %v2327, %v2443
  %v2496 = vsub.f32 %v2330, %v2443
  %v2497 = vsub.f32 %v2333, %v2443
  %v2498 = vsub.f32 %v2336, %v2443
  %v2499 = vsub.f32 %v2339, %v2443
  %v2500 = vsub.f32 %v2342, %v2443
  %v2501 = vsub.f32 %v2345, %v2443
  %v2502 = vsub.f32 %v2348, %v2443
  %v2503 = vsub.f32 %v2351, %v2443
  %v2504 = vsub.f32 %v2354, %v2443
  %v2505 = vsub.f32 %v2357, %v2443
  %v2506 = vsub.f32 %v2360, %v2443
  %v2507 = vsub.f32 %v2363, %v2443
  %v2508 = vmul.f32 %v2444, %v2444
  %v2509 = vmul.f32 %v2445, %v2445
  %v2510 = vmul.f32 %v2446, %v2446
  %v2511 = vmul.f32 %v2447, %v2447
  %v2512 = vmul.f32 %v2448, %v2448
  %v2513 = vmul.f32 %v2449, %v2449
  %v2514 = vmul.f32 %v2450, %v2450
  %v2515 = vmul.f32 %v2451, %v2451
  %v2516 = vmul.f32 %v2452, %v2452
  %v2517 = vmul.f32 %v2453, %v2453
  %v2518 = vmul.f32 %v2454, %v2454
  %v2519 = vmul.f32 %v2455, %v2455
  %v2520 = vmul.f32 %v2456, %v2456
  %v2521 = vmul.f32 %v2457, %v2457
  %v2522 = vmul.f32 %v2458, %v2458
  %v2523 = vmul.f32 %v2459, %v2459
  %v2524 = vmul.f32 %v2460, %v2460
  %v2525 = vmul.f32 %v2461, %v2461
  %v2526 = vmul.f32 %v2462, %v2462
  %v2527 = vmul.f32 %v2463, %v2463
  %v2528 = vmul.f32 %v2464, %v2464
  %v2529 = vmul.f32 %v2465, %v2465
  %v2530 = vmul.f32 %v2466, %v2466
  %v2531 = vmul.f32 %v2467, %v2467
  %v2532 = vmul.f32 %v2468, %v2468
  %v2533 = vmul.f32 %v2469, %v2469
  %v2534 = vmul.f32 %v2470, %v2470
  %v2535 = vmul.f32 %v2471, %v2471
  %v2536 = vmul.f32 %v2472, %v2472
  %v2537 = vmul.f32 %v2473, %v2473
  %v2538 = vmul.f32 %v2474, %v2474
  %v2539 = vmul.f32 %v2475, %v2475
  %v2540 = vmul.f32 %v2476, %v2476
  %v2541 = vmul.f32 %v2477, %v2477
  %v2542 = vmul.f32 %v2478, %v2478
  %v2543 = vmul.f32 %v2479, %v2479
  %v2544 = vmul.f32 %v2480, %v2480
  %v2545 = vmul.f32 %v2481, %v2481
  %v2546 = vmul.f32 %v2482, %v2482
  %v2547 = vmul.f32 %v2483, %v2483
  %v2548 = vmul.f32 %v2484, %v2484
  %v2549 = vmul.f32 %v2485, %v2485
  %v2550 = vmul.f32 %v2486, %v2486
  %v2551 = vmul.f32 %v2487, %v2487
  %v2552 = vmul.f32 %v2488, %v2488
  %v2553 = vmul.f32 %v2489, %v2489
  %v2554 = vmul.f32 %v2490, %v2490
  %v2555 = vmul.f32 %v2491, %v2491
  %v2556 = vmul.f32 %v2492, %v2492
  %v2557 = vmul.f32 %v2493, %v2493
  %v2558 = vmul.f32 %v2494, %v2494
  %v2559 = vmul.f32 %v2495, %v2495
  %v2560 = vmul.f32 %v2496, %v2496
  %v2561 = vmul.f32 %v2497, %v2497
  %v2562 = vmul.f32 %v2498, %v2498
  %v2563 = vmul.f32 %v2499, %v2499
  %v2564 = vmul.f32 %v2500, %v2500
  %v2565 = vmul.f32 %v2501, %v2501
  %v2566 = vmul.f32 %v2502, %v2502
  %v2567 = vmul.f32 %v2503, %v2503
  %v2568 = vmul.f32 %v2504, %v2504
  %v2569 = vmul.f32 %v2505, %v2505
  %v2570 = vmul.f32 %v2506, %v2506
  %v2571 = vmul.f32 %v2507, %v2507
  %v2572 = vadd.f32 %v2508, %v2509
  %v2573 = vadd.f32 %v2572, %v2510
  %v2574 = vadd.f32 %v2573, %v2511
  %v2575 = vadd.f32 %v2574, %v2512
  %v2576 = vadd.f32 %v2575, %v2513
  %v2577 = vadd.f32 %v2576, %v2514
  %v2578 = vadd.f32 %v2577, %v2515
  %v2579 = vadd.f32 %v2578, %v2516
  %v2580 = vadd.f32 %v2579, %v2517
  %v2581 = vadd.f32 %v2580, %v2518
  %v2582 = vadd.f32 %v2581, %v2519
  %v2583 = vadd.f32 %v2582, %v2520
  %v2584 = vadd.f32 %v2583, %v2521
  %v2585 = vadd.f32 %v2584, %v2522
  %v2586 = vadd.f32 %v2585, %v2523
  %v2587 = vadd.f32 %v2586, %v2524
  %v2588 = vadd.f32 %v2587, %v2525
  %v2589 = vadd.f32 %v2588, %v2526
  %v2590 = vadd.f32 %v2589, %v2527
  %v2591 = vadd.f32 %v2590, %v2528
  %v2592 = vadd.f32 %v2591, %v2529
  %v2593 = vadd.f32 %v2592, %v2530
  %v2594 = vadd.f32 %v2593, %v2531
  %v2595 = vadd.f32 %v2594, %v2532
  %v2596 = vadd.f32 %v2595, %v2533
  %v2597 = vadd.f32 %v2596, %v2534
  %v2598 = vadd.f32 %v2597, %v2535
  %v2599 = vadd.f32 %v2598, %v2536
  %v2600 = vadd.f32 %v2599, %v2537
  %v2601 = vadd.f32 %v2600, %v2538
  %v2602 = vadd.f32 %v2601, %v2539
  %v2603 = vadd.f32 %v2602, %v2540
  %v2604 = vadd.f32 %v2603, %v2541
  %v2605 = vadd.f32 %v2604, %v2542
  %v2606 = vadd.f32 %v2605, %v2543
  %v2607 = vadd.f32 %v2606, %v2544
  %v2608 = vadd.f32 %v2607, %v2545
  %v2609 = vadd.f32 %v2608, %v2546
  %v2610 = vadd.f32 %v2609, %v2547
  %v2611 = vadd.f32 %v2610, %v2548
  %v2612 = vadd.f32 %v2611, %v2549
  %v2613 = vadd.f32 %v2612, %v2550
  %v2614 = vadd.f32 %v2613, %v2551
  %v2615 = vadd.f32 %v2614, %v2552
  %v2616 = vadd.f32 %v2615, %v2553
  %v2617 = vadd.f32 %v2616, %v2554
  %v2618 = vadd.f32 %v2617, %v2555
  %v2619 = vadd.f32 %v2618, %v2556
  %v2620 = vadd.f32 %v2619, %v2557
  %v2621 = vadd.f32 %v2620, %v2558
  %v2622 = vadd.f32 %v2621, %v2559
  %v2623 = vadd.f32 %v2622, %v2560
  %v2624 = vadd.f32 %v2623, %v2561
  %v2625 = vadd.f32 %v2624, %v2562
  %v2626 = vadd.f32 %v2625, %v2563
  %v2627 = vadd.f32 %v2626, %v2564
  %v2628 = vadd.f32 %v2627, %v2565
  %v2629 = vadd.f32 %v2628, %v2566
  %v2630 = vadd.f32 %v2629, %v2567
  %v2631 = vadd.f32 %v2630, %v2568
  %v2632 = vadd.f32 %v2631, %v2569
  %v2633 = vadd.f32 %v2632, %v2570
  %v2634 = vadd.f32 %v2633, %v2571
  %v2635 = vrot.slane %v2634, 4
  %v2636 = vadd.f32 %v2634, %v2635
  %v2637 = vrot.slane %v2636, 2
  %v2638 = vadd.f32 %v2636, %v2637
  %v2639 = vrot.slane %v2638, 1
  %v2640 = vadd.f32 %v2638, %v2639
  %v2641 = vmul.f32 %v2640, %v2442
  %v2642 = vadd.f32 %v2641, 1e-05
  %v2643 = vrsqrt.pop %v2642
  %v2644 = vmul.f32 %v2643, %v2642
  %v2645 = vmul.f32 %v2644, %v2643
  %v2646 = vmul.f32 0.5, %v2645
  %v2647 = vsub.f32 1.5, %v2646
  %v2648 = vmul.f32 %v2643, %v2647
  %vm2649 = vweird.f32 %v2642
  %vm2650 = vweird.f32 %v2643
  %vm2651 = vmor %vm2649, %vm2650
  %v2652 = vsel %vm2651, %v2643, %v2648
  %v2653 = vmul.f32 %v2444, %v2652
  %v2654 = vmul.f32 %v2445, %v2652
  %v2655 = vmul.f32 %v2446, %v2652
  %v2656 = vmul.f32 %v2447, %v2652
  %v2657 = vmul.f32 %v2448, %v2652
  %v2658 = vmul.f32 %v2449, %v2652
  %v2659 = vmul.f32 %v2450, %v2652
  %v2660 = vmul.f32 %v2451, %v2652
  %v2661 = vmul.f32 %v2452, %v2652
  %v2662 = vmul.f32 %v2453, %v2652
  %v2663 = vmul.f32 %v2454, %v2652
  %v2664 = vmul.f32 %v2455, %v2652
  %v2665 = vmul.f32 %v2456, %v2652
  %v2666 = vmul.f32 %v2457, %v2652
  %v2667 = vmul.f32 %v2458, %v2652
  %v2668 = vmul.f32 %v2459, %v2652
  %v2669 = vmul.f32 %v2460, %v2652
  %v2670 = vmul.f32 %v2461, %v2652
  %v2671 = vmul.f32 %v2462, %v2652
  %v2672 = vmul.f32 %v2463, %v2652
  %v2673 = vmul.f32 %v2464, %v2652
  %v2674 = vmul.f32 %v2465, %v2652
  %v2675 = vmul.f32 %v2466, %v2652
  %v2676 = vmul.f32 %v2467, %v2652
  %v2677 = vmul.f32 %v2468, %v2652
  %v2678 = vmul.f32 %v2469, %v2652
  %v2679 = vmul.f32 %v2470, %v2652
  %v2680 = vmul.f32 %v2471, %v2652
  %v2681 = vmul.f32 %v2472, %v2652
  %v2682 = vmul.f32 %v2473, %v2652
  %v2683 = vmul.f32 %v2474, %v2652
  %v2684 = vmul.f32 %v2475, %v2652
  %v2685 = vmul.f32 %v2476, %v2652
  %v2686 = vmul.f32 %v2477, %v2652
  %v2687 = vmul.f32 %v2478, %v2652
  %v2688 = vmul.f32 %v2479, %v2652
  %v2689 = vmul.f32 %v2480, %v2652
  %v2690 = vmul.f32 %v2481, %v2652
  %v2691 = vmul.f32 %v2482, %v2652
  %v2692 = vmul.f32 %v2483, %v2652
  %v2693 = vmul.f32 %v2484, %v2652
  %v2694 = vmul.f32 %v2485, %v2652
  %v2695 = vmul.f32 %v2486, %v2652
  %v2696 = vmul.f32 %v2487, %v2652
  %v2697 = vmul.f32 %v2488, %v2652
  %v2698 = vmul.f32 %v2489, %v2652
  %v2699 = vmul.f32 %v2490, %v2652
  %v2700 = vmul.f32 %v2491, %v2652
  %v2701 = vmul.f32 %v2492, %v2652
  %v2702 = vmul.f32 %v2493, %v2652
  %v2703 = vmul.f32 %v2494, %v2652
  %v2704 = vmul.f32 %v2495, %v2652
  %v2705 = vmul.f32 %v2496, %v2652
  %v2706 = vmul.f32 %v2497, %v2652
  %v2707 = vmul.f32 %v2498, %v2652
  %v2708 = vmul.f32 %v2499, %v2652
  %v2709 = vmul.f32 %v2500, %v2652
  %v2710 = vmul.f32 %v2501, %v2652
  %v2711 = vmul.f32 %v2502, %v2652
  %v2712 = vmul.f32 %v2503, %v2652
  %v2713 = vmul.f32 %v2504, %v2652
  %v2714 = vmul.f32 %v2505, %v2652
  %v2715 = vmul.f32 %v2506, %v2652
  %v2716 = vmul.f32 %v2507, %v2652
  %v2718 = vperm.slane %v2365, 0
  %v2720 = vmul.f32 %v2653, %v2718
  %v2721 = vmul.f32 %v2654, %v2718
  %v2722 = vmul.f32 %v2655, %v2718
  %v2723 = vmul.f32 %v2656, %v2718
  %v2724 = vmul.f32 %v2657, %v2718
  %v2725 = vmul.f32 %v2658, %v2718
  %v2726 = vmul.f32 %v2659, %v2718
  %v2727 = vmul.f32 %v2660, %v2718
  %v2728 = vmul.f32 %v2661, %v2718
  %v2729 = vmul.f32 %v2662, %v2718
  %v2730 = vmul.f32 %v2663, %v2718
  %v2731 = vmul.f32 %v2664, %v2718
  %v2732 = vmul.f32 %v2665, %v2718
  %v2733 = vmul.f32 %v2666, %v2718
  %v2734 = vmul.f32 %v2667, %v2718
  %v2735 = vmul.f32 %v2668, %v2718
  %v2736 = vmul.f32 %v2669, %v2718
  %v2737 = vmul.f32 %v2670, %v2718
  %v2738 = vmul.f32 %v2671, %v2718
  %v2739 = vmul.f32 %v2672, %v2718
  %v2740 = vmul.f32 %v2673, %v2718
  %v2741 = vmul.f32 %v2674, %v2718
  %v2742 = vmul.f32 %v2675, %v2718
  %v2743 = vmul.f32 %v2676, %v2718
  %v2744 = vmul.f32 %v2677, %v2718
  %v2745 = vmul.f32 %v2678, %v2718
  %v2746 = vmul.f32 %v2679, %v2718
  %v2747 = vmul.f32 %v2680, %v2718
  %v2748 = vmul.f32 %v2681, %v2718
  %v2749 = vmul.f32 %v2682, %v2718
  %v2750 = vmul.f32 %v2683, %v2718
  %v2751 = vmul.f32 %v2684, %v2718
  %v2752 = vmul.f32 %v2685, %v2718
  %v2753 = vmul.f32 %v2686, %v2718
  %v2754 = vmul.f32 %v2687, %v2718
  %v2755 = vmul.f32 %v2688, %v2718
  %v2756 = vmul.f32 %v2689, %v2718
  %v2757 = vmul.f32 %v2690, %v2718
  %v2758 = vmul.f32 %v2691, %v2718
  %v2759 = vmul.f32 %v2692, %v2718
  %v2760 = vmul.f32 %v2693, %v2718
  %v2761 = vmul.f32 %v2694, %v2718
  %v2762 = vmul.f32 %v2695, %v2718
  %v2763 = vmul.f32 %v2696, %v2718
  %v2764 = vmul.f32 %v2697, %v2718
  %v2765 = vmul.f32 %v2698, %v2718
  %v2766 = vmul.f32 %v2699, %v2718
  %v2767 = vmul.f32 %v2700, %v2718
  %v2768 = vmul.f32 %v2701, %v2718
  %v2769 = vmul.f32 %v2702, %v2718
  %v2770 = vmul.f32 %v2703, %v2718
  %v2771 = vmul.f32 %v2704, %v2718
  %v2772 = vmul.f32 %v2705, %v2718
  %v2773 = vmul.f32 %v2706, %v2718
  %v2774 = vmul.f32 %v2707, %v2718
  %v2775 = vmul.f32 %v2708, %v2718
  %v2776 = vmul.f32 %v2709, %v2718
  %v2777 = vmul.f32 %v2710, %v2718
  %v2778 = vmul.f32 %v2711, %v2718
  %v2779 = vmul.f32 %v2712, %v2718
  %v2780 = vmul.f32 %v2713, %v2718
  %v2781 = vmul.f32 %v2714, %v2718
  %v2782 = vmul.f32 %v2715, %v2718
  %v2783 = vmul.f32 %v2716, %v2718
  %v2785 = vperm.slane %v2366, 0
  %v2787 = vadd.f32 %v2720, %v2785
  %v2788 = vadd.f32 %v2721, %v2785
  %v2789 = vadd.f32 %v2722, %v2785
  %v2790 = vadd.f32 %v2723, %v2785
  %v2791 = vadd.f32 %v2724, %v2785
  %v2792 = vadd.f32 %v2725, %v2785
  %v2793 = vadd.f32 %v2726, %v2785
  %v2794 = vadd.f32 %v2727, %v2785
  %v2795 = vadd.f32 %v2728, %v2785
  %v2796 = vadd.f32 %v2729, %v2785
  %v2797 = vadd.f32 %v2730, %v2785
  %v2798 = vadd.f32 %v2731, %v2785
  %v2799 = vadd.f32 %v2732, %v2785
  %v2800 = vadd.f32 %v2733, %v2785
  %v2801 = vadd.f32 %v2734, %v2785
  %v2802 = vadd.f32 %v2735, %v2785
  %v2803 = vadd.f32 %v2736, %v2785
  %v2804 = vadd.f32 %v2737, %v2785
  %v2805 = vadd.f32 %v2738, %v2785
  %v2806 = vadd.f32 %v2739, %v2785
  %v2807 = vadd.f32 %v2740, %v2785
  %v2808 = vadd.f32 %v2741, %v2785
  %v2809 = vadd.f32 %v2742, %v2785
  %v2810 = vadd.f32 %v2743, %v2785
  %v2811 = vadd.f32 %v2744, %v2785
  %v2812 = vadd.f32 %v2745, %v2785
  %v2813 = vadd.f32 %v2746, %v2785
  %v2814 = vadd.f32 %v2747, %v2785
  %v2815 = vadd.f32 %v2748, %v2785
  %v2816 = vadd.f32 %v2749, %v2785
  %v2817 = vadd.f32 %v2750, %v2785
  %v2818 = vadd.f32 %v2751, %v2785
  %v2819 = vadd.f32 %v2752, %v2785
  %v2820 = vadd.f32 %v2753, %v2785
  %v2821 = vadd.f32 %v2754, %v2785
  %v2822 = vadd.f32 %v2755, %v2785
  %v2823 = vadd.f32 %v2756, %v2785
  %v2824 = vadd.f32 %v2757, %v2785
  %v2825 = vadd.f32 %v2758, %v2785
  %v2826 = vadd.f32 %v2759, %v2785
  %v2827 = vadd.f32 %v2760, %v2785
  %v2828 = vadd.f32 %v2761, %v2785
  %v2829 = vadd.f32 %v2762, %v2785
  %v2830 = vadd.f32 %v2763, %v2785
  %v2831 = vadd.f32 %v2764, %v2785
  %v2832 = vadd.f32 %v2765, %v2785
  %v2833 = vadd.f32 %v2766, %v2785
  %v2834 = vadd.f32 %v2767, %v2785
  %v2835 = vadd.f32 %v2768, %v2785
  %v2836 = vadd.f32 %v2769, %v2785
  %v2837 = vadd.f32 %v2770, %v2785
  %v2838 = vadd.f32 %v2771, %v2785
  %v2839 = vadd.f32 %v2772, %v2785
  %v2840 = vadd.f32 %v2773, %v2785
  %v2841 = vadd.f32 %v2774, %v2785
  %v2842 = vadd.f32 %v2775, %v2785
  %v2843 = vadd.f32 %v2776, %v2785
  %v2844 = vadd.f32 %v2777, %v2785
  %v2845 = vadd.f32 %v2778, %v2785
  %v2846 = vadd.f32 %v2779, %v2785
  %v2847 = vadd.f32 %v2780, %v2785
  %v2848 = vadd.f32 %v2781, %v2785
  %v2849 = vadd.f32 %v2782, %v2785
  %v2850 = vadd.f32 %v2783, %v2785
  %v2851 = vmax.f32 %v2787, 0.0
  %v2852 = vmax.f32 %v2788, 0.0
  %v2853 = vmax.f32 %v2789, 0.0
  %v2854 = vmax.f32 %v2790, 0.0
  %v2855 = vmax.f32 %v2791, 0.0
  %v2856 = vmax.f32 %v2792, 0.0
  %v2857 = vmax.f32 %v2793, 0.0
  %v2858 = vmax.f32 %v2794, 0.0
  %v2859 = vmax.f32 %v2795, 0.0
  %v2860 = vmax.f32 %v2796, 0.0
  %v2861 = vmax.f32 %v2797, 0.0
  %v2862 = vmax.f32 %v2798, 0.0
  %v2863 = vmax.f32 %v2799, 0.0
  %v2864 = vmax.f32 %v2800, 0.0
  %v2865 = vmax.f32 %v2801, 0.0
  %v2866 = vmax.f32 %v2802, 0.0
  %v2867 = vmax.f32 %v2803, 0.0
  %v2868 = vmax.f32 %v2804, 0.0
  %v2869 = vmax.f32 %v2805, 0.0
  %v2870 = vmax.f32 %v2806, 0.0
  %v2871 = vmax.f32 %v2807, 0.0
  %v2872 = vmax.f32 %v2808, 0.0
  %v2873 = vmax.f32 %v2809, 0.0
  %v2874 = vmax.f32 %v2810, 0.0
  %v2875 = vmax.f32 %v2811, 0.0
  %v2876 = vmax.f32 %v2812, 0.0
  %v2877 = vmax.f32 %v2813, 0.0
  %v2878 = vmax.f32 %v2814, 0.0
  %v2879 = vmax.f32 %v2815, 0.0
  %v2880 = vmax.f32 %v2816, 0.0
  %v2881 = vmax.f32 %v2817, 0.0
  %v2882 = vmax.f32 %v2818, 0.0
  %v2883 = vmax.f32 %v2819, 0.0
  %v2884 = vmax.f32 %v2820, 0.0
  %v2885 = vmax.f32 %v2821, 0.0
  %v2886 = vmax.f32 %v2822, 0.0
  %v2887 = vmax.f32 %v2823, 0.0
  %v2888 = vmax.f32 %v2824, 0.0
  %v2889 = vmax.f32 %v2825, 0.0
  %v2890 = vmax.f32 %v2826, 0.0
  %v2891 = vmax.f32 %v2827, 0.0
  %v2892 = vmax.f32 %v2828, 0.0
  %v2893 = vmax.f32 %v2829, 0.0
  %v2894 = vmax.f32 %v2830, 0.0
  %v2895 = vmax.f32 %v2831, 0.0
  %v2896 = vmax.f32 %v2832, 0.0
  %v2897 = vmax.f32 %v2833, 0.0
  %v2898 = vmax.f32 %v2834, 0.0
  %v2899 = vmax.f32 %v2835, 0.0
  %v2900 = vmax.f32 %v2836, 0.0
  %v2901 = vmax.f32 %v2837, 0.0
  %v2902 = vmax.f32 %v2838, 0.0
  %v2903 = vmax.f32 %v2839, 0.0
  %v2904 = vmax.f32 %v2840, 0.0
  %v2905 = vmax.f32 %v2841, 0.0
  %v2906 = vmax.f32 %v2842, 0.0
  %v2907 = vmax.f32 %v2843, 0.0
  %v2908 = vmax.f32 %v2844, 0.0
  %v2909 = vmax.f32 %v2845, 0.0
  %v2910 = vmax.f32 %v2846, 0.0
  %v2911 = vmax.f32 %v2847, 0.0
  %v2912 = vmax.f32 %v2848, 0.0
  %v2913 = vmax.f32 %v2849, 0.0
  %v2914 = vmax.f32 %v2850, 0.0
  %2915 = vst [vmem:[#allocation2] sm:$0xff] 0.0
  %2916 = vst [vmem:[#allocation2 + $0x8] sm:$0xff] 0.0
  %2917 = vst [vmem:[#allocation2 + $0x10] sm:$0x3] 0.0
  %2918 = vst [vmem:[#allocation2 + $0x1b0] sm:$0xff] 0.0
  %2919 = vst [vmem:[#allocation2 + $0x1b8] sm:$0xff] 0.0
  %2920 = vst [vmem:[#allocation2 + $0x1c0] sm:$0x3] 0.0
  %s2921 = scalar_lea.vmem [#allocation2], 408
  %2922 = vst [vmem:[%s2921] sm:$0xff] 0.0
  %2923 = vst [vmem:[%s2921 + $0x8] sm:$0xff] 0.0
  %2924 = vst [vmem:[%s2921 + $0x10] sm:$0x3] 0.0
  %2925 = vst [vmem:[%s2921 + $0x1b0] sm:$0xff] 0.0
  %2926 = vst [vmem:[%s2921 + $0x1b8] sm:$0xff] 0.0
  %2927 = vst [vmem:[%s2921 + $0x1c0] sm:$0x3] 0.0
  %2928 = vst [vmem:[#allocation2] sm:$0x1] 0.0
  %2929 = vst [vmem:[#allocation2 + $0x18] sm:$0x1] 0.0
  %2930 = vst [vmem:[#allocation2 + $0x30] sm:$0x1] 0.0
  %2931 = vst [vmem:[#allocation2 + $0x48] sm:$0x1] 0.0
  %2932 = vst [vmem:[#allocation2 + $0x60] sm:$0x1] 0.0
  %2933 = vst [vmem:[#allocation2 + $0x78] sm:$0x1] 0.0
  %2934 = vst [vmem:[#allocation2 + $0x90] sm:$0x1] 0.0
  %2935 = vst [vmem:[#allocation2 + $0xa8] sm:$0x1] 0.0
  %2936 = vst [vmem:[#allocation2 + $0xc0] sm:$0x1] 0.0
  %2937 = vst [vmem:[#allocation2 + $0xd8] sm:$0x1] 0.0
  %2938 = vst [vmem:[#allocation2 + $0xf0] sm:$0x1] 0.0
  %2939 = vst [vmem:[#allocation2 + $0x108] sm:$0x1] 0.0
  %2940 = vst [vmem:[#allocation2 + $0x120] sm:$0x1] 0.0
  %2941 = vst [vmem:[#allocation2 + $0x138] sm:$0x1] 0.0
  %2942 = vst [vmem:[#allocation2 + $0x150] sm:$0x1] 0.0
  %2943 = vst [vmem:[#allocation2 + $0x168] sm:$0x1] 0.0
  %2944 = vst [vmem:[#allocation2 + $0x180] sm:$0x1] 0.0
  %2945 = vst [vmem:[#allocation2 + $0x198] sm:$0x1] 0.0
  %2946 = vst [vmem:[#allocation2 + $0x1b0] sm:$0x1] 0.0
  %2947 = vst [vmem:[#allocation2 + $0x1c8] sm:$0x1] 0.0
  %2948 = vst [vmem:[#allocation2 + $0x1e0] sm:$0x1] 0.0
  %2949 = vst [vmem:[#allocation2 + $0x1f8] sm:$0x1] 0.0
  %2950 = vst [vmem:[#allocation2 + $0x210] sm:$0x1] 0.0
  %2951 = vst [vmem:[#allocation2 + $0x228] sm:$0x1] 0.0
  %2952 = vst [vmem:[#allocation2 + $0x240] sm:$0x1] 0.0
  %2953 = vst [vmem:[#allocation2 + $0x258] sm:$0x1] 0.0
  %2954 = vst [vmem:[#allocation2 + $0x270] sm:$0x1] 0.0
  %2955 = vst [vmem:[#allocation2 + $0x288] sm:$0x1] 0.0
  %2956 = vst [vmem:[#allocation2 + $0x2a0] sm:$0x1] 0.0
  %2957 = vst [vmem:[#allocation2 + $0x2b8] sm:$0x1] 0.0
  %2958 = vst [vmem:[#allocation2 + $0x2d0] sm:$0x1] 0.0
  %2959 = vst [vmem:[#allocation2 + $0x2e8] sm:$0x1] 0.0
  %2960 = vst [vmem:[#allocation2 + $0x300] sm:$0x1] 0.0
  %2961 = vst [vmem:[#allocation2 + $0x318] sm:$0x1] 0.0
  %2962 = vst [vmem:[#allocation2 + $0x330] sm:$0x1] 0.0
  %2963 = vst [vmem:[#allocation2 + $0x348] sm:$0x1] 0.0
  %2964 = vst [vmem:[#allocation2 + $0x11] sm:$0x1] 0.0
  %2965 = vst [vmem:[#allocation2 + $0x29] sm:$0x1] 0.0
  %2966 = vst [vmem:[#allocation2 + $0x41] sm:$0x1] 0.0
  %2967 = vst [vmem:[#allocation2 + $0x59] sm:$0x1] 0.0
  %2968 = vst [vmem:[#allocation2 + $0x71] sm:$0x1] 0.0
  %2969 = vst [vmem:[#allocation2 + $0x89] sm:$0x1] 0.0
  %2970 = vst [vmem:[#allocation2 + $0xa1] sm:$0x1] 0.0
  %2971 = vst [vmem:[#allocation2 + $0xb9] sm:$0x1] 0.0
  %2972 = vst [vmem:[#allocation2 + $0xd1] sm:$0x1] 0.0
  %2973 = vst [vmem:[#allocation2 + $0xe9] sm:$0x1] 0.0
  %2974 = vst [vmem:[#allocation2 + $0x101] sm:$0x1] 0.0
  %2975 = vst [vmem:[#allocation2 + $0x119] sm:$0x1] 0.0
  %2976 = vst [vmem:[#allocation2 + $0x131] sm:$0x1] 0.0
  %2977 = vst [vmem:[#allocation2 + $0x149] sm:$0x1] 0.0
  %2978 = vst [vmem:[#allocation2 + $0x161] sm:$0x1] 0.0
  %2979 = vst [vmem:[#allocation2 + $0x179] sm:$0x1] 0.0
  %2980 = vst [vmem:[#allocation2 + $0x191] sm:$0x1] 0.0
  %2981 = vst [vmem:[#allocation2 + $0x1a9] sm:$0x1] 0.0
  %2982 = vst [vmem:[#allocation2 + $0x1c1] sm:$0x1] 0.0
  %2983 = vst [vmem:[#allocation2 + $0x1d9] sm:$0x1] 0.0
  %2984 = vst [vmem:[#allocation2 + $0x1f1] sm:$0x1] 0.0
  %2985 = vst [vmem:[#allocation2 + $0x209] sm:$0x1] 0.0
  %2986 = vst [vmem:[#allocation2 + $0x221] sm:$0x1] 0.0
  %2987 = vst [vmem:[#allocation2 + $0x239] sm:$0x1] 0.0
  %2988 = vst [vmem:[#allocation2 + $0x251] sm:$0x1] 0.0
  %2989 = vst [vmem:[#allocation2 + $0x269] sm:$0x1] 0.0
  %2990 = vst [vmem:[#allocation2 + $0x281] sm:$0x1] 0.0
  %2991 = vst [vmem:[#allocation2 + $0x299] sm:$0x1] 0.0
  %2992 = vst [vmem:[#allocation2 + $0x2b1] sm:$0x1] 0.0
  %2993 = vst [vmem:[#allocation2 + $0x2c9] sm:$0x1] 0.0
  %2994 = vst [vmem:[#allocation2 + $0x2e1] sm:$0x1] 0.0
  %2995 = vst [vmem:[#allocation2 + $0x2f9] sm:$0x1] 0.0
  %2996 = vst [vmem:[#allocation2 + $0x311] sm:$0x1] 0.0
  %2997 = vst [vmem:[#allocation2 + $0x329] sm:$0x1] 0.0
  %2998 = vst [vmem:[#allocation2 + $0x341] sm:$0x1] 0.0
  %2999 = vst [vmem:[#allocation2 + $0x359] sm:$0x1] 0.0
  %s3000 = scalar_lea.vmem [#allocation2], 24
  %3001 = vst [vmem:[%s3000 + $0x1] sm:$0xff] %v2851
  %3002 = vst [vmem:[%s3000 + $0x9] sm:$0xff] %v2852
  %3003 = vst [vmem:[%s3000 + $0x19] sm:$0xff] %v2853
  %3004 = vst [vmem:[%s3000 + $0x21] sm:$0xff] %v2854
  %3005 = vst [vmem:[%s3000 + $0x31] sm:$0xff] %v2855
  %3006 = vst [vmem:[%s3000 + $0x39] sm:$0xff] %v2856
  %3007 = vst [vmem:[%s3000 + $0x49] sm:$0xff] %v2857
  %3008 = vst [vmem:[%s3000 + $0x51] sm:$0xff] %v2858
  %3009 = vst [vmem:[%s3000 + $0x61] sm:$0xff] %v2859
  %3010 = vst [vmem:[%s3000 + $0x69] sm:$0xff] %v2860
  %3011 = vst [vmem:[%s3000 + $0x79] sm:$0xff] %v2861
  %3012 = vst [vmem:[%s3000 + $0x81] sm:$0xff] %v2862
  %3013 = vst [vmem:[%s3000 + $0x91] sm:$0xff] %v2863
  %3014 = vst [vmem:[%s3000 + $0x99] sm:$0xff] %v2864
  %3015 = vst [vmem:[%s3000 + $0xa9] sm:$0xff] %v2865
  %3016 = vst [vmem:[%s3000 + $0xb1] sm:$0xff] %v2866
  %3017 = vst [vmem:[%s3000 + $0xc1] sm:$0xff] %v2867
  %3018 = vst [vmem:[%s3000 + $0xc9] sm:$0xff] %v2868
  %3019 = vst [vmem:[%s3000 + $0xd9] sm:$0xff] %v2869
  %3020 = vst [vmem:[%s3000 + $0xe1] sm:$0xff] %v2870
  %3021 = vst [vmem:[%s3000 + $0xf1] sm:$0xff] %v2871
  %3022 = vst [vmem:[%s3000 + $0xf9] sm:$0xff] %v2872
  %3023 = vst [vmem:[%s3000 + $0x109] sm:$0xff] %v2873
  %3024 = vst [vmem:[%s3000 + $0x111] sm:$0xff] %v2874
  %3025 = vst [vmem:[%s3000 + $0x121] sm:$0xff] %v2875
  %3026 = vst [vmem:[%s3000 + $0x129] sm:$0xff] %v2876
  %3027 = vst [vmem:[%s3000 + $0x139] sm:$0xff] %v2877
  %3028 = vst [vmem:[%s3000 + $0x141] sm:$0xff] %v2878
  %3029 = vst [vmem:[%s3000 + $0x151] sm:$0xff] %v2879
  %3030 = vst [vmem:[%s3000 + $0x159] sm:$0xff] %v2880
  %3031 = vst [vmem:[%s3000 + $0x169] sm:$0xff] %v2881
  %3032 = vst [vmem:[%s3000 + $0x171] sm:$0xff] %v2882
  %3033 = vst [vmem:[%s3000 + $0x1b1] sm:$0xff] %v2883
  %3034 = vst [vmem:[%s3000 + $0x1b9] sm:$0xff] %v2884
  %3035 = vst [vmem:[%s3000 + $0x1c9] sm:$0xff] %v2885
  %3036 = vst [vmem:[%s3000 + $0x1d1] sm:$0xff] %v2886
  %3037 = vst [vmem:[%s3000 + $0x1e1] sm:$0xff] %v2887
  %3038 = vst [vmem:[%s3000 + $0x1e9] sm:$0xff] %v2888
  %3039 = vst [vmem:[%s3000 + $0x1f9] sm:$0xff] %v2889
  %3040 = vst [vmem:[%s3000 + $0x201] sm:$0xff] %v2890
  %3041 = vst [vmem:[%s3000 + $0x211] sm:$0xff] %v2891
  %3042 = vst [vmem:[%s3000 + $0x219] sm:$0xff] %v2892
  %3043 = vst [vmem:[%s3000 + $0x229] sm:$0xff] %v2893
  %3044 = vst [vmem:[%s3000 + $0x231] sm:$0xff] %v2894
  %3045 = vst [vmem:[%s3000 + $0x241] sm:$0xff] %v2895
  %3046 = vst [vmem:[%s3000 + $0x249] sm:$0xff] %v2896
  %3047 = vst [vmem:[%s3000 + $0x259] sm:$0xff] %v2897
  %3048 = vst [vmem:[%s3000 + $0x261] sm:$0xff] %v2898
  %3049 = vst [vmem:[%s3000 + $0x271] sm:$0xff] %v2899
  %3050 = vst [vmem:[%s3000 + $0x279] sm:$0xff] %v2900
  %3051 = vst [vmem:[%s3000 + $0x289] sm:$0xff] %v2901
  %3052 = vst [vmem:[%s3000 + $0x291] sm:$0xff] %v2902
  %3053 = vst [vmem:[%s3000 + $0x2a1] sm:$0xff] %v2903
  %3054 = vst [vmem:[%s3000 + $0x2a9] sm:$0xff] %v2904
  %3055 = vst [vmem:[%s3000 + $0x2b9] sm:$0xff] %v2905
  %3056 = vst [vmem:[%s3000 + $0x2c1] sm:$0xff] %v2906
  %3057 = vst [vmem:[%s3000 + $0x2d1] sm:$0xff] %v2907
  %3058 = vst [vmem:[%s3000 + $0x2d9] sm:$0xff] %v2908
  %3059 = vst [vmem:[%s3000 + $0x2e9] sm:$0xff] %v2909
  %3060 = vst [vmem:[%s3000 + $0x2f1] sm:$0xff] %v2910
  %3061 = vst [vmem:[%s3000 + $0x301] sm:$0xff] %v2911
  %3062 = vst [vmem:[%s3000 + $0x309] sm:$0xff] %v2912
  %3063 = vst [vmem:[%s3000 + $0x319] sm:$0xff] %v2913
  %3064 = vst [vmem:[%s3000 + $0x321] sm:$0xff] %v2914
  %v3065 = vld [vmem:[#allocation2] sm:$0xff]
  %v3066 = vld [vmem:[#allocation2 + $0x8] sm:$0xff]
  %v3067 = vld [vmem:[#allocation2 + $0x18] sm:$0xff]
  %v3068 = vld [vmem:[#allocation2 + $0x20] sm:$0xff]
  %v3069 = vld [vmem:[#allocation2 + $0x30] sm:$0xff]
  %v3070 = vld [vmem:[#allocation2 + $0x38] sm:$0xff]
  %v3071 = vld [vmem:[#allocation2 + $0x48] sm:$0xff]
  %v3072 = vld [vmem:[#allocation2 + $0x50] sm:$0xff]
  %v3073 = vld [vmem:[#allocation2 + $0x60] sm:$0xff]
  %v3074 = vld [vmem:[#allocation2 + $0x68] sm:$0xff]
  %v3075 = vld [vmem:[#allocation2 + $0x78] sm:$0xff]
  %v3076 = vld [vmem:[#allocation2 + $0x80] sm:$0xff]
  %v3077 = vld [vmem:[#allocation2 + $0x90] sm:$0xff]
  %v3078 = vld [vmem:[#allocation2 + $0x98] sm:$0xff]
  %v3079 = vld [vmem:[#allocation2 + $0xa8] sm:$0xff]
  %v3080 = vld [vmem:[#allocation2 + $0xb0] sm:$0xff]
  %v3081 = vld [vmem:[#allocation2 + $0xc0] sm:$0xff]
  %v3082 = vld [vmem:[#allocation2 + $0xc8] sm:$0xff]
  %v3083 = vld [vmem:[#allocation2 + $0xd8] sm:$0xff]
  %v3084 = vld [vmem:[#allocation2 + $0xe0] sm:$0xff]
  %v3085 = vld [vmem:[#allocation2 + $0xf0] sm:$0xff]
  %v3086 = vld [vmem:[#allocation2 + $0xf8] sm:$0xff]
  %v3087 = vld [vmem:[#allocation2 + $0x108] sm:$0xff]
  %v3088 = vld [vmem:[#allocation2 + $0x110] sm:$0xff]
  %v3089 = vld [vmem:[#allocation2 + $0x120] sm:$0xff]
  %v3090 = vld [vmem:[#allocation2 + $0x128] sm:$0xff]
  %v3091 = vld [vmem:[#allocation2 + $0x138] sm:$0xff]
  %v3092 = vld [vmem:[#allocation2 + $0x140] sm:$0xff]
  %v3093 = vld [vmem:[#allocation2 + $0x150] sm:$0xff]
  %v3094 = vld [vmem:[#allocation2 + $0x158] sm:$0xff]
  %v3095 = vld [vmem:[#allocation2 + $0x168] sm:$0xff]
  %v3096 = vld [vmem:[#allocation2 + $0x170] sm:$0xff]
  %v3097 = vld [vmem:[#allocation2 + $0x1b0] sm:$0xff]
  %v3098 = vld [vmem:[#allocation2 + $0x1b8] sm:$0xff]
  %v3099 = vld [vmem:[#allocation2 + $0x1c8] sm:$0xff]
  %v3100 = vld [vmem:[#allocation2 + $0x1d0] sm:$0xff]
  %v3101 = vld [vmem:[#allocation2 + $0x1e0] sm:$0xff]
  %v3102 = vld [vmem:[#allocation2 + $0x1e8] sm:$0xff]
  %v3103 = vld [vmem:[#allocation2 + $0x1f8] sm:$0xff]
  %v3104 = vld [vmem:[#allocation2 + $0x200] sm:$0xff]
  %v3105 = vld [vmem:[#allocation2 + $0x210] sm:$0xff]
  %v3106 = vld [vmem:[#allocation2 + $0x218] sm:$0xff]
  %v3107 = vld [vmem:[#allocation2 + $0x228] sm:$0xff]
  %v3108 = vld [vmem:[#allocation2 + $0x230] sm:$0xff]
  %v3109 = vld [vmem:[#allocation2 + $0x240] sm:$0xff]
  %v3110 = vld [vmem:[#allocation2 + $0x248] sm:$0xff]
  %v3111 = vld [vmem:[#allocation2 + $0x258] sm:$0xff]
  %v3112 = vld [vmem:[#allocation2 + $0x260] sm:$0xff]
  %v3113 = vld [vmem:[#allocation2 + $0x270] sm:$0xff]
  %v3114 = vld [vmem:[#allocation2 + $0x278] sm:$0xff]
  %v3115 = vld [vmem:[#allocation2 + $0x288] sm:$0xff]
  %v3116 = vld [vmem:[#allocation2 + $0x290] sm:$0xff]
  %v3117 = vld [vmem:[#allocation2 + $0x2a0] sm:$0xff]
  %v3118 = vld [vmem:[#allocation2 + $0x2a8] sm:$0xff]
  %v3119 = vld [vmem:[#allocation2 + $0x2b8] sm:$0xff]
  %v3120 = vld [vmem:[#allocation2 + $0x2c0] sm:$0xff]
  %v3121 = vld [vmem:[#allocation2 + $0x2d0] sm:$0xff]
  %v3122 = vld [vmem:[#allocation2 + $0x2d8] sm:$0xff]
  %v3123 = vld [vmem:[#allocation2 + $0x2e8] sm:$0xff]
  %v3124 = vld [vmem:[#allocation2 + $0x2f0] sm:$0xff]
  %v3125 = vld [vmem:[#allocation2 + $0x300] sm:$0xff]
  %v3126 = vld [vmem:[#allocation2 + $0x308] sm:$0xff]
  %v3127 = vld [vmem:[#allocation2 + $0x318] sm:$0xff]
  %v3128 = vld [vmem:[#allocation2 + $0x320] sm:$0xff]
  %v3129 = vld [vmem:[#allocation2 + $0x1] sm:$0xff]
  %v3130 = vld [vmem:[#allocation2 + $0x9] sm:$0xff]
  %v3131 = vld [vmem:[#allocation2 + $0x19] sm:$0xff]
  %v3132 = vld [vmem:[#allocation2 + $0x21] sm:$0xff]
  %v3133 = vld [vmem:[#allocation2 + $0x31] sm:$0xff]
  %v3134 = vld [vmem:[#allocation2 + $0x39] sm:$0xff]
  %v3135 = vld [vmem:[#allocation2 + $0x49] sm:$0xff]
  %v3136 = vld [vmem:[#allocation2 + $0x51] sm:$0xff]
  %v3137 = vld [vmem:[#allocation2 + $0x61] sm:$0xff]
  %v3138 = vld [vmem:[#allocation2 + $0x69] sm:$0xff]
  %v3139 = vld [vmem:[#allocation2 + $0x79] sm:$0xff]
  %v3140 = vld [vmem:[#allocation2 + $0x81] sm:$0xff]
  %v3141 = vld [vmem:[#allocation2 + $0x91] sm:$0xff]
  %v3142 = vld [vmem:[#allocation2 + $0x99] sm:$0xff]
  %v3143 = vld [vmem:[#allocation2 + $0xa9] sm:$0xff]
  %v3144 = vld [vmem:[#allocation2 + $0xb1] sm:$0xff]
  %v3145 = vld [vmem:[#allocation2 + $0xc1] sm:$0xff]
  %v3146 = vld [vmem:[#allocation2 + $0xc9] sm:$0xff]
  %v3147 = vld [vmem:[#allocation2 + $0xd9] sm:$0xff]
  %v3148 = vld [vmem:[#allocation2 + $0xe1] sm:$0xff]
  %v3149 = vld [vmem:[#allocation2 + $0xf1] sm:$0xff]
  %v3150 = vld [vmem:[#allocation2 + $0xf9] sm:$0xff]
  %v3151 = vld [vmem:[#allocation2 + $0x109] sm:$0xff]
  %v3152 = vld [vmem:[#allocation2 + $0x111] sm:$0xff]
  %v3153 = vld [vmem:[#allocation2 + $0x121] sm:$0xff]
  %v3154 = vld [vmem:[#allocation2 + $0x129] sm:$0xff]
  %v3155 = vld [vmem:[#allocation2 + $0x139] sm:$0xff]
  %v3156 = vld [vmem:[#allocation2 + $0x141] sm:$0xff]
  %v3157 = vld [vmem:[#allocation2 + $0x151] sm:$0xff]
  %v3158 = vld [vmem:[#allocation2 + $0x159] sm:$0xff]
  %v3159 = vld [vmem:[#allocation2 + $0x169] sm:$0xff]
  %v3160 = vld [vmem:[#allocation2 + $0x171] sm:$0xff]
  %v3161 = vld [vmem:[#allocation2 + $0x1b1] sm:$0xff]
  %v3162 = vld [vmem:[#allocation2 + $0x1b9] sm:$0xff]
  %v3163 = vld [vmem:[#allocation2 + $0x1c9] sm:$0xff]
  %v3164 = vld [vmem:[#allocation2 + $0x1d1] sm:$0xff]
  %v3165 = vld [vmem:[#allocation2 + $0x1e1] sm:$0xff]
  %v3166 = vld [vmem:[#allocation2 + $0x1e9] sm:$0xff]
  %v3167 = vld [vmem:[#allocation2 + $0x1f9] sm:$0xff]
  %v3168 = vld [vmem:[#allocation2 + $0x201] sm:$0xff]
  %v3169 = vld [vmem:[#allocation2 + $0x211] sm:$0xff]
  %v3170 = vld [vmem:[#allocation2 + $0x219] sm:$0xff]
  %v3171 = vld [vmem:[#allocation2 + $0x229] sm:$0xff]
  %v3172 = vld [vmem:[#allocation2 + $0x231] sm:$0xff]
  %v3173 = vld [vmem:[#allocation2 + $0x241] sm:$0xff]
  %v3174 = vld [vmem:[#allocation2 + $0x249] sm:$0xff]
  %v3175 = vld [vmem:[#allocation2 + $0x259] sm:$0xff]
  %v3176 = vld [vmem:[#allocation2 + $0x261] sm:$0xff]
  %v3177 = vld [vmem:[#allocation2 + $0x271] sm:$0xff]
  %v3178 = vld [vmem:[#allocation2 + $0x279] sm:$0xff]
  %v3179 = vld [vmem:[#allocation2 + $0x289] sm:$0xff]
  %v3180 = vld [vmem:[#allocation2 + $0x291] sm:$0xff]
  %v3181 = vld [vmem:[#allocation2 + $0x2a1] sm:$0xff]
  %v3182 = vld [vmem:[#allocation2 + $0x2a9] sm:$0xff]
  %v3183 = vld [vmem:[#allocation2 + $0x2b9] sm:$0xff]
  %v3184 = vld [vmem:[#allocation2 + $0x2c1] sm:$0xff]
  %v3185 = vld [vmem:[#allocation2 + $0x2d1] sm:$0xff]
  %v3186 = vld [vmem:[#allocation2 + $0x2d9] sm:$0xff]
  %v3187 = vld [vmem:[#allocation2 + $0x2e9] sm:$0xff]
  %v3188 = vld [vmem:[#allocation2 + $0x2f1] sm:$0xff]
  %v3189 = vld [vmem:[#allocation2 + $0x301] sm:$0xff]
  %v3190 = vld [vmem:[#allocation2 + $0x309] sm:$0xff]
  %v3191 = vld [vmem:[#allocation2 + $0x319] sm:$0xff]
  %v3192 = vld [vmem:[#allocation2 + $0x321] sm:$0xff]
  %3193 = vrot.lane.b32.xlu0 %v3129, 8
  %v3194 = vpop.permute.xlu0 %3193
  %3195 = vrot.lane.b32.xlu0 %v3130, 8
  %v3196 = vpop.permute.xlu0 %3195
  %3197 = vrot.lane.b32.xlu0 %v3131, 8
  %v3198 = vpop.permute.xlu0 %3197
  %3199 = vrot.lane.b32.xlu0 %v3132, 8
  %v3200 = vpop.permute.xlu0 %3199
  %3201 = vrot.lane.b32.xlu0 %v3133, 8
  %v3202 = vpop.permute.xlu0 %3201
  %3203 = vrot.lane.b32.xlu0 %v3134, 8
  %v3204 = vpop.permute.xlu0 %3203
  %3205 = vrot.lane.b32.xlu0 %v3135, 8
  %v3206 = vpop.permute.xlu0 %3205
  %3207 = vrot.lane.b32.xlu0 %v3136, 8
  %v3208 = vpop.permute.xlu0 %3207
  %3209 = vrot.lane.b32.xlu0 %v3137, 8
  %v3210 = vpop.permute.xlu0 %3209
  %3211 = vrot.lane.b32.xlu0 %v3138, 8
  %v3212 = vpop.permute.xlu0 %3211
  %3213 = vrot.lane.b32.xlu0 %v3139, 8
  %v3214 = vpop.permute.xlu0 %3213
  %3215 = vrot.lane.b32.xlu0 %v3140, 8
  %v3216 = vpop.permute.xlu0 %3215
  %3217 = vrot.lane.b32.xlu0 %v3141, 8
  %v3218 = vpop.permute.xlu0 %3217
  %3219 = vrot.lane.b32.xlu0 %v3142, 8
  %v3220 = vpop.permute.xlu0 %3219
  %3221 = vrot.lane.b32.xlu0 %v3143, 8
  %v3222 = vpop.permute.xlu0 %3221
  %3223 = vrot.lane.b32.xlu0 %v3144, 8
  %v3224 = vpop.permute.xlu0 %3223
  %3225 = vrot.lane.b32.xlu0 %v3145, 8
  %v3226 = vpop.permute.xlu0 %3225
  %3227 = vrot.lane.b32.xlu0 %v3146, 8
  %v3228 = vpop.permute.xlu0 %3227
  %3229 = vrot.lane.b32.xlu0 %v3147, 8
  %v3230 = vpop.permute.xlu0 %3229
  %3231 = vrot.lane.b32.xlu0 %v3148, 8
  %v3232 = vpop.permute.xlu0 %3231
  %3233 = vrot.lane.b32.xlu0 %v3149, 8
  %v3234 = vpop.permute.xlu0 %3233
  %3235 = vrot.lane.b32.xlu0 %v3150, 8
  %v3236 = vpop.permute.xlu0 %3235
  %3237 = vrot.lane.b32.xlu0 %v3151, 8
  %v3238 = vpop.permute.xlu0 %3237
  %3239 = vrot.lane.b32.xlu0 %v3152, 8
  %v3240 = vpop.permute.xlu0 %3239
  %3241 = vrot.lane.b32.xlu0 %v3153, 8
  %v3242 = vpop.permute.xlu0 %3241
  %3243 = vrot.lane.b32.xlu0 %v3154, 8
  %v3244 = vpop.permute.xlu0 %3243
  %3245 = vrot.lane.b32.xlu0 %v3155, 8
  %v3246 = vpop.permute.xlu0 %3245
  %3247 = vrot.lane.b32.xlu0 %v3156, 8
  %v3248 = vpop.permute.xlu0 %3247
  %3249 = vrot.lane.b32.xlu0 %v3157, 8
  %v3250 = vpop.permute.xlu0 %3249
  %3251 = vrot.lane.b32.xlu0 %v3158, 8
  %v3252 = vpop.permute.xlu0 %3251
  %3253 = vrot.lane.b32.xlu0 %v3159, 8
  %v3254 = vpop.permute.xlu0 %3253
  %3255 = vrot.lane.b32.xlu0 %v3160, 8
  %v3256 = vpop.permute.xlu0 %3255
  %3257 = vrot.lane.b32.xlu0 %v3161, 8
  %v3258 = vpop.permute.xlu0 %3257
  %3259 = vrot.lane.b32.xlu0 %v3162, 8
  %v3260 = vpop.permute.xlu0 %3259
  %3261 = vrot.lane.b32.xlu0 %v3163, 8
  %v3262 = vpop.permute.xlu0 %3261
  %3263 = vrot.lane.b32.xlu0 %v3164, 8
  %v3264 = vpop.permute.xlu0 %3263
  %3265 = vrot.lane.b32.xlu0 %v3165, 8
  %v3266 = vpop.permute.xlu0 %3265
  %3267 = vrot.lane.b32.xlu0 %v3166, 8
  %v3268 = vpop.permute.xlu0 %3267
  %3269 = vrot.lane.b32.xlu0 %v3167, 8
  %v3270 = vpop.permute.xlu0 %3269
  %3271 = vrot.lane.b32.xlu0 %v3168, 8
  %v3272 = vpop.permute.xlu0 %3271
  %3273 = vrot.lane.b32.xlu0 %v3169, 8
  %v3274 = vpop.permute.xlu0 %3273
  %3275 = vrot.lane.b32.xlu0 %v3170, 8
  %v3276 = vpop.permute.xlu0 %3275
  %3277 = vrot.lane.b32.xlu0 %v3171, 8
  %v3278 = vpop.permute.xlu0 %3277
  %3279 = vrot.lane.b32.xlu0 %v3172, 8
  %v3280 = vpop.permute.xlu0 %3279
  %3281 = vrot.lane.b32.xlu0 %v3173, 8
  %v3282 = vpop.permute.xlu0 %3281
  %3283 = vrot.lane.b32.xlu0 %v3174, 8
  %v3284 = vpop.permute.xlu0 %3283
  %3285 = vrot.lane.b32.xlu0 %v3175, 8
  %v3286 = vpop.permute.xlu0 %3285
  %3287 = vrot.lane.b32.xlu0 %v3176, 8
  %v3288 = vpop.permute.xlu0 %3287
  %3289 = vrot.lane.b32.xlu0 %v3177, 8
  %v3290 = vpop.permute.xlu0 %3289
  %3291 = vrot.lane.b32.xlu0 %v3178, 8
  %v3292 = vpop.permute.xlu0 %3291
  %3293 = vrot.lane.b32.xlu0 %v3179, 8
  %v3294 = vpop.permute.xlu0 %3293
  %3295 = vrot.lane.b32.xlu0 %v3180, 8
  %v3296 = vpop.permute.xlu0 %3295
  %3297 = vrot.lane.b32.xlu0 %v3181, 8
  %v3298 = vpop.permute.xlu0 %3297
  %3299 = vrot.lane.b32.xlu0 %v3182, 8
  %v3300 = vpop.permute.xlu0 %3299
  %3301 = vrot.lane.b32.xlu0 %v3183, 8
  %v3302 = vpop.permute.xlu0 %3301
  %3303 = vrot.lane.b32.xlu0 %v3184, 8
  %v3304 = vpop.permute.xlu0 %3303
  %3305 = vrot.lane.b32.xlu0 %v3185, 8
  %v3306 = vpop.permute.xlu0 %3305
  %3307 = vrot.lane.b32.xlu0 %v3186, 8
  %v3308 = vpop.permute.xlu0 %3307
  %3309 = vrot.lane.b32.xlu0 %v3187, 8
  %v3310 = vpop.permute.xlu0 %3309
  %3311 = vrot.lane.b32.xlu0 %v3188, 8
  %v3312 = vpop.permute.xlu0 %3311
  %3313 = vrot.lane.b32.xlu0 %v3189, 8
  %v3314 = vpop.permute.xlu0 %3313
  %3315 = vrot.lane.b32.xlu0 %v3190, 8
  %v3316 = vpop.permute.xlu0 %3315
  %3317 = vrot.lane.b32.xlu0 %v3191, 8
  %v3318 = vpop.permute.xlu0 %3317
  %3319 = vrot.lane.b32.xlu0 %v3192, 8
  %v3320 = vpop.permute.xlu0 %3319
  %v3321 = vadd.f32 %v3065, %v3194
  %v3322 = vadd.f32 %v3066, %v3196
  %v3323 = vadd.f32 %v3067, %v3198
  %v3324 = vadd.f32 %v3068, %v3200
  %v3325 = vadd.f32 %v3069, %v3202
  %v3326 = vadd.f32 %v3070, %v3204
  %v3327 = vadd.f32 %v3071, %v3206
  %v3328 = vadd.f32 %v3072, %v3208
  %v3329 = vadd.f32 %v3073, %v3210
  %v3330 = vadd.f32 %v3074, %v3212
  %v3331 = vadd.f32 %v3075, %v3214
  %v3332 = vadd.f32 %v3076, %v3216
  %v3333 = vadd.f32 %v3077, %v3218
  %v3334 = vadd.f32 %v3078, %v3220
  %v3335 = vadd.f32 %v3079, %v3222
  %v3336 = vadd.f32 %v3080, %v3224
  %v3337 = vadd.f32 %v3081, %v3226
  %v3338 = vadd.f32 %v3082, %v3228
  %v3339 = vadd.f32 %v3083, %v3230
  %v3340 = vadd.f32 %v3084, %v3232
  %v3341 = vadd.f32 %v3085, %v3234
  %v3342 = vadd.f32 %v3086, %v3236
  %v3343 = vadd.f32 %v3087, %v3238
  %v3344 = vadd.f32 %v3088, %v3240
  %v3345 = vadd.f32 %v3089, %v3242
  %v3346 = vadd.f32 %v3090, %v3244
  %v3347 = vadd.f32 %v3091, %v3246
  %v3348 = vadd.f32 %v3092, %v3248
  %v3349 = vadd.f32 %v3093, %v3250
  %v3350 = vadd.f32 %v3094, %v3252
  %v3351 = vadd.f32 %v3095, %v3254
  %v3352 = vadd.f32 %v3096, %v3256
  %v3353 = vadd.f32 %v3097, %v3258
  %v3354 = vadd.f32 %v3098, %v3260
  %v3355 = vadd.f32 %v3099, %v3262
  %v3356 = vadd.f32 %v3100, %v3264
  %v3357 = vadd.f32 %v3101, %v3266
  %v3358 = vadd.f32 %v3102, %v3268
  %v3359 = vadd.f32 %v3103, %v3270
  %v3360 = vadd.f32 %v3104, %v3272
  %v3361 = vadd.f32 %v3105, %v3274
  %v3362 = vadd.f32 %v3106, %v3276
  %v3363 = vadd.f32 %v3107, %v3278
  %v3364 = vadd.f32 %v3108, %v3280
  %v3365 = vadd.f32 %v3109, %v3282
  %v3366 = vadd.f32 %v3110, %v3284
  %v3367 = vadd.f32 %v3111, %v3286
  %v3368 = vadd.f32 %v3112, %v3288
  %v3369 = vadd.f32 %v3113, %v3290
  %v3370 = vadd.f32 %v3114, %v3292
  %v3371 = vadd.f32 %v3115, %v3294
  %v3372 = vadd.f32 %v3116, %v3296
  %v3373 = vadd.f32 %v3117, %v3298
  %v3374 = vadd.f32 %v3118, %v3300
  %v3375 = vadd.f32 %v3119, %v3302
  %v3376 = vadd.f32 %v3120, %v3304
  %v3377 = vadd.f32 %v3121, %v3306
  %v3378 = vadd.f32 %v3122, %v3308
  %v3379 = vadd.f32 %v3123, %v3310
  %v3380 = vadd.f32 %v3124, %v3312
  %v3381 = vadd.f32 %v3125, %v3314
  %v3382 = vadd.f32 %v3126, %v3316
  %v3383 = vadd.f32 %v3127, %v3318
  %v3384 = vadd.f32 %v3128, %v3320
  %v3385 = vld [vmem:[#allocation2 + $0x2] sm:$0xff]
  %v3386 = vld [vmem:[#allocation2 + $0xa] sm:$0xff]
  %v3387 = vld [vmem:[#allocation2 + $0x1a] sm:$0xff]
  %v3388 = vld [vmem:[#allocation2 + $0x22] sm:$0xff]
  %v3389 = vld [vmem:[#allocation2 + $0x32] sm:$0xff]
  %v3390 = vld [vmem:[#allocation2 + $0x3a] sm:$0xff]
  %v3391 = vld [vmem:[#allocation2 + $0x4a] sm:$0xff]
  %v3392 = vld [vmem:[#allocation2 + $0x52] sm:$0xff]
  %v3393 = vld [vmem:[#allocation2 + $0x62] sm:$0xff]
  %v3394 = vld [vmem:[#allocation2 + $0x6a] sm:$0xff]
  %v3395 = vld [vmem:[#allocation2 + $0x7a] sm:$0xff]
  %v3396 = vld [vmem:[#allocation2 + $0x82] sm:$0xff]
  %v3397 = vld [vmem:[#allocation2 + $0x92] sm:$0xff]
  %v3398 = vld [vmem:[#allocation2 + $0x9a] sm:$0xff]
  %v3399 = vld [vmem:[#allocation2 + $0xaa] sm:$0xff]
  %v3400 = vld [vmem:[#allocation2 + $0xb2] sm:$0xff]
  %v3401 = vld [vmem:[#allocation2 + $0xc2] sm:$0xff]
  %v3402 = vld [vmem:[#allocation2 + $0xca] sm:$0xff]
  %v3403 = vld [vmem:[#allocation2 + $0xda] sm:$0xff]
  %v3404 = vld [vmem:[#allocation2 + $0xe2] sm:$0xff]
  %v3405 = vld [vmem:[#allocation2 + $0xf2] sm:$0xff]
  %v3406 = vld [vmem:[#allocation2 + $0xfa] sm:$0xff]
  %v3407 = vld [vmem:[#allocation2 + $0x10a] sm:$0xff]
  %v3408 = vld [vmem:[#allocation2 + $0x112] sm:$0xff]
  %v3409 = vld [vmem:[#allocation2 + $0x122] sm:$0xff]
  %v3410 = vld [vmem:[#allocation2 + $0x12a] sm:$0xff]
  %v3411 = vld [vmem:[#allocation2 + $0x13a] sm:$0xff]
  %v3412 = vld [vmem:[#allocation2 + $0x142] sm:$0xff]
  %v3413 = vld [vmem:[#allocation2 + $0x152] sm:$0xff]
  %v3414 = vld [vmem:[#allocation2 + $0x15a] sm:$0xff]
  %v3415 = vld [vmem:[#allocation2 + $0x16a] sm:$0xff]
  %v3416 = vld [vmem:[#allocation2 + $0x172] sm:$0xff]
  %v3417 = vld [vmem:[#allocation2 + $0x1b2] sm:$0xff]
  %v3418 = vld [vmem:[#allocation2 + $0x1ba] sm:$0xff]
  %v3419 = vld [vmem:[#allocation2 + $0x1ca] sm:$0xff]
  %v3420 = vld [vmem:[#allocation2 + $0x1d2] sm:$0xff]
  %v3421 = vld [vmem:[#allocation2 + $0x1e2] sm:$0xff]
  %v3422 = vld [vmem:[#allocation2 + $0x1ea] sm:$0xff]
  %v3423 = vld [vmem:[#allocation2 + $0x1fa] sm:$0xff]
  %v3424 = vld [vmem:[#allocation2 + $0x202] sm:$0xff]
  %v3425 = vld [vmem:[#allocation2 + $0x212] sm:$0xff]
  %v3426 = vld [vmem:[#allocation2 + $0x21a] sm:$0xff]
  %v3427 = vld [vmem:[#allocation2 + $0x22a] sm:$0xff]
  %v3428 = vld [vmem:[#allocation2 + $0x232] sm:$0xff]
  %v3429 = vld [vmem:[#allocation2 + $0x242] sm:$0xff]
  %v3430 = vld [vmem:[#allocation2 + $0x24a] sm:$0xff]
  %v3431 = vld [vmem:[#allocation2 + $0x25a] sm:$0xff]
  %v3432 = vld [vmem:[#allocation2 + $0x262] sm:$0xff]
  %v3433 = vld [vmem:[#allocation2 + $0x272] sm:$0xff]
  %v3434 = vld [vmem:[#allocation2 + $0x27a] sm:$0xff]
  %v3435 = vld [vmem:[#allocation2 + $0x28a] sm:$0xff]
  %v3436 = vld [vmem:[#allocation2 + $0x292] sm:$0xff]
  %v3437 = vld [vmem:[#allocation2 + $0x2a2] sm:$0xff]
  %v3438 = vld [vmem:[#allocation2 + $0x2aa] sm:$0xff]
  %v3439 = vld [vmem:[#allocation2 + $0x2ba] sm:$0xff]
  %v3440 = vld [vmem:[#allocation2 + $0x2c2] sm:$0xff]
  %v3441 = vld [vmem:[#allocation2 + $0x2d2] sm:$0xff]
  %v3442 = vld [vmem:[#allocation2 + $0x2da] sm:$0xff]
  %v3443 = vld [vmem:[#allocation2 + $0x2ea] sm:$0xff]
  %v3444 = vld [vmem:[#allocation2 + $0x2f2] sm:$0xff]
  %v3445 = vld [vmem:[#allocation2 + $0x302] sm:$0xff]
  %v3446 = vld [vmem:[#allocation2 + $0x30a] sm:$0xff]
  %v3447 = vld [vmem:[#allocation2 + $0x31a] sm:$0xff]
  %v3448 = vld [vmem:[#allocation2 + $0x322] sm:$0xff]
  %3449 = vrot.lane.b32.xlu0 %v3385, 16
  %v3450 = vpop.permute.xlu0 %3449
  %3451 = vrot.lane.b32.xlu0 %v3386, 16
  %v3452 = vpop.permute.xlu0 %3451
  %3453 = vrot.lane.b32.xlu0 %v3387, 16
  %v3454 = vpop.permute.xlu0 %3453
  %3455 = vrot.lane.b32.xlu0 %v3388, 16
  %v3456 = vpop.permute.xlu0 %3455
  %3457 = vrot.lane.b32.xlu0 %v3389, 16
  %v3458 = vpop.permute.xlu0 %3457
  %3459 = vrot.lane.b32.xlu0 %v3390, 16
  %v3460 = vpop.permute.xlu0 %3459
  %3461 = vrot.lane.b32.xlu0 %v3391, 16
  %v3462 = vpop.permute.xlu0 %3461
  %3463 = vrot.lane.b32.xlu0 %v3392, 16
  %v3464 = vpop.permute.xlu0 %3463
  %3465 = vrot.lane.b32.xlu0 %v3393, 16
  %v3466 = vpop.permute.xlu0 %3465
  %3467 = vrot.lane.b32.xlu0 %v3394, 16
  %v3468 = vpop.permute.xlu0 %3467
  %3469 = vrot.lane.b32.xlu0 %v3395, 16
  %v3470 = vpop.permute.xlu0 %3469
  %3471 = vrot.lane.b32.xlu0 %v3396, 16
  %v3472 = vpop.permute.xlu0 %3471
  %3473 = vrot.lane.b32.xlu0 %v3397, 16
  %v3474 = vpop.permute.xlu0 %3473
  %3475 = vrot.lane.b32.xlu0 %v3398, 16
  %v3476 = vpop.permute.xlu0 %3475
  %3477 = vrot.lane.b32.xlu0 %v3399, 16
  %v3478 = vpop.permute.xlu0 %3477
  %3479 = vrot.lane.b32.xlu0 %v3400, 16
  %v3480 = vpop.permute.xlu0 %3479
  %3481 = vrot.lane.b32.xlu0 %v3401, 16
  %v3482 = vpop.permute.xlu0 %3481
  %3483 = vrot.lane.b32.xlu0 %v3402, 16
  %v3484 = vpop.permute.xlu0 %3483
  %3485 = vrot.lane.b32.xlu0 %v3403, 16
  %v3486 = vpop.permute.xlu0 %3485
  %3487 = vrot.lane.b32.xlu0 %v3404, 16
  %v3488 = vpop.permute.xlu0 %3487
  %3489 = vrot.lane.b32.xlu0 %v3405, 16
  %v3490 = vpop.permute.xlu0 %3489
  %3491 = vrot.lane.b32.xlu0 %v3406, 16
  %v3492 = vpop.permute.xlu0 %3491
  %3493 = vrot.lane.b32.xlu0 %v3407, 16
  %v3494 = vpop.permute.xlu0 %3493
  %3495 = vrot.lane.b32.xlu0 %v3408, 16
  %v3496 = vpop.permute.xlu0 %3495
  %3497 = vrot.lane.b32.xlu0 %v3409, 16
  %v3498 = vpop.permute.xlu0 %3497
  %3499 = vrot.lane.b32.xlu0 %v3410, 16
  %v3500 = vpop.permute.xlu0 %3499
  %3501 = vrot.lane.b32.xlu0 %v3411, 16
  %v3502 = vpop.permute.xlu0 %3501
  %3503 = vrot.lane.b32.xlu0 %v3412, 16
  %v3504 = vpop.permute.xlu0 %3503
  %3505 = vrot.lane.b32.xlu0 %v3413, 16
  %v3506 = vpop.permute.xlu0 %3505
  %3507 = vrot.lane.b32.xlu0 %v3414, 16
  %v3508 = vpop.permute.xlu0 %3507
  %3509 = vrot.lane.b32.xlu0 %v3415, 16
  %v3510 = vpop.permute.xlu0 %3509
  %3511 = vrot.lane.b32.xlu0 %v3416, 16
  %v3512 = vpop.permute.xlu0 %3511
  %3513 = vrot.lane.b32.xlu0 %v3417, 16
  %v3514 = vpop.permute.xlu0 %3513
  %3515 = vrot.lane.b32.xlu0 %v3418, 16
  %v3516 = vpop.permute.xlu0 %3515
  %3517 = vrot.lane.b32.xlu0 %v3419, 16
  %v3518 = vpop.permute.xlu0 %3517
  %3519 = vrot.lane.b32.xlu0 %v3420, 16
  %v3520 = vpop.permute.xlu0 %3519
  %3521 = vrot.lane.b32.xlu0 %v3421, 16
  %v3522 = vpop.permute.xlu0 %3521
  %3523 = vrot.lane.b32.xlu0 %v3422, 16
  %v3524 = vpop.permute.xlu0 %3523
  %3525 = vrot.lane.b32.xlu0 %v3423, 16
  %v3526 = vpop.permute.xlu0 %3525
  %3527 = vrot.lane.b32.xlu0 %v3424, 16
  %v3528 = vpop.permute.xlu0 %3527
  %3529 = vrot.lane.b32.xlu0 %v3425, 16
  %v3530 = vpop.permute.xlu0 %3529
  %3531 = vrot.lane.b32.xlu0 %v3426, 16
  %v3532 = vpop.permute.xlu0 %3531
  %3533 = vrot.lane.b32.xlu0 %v3427, 16
  %v3534 = vpop.permute.xlu0 %3533
  %3535 = vrot.lane.b32.xlu0 %v3428, 16
  %v3536 = vpop.permute.xlu0 %3535
  %3537 = vrot.lane.b32.xlu0 %v3429, 16
  %v3538 = vpop.permute.xlu0 %3537
  %3539 = vrot.lane.b32.xlu0 %v3430, 16
  %v3540 = vpop.permute.xlu0 %3539
  %3541 = vrot.lane.b32.xlu0 %v3431, 16
  %v3542 = vpop.permute.xlu0 %3541
  %3543 = vrot.lane.b32.xlu0 %v3432, 16
  %v3544 = vpop.permute.xlu0 %3543
  %3545 = vrot.lane.b32.xlu0 %v3433, 16
  %v3546 = vpop.permute.xlu0 %3545
  %3547 = vrot.lane.b32.xlu0 %v3434, 16
  %v3548 = vpop.permute.xlu0 %3547
  %3549 = vrot.lane.b32.xlu0 %v3435, 16
  %v3550 = vpop.permute.xlu0 %3549
  %3551 = vrot.lane.b32.xlu0 %v3436, 16
  %v3552 = vpop.permute.xlu0 %3551
  %3553 = vrot.lane.b32.xlu0 %v3437, 16
  %v3554 = vpop.permute.xlu0 %3553
  %3555 = vrot.lane.b32.xlu0 %v3438, 16
  %v3556 = vpop.permute.xlu0 %3555
  %3557 = vrot.lane.b32.xlu0 %v3439, 16
  %v3558 = vpop.permute.xlu0 %3557
  %3559 = vrot.lane.b32.xlu0 %v3440, 16
  %v3560 = vpop.permute.xlu0 %3559
  %3561 = vrot.lane.b32.xlu0 %v3441, 16
  %v3562 = vpop.permute.xlu0 %3561
  %3563 = vrot.lane.b32.xlu0 %v3442, 16
  %v3564 = vpop.permute.xlu0 %3563
  %3565 = vrot.lane.b32.xlu0 %v3443, 16
  %v3566 = vpop.permute.xlu0 %3565
  %3567 = vrot.lane.b32.xlu0 %v3444, 16
  %v3568 = vpop.permute.xlu0 %3567
  %3569 = vrot.lane.b32.xlu0 %v3445, 16
  %v3570 = vpop.permute.xlu0 %3569
  %3571 = vrot.lane.b32.xlu0 %v3446, 16
  %v3572 = vpop.permute.xlu0 %3571
  %3573 = vrot.lane.b32.xlu0 %v3447, 16
  %v3574 = vpop.permute.xlu0 %3573
  %3575 = vrot.lane.b32.xlu0 %v3448, 16
  %v3576 = vpop.permute.xlu0 %3575
  %v3577 = vadd.f32 %v3321, %v3450
  %v3578 = vadd.f32 %v3322, %v3452
  %v3579 = vadd.f32 %v3323, %v3454
  %v3580 = vadd.f32 %v3324, %v3456
  %v3581 = vadd.f32 %v3325, %v3458
  %v3582 = vadd.f32 %v3326, %v3460
  %v3583 = vadd.f32 %v3327, %v3462
  %v3584 = vadd.f32 %v3328, %v3464
  %v3585 = vadd.f32 %v3329, %v3466
  %v3586 = vadd.f32 %v3330, %v3468
  %v3587 = vadd.f32 %v3331, %v3470
  %v3588 = vadd.f32 %v3332, %v3472
  %v3589 = vadd.f32 %v3333, %v3474
  %v3590 = vadd.f32 %v3334, %v3476
  %v3591 = vadd.f32 %v3335, %v3478
  %v3592 = vadd.f32 %v3336, %v3480
  %v3593 = vadd.f32 %v3337, %v3482
  %v3594 = vadd.f32 %v3338, %v3484
  %v3595 = vadd.f32 %v3339, %v3486
  %v3596 = vadd.f32 %v3340, %v3488
  %v3597 = vadd.f32 %v3341, %v3490
  %v3598 = vadd.f32 %v3342, %v3492
  %v3599 = vadd.f32 %v3343, %v3494
  %v3600 = vadd.f32 %v3344, %v3496
  %v3601 = vadd.f32 %v3345, %v3498
  %v3602 = vadd.f32 %v3346, %v3500
  %v3603 = vadd.f32 %v3347, %v3502
  %v3604 = vadd.f32 %v3348, %v3504
  %v3605 = vadd.f32 %v3349, %v3506
  %v3606 = vadd.f32 %v3350, %v3508
  %v3607 = vadd.f32 %v3351, %v3510
  %v3608 = vadd.f32 %v3352, %v3512
  %v3609 = vadd.f32 %v3353, %v3514
  %v3610 = vadd.f32 %v3354, %v3516
  %v3611 = vadd.f32 %v3355, %v3518
  %v3612 = vadd.f32 %v3356, %v3520
  %v3613 = vadd.f32 %v3357, %v3522
  %v3614 = vadd.f32 %v3358, %v3524
  %v3615 = vadd.f32 %v3359, %v3526
  %v3616 = vadd.f32 %v3360, %v3528
  %v3617 = vadd.f32 %v3361, %v3530
  %v3618 = vadd.f32 %v3362, %v3532
  %v3619 = vadd.f32 %v3363, %v3534
  %v3620 = vadd.f32 %v3364, %v3536
  %v3621 = vadd.f32 %v3365, %v3538
  %v3622 = vadd.f32 %v3366, %v3540
  %v3623 = vadd.f32 %v3367, %v3542
  %v3624 = vadd.f32 %v3368, %v3544
  %v3625 = vadd.f32 %v3369, %v3546
  %v3626 = vadd.f32 %v3370, %v3548
  %v3627 = vadd.f32 %v3371, %v3550
  %v3628 = vadd.f32 %v3372, %v3552
  %v3629 = vadd.f32 %v3373, %v3554
  %v3630 = vadd.f32 %v3374, %v3556
  %v3631 = vadd.f32 %v3375, %v3558
  %v3632 = vadd.f32 %v3376, %v3560
  %v3633 = vadd.f32 %v3377, %v3562
  %v3634 = vadd.f32 %v3378, %v3564
  %v3635 = vadd.f32 %v3379, %v3566
  %v3636 = vadd.f32 %v3380, %v3568
  %v3637 = vadd.f32 %v3381, %v3570
  %v3638 = vadd.f32 %v3382, %v3572
  %v3639 = vadd.f32 %v3383, %v3574
  %v3640 = vadd.f32 %v3384, %v3576
  %v3641 = vld [vmem:[%s3000] sm:$0xff]
  %v3642 = vld [vmem:[%s3000 + $0x8] sm:$0xff]
  %v3643 = vld [vmem:[%s3000 + $0x18] sm:$0xff]
  %v3644 = vld [vmem:[%s3000 + $0x20] sm:$0xff]
  %v3645 = vld [vmem:[%s3000 + $0x30] sm:$0xff]
  %v3646 = vld [vmem:[%s3000 + $0x38] sm:$0xff]
  %v3647 = vld [vmem:[%s3000 + $0x48] sm:$0xff]
  %v3648 = vld [vmem:[%s3000 + $0x50] sm:$0xff]
  %v3649 = vld [vmem:[%s3000 + $0x60] sm:$0xff]
  %v3650 = vld [vmem:[%s3000 + $0x68] sm:$0xff]
  %v3651 = vld [vmem:[%s3000 + $0x78] sm:$0xff]
  %v3652 = vld [vmem:[%s3000 + $0x80] sm:$0xff]
  %v3653 = vld [vmem:[%s3000 + $0x90] sm:$0xff]
  %v3654 = vld [vmem:[%s3000 + $0x98] sm:$0xff]
  %v3655 = vld [vmem:[%s3000 + $0xa8] sm:$0xff]
  %v3656 = vld [vmem:[%s3000 + $0xb0] sm:$0xff]
  %v3657 = vld [vmem:[%s3000 + $0xc0] sm:$0xff]
  %v3658 = vld [vmem:[%s3000 + $0xc8] sm:$0xff]
  %v3659 = vld [vmem:[%s3000 + $0xd8] sm:$0xff]
  %v3660 = vld [vmem:[%s3000 + $0xe0] sm:$0xff]
  %v3661 = vld [vmem:[%s3000 + $0xf0] sm:$0xff]
  %v3662 = vld [vmem:[%s3000 + $0xf8] sm:$0xff]
  %v3663 = vld [vmem:[%s3000 + $0x108] sm:$0xff]
  %v3664 = vld [vmem:[%s3000 + $0x110] sm:$0xff]
  %v3665 = vld [vmem:[%s3000 + $0x120] sm:$0xff]
  %v3666 = vld [vmem:[%s3000 + $0x128] sm:$0xff]
  %v3667 = vld [vmem:[%s3000 + $0x138] sm:$0xff]
  %v3668 = vld [vmem:[%s3000 + $0x140] sm:$0xff]
  %v3669 = vld [vmem:[%s3000 + $0x150] sm:$0xff]
  %v3670 = vld [vmem:[%s3000 + $0x158] sm:$0xff]
  %v3671 = vld [vmem:[%s3000 + $0x168] sm:$0xff]
  %v3672 = vld [vmem:[%s3000 + $0x170] sm:$0xff]
  %v3673 = vld [vmem:[%s3000 + $0x1b0] sm:$0xff]
  %v3674 = vld [vmem:[%s3000 + $0x1b8] sm:$0xff]
  %v3675 = vld [vmem:[%s3000 + $0x1c8] sm:$0xff]
  %v3676 = vld [vmem:[%s3000 + $0x1d0] sm:$0xff]
  %v3677 = vld [vmem:[%s3000 + $0x1e0] sm:$0xff]
  %v3678 = vld [vmem:[%s3000 + $0x1e8] sm:$0xff]
  %v3679 = vld [vmem:[%s3000 + $0x1f8] sm:$0xff]
  %v3680 = vld [vmem:[%s3000 + $0x200] sm:$0xff]
  %v3681 = vld [vmem:[%s3000 + $0x210] sm:$0xff]
  %v3682 = vld [vmem:[%s3000 + $0x218] sm:$0xff]
  %v3683 = vld [vmem:[%s3000 + $0x228] sm:$0xff]
  %v3684 = vld [vmem:[%s3000 + $0x230] sm:$0xff]
  %v3685 = vld [vmem:[%s3000 + $0x240] sm:$0xff]
  %v3686 = vld [vmem:[%s3000 + $0x248] sm:$0xff]
  %v3687 = vld [vmem:[%s3000 + $0x258] sm:$0xff]
  %v3688 = vld [vmem:[%s3000 + $0x260] sm:$0xff]
  %v3689 = vld [vmem:[%s3000 + $0x270] sm:$0xff]
  %v3690 = vld [vmem:[%s3000 + $0x278] sm:$0xff]
  %v3691 = vld [vmem:[%s3000 + $0x288] sm:$0xff]
  %v3692 = vld [vmem:[%s3000 + $0x290] sm:$0xff]
  %v3693 = vld [vmem:[%s3000 + $0x2a0] sm:$0xff]
  %v3694 = vld [vmem:[%s3000 + $0x2a8] sm:$0xff]
  %v3695 = vld [vmem:[%s3000 + $0x2b8] sm:$0xff]
  %v3696 = vld [vmem:[%s3000 + $0x2c0] sm:$0xff]
  %v3697 = vld [vmem:[%s3000 + $0x2d0] sm:$0xff]
  %v3698 = vld [vmem:[%s3000 + $0x2d8] sm:$0xff]
  %v3699 = vld [vmem:[%s3000 + $0x2e8] sm:$0xff]
  %v3700 = vld [vmem:[%s3000 + $0x2f0] sm:$0xff]
  %v3701 = vld [vmem:[%s3000 + $0x300] sm:$0xff]
  %v3702 = vld [vmem:[%s3000 + $0x308] sm:$0xff]
  %v3703 = vld [vmem:[%s3000 + $0x318] sm:$0xff]
  %v3704 = vld [vmem:[%s3000 + $0x320] sm:$0xff]
  %3705 = vrot.lane.b32.xlu0 %v3641, 24
  %v3706 = vpop.permute.xlu0 %3705
  %3707 = vrot.lane.b32.xlu0 %v3642, 24
  %v3708 = vpop.permute.xlu0 %3707
  %3709 = vrot.lane.b32.xlu0 %v3643, 24
  %v3710 = vpop.permute.xlu0 %3709
  %3711 = vrot.lane.b32.xlu0 %v3644, 24
  %v3712 = vpop.permute.xlu0 %3711
  %3713 = vrot.lane.b32.xlu0 %v3645, 24
  %v3714 = vpop.permute.xlu0 %3713
  %3715 = vrot.lane.b32.xlu0 %v3646, 24
  %v3716 = vpop.permute.xlu0 %3715
  %3717 = vrot.lane.b32.xlu0 %v3647, 24
  %v3718 = vpop.permute.xlu0 %3717
  %3719 = vrot.lane.b32.xlu0 %v3648, 24
  %v3720 = vpop.permute.xlu0 %3719
  %3721 = vrot.lane.b32.xlu0 %v3649, 24
  %v3722 = vpop.permute.xlu0 %3721
  %3723 = vrot.lane.b32.xlu0 %v3650, 24
  %v3724 = vpop.permute.xlu0 %3723
  %3725 = vrot.lane.b32.xlu0 %v3651, 24
  %v3726 = vpop.permute.xlu0 %3725
  %3727 = vrot.lane.b32.xlu0 %v3652, 24
  %v3728 = vpop.permute.xlu0 %3727
  %3729 = vrot.lane.b32.xlu0 %v3653, 24
  %v3730 = vpop.permute.xlu0 %3729
  %3731 = vrot.lane.b32.xlu0 %v3654, 24
  %v3732 = vpop.permute.xlu0 %3731
  %3733 = vrot.lane.b32.xlu0 %v3655, 24
  %v3734 = vpop.permute.xlu0 %3733
  %3735 = vrot.lane.b32.xlu0 %v3656, 24
  %v3736 = vpop.permute.xlu0 %3735
  %3737 = vrot.lane.b32.xlu0 %v3657, 24
  %v3738 = vpop.permute.xlu0 %3737
  %3739 = vrot.lane.b32.xlu0 %v3658, 24
  %v3740 = vpop.permute.xlu0 %3739
  %3741 = vrot.lane.b32.xlu0 %v3659, 24
  %v3742 = vpop.permute.xlu0 %3741
  %3743 = vrot.lane.b32.xlu0 %v3660, 24
  %v3744 = vpop.permute.xlu0 %3743
  %3745 = vrot.lane.b32.xlu0 %v3661, 24
  %v3746 = vpop.permute.xlu0 %3745
  %3747 = vrot.lane.b32.xlu0 %v3662, 24
  %v3748 = vpop.permute.xlu0 %3747
  %3749 = vrot.lane.b32.xlu0 %v3663, 24
  %v3750 = vpop.permute.xlu0 %3749
  %3751 = vrot.lane.b32.xlu0 %v3664, 24
  %v3752 = vpop.permute.xlu0 %3751
  %3753 = vrot.lane.b32.xlu0 %v3665, 24
  %v3754 = vpop.permute.xlu0 %3753
  %3755 = vrot.lane.b32.xlu0 %v3666, 24
  %v3756 = vpop.permute.xlu0 %3755
  %3757 = vrot.lane.b32.xlu0 %v3667, 24
  %v3758 = vpop.permute.xlu0 %3757
  %3759 = vrot.lane.b32.xlu0 %v3668, 24
  %v3760 = vpop.permute.xlu0 %3759
  %3761 = vrot.lane.b32.xlu0 %v3669, 24
  %v3762 = vpop.permute.xlu0 %3761
  %3763 = vrot.lane.b32.xlu0 %v3670, 24
  %v3764 = vpop.permute.xlu0 %3763
  %3765 = vrot.lane.b32.xlu0 %v3671, 24
  %v3766 = vpop.permute.xlu0 %3765
  %3767 = vrot.lane.b32.xlu0 %v3672, 24
  %v3768 = vpop.permute.xlu0 %3767
  %3769 = vrot.lane.b32.xlu0 %v3673, 24
  %v3770 = vpop.permute.xlu0 %3769
  %3771 = vrot.lane.b32.xlu0 %v3674, 24
  %v3772 = vpop.permute.xlu0 %3771
  %3773 = vrot.lane.b32.xlu0 %v3675, 24
  %v3774 = vpop.permute.xlu0 %3773
  %3775 = vrot.lane.b32.xlu0 %v3676, 24
  %v3776 = vpop.permute.xlu0 %3775
  %3777 = vrot.lane.b32.xlu0 %v3677, 24
  %v3778 = vpop.permute.xlu0 %3777
  %3779 = vrot.lane.b32.xlu0 %v3678, 24
  %v3780 = vpop.permute.xlu0 %3779
  %3781 = vrot.lane.b32.xlu0 %v3679, 24
  %v3782 = vpop.permute.xlu0 %3781
  %3783 = vrot.lane.b32.xlu0 %v3680, 24
  %v3784 = vpop.permute.xlu0 %3783
  %3785 = vrot.lane.b32.xlu0 %v3681, 24
  %v3786 = vpop.permute.xlu0 %3785
  %3787 = vrot.lane.b32.xlu0 %v3682, 24
  %v3788 = vpop.permute.xlu0 %3787
  %3789 = vrot.lane.b32.xlu0 %v3683, 24
  %v3790 = vpop.permute.xlu0 %3789
  %3791 = vrot.lane.b32.xlu0 %v3684, 24
  %v3792 = vpop.permute.xlu0 %3791
  %3793 = vrot.lane.b32.xlu0 %v3685, 24
  %v3794 = vpop.permute.xlu0 %3793
  %3795 = vrot.lane.b32.xlu0 %v3686, 24
  %v3796 = vpop.permute.xlu0 %3795
  %3797 = vrot.lane.b32.xlu0 %v3687, 24
  %v3798 = vpop.permute.xlu0 %3797
  %3799 = vrot.lane.b32.xlu0 %v3688, 24
  %v3800 = vpop.permute.xlu0 %3799
  %3801 = vrot.lane.b32.xlu0 %v3689, 24
  %v3802 = vpop.permute.xlu0 %3801
  %3803 = vrot.lane.b32.xlu0 %v3690, 24
  %v3804 = vpop.permute.xlu0 %3803
  %3805 = vrot.lane.b32.xlu0 %v3691, 24
  %v3806 = vpop.permute.xlu0 %3805
  %3807 = vrot.lane.b32.xlu0 %v3692, 24
  %v3808 = vpop.permute.xlu0 %3807
  %3809 = vrot.lane.b32.xlu0 %v3693, 24
  %v3810 = vpop.permute.xlu0 %3809
  %3811 = vrot.lane.b32.xlu0 %v3694, 24
  %v3812 = vpop.permute.xlu0 %3811
  %3813 = vrot.lane.b32.xlu0 %v3695, 24
  %v3814 = vpop.permute.xlu0 %3813
  %3815 = vrot.lane.b32.xlu0 %v3696, 24
  %v3816 = vpop.permute.xlu0 %3815
  %3817 = vrot.lane.b32.xlu0 %v3697, 24
  %v3818 = vpop.permute.xlu0 %3817
  %3819 = vrot.lane.b32.xlu0 %v3698, 24
  %v3820 = vpop.permute.xlu0 %3819
  %3821 = vrot.lane.b32.xlu0 %v3699, 24
  %v3822 = vpop.permute.xlu0 %3821
  %3823 = vrot.lane.b32.xlu0 %v3700, 24
  %v3824 = vpop.permute.xlu0 %3823
  %3825 = vrot.lane.b32.xlu0 %v3701, 24
  %v3826 = vpop.permute.xlu0 %3825
  %3827 = vrot.lane.b32.xlu0 %v3702, 24
  %v3828 = vpop.permute.xlu0 %3827
  %3829 = vrot.lane.b32.xlu0 %v3703, 24
  %v3830 = vpop.permute.xlu0 %3829
  %3831 = vrot.lane.b32.xlu0 %v3704, 24
  %v3832 = vpop.permute.xlu0 %3831
  %v3833 = vadd.f32 %v3577, %v3706
  %v3834 = vadd.f32 %v3578, %v3708
  %v3835 = vadd.f32 %v3579, %v3710
  %v3836 = vadd.f32 %v3580, %v3712
  %v3837 = vadd.f32 %v3581, %v3714
  %v3838 = vadd.f32 %v3582, %v3716
  %v3839 = vadd.f32 %v3583, %v3718
  %v3840 = vadd.f32 %v3584, %v3720
  %v3841 = vadd.f32 %v3585, %v3722
  %v3842 = vadd.f32 %v3586, %v3724
  %v3843 = vadd.f32 %v3587, %v3726
  %v3844 = vadd.f32 %v3588, %v3728
  %v3845 = vadd.f32 %v3589, %v3730
  %v3846 = vadd.f32 %v3590, %v3732
  %v3847 = vadd.f32 %v3591, %v3734
  %v3848 = vadd.f32 %v3592, %v3736
  %v3849 = vadd.f32 %v3593, %v3738
  %v3850 = vadd.f32 %v3594, %v3740
  %v3851 = vadd.f32 %v3595, %v3742
  %v3852 = vadd.f32 %v3596, %v3744
  %v3853 = vadd.f32 %v3597, %v3746
  %v3854 = vadd.f32 %v3598, %v3748
  %v3855 = vadd.f32 %v3599, %v3750
  %v3856 = vadd.f32 %v3600, %v3752
  %v3857 = vadd.f32 %v3601, %v3754
  %v3858 = vadd.f32 %v3602, %v3756
  %v3859 = vadd.f32 %v3603, %v3758
  %v3860 = vadd.f32 %v3604, %v3760
  %v3861 = vadd.f32 %v3605, %v3762
  %v3862 = vadd.f32 %v3606, %v3764
  %v3863 = vadd.f32 %v3607, %v3766
  %v3864 = vadd.f32 %v3608, %v3768
  %v3865 = vadd.f32 %v3609, %v3770
  %v3866 = vadd.f32 %v3610, %v3772
  %v3867 = vadd.f32 %v3611, %v3774
  %v3868 = vadd.f32 %v3612, %v3776
  %v3869 = vadd.f32 %v3613, %v3778
  %v3870 = vadd.f32 %v3614, %v3780
  %v3871 = vadd.f32 %v3615, %v3782
  %v3872 = vadd.f32 %v3616, %v3784
  %v3873 = vadd.f32 %v3617, %v3786
  %v3874 = vadd.f32 %v3618, %v3788
  %v3875 = vadd.f32 %v3619, %v3790
  %v3876 = vadd.f32 %v3620, %v3792
  %v3877 = vadd.f32 %v3621, %v3794
  %v3878 = vadd.f32 %v3622, %v3796
  %v3879 = vadd.f32 %v3623, %v3798
  %v3880 = vadd.f32 %v3624, %v3800
  %v3881 = vadd.f32 %v3625, %v3802
  %v3882 = vadd.f32 %v3626, %v3804
  %v3883 = vadd.f32 %v3627, %v3806
  %v3884 = vadd.f32 %v3628, %v3808
  %v3885 = vadd.f32 %v3629, %v3810
  %v3886 = vadd.f32 %v3630, %v3812
  %v3887 = vadd.f32 %v3631, %v3814
  %v3888 = vadd.f32 %v3632, %v3816
  %v3889 = vadd.f32 %v3633, %v3818
  %v3890 = vadd.f32 %v3634, %v3820
  %v3891 = vadd.f32 %v3635, %v3822
  %v3892 = vadd.f32 %v3636, %v3824
  %v3893 = vadd.f32 %v3637, %v3826
  %v3894 = vadd.f32 %v3638, %v3828
  %v3895 = vadd.f32 %v3639, %v3830
  %v3896 = vadd.f32 %v3640, %v3832
  %v3897 = vld [vmem:[%s3000 + $0x1] sm:$0xff]
  %v3898 = vld [vmem:[%s3000 + $0x9] sm:$0xff]
  %v3899 = vld [vmem:[%s3000 + $0x19] sm:$0xff]
  %v3900 = vld [vmem:[%s3000 + $0x21] sm:$0xff]
  %v3901 = vld [vmem:[%s3000 + $0x31] sm:$0xff]
  %v3902 = vld [vmem:[%s3000 + $0x39] sm:$0xff]
  %v3903 = vld [vmem:[%s3000 + $0x49] sm:$0xff]
  %v3904 = vld [vmem:[%s3000 + $0x51] sm:$0xff]
  %v3905 = vld [vmem:[%s3000 + $0x61] sm:$0xff]
  %v3906 = vld [vmem:[%s3000 + $0x69] sm:$0xff]
  %v3907 = vld [vmem:[%s3000 + $0x79] sm:$0xff]
  %v3908 = vld [vmem:[%s3000 + $0x81] sm:$0xff]
  %v3909 = vld [vmem:[%s3000 + $0x91] sm:$0xff]
  %v3910 = vld [vmem:[%s3000 + $0x99] sm:$0xff]
  %v3911 = vld [vmem:[%s3000 + $0xa9] sm:$0xff]
  %v3912 = vld [vmem:[%s3000 + $0xb1] sm:$0xff]
  %v3913 = vld [vmem:[%s3000 + $0xc1] sm:$0xff]
  %v3914 = vld [vmem:[%s3000 + $0xc9] sm:$0xff]
  %v3915 = vld [vmem:[%s3000 + $0xd9] sm:$0xff]
  %v3916 = vld [vmem:[%s3000 + $0xe1] sm:$0xff]
  %v3917 = vld [vmem:[%s3000 + $0xf1] sm:$0xff]
  %v3918 = vld [vmem:[%s3000 + $0xf9] sm:$0xff]
  %v3919 = vld [vmem:[%s3000 + $0x109] sm:$0xff]
  %v3920 = vld [vmem:[%s3000 + $0x111] sm:$0xff]
  %v3921 = vld [vmem:[%s3000 + $0x121] sm:$0xff]
  %v3922 = vld [vmem:[%s3000 + $0x129] sm:$0xff]
  %v3923 = vld [vmem:[%s3000 + $0x139] sm:$0xff]
  %v3924 = vld [vmem:[%s3000 + $0x141] sm:$0xff]
  %v3925 = vld [vmem:[%s3000 + $0x151] sm:$0xff]
  %v3926 = vld [vmem:[%s3000 + $0x159] sm:$0xff]
  %v3927 = vld [vmem:[%s3000 + $0x169] sm:$0xff]
  %v3928 = vld [vmem:[%s3000 + $0x171] sm:$0xff]
  %v3929 = vld [vmem:[%s3000 + $0x1b1] sm:$0xff]
  %v3930 = vld [vmem:[%s3000 + $0x1b9] sm:$0xff]
  %v3931 = vld [vmem:[%s3000 + $0x1c9] sm:$0xff]
  %v3932 = vld [vmem:[%s3000 + $0x1d1] sm:$0xff]
  %v3933 = vld [vmem:[%s3000 + $0x1e1] sm:$0xff]
  %v3934 = vld [vmem:[%s3000 + $0x1e9] sm:$0xff]
  %v3935 = vld [vmem:[%s3000 + $0x1f9] sm:$0xff]
  %v3936 = vld [vmem:[%s3000 + $0x201] sm:$0xff]
  %v3937 = vld [vmem:[%s3000 + $0x211] sm:$0xff]
  %v3938 = vld [vmem:[%s3000 + $0x219] sm:$0xff]
  %v3939 = vld [vmem:[%s3000 + $0x229] sm:$0xff]
  %v3940 = vld [vmem:[%s3000 + $0x231] sm:$0xff]
  %v3941 = vld [vmem:[%s3000 + $0x241] sm:$0xff]
  %v3942 = vld [vmem:[%s3000 + $0x249] sm:$0xff]
  %v3943 = vld [vmem:[%s3000 + $0x259] sm:$0xff]
  %v3944 = vld [vmem:[%s3000 + $0x261] sm:$0xff]
  %v3945 = vld [vmem:[%s3000 + $0x271] sm:$0xff]
  %v3946 = vld [vmem:[%s3000 + $0x279] sm:$0xff]
  %v3947 = vld [vmem:[%s3000 + $0x289] sm:$0xff]
  %v3948 = vld [vmem:[%s3000 + $0x291] sm:$0xff]
  %v3949 = vld [vmem:[%s3000 + $0x2a1] sm:$0xff]
  %v3950 = vld [vmem:[%s3000 + $0x2a9] sm:$0xff]
  %v3951 = vld [vmem:[%s3000 + $0x2b9] sm:$0xff]
  %v3952 = vld [vmem:[%s3000 + $0x2c1] sm:$0xff]
  %v3953 = vld [vmem:[%s3000 + $0x2d1] sm:$0xff]
  %v3954 = vld [vmem:[%s3000 + $0x2d9] sm:$0xff]
  %v3955 = vld [vmem:[%s3000 + $0x2e9] sm:$0xff]
  %v3956 = vld [vmem:[%s3000 + $0x2f1] sm:$0xff]
  %v3957 = vld [vmem:[%s3000 + $0x301] sm:$0xff]
  %v3958 = vld [vmem:[%s3000 + $0x309] sm:$0xff]
  %v3959 = vld [vmem:[%s3000 + $0x319] sm:$0xff]
  %v3960 = vld [vmem:[%s3000 + $0x321] sm:$0xff]
  %3961 = vrot.lane.b32.xlu0 %v3897, 32
  %v3962 = vpop.permute.xlu0 %3961
  %3963 = vrot.lane.b32.xlu0 %v3898, 32
  %v3964 = vpop.permute.xlu0 %3963
  %3965 = vrot.lane.b32.xlu0 %v3899, 32
  %v3966 = vpop.permute.xlu0 %3965
  %3967 = vrot.lane.b32.xlu0 %v3900, 32
  %v3968 = vpop.permute.xlu0 %3967
  %3969 = vrot.lane.b32.xlu0 %v3901, 32
  %v3970 = vpop.permute.xlu0 %3969
  %3971 = vrot.lane.b32.xlu0 %v3902, 32
  %v3972 = vpop.permute.xlu0 %3971
  %3973 = vrot.lane.b32.xlu0 %v3903, 32
  %v3974 = vpop.permute.xlu0 %3973
  %3975 = vrot.lane.b32.xlu0 %v3904, 32
  %v3976 = vpop.permute.xlu0 %3975
  %3977 = vrot.lane.b32.xlu0 %v3905, 32
  %v3978 = vpop.permute.xlu0 %3977
  %3979 = vrot.lane.b32.xlu0 %v3906, 32
  %v3980 = vpop.permute.xlu0 %3979
  %3981 = vrot.lane.b32.xlu0 %v3907, 32
  %v3982 = vpop.permute.xlu0 %3981
  %3983 = vrot.lane.b32.xlu0 %v3908, 32
  %v3984 = vpop.permute.xlu0 %3983
  %3985 = vrot.lane.b32.xlu0 %v3909, 32
  %v3986 = vpop.permute.xlu0 %3985
  %3987 = vrot.lane.b32.xlu0 %v3910, 32
  %v3988 = vpop.permute.xlu0 %3987
  %3989 = vrot.lane.b32.xlu0 %v3911, 32
  %v3990 = vpop.permute.xlu0 %3989
  %3991 = vrot.lane.b32.xlu0 %v3912, 32
  %v3992 = vpop.permute.xlu0 %3991
  %3993 = vrot.lane.b32.xlu0 %v3913, 32
  %v3994 = vpop.permute.xlu0 %3993
  %3995 = vrot.lane.b32.xlu0 %v3914, 32
  %v3996 = vpop.permute.xlu0 %3995
  %3997 = vrot.lane.b32.xlu0 %v3915, 32
  %v3998 = vpop.permute.xlu0 %3997
  %3999 = vrot.lane.b32.xlu0 %v3916, 32
  %v4000 = vpop.permute.xlu0 %3999
  %4001 = vrot.lane.b32.xlu0 %v3917, 32
  %v4002 = vpop.permute.xlu0 %4001
  %4003 = vrot.lane.b32.xlu0 %v3918, 32
  %v4004 = vpop.permute.xlu0 %4003
  %4005 = vrot.lane.b32.xlu0 %v3919, 32
  %v4006 = vpop.permute.xlu0 %4005
  %4007 = vrot.lane.b32.xlu0 %v3920, 32
  %v4008 = vpop.permute.xlu0 %4007
  %4009 = vrot.lane.b32.xlu0 %v3921, 32
  %v4010 = vpop.permute.xlu0 %4009
  %4011 = vrot.lane.b32.xlu0 %v3922, 32
  %v4012 = vpop.permute.xlu0 %4011
  %4013 = vrot.lane.b32.xlu0 %v3923, 32
  %v4014 = vpop.permute.xlu0 %4013
  %4015 = vrot.lane.b32.xlu0 %v3924, 32
  %v4016 = vpop.permute.xlu0 %4015
  %4017 = vrot.lane.b32.xlu0 %v3925, 32
  %v4018 = vpop.permute.xlu0 %4017
  %4019 = vrot.lane.b32.xlu0 %v3926, 32
  %v4020 = vpop.permute.xlu0 %4019
  %4021 = vrot.lane.b32.xlu0 %v3927, 32
  %v4022 = vpop.permute.xlu0 %4021
  %4023 = vrot.lane.b32.xlu0 %v3928, 32
  %v4024 = vpop.permute.xlu0 %4023
  %4025 = vrot.lane.b32.xlu0 %v3929, 32
  %v4026 = vpop.permute.xlu0 %4025
  %4027 = vrot.lane.b32.xlu0 %v3930, 32
  %v4028 = vpop.permute.xlu0 %4027
  %4029 = vrot.lane.b32.xlu0 %v3931, 32
  %v4030 = vpop.permute.xlu0 %4029
  %4031 = vrot.lane.b32.xlu0 %v3932, 32
  %v4032 = vpop.permute.xlu0 %4031
  %4033 = vrot.lane.b32.xlu0 %v3933, 32
  %v4034 = vpop.permute.xlu0 %4033
  %4035 = vrot.lane.b32.xlu0 %v3934, 32
  %v4036 = vpop.permute.xlu0 %4035
  %4037 = vrot.lane.b32.xlu0 %v3935, 32
  %v4038 = vpop.permute.xlu0 %4037
  %4039 = vrot.lane.b32.xlu0 %v3936, 32
  %v4040 = vpop.permute.xlu0 %4039
  %4041 = vrot.lane.b32.xlu0 %v3937, 32
  %v4042 = vpop.permute.xlu0 %4041
  %4043 = vrot.lane.b32.xlu0 %v3938, 32
  %v4044 = vpop.permute.xlu0 %4043
  %4045 = vrot.lane.b32.xlu0 %v3939, 32
  %v4046 = vpop.permute.xlu0 %4045
  %4047 = vrot.lane.b32.xlu0 %v3940, 32
  %v4048 = vpop.permute.xlu0 %4047
  %4049 = vrot.lane.b32.xlu0 %v3941, 32
  %v4050 = vpop.permute.xlu0 %4049
  %4051 = vrot.lane.b32.xlu0 %v3942, 32
  %v4052 = vpop.permute.xlu0 %4051
  %4053 = vrot.lane.b32.xlu0 %v3943, 32
  %v4054 = vpop.permute.xlu0 %4053
  %4055 = vrot.lane.b32.xlu0 %v3944, 32
  %v4056 = vpop.permute.xlu0 %4055
  %4057 = vrot.lane.b32.xlu0 %v3945, 32
  %v4058 = vpop.permute.xlu0 %4057
  %4059 = vrot.lane.b32.xlu0 %v3946, 32
  %v4060 = vpop.permute.xlu0 %4059
  %4061 = vrot.lane.b32.xlu0 %v3947, 32
  %v4062 = vpop.permute.xlu0 %4061
  %4063 = vrot.lane.b32.xlu0 %v3948, 32
  %v4064 = vpop.permute.xlu0 %4063
  %4065 = vrot.lane.b32.xlu0 %v3949, 32
  %v4066 = vpop.permute.xlu0 %4065
  %4067 = vrot.lane.b32.xlu0 %v3950, 32
  %v4068 = vpop.permute.xlu0 %4067
  %4069 = vrot.lane.b32.xlu0 %v3951, 32
  %v4070 = vpop.permute.xlu0 %4069
  %4071 = vrot.lane.b32.xlu0 %v3952, 32
  %v4072 = vpop.permute.xlu0 %4071
  %4073 = vrot.lane.b32.xlu0 %v3953, 32
  %v4074 = vpop.permute.xlu0 %4073
  %4075 = vrot.lane.b32.xlu0 %v3954, 32
  %v4076 = vpop.permute.xlu0 %4075
  %4077 = vrot.lane.b32.xlu0 %v3955, 32
  %v4078 = vpop.permute.xlu0 %4077
  %4079 = vrot.lane.b32.xlu0 %v3956, 32
  %v4080 = vpop.permute.xlu0 %4079
  %4081 = vrot.lane.b32.xlu0 %v3957, 32
  %v4082 = vpop.permute.xlu0 %4081
  %4083 = vrot.lane.b32.xlu0 %v3958, 32
  %v4084 = vpop.permute.xlu0 %4083
  %4085 = vrot.lane.b32.xlu0 %v3959, 32
  %v4086 = vpop.permute.xlu0 %4085
  %4087 = vrot.lane.b32.xlu0 %v3960, 32
  %v4088 = vpop.permute.xlu0 %4087
  %v4089 = vadd.f32 %v3833, %v3962
  %v4090 = vadd.f32 %v3834, %v3964
  %v4091 = vadd.f32 %v3835, %v3966
  %v4092 = vadd.f32 %v3836, %v3968
  %v4093 = vadd.f32 %v3837, %v3970
  %v4094 = vadd.f32 %v3838, %v3972
  %v4095 = vadd.f32 %v3839, %v3974
  %v4096 = vadd.f32 %v3840, %v3976
  %v4097 = vadd.f32 %v3841, %v3978
  %v4098 = vadd.f32 %v3842, %v3980
  %v4099 = vadd.f32 %v3843, %v3982
  %v4100 = vadd.f32 %v3844, %v3984
  %v4101 = vadd.f32 %v3845, %v3986
  %v4102 = vadd.f32 %v3846, %v3988
  %v4103 = vadd.f32 %v3847, %v3990
  %v4104 = vadd.f32 %v3848, %v3992
  %v4105 = vadd.f32 %v3849, %v3994
  %v4106 = vadd.f32 %v3850, %v3996
  %v4107 = vadd.f32 %v3851, %v3998
  %v4108 = vadd.f32 %v3852, %v4000
  %v4109 = vadd.f32 %v3853, %v4002
  %v4110 = vadd.f32 %v3854, %v4004
  %v4111 = vadd.f32 %v3855, %v4006
  %v4112 = vadd.f32 %v3856, %v4008
  %v4113 = vadd.f32 %v3857, %v4010
  %v4114 = vadd.f32 %v3858, %v4012
  %v4115 = vadd.f32 %v3859, %v4014
  %v4116 = vadd.f32 %v3860, %v4016
  %v4117 = vadd.f32 %v3861, %v4018
  %v4118 = vadd.f32 %v3862, %v4020
  %v4119 = vadd.f32 %v3863, %v4022
  %v4120 = vadd.f32 %v3864, %v4024
  %v4121 = vadd.f32 %v3865, %v4026
  %v4122 = vadd.f32 %v3866, %v4028
  %v4123 = vadd.f32 %v3867, %v4030
  %v4124 = vadd.f32 %v3868, %v4032
  %v4125 = vadd.f32 %v3869, %v4034
  %v4126 = vadd.f32 %v3870, %v4036
  %v4127 = vadd.f32 %v3871, %v4038
  %v4128 = vadd.f32 %v3872, %v4040
  %v4129 = vadd.f32 %v3873, %v4042
  %v4130 = vadd.f32 %v3874, %v4044
  %v4131 = vadd.f32 %v3875, %v4046
  %v4132 = vadd.f32 %v3876, %v4048
  %v4133 = vadd.f32 %v3877, %v4050
  %v4134 = vadd.f32 %v3878, %v4052
  %v4135 = vadd.f32 %v3879, %v4054
  %v4136 = vadd.f32 %v3880, %v4056
  %v4137 = vadd.f32 %v3881, %v4058
  %v4138 = vadd.f32 %v3882, %v4060
  %v4139 = vadd.f32 %v3883, %v4062
  %v4140 = vadd.f32 %v3884, %v4064
  %v4141 = vadd.f32 %v3885, %v4066
  %v4142 = vadd.f32 %v3886, %v4068
  %v4143 = vadd.f32 %v3887, %v4070
  %v4144 = vadd.f32 %v3888, %v4072
  %v4145 = vadd.f32 %v3889, %v4074
  %v4146 = vadd.f32 %v3890, %v4076
  %v4147 = vadd.f32 %v3891, %v4078
  %v4148 = vadd.f32 %v3892, %v4080
  %v4149 = vadd.f32 %v3893, %v4082
  %v4150 = vadd.f32 %v3894, %v4084
  %v4151 = vadd.f32 %v3895, %v4086
  %v4152 = vadd.f32 %v3896, %v4088
  %v4153 = vld [vmem:[%s3000 + $0x2] sm:$0xff]
  %v4154 = vld [vmem:[%s3000 + $0xa] sm:$0xff]
  %v4155 = vld [vmem:[%s3000 + $0x1a] sm:$0xff]
  %v4156 = vld [vmem:[%s3000 + $0x22] sm:$0xff]
  %v4157 = vld [vmem:[%s3000 + $0x32] sm:$0xff]
  %v4158 = vld [vmem:[%s3000 + $0x3a] sm:$0xff]
  %v4159 = vld [vmem:[%s3000 + $0x4a] sm:$0xff]
  %v4160 = vld [vmem:[%s3000 + $0x52] sm:$0xff]
  %v4161 = vld [vmem:[%s3000 + $0x62] sm:$0xff]
  %v4162 = vld [vmem:[%s3000 + $0x6a] sm:$0xff]
  %v4163 = vld [vmem:[%s3000 + $0x7a] sm:$0xff]
  %v4164 = vld [vmem:[%s3000 + $0x82] sm:$0xff]
  %v4165 = vld [vmem:[%s3000 + $0x92] sm:$0xff]
  %v4166 = vld [vmem:[%s3000 + $0x9a] sm:$0xff]
  %v4167 = vld [vmem:[%s3000 + $0xaa] sm:$0xff]
  %v4168 = vld [vmem:[%s3000 + $0xb2] sm:$0xff]
  %v4169 = vld [vmem:[%s3000 + $0xc2] sm:$0xff]
  %v4170 = vld [vmem:[%s3000 + $0xca] sm:$0xff]
  %v4171 = vld [vmem:[%s3000 + $0xda] sm:$0xff]
  %v4172 = vld [vmem:[%s3000 + $0xe2] sm:$0xff]
  %v4173 = vld [vmem:[%s3000 + $0xf2] sm:$0xff]
  %v4174 = vld [vmem:[%s3000 + $0xfa] sm:$0xff]
  %v4175 = vld [vmem:[%s3000 + $0x10a] sm:$0xff]
  %v4176 = vld [vmem:[%s3000 + $0x112] sm:$0xff]
  %v4177 = vld [vmem:[%s3000 + $0x122] sm:$0xff]
  %v4178 = vld [vmem:[%s3000 + $0x12a] sm:$0xff]
  %v4179 = vld [vmem:[%s3000 + $0x13a] sm:$0xff]
  %v4180 = vld [vmem:[%s3000 + $0x142] sm:$0xff]
  %v4181 = vld [vmem:[%s3000 + $0x152] sm:$0xff]
  %v4182 = vld [vmem:[%s3000 + $0x15a] sm:$0xff]
  %v4183 = vld [vmem:[%s3000 + $0x16a] sm:$0xff]
  %v4184 = vld [vmem:[%s3000 + $0x172] sm:$0xff]
  %v4185 = vld [vmem:[%s3000 + $0x1b2] sm:$0xff]
  %v4186 = vld [vmem:[%s3000 + $0x1ba] sm:$0xff]
  %v4187 = vld [vmem:[%s3000 + $0x1ca] sm:$0xff]
  %v4188 = vld [vmem:[%s3000 + $0x1d2] sm:$0xff]
  %v4189 = vld [vmem:[%s3000 + $0x1e2] sm:$0xff]
  %v4190 = vld [vmem:[%s3000 + $0x1ea] sm:$0xff]
  %v4191 = vld [vmem:[%s3000 + $0x1fa] sm:$0xff]
  %v4192 = vld [vmem:[%s3000 + $0x202] sm:$0xff]
  %v4193 = vld [vmem:[%s3000 + $0x212] sm:$0xff]
  %v4194 = vld [vmem:[%s3000 + $0x21a] sm:$0xff]
  %v4195 = vld [vmem:[%s3000 + $0x22a] sm:$0xff]
  %v4196 = vld [vmem:[%s3000 + $0x232] sm:$0xff]
  %v4197 = vld [vmem:[%s3000 + $0x242] sm:$0xff]
  %v4198 = vld [vmem:[%s3000 + $0x24a] sm:$0xff]
  %v4199 = vld [vmem:[%s3000 + $0x25a] sm:$0xff]
  %v4200 = vld [vmem:[%s3000 + $0x262] sm:$0xff]
  %v4201 = vld [vmem:[%s3000 + $0x272] sm:$0xff]
  %v4202 = vld [vmem:[%s3000 + $0x27a] sm:$0xff]
  %v4203 = vld [vmem:[%s3000 + $0x28a] sm:$0xff]
  %v4204 = vld [vmem:[%s3000 + $0x292] sm:$0xff]
  %v4205 = vld [vmem:[%s3000 + $0x2a2] sm:$0xff]
  %v4206 = vld [vmem:[%s3000 + $0x2aa] sm:$0xff]
  %v4207 = vld [vmem:[%s3000 + $0x2ba] sm:$0xff]
  %v4208 = vld [vmem:[%s3000 + $0x2c2] sm:$0xff]
  %v4209 = vld [vmem:[%s3000 + $0x2d2] sm:$0xff]
  %v4210 = vld [vmem:[%s3000 + $0x2da] sm:$0xff]
  %v4211 = vld [vmem:[%s3000 + $0x2ea] sm:$0xff]
  %v4212 = vld [vmem:[%s3000 + $0x2f2] sm:$0xff]
  %v4213 = vld [vmem:[%s3000 + $0x302] sm:$0xff]
  %v4214 = vld [vmem:[%s3000 + $0x30a] sm:$0xff]
  %v4215 = vld [vmem:[%s3000 + $0x31a] sm:$0xff]
  %v4216 = vld [vmem:[%s3000 + $0x322] sm:$0xff]
  %4217 = vrot.lane.b32.xlu0 %v4153, 40
  %v4218 = vpop.permute.xlu0 %4217
  %4219 = vrot.lane.b32.xlu0 %v4154, 40
  %v4220 = vpop.permute.xlu0 %4219
  %4221 = vrot.lane.b32.xlu0 %v4155, 40
  %v4222 = vpop.permute.xlu0 %4221
  %4223 = vrot.lane.b32.xlu0 %v4156, 40
  %v4224 = vpop.permute.xlu0 %4223
  %4225 = vrot.lane.b32.xlu0 %v4157, 40
  %v4226 = vpop.permute.xlu0 %4225
  %4227 = vrot.lane.b32.xlu0 %v4158, 40
  %v4228 = vpop.permute.xlu0 %4227
  %4229 = vrot.lane.b32.xlu0 %v4159, 40
  %v4230 = vpop.permute.xlu0 %4229
  %4231 = vrot.lane.b32.xlu0 %v4160, 40
  %v4232 = vpop.permute.xlu0 %4231
  %4233 = vrot.lane.b32.xlu0 %v4161, 40
  %v4234 = vpop.permute.xlu0 %4233
  %4235 = vrot.lane.b32.xlu0 %v4162, 40
  %v4236 = vpop.permute.xlu0 %4235
  %4237 = vrot.lane.b32.xlu0 %v4163, 40
  %v4238 = vpop.permute.xlu0 %4237
  %4239 = vrot.lane.b32.xlu0 %v4164, 40
  %v4240 = vpop.permute.xlu0 %4239
  %4241 = vrot.lane.b32.xlu0 %v4165, 40
  %v4242 = vpop.permute.xlu0 %4241
  %4243 = vrot.lane.b32.xlu0 %v4166, 40
  %v4244 = vpop.permute.xlu0 %4243
  %4245 = vrot.lane.b32.xlu0 %v4167, 40
  %v4246 = vpop.permute.xlu0 %4245
  %4247 = vrot.lane.b32.xlu0 %v4168, 40
  %v4248 = vpop.permute.xlu0 %4247
  %4249 = vrot.lane.b32.xlu0 %v4169, 40
  %v4250 = vpop.permute.xlu0 %4249
  %4251 = vrot.lane.b32.xlu0 %v4170, 40
  %v4252 = vpop.permute.xlu0 %4251
  %4253 = vrot.lane.b32.xlu0 %v4171, 40
  %v4254 = vpop.permute.xlu0 %4253
  %4255 = vrot.lane.b32.xlu0 %v4172, 40
  %v4256 = vpop.permute.xlu0 %4255
  %4257 = vrot.lane.b32.xlu0 %v4173, 40
  %v4258 = vpop.permute.xlu0 %4257
  %4259 = vrot.lane.b32.xlu0 %v4174, 40
  %v4260 = vpop.permute.xlu0 %4259
  %4261 = vrot.lane.b32.xlu0 %v4175, 40
  %v4262 = vpop.permute.xlu0 %4261
  %4263 = vrot.lane.b32.xlu0 %v4176, 40
  %v4264 = vpop.permute.xlu0 %4263
  %4265 = vrot.lane.b32.xlu0 %v4177, 40
  %v4266 = vpop.permute.xlu0 %4265
  %4267 = vrot.lane.b32.xlu0 %v4178, 40
  %v4268 = vpop.permute.xlu0 %4267
  %4269 = vrot.lane.b32.xlu0 %v4179, 40
  %v4270 = vpop.permute.xlu0 %4269
  %4271 = vrot.lane.b32.xlu0 %v4180, 40
  %v4272 = vpop.permute.xlu0 %4271
  %4273 = vrot.lane.b32.xlu0 %v4181, 40
  %v4274 = vpop.permute.xlu0 %4273
  %4275 = vrot.lane.b32.xlu0 %v4182, 40
  %v4276 = vpop.permute.xlu0 %4275
  %4277 = vrot.lane.b32.xlu0 %v4183, 40
  %v4278 = vpop.permute.xlu0 %4277
  %4279 = vrot.lane.b32.xlu0 %v4184, 40
  %v4280 = vpop.permute.xlu0 %4279
  %4281 = vrot.lane.b32.xlu0 %v4185, 40
  %v4282 = vpop.permute.xlu0 %4281
  %4283 = vrot.lane.b32.xlu0 %v4186, 40
  %v4284 = vpop.permute.xlu0 %4283
  %4285 = vrot.lane.b32.xlu0 %v4187, 40
  %v4286 = vpop.permute.xlu0 %4285
  %4287 = vrot.lane.b32.xlu0 %v4188, 40
  %v4288 = vpop.permute.xlu0 %4287
  %4289 = vrot.lane.b32.xlu0 %v4189, 40
  %v4290 = vpop.permute.xlu0 %4289
  %4291 = vrot.lane.b32.xlu0 %v4190, 40
  %v4292 = vpop.permute.xlu0 %4291
  %4293 = vrot.lane.b32.xlu0 %v4191, 40
  %v4294 = vpop.permute.xlu0 %4293
  %4295 = vrot.lane.b32.xlu0 %v4192, 40
  %v4296 = vpop.permute.xlu0 %4295
  %4297 = vrot.lane.b32.xlu0 %v4193, 40
  %v4298 = vpop.permute.xlu0 %4297
  %4299 = vrot.lane.b32.xlu0 %v4194, 40
  %v4300 = vpop.permute.xlu0 %4299
  %4301 = vrot.lane.b32.xlu0 %v4195, 40
  %v4302 = vpop.permute.xlu0 %4301
  %4303 = vrot.lane.b32.xlu0 %v4196, 40
  %v4304 = vpop.permute.xlu0 %4303
  %4305 = vrot.lane.b32.xlu0 %v4197, 40
  %v4306 = vpop.permute.xlu0 %4305
  %4307 = vrot.lane.b32.xlu0 %v4198, 40
  %v4308 = vpop.permute.xlu0 %4307
  %4309 = vrot.lane.b32.xlu0 %v4199, 40
  %v4310 = vpop.permute.xlu0 %4309
  %4311 = vrot.lane.b32.xlu0 %v4200, 40
  %v4312 = vpop.permute.xlu0 %4311
  %4313 = vrot.lane.b32.xlu0 %v4201, 40
  %v4314 = vpop.permute.xlu0 %4313
  %4315 = vrot.lane.b32.xlu0 %v4202, 40
  %v4316 = vpop.permute.xlu0 %4315
  %4317 = vrot.lane.b32.xlu0 %v4203, 40
  %v4318 = vpop.permute.xlu0 %4317
  %4319 = vrot.lane.b32.xlu0 %v4204, 40
  %v4320 = vpop.permute.xlu0 %4319
  %4321 = vrot.lane.b32.xlu0 %v4205, 40
  %v4322 = vpop.permute.xlu0 %4321
  %4323 = vrot.lane.b32.xlu0 %v4206, 40
  %v4324 = vpop.permute.xlu0 %4323
  %4325 = vrot.lane.b32.xlu0 %v4207, 40
  %v4326 = vpop.permute.xlu0 %4325
  %4327 = vrot.lane.b32.xlu0 %v4208, 40
  %v4328 = vpop.permute.xlu0 %4327
  %4329 = vrot.lane.b32.xlu0 %v4209, 40
  %v4330 = vpop.permute.xlu0 %4329
  %4331 = vrot.lane.b32.xlu0 %v4210, 40
  %v4332 = vpop.permute.xlu0 %4331
  %4333 = vrot.lane.b32.xlu0 %v4211, 40
  %v4334 = vpop.permute.xlu0 %4333
  %4335 = vrot.lane.b32.xlu0 %v4212, 40
  %v4336 = vpop.permute.xlu0 %4335
  %4337 = vrot.lane.b32.xlu0 %v4213, 40
  %v4338 = vpop.permute.xlu0 %4337
  %4339 = vrot.lane.b32.xlu0 %v4214, 40
  %v4340 = vpop.permute.xlu0 %4339
  %4341 = vrot.lane.b32.xlu0 %v4215, 40
  %v4342 = vpop.permute.xlu0 %4341
  %4343 = vrot.lane.b32.xlu0 %v4216, 40
  %v4344 = vpop.permute.xlu0 %4343
  %v4345 = vadd.f32 %v4089, %v4218
  %v4346 = vadd.f32 %v4090, %v4220
  %v4347 = vadd.f32 %v4091, %v4222
  %v4348 = vadd.f32 %v4092, %v4224
  %v4349 = vadd.f32 %v4093, %v4226
  %v4350 = vadd.f32 %v4094, %v4228
  %v4351 = vadd.f32 %v4095, %v4230
  %v4352 = vadd.f32 %v4096, %v4232
  %v4353 = vadd.f32 %v4097, %v4234
  %v4354 = vadd.f32 %v4098, %v4236
  %v4355 = vadd.f32 %v4099, %v4238
  %v4356 = vadd.f32 %v4100, %v4240
  %v4357 = vadd.f32 %v4101, %v4242
  %v4358 = vadd.f32 %v4102, %v4244
  %v4359 = vadd.f32 %v4103, %v4246
  %v4360 = vadd.f32 %v4104, %v4248
  %v4361 = vadd.f32 %v4105, %v4250
  %v4362 = vadd.f32 %v4106, %v4252
  %v4363 = vadd.f32 %v4107, %v4254
  %v4364 = vadd.f32 %v4108, %v4256
  %v4365 = vadd.f32 %v4109, %v4258
  %v4366 = vadd.f32 %v4110, %v4260
  %v4367 = vadd.f32 %v4111, %v4262
  %v4368 = vadd.f32 %v4112, %v4264
  %v4369 = vadd.f32 %v4113, %v4266
  %v4370 = vadd.f32 %v4114, %v4268
  %v4371 = vadd.f32 %v4115, %v4270
  %v4372 = vadd.f32 %v4116, %v4272
  %v4373 = vadd.f32 %v4117, %v4274
  %v4374 = vadd.f32 %v4118, %v4276
  %v4375 = vadd.f32 %v4119, %v4278
  %v4376 = vadd.f32 %v4120, %v4280
  %v4377 = vadd.f32 %v4121, %v4282
  %v4378 = vadd.f32 %v4122, %v4284
  %v4379 = vadd.f32 %v4123, %v4286
  %v4380 = vadd.f32 %v4124, %v4288
  %v4381 = vadd.f32 %v4125, %v4290
  %v4382 = vadd.f32 %v4126, %v4292
  %v4383 = vadd.f32 %v4127, %v4294
  %v4384 = vadd.f32 %v4128, %v4296
  %v4385 = vadd.f32 %v4129, %v4298
  %v4386 = vadd.f32 %v4130, %v4300
  %v4387 = vadd.f32 %v4131, %v4302
  %v4388 = vadd.f32 %v4132, %v4304
  %v4389 = vadd.f32 %v4133, %v4306
  %v4390 = vadd.f32 %v4134, %v4308
  %v4391 = vadd.f32 %v4135, %v4310
  %v4392 = vadd.f32 %v4136, %v4312
  %v4393 = vadd.f32 %v4137, %v4314
  %v4394 = vadd.f32 %v4138, %v4316
  %v4395 = vadd.f32 %v4139, %v4318
  %v4396 = vadd.f32 %v4140, %v4320
  %v4397 = vadd.f32 %v4141, %v4322
  %v4398 = vadd.f32 %v4142, %v4324
  %v4399 = vadd.f32 %v4143, %v4326
  %v4400 = vadd.f32 %v4144, %v4328
  %v4401 = vadd.f32 %v4145, %v4330
  %v4402 = vadd.f32 %v4146, %v4332
  %v4403 = vadd.f32 %v4147, %v4334
  %v4404 = vadd.f32 %v4148, %v4336
  %v4405 = vadd.f32 %v4149, %v4338
  %v4406 = vadd.f32 %v4150, %v4340
  %v4407 = vadd.f32 %v4151, %v4342
  %v4408 = vadd.f32 %v4152, %v4344
  %s4409 = scalar_lea.vmem [#allocation2], 48
  %v4410 = vld [vmem:[%s4409] sm:$0xff]
  %v4411 = vld [vmem:[%s4409 + $0x8] sm:$0xff]
  %v4412 = vld [vmem:[%s4409 + $0x18] sm:$0xff]
  %v4413 = vld [vmem:[%s4409 + $0x20] sm:$0xff]
  %v4414 = vld [vmem:[%s4409 + $0x30] sm:$0xff]
  %v4415 = vld [vmem:[%s4409 + $0x38] sm:$0xff]
  %v4416 = vld [vmem:[%s4409 + $0x48] sm:$0xff]
  %v4417 = vld [vmem:[%s4409 + $0x50] sm:$0xff]
  %v4418 = vld [vmem:[%s4409 + $0x60] sm:$0xff]
  %v4419 = vld [vmem:[%s4409 + $0x68] sm:$0xff]
  %v4420 = vld [vmem:[%s4409 + $0x78] sm:$0xff]
  %v4421 = vld [vmem:[%s4409 + $0x80] sm:$0xff]
  %v4422 = vld [vmem:[%s4409 + $0x90] sm:$0xff]
  %v4423 = vld [vmem:[%s4409 + $0x98] sm:$0xff]
  %v4424 = vld [vmem:[%s4409 + $0xa8] sm:$0xff]
  %v4425 = vld [vmem:[%s4409 + $0xb0] sm:$0xff]
  %v4426 = vld [vmem:[%s4409 + $0xc0] sm:$0xff]
  %v4427 = vld [vmem:[%s4409 + $0xc8] sm:$0xff]
  %v4428 = vld [vmem:[%s4409 + $0xd8] sm:$0xff]
  %v4429 = vld [vmem:[%s4409 + $0xe0] sm:$0xff]
  %v4430 = vld [vmem:[%s4409 + $0xf0] sm:$0xff]
  %v4431 = vld [vmem:[%s4409 + $0xf8] sm:$0xff]
  %v4432 = vld [vmem:[%s4409 + $0x108] sm:$0xff]
  %v4433 = vld [vmem:[%s4409 + $0x110] sm:$0xff]
  %v4434 = vld [vmem:[%s4409 + $0x120] sm:$0xff]
  %v4435 = vld [vmem:[%s4409 + $0x128] sm:$0xff]
  %v4436 = vld [vmem:[%s4409 + $0x138] sm:$0xff]
  %v4437 = vld [vmem:[%s4409 + $0x140] sm:$0xff]
  %v4438 = vld [vmem:[%s4409 + $0x150] sm:$0xff]
  %v4439 = vld [vmem:[%s4409 + $0x158] sm:$0xff]
  %v4440 = vld [vmem:[%s4409 + $0x168] sm:$0xff]
  %v4441 = vld [vmem:[%s4409 + $0x170] sm:$0xff]
  %v4442 = vld [vmem:[%s4409 + $0x1b0] sm:$0xff]
  %v4443 = vld [vmem:[%s4409 + $0x1b8] sm:$0xff]
  %v4444 = vld [vmem:[%s4409 + $0x1c8] sm:$0xff]
  %v4445 = vld [vmem:[%s4409 + $0x1d0] sm:$0xff]
  %v4446 = vld [vmem:[%s4409 + $0x1e0] sm:$0xff]
  %v4447 = vld [vmem:[%s4409 + $0x1e8] sm:$0xff]
  %v4448 = vld [vmem:[%s4409 + $0x1f8] sm:$0xff]
  %v4449 = vld [vmem:[%s4409 + $0x200] sm:$0xff]
  %v4450 = vld [vmem:[%s4409 + $0x210] sm:$0xff]
  %v4451 = vld [vmem:[%s4409 + $0x218] sm:$0xff]
  %v4452 = vld [vmem:[%s4409 + $0x228] sm:$0xff]
  %v4453 = vld [vmem:[%s4409 + $0x230] sm:$0xff]
  %v4454 = vld [vmem:[%s4409 + $0x240] sm:$0xff]
  %v4455 = vld [vmem:[%s4409 + $0x248] sm:$0xff]
  %v4456 = vld [vmem:[%s4409 + $0x258] sm:$0xff]
  %v4457 = vld [vmem:[%s4409 + $0x260] sm:$0xff]
  %v4458 = vld [vmem:[%s4409 + $0x270] sm:$0xff]
  %v4459 = vld [vmem:[%s4409 + $0x278] sm:$0xff]
  %v4460 = vld [vmem:[%s4409 + $0x288] sm:$0xff]
  %v4461 = vld [vmem:[%s4409 + $0x290] sm:$0xff]
  %v4462 = vld [vmem:[%s4409 + $0x2a0] sm:$0xff]
  %v4463 = vld [vmem:[%s4409 + $0x2a8] sm:$0xff]
  %v4464 = vld [vmem:[%s4409 + $0x2b8] sm:$0xff]
  %v4465 = vld [vmem:[%s4409 + $0x2c0] sm:$0xff]
  %v4466 = vld [vmem:[%s4409 + $0x2d0] sm:$0xff]
  %v4467 = vld [vmem:[%s4409 + $0x2d8] sm:$0xff]
  %v4468 = vld [vmem:[%s4409 + $0x2e8] sm:$0xff]
  %v4469 = vld [vmem:[%s4409 + $0x2f0] sm:$0xff]
  %v4470 = vld [vmem:[%s4409 + $0x300] sm:$0xff]
  %v4471 = vld [vmem:[%s4409 + $0x308] sm:$0xff]
  %v4472 = vld [vmem:[%s4409 + $0x318] sm:$0xff]
  %v4473 = vld [vmem:[%s4409 + $0x320] sm:$0xff]
  %4474 = vrot.lane.b32.xlu0 %v4410, 48
  %v4475 = vpop.permute.xlu0 %4474
  %4476 = vrot.lane.b32.xlu0 %v4411, 48
  %v4477 = vpop.permute.xlu0 %4476
  %4478 = vrot.lane.b32.xlu0 %v4412, 48
  %v4479 = vpop.permute.xlu0 %4478
  %4480 = vrot.lane.b32.xlu0 %v4413, 48
  %v4481 = vpop.permute.xlu0 %4480
  %4482 = vrot.lane.b32.xlu0 %v4414, 48
  %v4483 = vpop.permute.xlu0 %4482
  %4484 = vrot.lane.b32.xlu0 %v4415, 48
  %v4485 = vpop.permute.xlu0 %4484
  %4486 = vrot.lane.b32.xlu0 %v4416, 48
  %v4487 = vpop.permute.xlu0 %4486
  %4488 = vrot.lane.b32.xlu0 %v4417, 48
  %v4489 = vpop.permute.xlu0 %4488
  %4490 = vrot.lane.b32.xlu0 %v4418, 48
  %v4491 = vpop.permute.xlu0 %4490
  %4492 = vrot.lane.b32.xlu0 %v4419, 48
  %v4493 = vpop.permute.xlu0 %4492
  %4494 = vrot.lane.b32.xlu0 %v4420, 48
  %v4495 = vpop.permute.xlu0 %4494
  %4496 = vrot.lane.b32.xlu0 %v4421, 48
  %v4497 = vpop.permute.xlu0 %4496
  %4498 = vrot.lane.b32.xlu0 %v4422, 48
  %v4499 = vpop.permute.xlu0 %4498
  %4500 = vrot.lane.b32.xlu0 %v4423, 48
  %v4501 = vpop.permute.xlu0 %4500
  %4502 = vrot.lane.b32.xlu0 %v4424, 48
  %v4503 = vpop.permute.xlu0 %4502
  %4504 = vrot.lane.b32.xlu0 %v4425, 48
  %v4505 = vpop.permute.xlu0 %4504
  %4506 = vrot.lane.b32.xlu0 %v4426, 48
  %v4507 = vpop.permute.xlu0 %4506
  %4508 = vrot.lane.b32.xlu0 %v4427, 48
  %v4509 = vpop.permute.xlu0 %4508
  %4510 = vrot.lane.b32.xlu0 %v4428, 48
  %v4511 = vpop.permute.xlu0 %4510
  %4512 = vrot.lane.b32.xlu0 %v4429, 48
  %v4513 = vpop.permute.xlu0 %4512
  %4514 = vrot.lane.b32.xlu0 %v4430, 48
  %v4515 = vpop.permute.xlu0 %4514
  %4516 = vrot.lane.b32.xlu0 %v4431, 48
  %v4517 = vpop.permute.xlu0 %4516
  %4518 = vrot.lane.b32.xlu0 %v4432, 48
  %v4519 = vpop.permute.xlu0 %4518
  %4520 = vrot.lane.b32.xlu0 %v4433, 48
  %v4521 = vpop.permute.xlu0 %4520
  %4522 = vrot.lane.b32.xlu0 %v4434, 48
  %v4523 = vpop.permute.xlu0 %4522
  %4524 = vrot.lane.b32.xlu0 %v4435, 48
  %v4525 = vpop.permute.xlu0 %4524
  %4526 = vrot.lane.b32.xlu0 %v4436, 48
  %v4527 = vpop.permute.xlu0 %4526
  %4528 = vrot.lane.b32.xlu0 %v4437, 48
  %v4529 = vpop.permute.xlu0 %4528
  %4530 = vrot.lane.b32.xlu0 %v4438, 48
  %v4531 = vpop.permute.xlu0 %4530
  %4532 = vrot.lane.b32.xlu0 %v4439, 48
  %v4533 = vpop.permute.xlu0 %4532
  %4534 = vrot.lane.b32.xlu0 %v4440, 48
  %v4535 = vpop.permute.xlu0 %4534
  %4536 = vrot.lane.b32.xlu0 %v4441, 48
  %v4537 = vpop.permute.xlu0 %4536
  %4538 = vrot.lane.b32.xlu0 %v4442, 48
  %v4539 = vpop.permute.xlu0 %4538
  %4540 = vrot.lane.b32.xlu0 %v4443, 48
  %v4541 = vpop.permute.xlu0 %4540
  %4542 = vrot.lane.b32.xlu0 %v4444, 48
  %v4543 = vpop.permute.xlu0 %4542
  %4544 = vrot.lane.b32.xlu0 %v4445, 48
  %v4545 = vpop.permute.xlu0 %4544
  %4546 = vrot.lane.b32.xlu0 %v4446, 48
  %v4547 = vpop.permute.xlu0 %4546
  %4548 = vrot.lane.b32.xlu0 %v4447, 48
  %v4549 = vpop.permute.xlu0 %4548
  %4550 = vrot.lane.b32.xlu0 %v4448, 48
  %v4551 = vpop.permute.xlu0 %4550
  %4552 = vrot.lane.b32.xlu0 %v4449, 48
  %v4553 = vpop.permute.xlu0 %4552
  %4554 = vrot.lane.b32.xlu0 %v4450, 48
  %v4555 = vpop.permute.xlu0 %4554
  %4556 = vrot.lane.b32.xlu0 %v4451, 48
  %v4557 = vpop.permute.xlu0 %4556
  %4558 = vrot.lane.b32.xlu0 %v4452, 48
  %v4559 = vpop.permute.xlu0 %4558
  %4560 = vrot.lane.b32.xlu0 %v4453, 48
  %v4561 = vpop.permute.xlu0 %4560
  %4562 = vrot.lane.b32.xlu0 %v4454, 48
  %v4563 = vpop.permute.xlu0 %4562
  %4564 = vrot.lane.b32.xlu0 %v4455, 48
  %v4565 = vpop.permute.xlu0 %4564
  %4566 = vrot.lane.b32.xlu0 %v4456, 48
  %v4567 = vpop.permute.xlu0 %4566
  %4568 = vrot.lane.b32.xlu0 %v4457, 48
  %v4569 = vpop.permute.xlu0 %4568
  %4570 = vrot.lane.b32.xlu0 %v4458, 48
  %v4571 = vpop.permute.xlu0 %4570
  %4572 = vrot.lane.b32.xlu0 %v4459, 48
  %v4573 = vpop.permute.xlu0 %4572
  %4574 = vrot.lane.b32.xlu0 %v4460, 48
  %v4575 = vpop.permute.xlu0 %4574
  %4576 = vrot.lane.b32.xlu0 %v4461, 48
  %v4577 = vpop.permute.xlu0 %4576
  %4578 = vrot.lane.b32.xlu0 %v4462, 48
  %v4579 = vpop.permute.xlu0 %4578
  %4580 = vrot.lane.b32.xlu0 %v4463, 48
  %v4581 = vpop.permute.xlu0 %4580
  %4582 = vrot.lane.b32.xlu0 %v4464, 48
  %v4583 = vpop.permute.xlu0 %4582
  %4584 = vrot.lane.b32.xlu0 %v4465, 48
  %v4585 = vpop.permute.xlu0 %4584
  %4586 = vrot.lane.b32.xlu0 %v4466, 48
  %v4587 = vpop.permute.xlu0 %4586
  %4588 = vrot.lane.b32.xlu0 %v4467, 48
  %v4589 = vpop.permute.xlu0 %4588
  %4590 = vrot.lane.b32.xlu0 %v4468, 48
  %v4591 = vpop.permute.xlu0 %4590
  %4592 = vrot.lane.b32.xlu0 %v4469, 48
  %v4593 = vpop.permute.xlu0 %4592
  %4594 = vrot.lane.b32.xlu0 %v4470, 48
  %v4595 = vpop.permute.xlu0 %4594
  %4596 = vrot.lane.b32.xlu0 %v4471, 48
  %v4597 = vpop.permute.xlu0 %4596
  %4598 = vrot.lane.b32.xlu0 %v4472, 48
  %v4599 = vpop.permute.xlu0 %4598
  %4600 = vrot.lane.b32.xlu0 %v4473, 48
  %v4601 = vpop.permute.xlu0 %4600
  %v4602 = vadd.f32 %v4345, %v4475
  %v4603 = vadd.f32 %v4346, %v4477
  %v4604 = vadd.f32 %v4347, %v4479
  %v4605 = vadd.f32 %v4348, %v4481
  %v4606 = vadd.f32 %v4349, %v4483
  %v4607 = vadd.f32 %v4350, %v4485
  %v4608 = vadd.f32 %v4351, %v4487
  %v4609 = vadd.f32 %v4352, %v4489
  %v4610 = vadd.f32 %v4353, %v4491
  %v4611 = vadd.f32 %v4354, %v4493
  %v4612 = vadd.f32 %v4355, %v4495
  %v4613 = vadd.f32 %v4356, %v4497
  %v4614 = vadd.f32 %v4357, %v4499
  %v4615 = vadd.f32 %v4358, %v4501
  %v4616 = vadd.f32 %v4359, %v4503
  %v4617 = vadd.f32 %v4360, %v4505
  %v4618 = vadd.f32 %v4361, %v4507
  %v4619 = vadd.f32 %v4362, %v4509
  %v4620 = vadd.f32 %v4363, %v4511
  %v4621 = vadd.f32 %v4364, %v4513
  %v4622 = vadd.f32 %v4365, %v4515
  %v4623 = vadd.f32 %v4366, %v4517
  %v4624 = vadd.f32 %v4367, %v4519
  %v4625 = vadd.f32 %v4368, %v4521
  %v4626 = vadd.f32 %v4369, %v4523
  %v4627 = vadd.f32 %v4370, %v4525
  %v4628 = vadd.f32 %v4371, %v4527
  %v4629 = vadd.f32 %v4372, %v4529
  %v4630 = vadd.f32 %v4373, %v4531
  %v4631 = vadd.f32 %v4374, %v4533
  %v4632 = vadd.f32 %v4375, %v4535
  %v4633 = vadd.f32 %v4376, %v4537
  %v4634 = vadd.f32 %v4377, %v4539
  %v4635 = vadd.f32 %v4378, %v4541
  %v4636 = vadd.f32 %v4379, %v4543
  %v4637 = vadd.f32 %v4380, %v4545
  %v4638 = vadd.f32 %v4381, %v4547
  %v4639 = vadd.f32 %v4382, %v4549
  %v4640 = vadd.f32 %v4383, %v4551
  %v4641 = vadd.f32 %v4384, %v4553
  %v4642 = vadd.f32 %v4385, %v4555
  %v4643 = vadd.f32 %v4386, %v4557
  %v4644 = vadd.f32 %v4387, %v4559
  %v4645 = vadd.f32 %v4388, %v4561
  %v4646 = vadd.f32 %v4389, %v4563
  %v4647 = vadd.f32 %v4390, %v4565
  %v4648 = vadd.f32 %v4391, %v4567
  %v4649 = vadd.f32 %v4392, %v4569
  %v4650 = vadd.f32 %v4393, %v4571
  %v4651 = vadd.f32 %v4394, %v4573
  %v4652 = vadd.f32 %v4395, %v4575
  %v4653 = vadd.f32 %v4396, %v4577
  %v4654 = vadd.f32 %v4397, %v4579
  %v4655 = vadd.f32 %v4398, %v4581
  %v4656 = vadd.f32 %v4399, %v4583
  %v4657 = vadd.f32 %v4400, %v4585
  %v4658 = vadd.f32 %v4401, %v4587
  %v4659 = vadd.f32 %v4402, %v4589
  %v4660 = vadd.f32 %v4403, %v4591
  %v4661 = vadd.f32 %v4404, %v4593
  %v4662 = vadd.f32 %v4405, %v4595
  %v4663 = vadd.f32 %v4406, %v4597
  %v4664 = vadd.f32 %v4407, %v4599
  %v4665 = vadd.f32 %v4408, %v4601
  %v4666 = vld [vmem:[%s4409 + $0x1] sm:$0xff]
  %v4667 = vld [vmem:[%s4409 + $0x9] sm:$0xff]
  %v4668 = vld [vmem:[%s4409 + $0x19] sm:$0xff]
  %v4669 = vld [vmem:[%s4409 + $0x21] sm:$0xff]
  %v4670 = vld [vmem:[%s4409 + $0x31] sm:$0xff]
  %v4671 = vld [vmem:[%s4409 + $0x39] sm:$0xff]
  %v4672 = vld [vmem:[%s4409 + $0x49] sm:$0xff]
  %v4673 = vld [vmem:[%s4409 + $0x51] sm:$0xff]
  %v4674 = vld [vmem:[%s4409 + $0x61] sm:$0xff]
  %v4675 = vld [vmem:[%s4409 + $0x69] sm:$0xff]
  %v4676 = vld [vmem:[%s4409 + $0x79] sm:$0xff]
  %v4677 = vld [vmem:[%s4409 + $0x81] sm:$0xff]
  %v4678 = vld [vmem:[%s4409 + $0x91] sm:$0xff]
  %v4679 = vld [vmem:[%s4409 + $0x99] sm:$0xff]
  %v4680 = vld [vmem:[%s4409 + $0xa9] sm:$0xff]
  %v4681 = vld [vmem:[%s4409 + $0xb1] sm:$0xff]
  %v4682 = vld [vmem:[%s4409 + $0xc1] sm:$0xff]
  %v4683 = vld [vmem:[%s4409 + $0xc9] sm:$0xff]
  %v4684 = vld [vmem:[%s4409 + $0xd9] sm:$0xff]
  %v4685 = vld [vmem:[%s4409 + $0xe1] sm:$0xff]
  %v4686 = vld [vmem:[%s4409 + $0xf1] sm:$0xff]
  %v4687 = vld [vmem:[%s4409 + $0xf9] sm:$0xff]
  %v4688 = vld [vmem:[%s4409 + $0x109] sm:$0xff]
  %v4689 = vld [vmem:[%s4409 + $0x111] sm:$0xff]
  %v4690 = vld [vmem:[%s4409 + $0x121] sm:$0xff]
  %v4691 = vld [vmem:[%s4409 + $0x129] sm:$0xff]
  %v4692 = vld [vmem:[%s4409 + $0x139] sm:$0xff]
  %v4693 = vld [vmem:[%s4409 + $0x141] sm:$0xff]
  %v4694 = vld [vmem:[%s4409 + $0x151] sm:$0xff]
  %v4695 = vld [vmem:[%s4409 + $0x159] sm:$0xff]
  %v4696 = vld [vmem:[%s4409 + $0x169] sm:$0xff]
  %v4697 = vld [vmem:[%s4409 + $0x171] sm:$0xff]
  %v4698 = vld [vmem:[%s4409 + $0x1b1] sm:$0xff]
  %v4699 = vld [vmem:[%s4409 + $0x1b9] sm:$0xff]
  %v4700 = vld [vmem:[%s4409 + $0x1c9] sm:$0xff]
  %v4701 = vld [vmem:[%s4409 + $0x1d1] sm:$0xff]
  %v4702 = vld [vmem:[%s4409 + $0x1e1] sm:$0xff]
  %v4703 = vld [vmem:[%s4409 + $0x1e9] sm:$0xff]
  %v4704 = vld [vmem:[%s4409 + $0x1f9] sm:$0xff]
  %v4705 = vld [vmem:[%s4409 + $0x201] sm:$0xff]
  %v4706 = vld [vmem:[%s4409 + $0x211] sm:$0xff]
  %v4707 = vld [vmem:[%s4409 + $0x219] sm:$0xff]
  %v4708 = vld [vmem:[%s4409 + $0x229] sm:$0xff]
  %v4709 = vld [vmem:[%s4409 + $0x231] sm:$0xff]
  %v4710 = vld [vmem:[%s4409 + $0x241] sm:$0xff]
  %v4711 = vld [vmem:[%s4409 + $0x249] sm:$0xff]
  %v4712 = vld [vmem:[%s4409 + $0x259] sm:$0xff]
  %v4713 = vld [vmem:[%s4409 + $0x261] sm:$0xff]
  %v4714 = vld [vmem:[%s4409 + $0x271] sm:$0xff]
  %v4715 = vld [vmem:[%s4409 + $0x279] sm:$0xff]
  %v4716 = vld [vmem:[%s4409 + $0x289] sm:$0xff]
  %v4717 = vld [vmem:[%s4409 + $0x291] sm:$0xff]
  %v4718 = vld [vmem:[%s4409 + $0x2a1] sm:$0xff]
  %v4719 = vld [vmem:[%s4409 + $0x2a9] sm:$0xff]
  %v4720 = vld [vmem:[%s4409 + $0x2b9] sm:$0xff]
  %v4721 = vld [vmem:[%s4409 + $0x2c1] sm:$0xff]
  %v4722 = vld [vmem:[%s4409 + $0x2d1] sm:$0xff]
  %v4723 = vld [vmem:[%s4409 + $0x2d9] sm:$0xff]
  %v4724 = vld [vmem:[%s4409 + $0x2e9] sm:$0xff]
  %v4725 = vld [vmem:[%s4409 + $0x2f1] sm:$0xff]
  %v4726 = vld [vmem:[%s4409 + $0x301] sm:$0xff]
  %v4727 = vld [vmem:[%s4409 + $0x309] sm:$0xff]
  %v4728 = vld [vmem:[%s4409 + $0x319] sm:$0xff]
  %v4729 = vld [vmem:[%s4409 + $0x321] sm:$0xff]
  %4730 = vrot.lane.b32.xlu0 %v4666, 56
  %v4731 = vpop.permute.xlu0 %4730
  %4732 = vrot.lane.b32.xlu0 %v4667, 56
  %v4733 = vpop.permute.xlu0 %4732
  %4734 = vrot.lane.b32.xlu0 %v4668, 56
  %v4735 = vpop.permute.xlu0 %4734
  %4736 = vrot.lane.b32.xlu0 %v4669, 56
  %v4737 = vpop.permute.xlu0 %4736
  %4738 = vrot.lane.b32.xlu0 %v4670, 56
  %v4739 = vpop.permute.xlu0 %4738
  %4740 = vrot.lane.b32.xlu0 %v4671, 56
  %v4741 = vpop.permute.xlu0 %4740
  %4742 = vrot.lane.b32.xlu0 %v4672, 56
  %v4743 = vpop.permute.xlu0 %4742
  %4744 = vrot.lane.b32.xlu0 %v4673, 56
  %v4745 = vpop.permute.xlu0 %4744
  %4746 = vrot.lane.b32.xlu0 %v4674, 56
  %v4747 = vpop.permute.xlu0 %4746
  %4748 = vrot.lane.b32.xlu0 %v4675, 56
  %v4749 = vpop.permute.xlu0 %4748
  %4750 = vrot.lane.b32.xlu0 %v4676, 56
  %v4751 = vpop.permute.xlu0 %4750
  %4752 = vrot.lane.b32.xlu0 %v4677, 56
  %v4753 = vpop.permute.xlu0 %4752
  %4754 = vrot.lane.b32.xlu0 %v4678, 56
  %v4755 = vpop.permute.xlu0 %4754
  %4756 = vrot.lane.b32.xlu0 %v4679, 56
  %v4757 = vpop.permute.xlu0 %4756
  %4758 = vrot.lane.b32.xlu0 %v4680, 56
  %v4759 = vpop.permute.xlu0 %4758
  %4760 = vrot.lane.b32.xlu0 %v4681, 56
  %v4761 = vpop.permute.xlu0 %4760
  %4762 = vrot.lane.b32.xlu0 %v4682, 56
  %v4763 = vpop.permute.xlu0 %4762
  %4764 = vrot.lane.b32.xlu0 %v4683, 56
  %v4765 = vpop.permute.xlu0 %4764
  %4766 = vrot.lane.b32.xlu0 %v4684, 56
  %v4767 = vpop.permute.xlu0 %4766
  %4768 = vrot.lane.b32.xlu0 %v4685, 56
  %v4769 = vpop.permute.xlu0 %4768
  %4770 = vrot.lane.b32.xlu0 %v4686, 56
  %v4771 = vpop.permute.xlu0 %4770
  %4772 = vrot.lane.b32.xlu0 %v4687, 56
  %v4773 = vpop.permute.xlu0 %4772
  %4774 = vrot.lane.b32.xlu0 %v4688, 56
  %v4775 = vpop.permute.xlu0 %4774
  %4776 = vrot.lane.b32.xlu0 %v4689, 56
  %v4777 = vpop.permute.xlu0 %4776
  %4778 = vrot.lane.b32.xlu0 %v4690, 56
  %v4779 = vpop.permute.xlu0 %4778
  %4780 = vrot.lane.b32.xlu0 %v4691, 56
  %v4781 = vpop.permute.xlu0 %4780
  %4782 = vrot.lane.b32.xlu0 %v4692, 56
  %v4783 = vpop.permute.xlu0 %4782
  %4784 = vrot.lane.b32.xlu0 %v4693, 56
  %v4785 = vpop.permute.xlu0 %4784
  %4786 = vrot.lane.b32.xlu0 %v4694, 56
  %v4787 = vpop.permute.xlu0 %4786
  %4788 = vrot.lane.b32.xlu0 %v4695, 56
  %v4789 = vpop.permute.xlu0 %4788
  %4790 = vrot.lane.b32.xlu0 %v4696, 56
  %v4791 = vpop.permute.xlu0 %4790
  %4792 = vrot.lane.b32.xlu0 %v4697, 56
  %v4793 = vpop.permute.xlu0 %4792
  %4794 = vrot.lane.b32.xlu0 %v4698, 56
  %v4795 = vpop.permute.xlu0 %4794
  %4796 = vrot.lane.b32.xlu0 %v4699, 56
  %v4797 = vpop.permute.xlu0 %4796
  %4798 = vrot.lane.b32.xlu0 %v4700, 56
  %v4799 = vpop.permute.xlu0 %4798
  %4800 = vrot.lane.b32.xlu0 %v4701, 56
  %v4801 = vpop.permute.xlu0 %4800
  %4802 = vrot.lane.b32.xlu0 %v4702, 56
  %v4803 = vpop.permute.xlu0 %4802
  %4804 = vrot.lane.b32.xlu0 %v4703, 56
  %v4805 = vpop.permute.xlu0 %4804
  %4806 = vrot.lane.b32.xlu0 %v4704, 56
  %v4807 = vpop.permute.xlu0 %4806
  %4808 = vrot.lane.b32.xlu0 %v4705, 56
  %v4809 = vpop.permute.xlu0 %4808
  %4810 = vrot.lane.b32.xlu0 %v4706, 56
  %v4811 = vpop.permute.xlu0 %4810
  %4812 = vrot.lane.b32.xlu0 %v4707, 56
  %v4813 = vpop.permute.xlu0 %4812
  %4814 = vrot.lane.b32.xlu0 %v4708, 56
  %v4815 = vpop.permute.xlu0 %4814
  %4816 = vrot.lane.b32.xlu0 %v4709, 56
  %v4817 = vpop.permute.xlu0 %4816
  %4818 = vrot.lane.b32.xlu0 %v4710, 56
  %v4819 = vpop.permute.xlu0 %4818
  %4820 = vrot.lane.b32.xlu0 %v4711, 56
  %v4821 = vpop.permute.xlu0 %4820
  %4822 = vrot.lane.b32.xlu0 %v4712, 56
  %v4823 = vpop.permute.xlu0 %4822
  %4824 = vrot.lane.b32.xlu0 %v4713, 56
  %v4825 = vpop.permute.xlu0 %4824
  %4826 = vrot.lane.b32.xlu0 %v4714, 56
  %v4827 = vpop.permute.xlu0 %4826
  %4828 = vrot.lane.b32.xlu0 %v4715, 56
  %v4829 = vpop.permute.xlu0 %4828
  %4830 = vrot.lane.b32.xlu0 %v4716, 56
  %v4831 = vpop.permute.xlu0 %4830
  %4832 = vrot.lane.b32.xlu0 %v4717, 56
  %v4833 = vpop.permute.xlu0 %4832
  %4834 = vrot.lane.b32.xlu0 %v4718, 56
  %v4835 = vpop.permute.xlu0 %4834
  %4836 = vrot.lane.b32.xlu0 %v4719, 56
  %v4837 = vpop.permute.xlu0 %4836
  %4838 = vrot.lane.b32.xlu0 %v4720, 56
  %v4839 = vpop.permute.xlu0 %4838
  %4840 = vrot.lane.b32.xlu0 %v4721, 56
  %v4841 = vpop.permute.xlu0 %4840
  %4842 = vrot.lane.b32.xlu0 %v4722, 56
  %v4843 = vpop.permute.xlu0 %4842
  %4844 = vrot.lane.b32.xlu0 %v4723, 56
  %v4845 = vpop.permute.xlu0 %4844
  %4846 = vrot.lane.b32.xlu0 %v4724, 56
  %v4847 = vpop.permute.xlu0 %4846
  %4848 = vrot.lane.b32.xlu0 %v4725, 56
  %v4849 = vpop.permute.xlu0 %4848
  %4850 = vrot.lane.b32.xlu0 %v4726, 56
  %v4851 = vpop.permute.xlu0 %4850
  %4852 = vrot.lane.b32.xlu0 %v4727, 56
  %v4853 = vpop.permute.xlu0 %4852
  %4854 = vrot.lane.b32.xlu0 %v4728, 56
  %v4855 = vpop.permute.xlu0 %4854
  %4856 = vrot.lane.b32.xlu0 %v4729, 56
  %v4857 = vpop.permute.xlu0 %4856
  %v4858 = vadd.f32 %v4602, %v4731
  %v4859 = vadd.f32 %v4603, %v4733
  %v4860 = vadd.f32 %v4604, %v4735
  %v4861 = vadd.f32 %v4605, %v4737
  %v4862 = vadd.f32 %v4606, %v4739
  %v4863 = vadd.f32 %v4607, %v4741
  %v4864 = vadd.f32 %v4608, %v4743
  %v4865 = vadd.f32 %v4609, %v4745
  %v4866 = vadd.f32 %v4610, %v4747
  %v4867 = vadd.f32 %v4611, %v4749
  %v4868 = vadd.f32 %v4612, %v4751
  %v4869 = vadd.f32 %v4613, %v4753
  %v4870 = vadd.f32 %v4614, %v4755
  %v4871 = vadd.f32 %v4615, %v4757
  %v4872 = vadd.f32 %v4616, %v4759
  %v4873 = vadd.f32 %v4617, %v4761
  %v4874 = vadd.f32 %v4618, %v4763
  %v4875 = vadd.f32 %v4619, %v4765
  %v4876 = vadd.f32 %v4620, %v4767
  %v4877 = vadd.f32 %v4621, %v4769
  %v4878 = vadd.f32 %v4622, %v4771
  %v4879 = vadd.f32 %v4623, %v4773
  %v4880 = vadd.f32 %v4624, %v4775
  %v4881 = vadd.f32 %v4625, %v4777
  %v4882 = vadd.f32 %v4626, %v4779
  %v4883 = vadd.f32 %v4627, %v4781
  %v4884 = vadd.f32 %v4628, %v4783
  %v4885 = vadd.f32 %v4629, %v4785
  %v4886 = vadd.f32 %v4630, %v4787
  %v4887 = vadd.f32 %v4631, %v4789
  %v4888 = vadd.f32 %v4632, %v4791
  %v4889 = vadd.f32 %v4633, %v4793
  %v4890 = vadd.f32 %v4634, %v4795
  %v4891 = vadd.f32 %v4635, %v4797
  %v4892 = vadd.f32 %v4636, %v4799
  %v4893 = vadd.f32 %v4637, %v4801
  %v4894 = vadd.f32 %v4638, %v4803
  %v4895 = vadd.f32 %v4639, %v4805
  %v4896 = vadd.f32 %v4640, %v4807
  %v4897 = vadd.f32 %v4641, %v4809
  %v4898 = vadd.f32 %v4642, %v4811
  %v4899 = vadd.f32 %v4643, %v4813
  %v4900 = vadd.f32 %v4644, %v4815
  %v4901 = vadd.f32 %v4645, %v4817
  %v4902 = vadd.f32 %v4646, %v4819
  %v4903 = vadd.f32 %v4647, %v4821
  %v4904 = vadd.f32 %v4648, %v4823
  %v4905 = vadd.f32 %v4649, %v4825
  %v4906 = vadd.f32 %v4650, %v4827
  %v4907 = vadd.f32 %v4651, %v4829
  %v4908 = vadd.f32 %v4652, %v4831
  %v4909 = vadd.f32 %v4653, %v4833
  %v4910 = vadd.f32 %v4654, %v4835
  %v4911 = vadd.f32 %v4655, %v4837
  %v4912 = vadd.f32 %v4656, %v4839
  %v4913 = vadd.f32 %v4657, %v4841
  %v4914 = vadd.f32 %v4658, %v4843
  %v4915 = vadd.f32 %v4659, %v4845
  %v4916 = vadd.f32 %v4660, %v4847
  %v4917 = vadd.f32 %v4661, %v4849
  %v4918 = vadd.f32 %v4662, %v4851
  %v4919 = vadd.f32 %v4663, %v4853
  %v4920 = vadd.f32 %v4664, %v4855
  %v4921 = vadd.f32 %v4665, %v4857
  %v4922 = vld [vmem:[%s4409 + $0x2] sm:$0xff]
  %v4923 = vld [vmem:[%s4409 + $0xa] sm:$0xff]
  %v4924 = vld [vmem:[%s4409 + $0x1a] sm:$0xff]
  %v4925 = vld [vmem:[%s4409 + $0x22] sm:$0xff]
  %v4926 = vld [vmem:[%s4409 + $0x32] sm:$0xff]
  %v4927 = vld [vmem:[%s4409 + $0x3a] sm:$0xff]
  %v4928 = vld [vmem:[%s4409 + $0x4a] sm:$0xff]
  %v4929 = vld [vmem:[%s4409 + $0x52] sm:$0xff]
  %v4930 = vld [vmem:[%s4409 + $0x62] sm:$0xff]
  %v4931 = vld [vmem:[%s4409 + $0x6a] sm:$0xff]
  %v4932 = vld [vmem:[%s4409 + $0x7a] sm:$0xff]
  %v4933 = vld [vmem:[%s4409 + $0x82] sm:$0xff]
  %v4934 = vld [vmem:[%s4409 + $0x92] sm:$0xff]
  %v4935 = vld [vmem:[%s4409 + $0x9a] sm:$0xff]
  %v4936 = vld [vmem:[%s4409 + $0xaa] sm:$0xff]
  %v4937 = vld [vmem:[%s4409 + $0xb2] sm:$0xff]
  %v4938 = vld [vmem:[%s4409 + $0xc2] sm:$0xff]
  %v4939 = vld [vmem:[%s4409 + $0xca] sm:$0xff]
  %v4940 = vld [vmem:[%s4409 + $0xda] sm:$0xff]
  %v4941 = vld [vmem:[%s4409 + $0xe2] sm:$0xff]
  %v4942 = vld [vmem:[%s4409 + $0xf2] sm:$0xff]
  %v4943 = vld [vmem:[%s4409 + $0xfa] sm:$0xff]
  %v4944 = vld [vmem:[%s4409 + $0x10a] sm:$0xff]
  %v4945 = vld [vmem:[%s4409 + $0x112] sm:$0xff]
  %v4946 = vld [vmem:[%s4409 + $0x122] sm:$0xff]
  %v4947 = vld [vmem:[%s4409 + $0x12a] sm:$0xff]
  %v4948 = vld [vmem:[%s4409 + $0x13a] sm:$0xff]
  %v4949 = vld [vmem:[%s4409 + $0x142] sm:$0xff]
  %v4950 = vld [vmem:[%s4409 + $0x152] sm:$0xff]
  %v4951 = vld [vmem:[%s4409 + $0x15a] sm:$0xff]
  %v4952 = vld [vmem:[%s4409 + $0x16a] sm:$0xff]
  %v4953 = vld [vmem:[%s4409 + $0x172] sm:$0xff]
  %v4954 = vld [vmem:[%s4409 + $0x1b2] sm:$0xff]
  %v4955 = vld [vmem:[%s4409 + $0x1ba] sm:$0xff]
  %v4956 = vld [vmem:[%s4409 + $0x1ca] sm:$0xff]
  %v4957 = vld [vmem:[%s4409 + $0x1d2] sm:$0xff]
  %v4958 = vld [vmem:[%s4409 + $0x1e2] sm:$0xff]
  %v4959 = vld [vmem:[%s4409 + $0x1ea] sm:$0xff]
  %v4960 = vld [vmem:[%s4409 + $0x1fa] sm:$0xff]
  %v4961 = vld [vmem:[%s4409 + $0x202] sm:$0xff]
  %v4962 = vld [vmem:[%s4409 + $0x212] sm:$0xff]
  %v4963 = vld [vmem:[%s4409 + $0x21a] sm:$0xff]
  %v4964 = vld [vmem:[%s4409 + $0x22a] sm:$0xff]
  %v4965 = vld [vmem:[%s4409 + $0x232] sm:$0xff]
  %v4966 = vld [vmem:[%s4409 + $0x242] sm:$0xff]
  %v4967 = vld [vmem:[%s4409 + $0x24a] sm:$0xff]
  %v4968 = vld [vmem:[%s4409 + $0x25a] sm:$0xff]
  %v4969 = vld [vmem:[%s4409 + $0x262] sm:$0xff]
  %v4970 = vld [vmem:[%s4409 + $0x272] sm:$0xff]
  %v4971 = vld [vmem:[%s4409 + $0x27a] sm:$0xff]
  %v4972 = vld [vmem:[%s4409 + $0x28a] sm:$0xff]
  %v4973 = vld [vmem:[%s4409 + $0x292] sm:$0xff]
  %v4974 = vld [vmem:[%s4409 + $0x2a2] sm:$0xff]
  %v4975 = vld [vmem:[%s4409 + $0x2aa] sm:$0xff]
  %v4976 = vld [vmem:[%s4409 + $0x2ba] sm:$0xff]
  %v4977 = vld [vmem:[%s4409 + $0x2c2] sm:$0xff]
  %v4978 = vld [vmem:[%s4409 + $0x2d2] sm:$0xff]
  %v4979 = vld [vmem:[%s4409 + $0x2da] sm:$0xff]
  %v4980 = vld [vmem:[%s4409 + $0x2ea] sm:$0xff]
  %v4981 = vld [vmem:[%s4409 + $0x2f2] sm:$0xff]
  %v4982 = vld [vmem:[%s4409 + $0x302] sm:$0xff]
  %v4983 = vld [vmem:[%s4409 + $0x30a] sm:$0xff]
  %v4984 = vld [vmem:[%s4409 + $0x31a] sm:$0xff]
  %v4985 = vld [vmem:[%s4409 + $0x322] sm:$0xff]
  %4986 = vrot.lane.b32.xlu0 %v4922, 64
  %v4987 = vpop.permute.xlu0 %4986
  %4988 = vrot.lane.b32.xlu0 %v4923, 64
  %v4989 = vpop.permute.xlu0 %4988
  %4990 = vrot.lane.b32.xlu0 %v4924, 64
  %v4991 = vpop.permute.xlu0 %4990
  %4992 = vrot.lane.b32.xlu0 %v4925, 64
  %v4993 = vpop.permute.xlu0 %4992
  %4994 = vrot.lane.b32.xlu0 %v4926, 64
  %v4995 = vpop.permute.xlu0 %4994
  %4996 = vrot.lane.b32.xlu0 %v4927, 64
  %v4997 = vpop.permute.xlu0 %4996
  %4998 = vrot.lane.b32.xlu0 %v4928, 64
  %v4999 = vpop.permute.xlu0 %4998
  %5000 = vrot.lane.b32.xlu0 %v4929, 64
  %v5001 = vpop.permute.xlu0 %5000
  %5002 = vrot.lane.b32.xlu0 %v4930, 64
  %v5003 = vpop.permute.xlu0 %5002
  %5004 = vrot.lane.b32.xlu0 %v4931, 64
  %v5005 = vpop.permute.xlu0 %5004
  %5006 = vrot.lane.b32.xlu0 %v4932, 64
  %v5007 = vpop.permute.xlu0 %5006
  %5008 = vrot.lane.b32.xlu0 %v4933, 64
  %v5009 = vpop.permute.xlu0 %5008
  %5010 = vrot.lane.b32.xlu0 %v4934, 64
  %v5011 = vpop.permute.xlu0 %5010
  %5012 = vrot.lane.b32.xlu0 %v4935, 64
  %v5013 = vpop.permute.xlu0 %5012
  %5014 = vrot.lane.b32.xlu0 %v4936, 64
  %v5015 = vpop.permute.xlu0 %5014
  %5016 = vrot.lane.b32.xlu0 %v4937, 64
  %v5017 = vpop.permute.xlu0 %5016
  %5018 = vrot.lane.b32.xlu0 %v4938, 64
  %v5019 = vpop.permute.xlu0 %5018
  %5020 = vrot.lane.b32.xlu0 %v4939, 64
  %v5021 = vpop.permute.xlu0 %5020
  %5022 = vrot.lane.b32.xlu0 %v4940, 64
  %v5023 = vpop.permute.xlu0 %5022
  %5024 = vrot.lane.b32.xlu0 %v4941, 64
  %v5025 = vpop.permute.xlu0 %5024
  %5026 = vrot.lane.b32.xlu0 %v4942, 64
  %v5027 = vpop.permute.xlu0 %5026
  %5028 = vrot.lane.b32.xlu0 %v4943, 64
  %v5029 = vpop.permute.xlu0 %5028
  %5030 = vrot.lane.b32.xlu0 %v4944, 64
  %v5031 = vpop.permute.xlu0 %5030
  %5032 = vrot.lane.b32.xlu0 %v4945, 64
  %v5033 = vpop.permute.xlu0 %5032
  %5034 = vrot.lane.b32.xlu0 %v4946, 64
  %v5035 = vpop.permute.xlu0 %5034
  %5036 = vrot.lane.b32.xlu0 %v4947, 64
  %v5037 = vpop.permute.xlu0 %5036
  %5038 = vrot.lane.b32.xlu0 %v4948, 64
  %v5039 = vpop.permute.xlu0 %5038
  %5040 = vrot.lane.b32.xlu0 %v4949, 64
  %v5041 = vpop.permute.xlu0 %5040
  %5042 = vrot.lane.b32.xlu0 %v4950, 64
  %v5043 = vpop.permute.xlu0 %5042
  %5044 = vrot.lane.b32.xlu0 %v4951, 64
  %v5045 = vpop.permute.xlu0 %5044
  %5046 = vrot.lane.b32.xlu0 %v4952, 64
  %v5047 = vpop.permute.xlu0 %5046
  %5048 = vrot.lane.b32.xlu0 %v4953, 64
  %v5049 = vpop.permute.xlu0 %5048
  %5050 = vrot.lane.b32.xlu0 %v4954, 64
  %v5051 = vpop.permute.xlu0 %5050
  %5052 = vrot.lane.b32.xlu0 %v4955, 64
  %v5053 = vpop.permute.xlu0 %5052
  %5054 = vrot.lane.b32.xlu0 %v4956, 64
  %v5055 = vpop.permute.xlu0 %5054
  %5056 = vrot.lane.b32.xlu0 %v4957, 64
  %v5057 = vpop.permute.xlu0 %5056
  %5058 = vrot.lane.b32.xlu0 %v4958, 64
  %v5059 = vpop.permute.xlu0 %5058
  %5060 = vrot.lane.b32.xlu0 %v4959, 64
  %v5061 = vpop.permute.xlu0 %5060
  %5062 = vrot.lane.b32.xlu0 %v4960, 64
  %v5063 = vpop.permute.xlu0 %5062
  %5064 = vrot.lane.b32.xlu0 %v4961, 64
  %v5065 = vpop.permute.xlu0 %5064
  %5066 = vrot.lane.b32.xlu0 %v4962, 64
  %v5067 = vpop.permute.xlu0 %5066
  %5068 = vrot.lane.b32.xlu0 %v4963, 64
  %v5069 = vpop.permute.xlu0 %5068
  %5070 = vrot.lane.b32.xlu0 %v4964, 64
  %v5071 = vpop.permute.xlu0 %5070
  %5072 = vrot.lane.b32.xlu0 %v4965, 64
  %v5073 = vpop.permute.xlu0 %5072
  %5074 = vrot.lane.b32.xlu0 %v4966, 64
  %v5075 = vpop.permute.xlu0 %5074
  %5076 = vrot.lane.b32.xlu0 %v4967, 64
  %v5077 = vpop.permute.xlu0 %5076
  %5078 = vrot.lane.b32.xlu0 %v4968, 64
  %v5079 = vpop.permute.xlu0 %5078
  %5080 = vrot.lane.b32.xlu0 %v4969, 64
  %v5081 = vpop.permute.xlu0 %5080
  %5082 = vrot.lane.b32.xlu0 %v4970, 64
  %v5083 = vpop.permute.xlu0 %5082
  %5084 = vrot.lane.b32.xlu0 %v4971, 64
  %v5085 = vpop.permute.xlu0 %5084
  %5086 = vrot.lane.b32.xlu0 %v4972, 64
  %v5087 = vpop.permute.xlu0 %5086
  %5088 = vrot.lane.b32.xlu0 %v4973, 64
  %v5089 = vpop.permute.xlu0 %5088
  %5090 = vrot.lane.b32.xlu0 %v4974, 64
  %v5091 = vpop.permute.xlu0 %5090
  %5092 = vrot.lane.b32.xlu0 %v4975, 64
  %v5093 = vpop.permute.xlu0 %5092
  %5094 = vrot.lane.b32.xlu0 %v4976, 64
  %v5095 = vpop.permute.xlu0 %5094
  %5096 = vrot.lane.b32.xlu0 %v4977, 64
  %v5097 = vpop.permute.xlu0 %5096
  %5098 = vrot.lane.b32.xlu0 %v4978, 64
  %v5099 = vpop.permute.xlu0 %5098
  %5100 = vrot.lane.b32.xlu0 %v4979, 64
  %v5101 = vpop.permute.xlu0 %5100
  %5102 = vrot.lane.b32.xlu0 %v4980, 64
  %v5103 = vpop.permute.xlu0 %5102
  %5104 = vrot.lane.b32.xlu0 %v4981, 64
  %v5105 = vpop.permute.xlu0 %5104
  %5106 = vrot.lane.b32.xlu0 %v4982, 64
  %v5107 = vpop.permute.xlu0 %5106
  %5108 = vrot.lane.b32.xlu0 %v4983, 64
  %v5109 = vpop.permute.xlu0 %5108
  %5110 = vrot.lane.b32.xlu0 %v4984, 64
  %v5111 = vpop.permute.xlu0 %5110
  %5112 = vrot.lane.b32.xlu0 %v4985, 64
  %v5113 = vpop.permute.xlu0 %5112
  %v5114 = vadd.f32 %v4858, %v4987
  %v5115 = vadd.f32 %v4859, %v4989
  %v5116 = vadd.f32 %v4860, %v4991
  %v5117 = vadd.f32 %v4861, %v4993
  %v5118 = vadd.f32 %v4862, %v4995
  %v5119 = vadd.f32 %v4863, %v4997
  %v5120 = vadd.f32 %v4864, %v4999
  %v5121 = vadd.f32 %v4865, %v5001
  %v5122 = vadd.f32 %v4866, %v5003
  %v5123 = vadd.f32 %v4867, %v5005
  %v5124 = vadd.f32 %v4868, %v5007
  %v5125 = vadd.f32 %v4869, %v5009
  %v5126 = vadd.f32 %v4870, %v5011
  %v5127 = vadd.f32 %v4871, %v5013
  %v5128 = vadd.f32 %v4872, %v5015
  %v5129 = vadd.f32 %v4873, %v5017
  %v5130 = vadd.f32 %v4874, %v5019
  %v5131 = vadd.f32 %v4875, %v5021
  %v5132 = vadd.f32 %v4876, %v5023
  %v5133 = vadd.f32 %v4877, %v5025
  %v5134 = vadd.f32 %v4878, %v5027
  %v5135 = vadd.f32 %v4879, %v5029
  %v5136 = vadd.f32 %v4880, %v5031
  %v5137 = vadd.f32 %v4881, %v5033
  %v5138 = vadd.f32 %v4882, %v5035
  %v5139 = vadd.f32 %v4883, %v5037
  %v5140 = vadd.f32 %v4884, %v5039
  %v5141 = vadd.f32 %v4885, %v5041
  %v5142 = vadd.f32 %v4886, %v5043
  %v5143 = vadd.f32 %v4887, %v5045
  %v5144 = vadd.f32 %v4888, %v5047
  %v5145 = vadd.f32 %v4889, %v5049
  %v5146 = vadd.f32 %v4890, %v5051
  %v5147 = vadd.f32 %v4891, %v5053
  %v5148 = vadd.f32 %v4892, %v5055
  %v5149 = vadd.f32 %v4893, %v5057
  %v5150 = vadd.f32 %v4894, %v5059
  %v5151 = vadd.f32 %v4895, %v5061
  %v5152 = vadd.f32 %v4896, %v5063
  %v5153 = vadd.f32 %v4897, %v5065
  %v5154 = vadd.f32 %v4898, %v5067
  %v5155 = vadd.f32 %v4899, %v5069
  %v5156 = vadd.f32 %v4900, %v5071
  %v5157 = vadd.f32 %v4901, %v5073
  %v5158 = vadd.f32 %v4902, %v5075
  %v5159 = vadd.f32 %v4903, %v5077
  %v5160 = vadd.f32 %v4904, %v5079
  %v5161 = vadd.f32 %v4905, %v5081
  %v5162 = vadd.f32 %v4906, %v5083
  %v5163 = vadd.f32 %v4907, %v5085
  %v5164 = vadd.f32 %v4908, %v5087
  %v5165 = vadd.f32 %v4909, %v5089
  %v5166 = vadd.f32 %v4910, %v5091
  %v5167 = vadd.f32 %v4911, %v5093
  %v5168 = vadd.f32 %v4912, %v5095
  %v5169 = vadd.f32 %v4913, %v5097
  %v5170 = vadd.f32 %v4914, %v5099
  %v5171 = vadd.f32 %v4915, %v5101
  %v5172 = vadd.f32 %v4916, %v5103
  %v5173 = vadd.f32 %v4917, %v5105
  %v5174 = vadd.f32 %v4918, %v5107
  %v5175 = vadd.f32 %v4919, %v5109
  %v5176 = vadd.f32 %v4920, %v5111
  %v5177 = vadd.f32 %v4921, %v5113
  %v5178 = vld [vmem:[%s2] sm:$0xff]
  %v5179 = vld [vmem:[%s2 + $0x8] sm:$0xff]
  %v5180 = vld [vmem:[%s2 + $0x10] sm:$0xff]
  %v5181 = vld [vmem:[%s2 + $0x18] sm:$0xff]
  %v5182 = vld [vmem:[%s2 + $0x20] sm:$0xff]
  %v5183 = vld [vmem:[%s2 + $0x28] sm:$0xff]
  %v5184 = vld [vmem:[%s2 + $0x30] sm:$0xff]
  %v5185 = vld [vmem:[%s2 + $0x38] sm:$0xff]
  %v5186 = vld [vmem:[%s2 + $0x40] sm:$0xff]
  %v5187 = vld [vmem:[%s2 + $0x48] sm:$0xff]
  %v5188 = vld [vmem:[%s2 + $0x50] sm:$0xff]
  %v5189 = vld [vmem:[%s2 + $0x58] sm:$0xff]
  %v5190 = vld [vmem:[%s2 + $0x60] sm:$0xff]
  %v5191 = vld [vmem:[%s2 + $0x68] sm:$0xff]
  %v5192 = vld [vmem:[%s2 + $0x70] sm:$0xff]
  %v5193 = vld [vmem:[%s2 + $0x78] sm:$0xff]
  %5194 = vmatpush.msra.mxu0 %v5193
  %5195 = vmatpush.msra.mxu0 %v5192
  %5196 = vmatpush.msra.mxu0 %v5191
  %5197 = vmatpush.msra.mxu0 %v5190
  %5198 = vmatpush.msra.mxu0 %v5189
  %5199 = vmatpush.msra.mxu0 %v5188
  %5200 = vmatpush.msra.mxu0 %v5187
  %5201 = vmatpush.msra.mxu0 %v5186
  %5202 = vmatpush.msra.mxu0 %v5185
  %5203 = vmatpush.msra.mxu0 %v5184
  %5204 = vmatpush.msra.mxu0 %v5183
  %5205 = vmatpush.msra.mxu0 %v5182
  %5206 = vmatpush.msra.mxu0 %v5181
  %5207 = vmatpush.msra.mxu0 %v5180
  %5208 = vmatpush.msra.mxu0 %v5179
  %5209 = vmatpush.msra.mxu0 %v5178
  %5210 = vmatmul.f32.gmra.mxu0 %v5114
  %v5211 = vpop.f32.mrf.mxu0
  %v5212 = vadd.f32 0.0, %v5211
  %5213 = vmatmul.f32.gmra.mxu0 %v5115
  %v5214 = vpop.f32.mrf.mxu0
  %v5215 = vadd.f32 0.0, %v5214
  %5216 = vmatmul.f32.gmra.mxu0 %v5116
  %v5217 = vpop.f32.mrf.mxu0
  %v5218 = vadd.f32 0.0, %v5217
  %5219 = vmatmul.f32.gmra.mxu0 %v5117
  %v5220 = vpop.f32.mrf.mxu0
  %v5221 = vadd.f32 0.0, %v5220
  %5222 = vmatmul.f32.gmra.mxu0 %v5118
  %v5223 = vpop.f32.mrf.mxu0
  %v5224 = vadd.f32 0.0, %v5223
  %5225 = vmatmul.f32.gmra.mxu0 %v5119
  %v5226 = vpop.f32.mrf.mxu0
  %v5227 = vadd.f32 0.0, %v5226
  %5228 = vmatmul.f32.gmra.mxu0 %v5120
  %v5229 = vpop.f32.mrf.mxu0
  %v5230 = vadd.f32 0.0, %v5229
  %5231 = vmatmul.f32.gmra.mxu0 %v5121
  %v5232 = vpop.f32.mrf.mxu0
  %v5233 = vadd.f32 0.0, %v5232
  %5234 = vmatmul.f32.gmra.mxu0 %v5122
  %v5235 = vpop.f32.mrf.mxu0
  %v5236 = vadd.f32 0.0, %v5235
  %5237 = vmatmul.f32.gmra.mxu0 %v5123
  %v5238 = vpop.f32.mrf.mxu0
  %v5239 = vadd.f32 0.0, %v5238
  %5240 = vmatmul.f32.gmra.mxu0 %v5124
  %v5241 = vpop.f32.mrf.mxu0
  %v5242 = vadd.f32 0.0, %v5241
  %5243 = vmatmul.f32.gmra.mxu0 %v5125
  %v5244 = vpop.f32.mrf.mxu0
  %v5245 = vadd.f32 0.0, %v5244
  %5246 = vmatmul.f32.gmra.mxu0 %v5126
  %v5247 = vpop.f32.mrf.mxu0
  %v5248 = vadd.f32 0.0, %v5247
  %5249 = vmatmul.f32.gmra.mxu0 %v5127
  %v5250 = vpop.f32.mrf.mxu0
  %v5251 = vadd.f32 0.0, %v5250
  %5252 = vmatmul.f32.gmra.mxu0 %v5128
  %v5253 = vpop.f32.mrf.mxu0
  %v5254 = vadd.f32 0.0, %v5253
  %5255 = vmatmul.f32.gmra.mxu0 %v5129
  %v5256 = vpop.f32.mrf.mxu0
  %v5257 = vadd.f32 0.0, %v5256
  %5258 = vmatmul.f32.gmra.mxu0 %v5130
  %v5259 = vpop.f32.mrf.mxu0
  %v5260 = vadd.f32 0.0, %v5259
  %5261 = vmatmul.f32.gmra.mxu0 %v5131
  %v5262 = vpop.f32.mrf.mxu0
  %v5263 = vadd.f32 0.0, %v5262
  %5264 = vmatmul.f32.gmra.mxu0 %v5132
  %v5265 = vpop.f32.mrf.mxu0
  %v5266 = vadd.f32 0.0, %v5265
  %5267 = vmatmul.f32.gmra.mxu0 %v5133
  %v5268 = vpop.f32.mrf.mxu0
  %v5269 = vadd.f32 0.0, %v5268
  %5270 = vmatmul.f32.gmra.mxu0 %v5134
  %v5271 = vpop.f32.mrf.mxu0
  %v5272 = vadd.f32 0.0, %v5271
  %5273 = vmatmul.f32.gmra.mxu0 %v5135
  %v5274 = vpop.f32.mrf.mxu0
  %v5275 = vadd.f32 0.0, %v5274
  %5276 = vmatmul.f32.gmra.mxu0 %v5136
  %v5277 = vpop.f32.mrf.mxu0
  %v5278 = vadd.f32 0.0, %v5277
  %5279 = vmatmul.f32.gmra.mxu0 %v5137
  %v5280 = vpop.f32.mrf.mxu0
  %v5281 = vadd.f32 0.0, %v5280
  %5282 = vmatmul.f32.gmra.mxu0 %v5138
  %v5283 = vpop.f32.mrf.mxu0
  %v5284 = vadd.f32 0.0, %v5283
  %5285 = vmatmul.f32.gmra.mxu0 %v5139
  %v5286 = vpop.f32.mrf.mxu0
  %v5287 = vadd.f32 0.0, %v5286
  %5288 = vmatmul.f32.gmra.mxu0 %v5140
  %v5289 = vpop.f32.mrf.mxu0
  %v5290 = vadd.f32 0.0, %v5289
  %5291 = vmatmul.f32.gmra.mxu0 %v5141
  %v5292 = vpop.f32.mrf.mxu0
  %v5293 = vadd.f32 0.0, %v5292
  %5294 = vmatmul.f32.gmra.mxu0 %v5142
  %v5295 = vpop.f32.mrf.mxu0
  %v5296 = vadd.f32 0.0, %v5295
  %5297 = vmatmul.f32.gmra.mxu0 %v5143
  %v5298 = vpop.f32.mrf.mxu0
  %v5299 = vadd.f32 0.0, %v5298
  %5300 = vmatmul.f32.gmra.mxu0 %v5144
  %v5301 = vpop.f32.mrf.mxu0
  %v5302 = vadd.f32 0.0, %v5301
  %5303 = vmatmul.f32.gmra.mxu0 %v5145
  %v5304 = vpop.f32.mrf.mxu0
  %v5305 = vadd.f32 0.0, %v5304
  %5306 = vmatmul.f32.gmra.mxu0 %v5146
  %v5307 = vpop.f32.mrf.mxu0
  %v5308 = vadd.f32 0.0, %v5307
  %5309 = vmatmul.f32.gmra.mxu0 %v5147
  %v5310 = vpop.f32.mrf.mxu0
  %v5311 = vadd.f32 0.0, %v5310
  %5312 = vmatmul.f32.gmra.mxu0 %v5148
  %v5313 = vpop.f32.mrf.mxu0
  %v5314 = vadd.f32 0.0, %v5313
  %5315 = vmatmul.f32.gmra.mxu0 %v5149
  %v5316 = vpop.f32.mrf.mxu0
  %v5317 = vadd.f32 0.0, %v5316
  %5318 = vmatmul.f32.gmra.mxu0 %v5150
  %v5319 = vpop.f32.mrf.mxu0
  %v5320 = vadd.f32 0.0, %v5319
  %5321 = vmatmul.f32.gmra.mxu0 %v5151
  %v5322 = vpop.f32.mrf.mxu0
  %v5323 = vadd.f32 0.0, %v5322
  %5324 = vmatmul.f32.gmra.mxu0 %v5152
  %v5325 = vpop.f32.mrf.mxu0
  %v5326 = vadd.f32 0.0, %v5325
  %5327 = vmatmul.f32.gmra.mxu0 %v5153
  %v5328 = vpop.f32.mrf.mxu0
  %v5329 = vadd.f32 0.0, %v5328
  %5330 = vmatmul.f32.gmra.mxu0 %v5154
  %v5331 = vpop.f32.mrf.mxu0
  %v5332 = vadd.f32 0.0, %v5331
  %5333 = vmatmul.f32.gmra.mxu0 %v5155
  %v5334 = vpop.f32.mrf.mxu0
  %v5335 = vadd.f32 0.0, %v5334
  %5336 = vmatmul.f32.gmra.mxu0 %v5156
  %v5337 = vpop.f32.mrf.mxu0
  %v5338 = vadd.f32 0.0, %v5337
  %5339 = vmatmul.f32.gmra.mxu0 %v5157
  %v5340 = vpop.f32.mrf.mxu0
  %v5341 = vadd.f32 0.0, %v5340
  %5342 = vmatmul.f32.gmra.mxu0 %v5158
  %v5343 = vpop.f32.mrf.mxu0
  %v5344 = vadd.f32 0.0, %v5343
  %5345 = vmatmul.f32.gmra.mxu0 %v5159
  %v5346 = vpop.f32.mrf.mxu0
  %v5347 = vadd.f32 0.0, %v5346
  %5348 = vmatmul.f32.gmra.mxu0 %v5160
  %v5349 = vpop.f32.mrf.mxu0
  %v5350 = vadd.f32 0.0, %v5349
  %5351 = vmatmul.f32.gmra.mxu0 %v5161
  %v5352 = vpop.f32.mrf.mxu0
  %v5353 = vadd.f32 0.0, %v5352
  %5354 = vmatmul.f32.gmra.mxu0 %v5162
  %v5355 = vpop.f32.mrf.mxu0
  %v5356 = vadd.f32 0.0, %v5355
  %5357 = vmatmul.f32.gmra.mxu0 %v5163
  %v5358 = vpop.f32.mrf.mxu0
  %v5359 = vadd.f32 0.0, %v5358
  %5360 = vmatmul.f32.gmra.mxu0 %v5164
  %v5361 = vpop.f32.mrf.mxu0
  %v5362 = vadd.f32 0.0, %v5361
  %5363 = vmatmul.f32.gmra.mxu0 %v5165
  %v5364 = vpop.f32.mrf.mxu0
  %v5365 = vadd.f32 0.0, %v5364
  %5366 = vmatmul.f32.gmra.mxu0 %v5166
  %v5367 = vpop.f32.mrf.mxu0
  %v5368 = vadd.f32 0.0, %v5367
  %5369 = vmatmul.f32.gmra.mxu0 %v5167
  %v5370 = vpop.f32.mrf.mxu0
  %v5371 = vadd.f32 0.0, %v5370
  %5372 = vmatmul.f32.gmra.mxu0 %v5168
  %v5373 = vpop.f32.mrf.mxu0
  %v5374 = vadd.f32 0.0, %v5373
  %5375 = vmatmul.f32.gmra.mxu0 %v5169
  %v5376 = vpop.f32.mrf.mxu0
  %v5377 = vadd.f32 0.0, %v5376
  %5378 = vmatmul.f32.gmra.mxu0 %v5170
  %v5379 = vpop.f32.mrf.mxu0
  %v5380 = vadd.f32 0.0, %v5379
  %5381 = vmatmul.f32.gmra.mxu0 %v5171
  %v5382 = vpop.f32.mrf.mxu0
  %v5383 = vadd.f32 0.0, %v5382
  %5384 = vmatmul.f32.gmra.mxu0 %v5172
  %v5385 = vpop.f32.mrf.mxu0
  %v5386 = vadd.f32 0.0, %v5385
  %5387 = vmatmul.f32.gmra.mxu0 %v5173
  %v5388 = vpop.f32.mrf.mxu0
  %v5389 = vadd.f32 0.0, %v5388
  %5390 = vmatmul.f32.gmra.mxu0 %v5174
  %v5391 = vpop.f32.mrf.mxu0
  %v5392 = vadd.f32 0.0, %v5391
  %5393 = vmatmul.f32.gmra.mxu0 %v5175
  %v5394 = vpop.f32.mrf.mxu0
  %v5395 = vadd.f32 0.0, %v5394
  %5396 = vmatmul.f32.gmra.mxu0 %v5176
  %v5397 = vpop.f32.mrf.mxu0
  %v5398 = vadd.f32 0.0, %v5397
  %5399 = vmatmul.f32.gmra.mxu0 %v5177
  %v5400 = vpop.f32.mrf.mxu0
  %v5401 = vadd.f32 0.0, %v5400
  %5402 = vdwg.mxu0
  %v5403 = vld [vmem:[%s5] sm:$0x1]
  %v5404 = vld [vmem:[%s6] sm:$0x1]
  %v5405 = vadd.f32 %v5212, %v5215
  %v5406 = vadd.f32 %v5405, %v5218
  %v5407 = vadd.f32 %v5406, %v5221
  %v5408 = vadd.f32 %v5407, %v5224
  %v5409 = vadd.f32 %v5408, %v5227
  %v5410 = vadd.f32 %v5409, %v5230
  %v5411 = vadd.f32 %v5410, %v5233
  %v5412 = vadd.f32 %v5411, %v5236
  %v5413 = vadd.f32 %v5412, %v5239
  %v5414 = vadd.f32 %v5413, %v5242
  %v5415 = vadd.f32 %v5414, %v5245
  %v5416 = vadd.f32 %v5415, %v5248
  %v5417 = vadd.f32 %v5416, %v5251
  %v5418 = vadd.f32 %v5417, %v5254
  %v5419 = vadd.f32 %v5418, %v5257
  %v5420 = vadd.f32 %v5419, %v5260
  %v5421 = vadd.f32 %v5420, %v5263
  %v5422 = vadd.f32 %v5421, %v5266
  %v5423 = vadd.f32 %v5422, %v5269
  %v5424 = vadd.f32 %v5423, %v5272
  %v5425 = vadd.f32 %v5424, %v5275
  %v5426 = vadd.f32 %v5425, %v5278
  %v5427 = vadd.f32 %v5426, %v5281
  %v5428 = vadd.f32 %v5427, %v5284
  %v5429 = vadd.f32 %v5428, %v5287
  %v5430 = vadd.f32 %v5429, %v5290
  %v5431 = vadd.f32 %v5430, %v5293
  %v5432 = vadd.f32 %v5431, %v5296
  %v5433 = vadd.f32 %v5432, %v5299
  %v5434 = vadd.f32 %v5433, %v5302
  %v5435 = vadd.f32 %v5434, %v5305
  %v5436 = vadd.f32 %v5435, %v5308
  %v5437 = vadd.f32 %v5436, %v5311
  %v5438 = vadd.f32 %v5437, %v5314
  %v5439 = vadd.f32 %v5438, %v5317
  %v5440 = vadd.f32 %v5439, %v5320
  %v5441 = vadd.f32 %v5440, %v5323
  %v5442 = vadd.f32 %v5441, %v5326
  %v5443 = vadd.f32 %v5442, %v5329
  %v5444 = vadd.f32 %v5443, %v5332
  %v5445 = vadd.f32 %v5444, %v5335
  %v5446 = vadd.f32 %v5445, %v5338
  %v5447 = vadd.f32 %v5446, %v5341
  %v5448 = vadd.f32 %v5447, %v5344
  %v5449 = vadd.f32 %v5448, %v5347
  %v5450 = vadd.f32 %v5449, %v5350
  %v5451 = vadd.f32 %v5450, %v5353
  %v5452 = vadd.f32 %v5451, %v5356
  %v5453 = vadd.f32 %v5452, %v5359
  %v5454 = vadd.f32 %v5453, %v5362
  %v5455 = vadd.f32 %v5454, %v5365
  %v5456 = vadd.f32 %v5455, %v5368
  %v5457 = vadd.f32 %v5456, %v5371
  %v5458 = vadd.f32 %v5457, %v5374
  %v5459 = vadd.f32 %v5458, %v5377
  %v5460 = vadd.f32 %v5459, %v5380
  %v5461 = vadd.f32 %v5460, %v5383
  %v5462 = vadd.f32 %v5461, %v5386
  %v5463 = vadd.f32 %v5462, %v5389
  %v5464 = vadd.f32 %v5463, %v5392
  %v5465 = vadd.f32 %v5464, %v5395
  %v5466 = vadd.f32 %v5465, %v5398
  %v5467 = vadd.f32 %v5466, %v5401
  %v5468 = vrot.slane %v5467, 4
  %v5469 = vadd.f32 %v5467, %v5468
  %v5470 = vrot.slane %v5469, 2
  %v5471 = vadd.f32 %v5469, %v5470
  %v5472 = vrot.slane %v5471, 1
  %v5473 = vadd.f32 %v5471, %v5472
  %v5474 = vmul.f32 %v5473, %v2442
  %v5475 = vsub.f32 %v5212, %v5474
  %v5476 = vsub.f32 %v5215, %v5474
  %v5477 = vsub.f32 %v5218, %v5474
  %v5478 = vsub.f32 %v5221, %v5474
  %v5479 = vsub.f32 %v5224, %v5474
  %v5480 = vsub.f32 %v5227, %v5474
  %v5481 = vsub.f32 %v5230, %v5474
  %v5482 = vsub.f32 %v5233, %v5474
  %v5483 = vsub.f32 %v5236, %v5474
  %v5484 = vsub.f32 %v5239, %v5474
  %v5485 = vsub.f32 %v5242, %v5474
  %v5486 = vsub.f32 %v5245, %v5474
  %v5487 = vsub.f32 %v5248, %v5474
  %v5488 = vsub.f32 %v5251, %v5474
  %v5489 = vsub.f32 %v5254, %v5474
  %v5490 = vsub.f32 %v5257, %v5474
  %v5491 = vsub.f32 %v5260, %v5474
  %v5492 = vsub.f32 %v5263, %v5474
  %v5493 = vsub.f32 %v5266, %v5474
  %v5494 = vsub.f32 %v5269, %v5474
  %v5495 = vsub.f32 %v5272, %v5474
  %v5496 = vsub.f32 %v5275, %v5474
  %v5497 = vsub.f32 %v5278, %v5474
  %v5498 = vsub.f32 %v5281, %v5474
  %v5499 = vsub.f32 %v5284, %v5474
  %v5500 = vsub.f32 %v5287, %v5474
  %v5501 = vsub.f32 %v5290, %v5474
  %v5502 = vsub.f32 %v5293, %v5474
  %v5503 = vsub.f32 %v5296, %v5474
  %v5504 = vsub.f32 %v5299, %v5474
  %v5505 = vsub.f32 %v5302, %v5474
  %v5506 = vsub.f32 %v5305, %v5474
  %v5507 = vsub.f32 %v5308, %v5474
  %v5508 = vsub.f32 %v5311, %v5474
  %v5509 = vsub.f32 %v5314, %v5474
  %v5510 = vsub.f32 %v5317, %v5474
  %v5511 = vsub.f32 %v5320, %v5474
  %v5512 = vsub.f32 %v5323, %v5474
  %v5513 = vsub.f32 %v5326, %v5474
  %v5514 = vsub.f32 %v5329, %v5474
  %v5515 = vsub.f32 %v5332, %v5474
  %v5516 = vsub.f32 %v5335, %v5474
  %v5517 = vsub.f32 %v5338, %v5474
  %v5518 = vsub.f32 %v5341, %v5474
  %v5519 = vsub.f32 %v5344, %v5474
  %v5520 = vsub.f32 %v5347, %v5474
  %v5521 = vsub.f32 %v5350, %v5474
  %v5522 = vsub.f32 %v5353, %v5474
  %v5523 = vsub.f32 %v5356, %v5474
  %v5524 = vsub.f32 %v5359, %v5474
  %v5525 = vsub.f32 %v5362, %v5474
  %v5526 = vsub.f32 %v5365, %v5474
  %v5527 = vsub.f32 %v5368, %v5474
  %v5528 = vsub.f32 %v5371, %v5474
  %v5529 = vsub.f32 %v5374, %v5474
  %v5530 = vsub.f32 %v5377, %v5474
  %v5531 = vsub.f32 %v5380, %v5474
  %v5532 = vsub.f32 %v5383, %v5474
  %v5533 = vsub.f32 %v5386, %v5474
  %v5534 = vsub.f32 %v5389, %v5474
  %v5535 = vsub.f32 %v5392, %v5474
  %v5536 = vsub.f32 %v5395, %v5474
  %v5537 = vsub.f32 %v5398, %v5474
  %v5538 = vsub.f32 %v5401, %v5474
  %v5539 = vmul.f32 %v5475, %v5475
  %v5540 = vmul.f32 %v5476, %v5476
  %v5541 = vmul.f32 %v5477, %v5477
  %v5542 = vmul.f32 %v5478, %v5478
  %v5543 = vmul.f32 %v5479, %v5479
  %v5544 = vmul.f32 %v5480, %v5480
  %v5545 = vmul.f32 %v5481, %v5481
  %v5546 = vmul.f32 %v5482, %v5482
  %v5547 = vmul.f32 %v5483, %v5483
  %v5548 = vmul.f32 %v5484, %v5484
  %v5549 = vmul.f32 %v5485, %v5485
  %v5550 = vmul.f32 %v5486, %v5486
  %v5551 = vmul.f32 %v5487, %v5487
  %v5552 = vmul.f32 %v5488, %v5488
  %v5553 = vmul.f32 %v5489, %v5489
  %v5554 = vmul.f32 %v5490, %v5490
  %v5555 = vmul.f32 %v5491, %v5491
  %v5556 = vmul.f32 %v5492, %v5492
  %v5557 = vmul.f32 %v5493, %v5493
  %v5558 = vmul.f32 %v5494, %v5494
  %v5559 = vmul.f32 %v5495, %v5495
  %v5560 = vmul.f32 %v5496, %v5496
  %v5561 = vmul.f32 %v5497, %v5497
  %v5562 = vmul.f32 %v5498, %v5498
  %v5563 = vmul.f32 %v5499, %v5499
  %v5564 = vmul.f32 %v5500, %v5500
  %v5565 = vmul.f32 %v5501, %v5501
  %v5566 = vmul.f32 %v5502, %v5502
  %v5567 = vmul.f32 %v5503, %v5503
  %v5568 = vmul.f32 %v5504, %v5504
  %v5569 = vmul.f32 %v5505, %v5505
  %v5570 = vmul.f32 %v5506, %v5506
  %v5571 = vmul.f32 %v5507, %v5507
  %v5572 = vmul.f32 %v5508, %v5508
  %v5573 = vmul.f32 %v5509, %v5509
  %v5574 = vmul.f32 %v5510, %v5510
  %v5575 = vmul.f32 %v5511, %v5511
  %v5576 = vmul.f32 %v5512, %v5512
  %v5577 = vmul.f32 %v5513, %v5513
  %v5578 = vmul.f32 %v5514, %v5514
  %v5579 = vmul.f32 %v5515, %v5515
  %v5580 = vmul.f32 %v5516, %v5516
  %v5581 = vmul.f32 %v5517, %v5517
  %v5582 = vmul.f32 %v5518, %v5518
  %v5583 = vmul.f32 %v5519, %v5519
  %v5584 = vmul.f32 %v5520, %v5520
  %v5585 = vmul.f32 %v5521, %v5521
  %v5586 = vmul.f32 %v5522, %v5522
  %v5587 = vmul.f32 %v5523, %v5523
  %v5588 = vmul.f32 %v5524, %v5524
  %v5589 = vmul.f32 %v5525, %v5525
  %v5590 = vmul.f32 %v5526, %v5526
  %v5591 = vmul.f32 %v5527, %v5527
  %v5592 = vmul.f32 %v5528, %v5528
  %v5593 = vmul.f32 %v5529, %v5529
  %v5594 = vmul.f32 %v5530, %v5530
  %v5595 = vmul.f32 %v5531, %v5531
  %v5596 = vmul.f32 %v5532, %v5532
  %v5597 = vmul.f32 %v5533, %v5533
  %v5598 = vmul.f32 %v5534, %v5534
  %v5599 = vmul.f32 %v5535, %v5535
  %v5600 = vmul.f32 %v5536, %v5536
  %v5601 = vmul.f32 %v5537, %v5537
  %v5602 = vmul.f32 %v5538, %v5538
  %v5603 = vadd.f32 %v5539, %v5540
  %v5604 = vadd.f32 %v5603, %v5541
  %v5605 = vadd.f32 %v5604, %v5542
  %v5606 = vadd.f32 %v5605, %v5543
  %v5607 = vadd.f32 %v5606, %v5544
  %v5608 = vadd.f32 %v5607, %v5545
  %v5609 = vadd.f32 %v5608, %v5546
  %v5610 = vadd.f32 %v5609, %v5547
  %v5611 = vadd.f32 %v5610, %v5548
  %v5612 = vadd.f32 %v5611, %v5549
  %v5613 = vadd.f32 %v5612, %v5550
  %v5614 = vadd.f32 %v5613, %v5551
  %v5615 = vadd.f32 %v5614, %v5552
  %v5616 = vadd.f32 %v5615, %v5553
  %v5617 = vadd.f32 %v5616, %v5554
  %v5618 = vadd.f32 %v5617, %v5555
  %v5619 = vadd.f32 %v5618, %v5556
  %v5620 = vadd.f32 %v5619, %v5557
  %v5621 = vadd.f32 %v5620, %v5558
  %v5622 = vadd.f32 %v5621, %v5559
  %v5623 = vadd.f32 %v5622, %v5560
  %v5624 = vadd.f32 %v5623, %v5561
  %v5625 = vadd.f32 %v5624, %v5562
  %v5626 = vadd.f32 %v5625, %v5563
  %v5627 = vadd.f32 %v5626, %v5564
  %v5628 = vadd.f32 %v5627, %v5565
  %v5629 = vadd.f32 %v5628, %v5566
  %v5630 = vadd.f32 %v5629, %v5567
  %v5631 = vadd.f32 %v5630, %v5568
  %v5632 = vadd.f32 %v5631, %v5569
  %v5633 = vadd.f32 %v5632, %v5570
  %v5634 = vadd.f32 %v5633, %v5571
  %v5635 = vadd.f32 %v5634, %v5572
  %v5636 = vadd.f32 %v5635, %v5573
  %v5637 = vadd.f32 %v5636, %v5574
  %v5638 = vadd.f32 %v5637, %v5575
  %v5639 = vadd.f32 %v5638, %v5576
  %v5640 = vadd.f32 %v5639, %v5577
  %v5641 = vadd.f32 %v5640, %v5578
  %v5642 = vadd.f32 %v5641, %v5579
  %v5643 = vadd.f32 %v5642, %v5580
  %v5644 = vadd.f32 %v5643, %v5581
  %v5645 = vadd.f32 %v5644, %v5582
  %v5646 = vadd.f32 %v5645, %v5583
  %v5647 = vadd.f32 %v5646, %v5584
  %v5648 = vadd.f32 %v5647, %v5585
  %v5649 = vadd.f32 %v5648, %v5586
  %v5650 = vadd.f32 %v5649, %v5587
  %v5651 = vadd.f32 %v5650, %v5588
  %v5652 = vadd.f32 %v5651, %v5589
  %v5653 = vadd.f32 %v5652, %v5590
  %v5654 = vadd.f32 %v5653, %v5591
  %v5655 = vadd.f32 %v5654, %v5592
  %v5656 = vadd.f32 %v5655, %v5593
  %v5657 = vadd.f32 %v5656, %v5594
  %v5658 = vadd.f32 %v5657, %v5595
  %v5659 = vadd.f32 %v5658, %v5596
  %v5660 = vadd.f32 %v5659, %v5597
  %v5661 = vadd.f32 %v5660, %v5598
  %v5662 = vadd.f32 %v5661, %v5599
  %v5663 = vadd.f32 %v5662, %v5600
  %v5664 = vadd.f32 %v5663, %v5601
  %v5665 = vadd.f32 %v5664, %v5602
  %v5666 = vrot.slane %v5665, 4
  %v5667 = vadd.f32 %v5665, %v5666
  %v5668 = vrot.slane %v5667, 2
  %v5669 = vadd.f32 %v5667, %v5668
  %v5670 = vrot.slane %v5669, 1
  %v5671 = vadd.f32 %v5669, %v5670
  %v5672 = vmul.f32 %v5671, %v2442
  %v5673 = vadd.f32 %v5672, 1e-05
  %v5674 = vrsqrt.pop %v5673
  %v5675 = vmul.f32 %v5674, %v5673
  %v5676 = vmul.f32 %v5675, %v5674
  %v5677 = vmul.f32 0.5, %v5676
  %v5678 = vsub.f32 1.5, %v5677
  %v5679 = vmul.f32 %v5674, %v5678
  %vm5680 = vweird.f32 %v5673
  %vm5681 = vweird.f32 %v5674
  %vm5682 = vmor %vm5680, %vm5681
  %v5683 = vsel %vm5682, %v5674, %v5679
  %v5684 = vmul.f32 %v5475, %v5683
  %v5685 = vmul.f32 %v5476, %v5683
  %v5686 = vmul.f32 %v5477, %v5683
  %v5687 = vmul.f32 %v5478, %v5683
  %v5688 = vmul.f32 %v5479, %v5683
  %v5689 = vmul.f32 %v5480, %v5683
  %v5690 = vmul.f32 %v5481, %v5683
  %v5691 = vmul.f32 %v5482, %v5683
  %v5692 = vmul.f32 %v5483, %v5683
  %v5693 = vmul.f32 %v5484, %v5683
  %v5694 = vmul.f32 %v5485, %v5683
  %v5695 = vmul.f32 %v5486, %v5683
  %v5696 = vmul.f32 %v5487, %v5683
  %v5697 = vmul.f32 %v5488, %v5683
  %v5698 = vmul.f32 %v5489, %v5683
  %v5699 = vmul.f32 %v5490, %v5683
  %v5700 = vmul.f32 %v5491, %v5683
  %v5701 = vmul.f32 %v5492, %v5683
  %v5702 = vmul.f32 %v5493, %v5683
  %v5703 = vmul.f32 %v5494, %v5683
  %v5704 = vmul.f32 %v5495, %v5683
  %v5705 = vmul.f32 %v5496, %v5683
  %v5706 = vmul.f32 %v5497, %v5683
  %v5707 = vmul.f32 %v5498, %v5683
  %v5708 = vmul.f32 %v5499, %v5683
  %v5709 = vmul.f32 %v5500, %v5683
  %v5710 = vmul.f32 %v5501, %v5683
  %v5711 = vmul.f32 %v5502, %v5683
  %v5712 = vmul.f32 %v5503, %v5683
  %v5713 = vmul.f32 %v5504, %v5683
  %v5714 = vmul.f32 %v5505, %v5683
  %v5715 = vmul.f32 %v5506, %v5683
  %v5716 = vmul.f32 %v5507, %v5683
  %v5717 = vmul.f32 %v5508, %v5683
  %v5718 = vmul.f32 %v5509, %v5683
  %v5719 = vmul.f32 %v5510, %v5683
  %v5720 = vmul.f32 %v5511, %v5683
  %v5721 = vmul.f32 %v5512, %v5683
  %v5722 = vmul.f32 %v5513, %v5683
  %v5723 = vmul.f32 %v5514, %v5683
  %v5724 = vmul.f32 %v5515, %v5683
  %v5725 = vmul.f32 %v5516, %v5683
  %v5726 = vmul.f32 %v5517, %v5683
  %v5727 = vmul.f32 %v5518, %v5683
  %v5728 = vmul.f32 %v5519, %v5683
  %v5729 = vmul.f32 %v5520, %v5683
  %v5730 = vmul.f32 %v5521, %v5683
  %v5731 = vmul.f32 %v5522, %v5683
  %v5732 = vmul.f32 %v5523, %v5683
  %v5733 = vmul.f32 %v5524, %v5683
  %v5734 = vmul.f32 %v5525, %v5683
  %v5735 = vmul.f32 %v5526, %v5683
  %v5736 = vmul.f32 %v5527, %v5683
  %v5737 = vmul.f32 %v5528, %v5683
  %v5738 = vmul.f32 %v5529, %v5683
  %v5739 = vmul.f32 %v5530, %v5683
  %v5740 = vmul.f32 %v5531, %v5683
  %v5741 = vmul.f32 %v5532, %v5683
  %v5742 = vmul.f32 %v5533, %v5683
  %v5743 = vmul.f32 %v5534, %v5683
  %v5744 = vmul.f32 %v5535, %v5683
  %v5745 = vmul.f32 %v5536, %v5683
  %v5746 = vmul.f32 %v5537, %v5683
  %v5747 = vmul.f32 %v5538, %v5683
  %v5749 = vperm.slane %v5403, 0
  %v5751 = vmul.f32 %v5684, %v5749
  %v5752 = vmul.f32 %v5685, %v5749
  %v5753 = vmul.f32 %v5686, %v5749
  %v5754 = vmul.f32 %v5687, %v5749
  %v5755 = vmul.f32 %v5688, %v5749
  %v5756 = vmul.f32 %v5689, %v5749
  %v5757 = vmul.f32 %v5690, %v5749
  %v5758 = vmul.f32 %v5691, %v5749
  %v5759 = vmul.f32 %v5692, %v5749
  %v5760 = vmul.f32 %v5693, %v5749
  %v5761 = vmul.f32 %v5694, %v5749
  %v5762 = vmul.f32 %v5695, %v5749
  %v5763 = vmul.f32 %v5696, %v5749
  %v5764 = vmul.f32 %v5697, %v5749
  %v5765 = vmul.f32 %v5698, %v5749
  %v5766 = vmul.f32 %v5699, %v5749
  %v5767 = vmul.f32 %v5700, %v5749
  %v5768 = vmul.f32 %v5701, %v5749
  %v5769 = vmul.f32 %v5702, %v5749
  %v5770 = vmul.f32 %v5703, %v5749
  %v5771 = vmul.f32 %v5704, %v5749
  %v5772 = vmul.f32 %v5705, %v5749
  %v5773 = vmul.f32 %v5706, %v5749
  %v5774 = vmul.f32 %v5707, %v5749
  %v5775 = vmul.f32 %v5708, %v5749
  %v5776 = vmul.f32 %v5709, %v5749
  %v5777 = vmul.f32 %v5710, %v5749
  %v5778 = vmul.f32 %v5711, %v5749
  %v5779 = vmul.f32 %v5712, %v5749
  %v5780 = vmul.f32 %v5713, %v5749
  %v5781 = vmul.f32 %v5714, %v5749
  %v5782 = vmul.f32 %v5715, %v5749
  %v5783 = vmul.f32 %v5716, %v5749
  %v5784 = vmul.f32 %v5717, %v5749
  %v5785 = vmul.f32 %v5718, %v5749
  %v5786 = vmul.f32 %v5719, %v5749
  %v5787 = vmul.f32 %v5720, %v5749
  %v5788 = vmul.f32 %v5721, %v5749
  %v5789 = vmul.f32 %v5722, %v5749
  %v5790 = vmul.f32 %v5723, %v5749
  %v5791 = vmul.f32 %v5724, %v5749
  %v5792 = vmul.f32 %v5725, %v5749
  %v5793 = vmul.f32 %v5726, %v5749
  %v5794 = vmul.f32 %v5727, %v5749
  %v5795 = vmul.f32 %v5728, %v5749
  %v5796 = vmul.f32 %v5729, %v5749
  %v5797 = vmul.f32 %v5730, %v5749
  %v5798 = vmul.f32 %v5731, %v5749
  %v5799 = vmul.f32 %v5732, %v5749
  %v5800 = vmul.f32 %v5733, %v5749
  %v5801 = vmul.f32 %v5734, %v5749
  %v5802 = vmul.f32 %v5735, %v5749
  %v5803 = vmul.f32 %v5736, %v5749
  %v5804 = vmul.f32 %v5737, %v5749
  %v5805 = vmul.f32 %v5738, %v5749
  %v5806 = vmul.f32 %v5739, %v5749
  %v5807 = vmul.f32 %v5740, %v5749
  %v5808 = vmul.f32 %v5741, %v5749
  %v5809 = vmul.f32 %v5742, %v5749
  %v5810 = vmul.f32 %v5743, %v5749
  %v5811 = vmul.f32 %v5744, %v5749
  %v5812 = vmul.f32 %v5745, %v5749
  %v5813 = vmul.f32 %v5746, %v5749
  %v5814 = vmul.f32 %v5747, %v5749
  %v5816 = vperm.slane %v5404, 0
  %v5818 = vadd.f32 %v5751, %v5816
  %v5819 = vadd.f32 %v5752, %v5816
  %v5820 = vadd.f32 %v5753, %v5816
  %v5821 = vadd.f32 %v5754, %v5816
  %v5822 = vadd.f32 %v5755, %v5816
  %v5823 = vadd.f32 %v5756, %v5816
  %v5824 = vadd.f32 %v5757, %v5816
  %v5825 = vadd.f32 %v5758, %v5816
  %v5826 = vadd.f32 %v5759, %v5816
  %v5827 = vadd.f32 %v5760, %v5816
  %v5828 = vadd.f32 %v5761, %v5816
  %v5829 = vadd.f32 %v5762, %v5816
  %v5830 = vadd.f32 %v5763, %v5816
  %v5831 = vadd.f32 %v5764, %v5816
  %v5832 = vadd.f32 %v5765, %v5816
  %v5833 = vadd.f32 %v5766, %v5816
  %v5834 = vadd.f32 %v5767, %v5816
  %v5835 = vadd.f32 %v5768, %v5816
  %v5836 = vadd.f32 %v5769, %v5816
  %v5837 = vadd.f32 %v5770, %v5816
  %v5838 = vadd.f32 %v5771, %v5816
  %v5839 = vadd.f32 %v5772, %v5816
  %v5840 = vadd.f32 %v5773, %v5816
  %v5841 = vadd.f32 %v5774, %v5816
  %v5842 = vadd.f32 %v5775, %v5816
  %v5843 = vadd.f32 %v5776, %v5816
  %v5844 = vadd.f32 %v5777, %v5816
  %v5845 = vadd.f32 %v5778, %v5816
  %v5846 = vadd.f32 %v5779, %v5816
  %v5847 = vadd.f32 %v5780, %v5816
  %v5848 = vadd.f32 %v5781, %v5816
  %v5849 = vadd.f32 %v5782, %v5816
  %v5850 = vadd.f32 %v5783, %v5816
  %v5851 = vadd.f32 %v5784, %v5816
  %v5852 = vadd.f32 %v5785, %v5816
  %v5853 = vadd.f32 %v5786, %v5816
  %v5854 = vadd.f32 %v5787, %v5816
  %v5855 = vadd.f32 %v5788, %v5816
  %v5856 = vadd.f32 %v5789, %v5816
  %v5857 = vadd.f32 %v5790, %v5816
  %v5858 = vadd.f32 %v5791, %v5816
  %v5859 = vadd.f32 %v5792, %v5816
  %v5860 = vadd.f32 %v5793, %v5816
  %v5861 = vadd.f32 %v5794, %v5816
  %v5862 = vadd.f32 %v5795, %v5816
  %v5863 = vadd.f32 %v5796, %v5816
  %v5864 = vadd.f32 %v5797, %v5816
  %v5865 = vadd.f32 %v5798, %v5816
  %v5866 = vadd.f32 %v5799, %v5816
  %v5867 = vadd.f32 %v5800, %v5816
  %v5868 = vadd.f32 %v5801, %v5816
  %v5869 = vadd.f32 %v5802, %v5816
  %v5870 = vadd.f32 %v5803, %v5816
  %v5871 = vadd.f32 %v5804, %v5816
  %v5872 = vadd.f32 %v5805, %v5816
  %v5873 = vadd.f32 %v5806, %v5816
  %v5874 = vadd.f32 %v5807, %v5816
  %v5875 = vadd.f32 %v5808, %v5816
  %v5876 = vadd.f32 %v5809, %v5816
  %v5877 = vadd.f32 %v5810, %v5816
  %v5878 = vadd.f32 %v5811, %v5816
  %v5879 = vadd.f32 %v5812, %v5816
  %v5880 = vadd.f32 %v5813, %v5816
  %v5881 = vadd.f32 %v5814, %v5816
  %v5882 = vld [vmem:[%s602 + $0x1] sm:$0xff]
  %v5883 = vld [vmem:[%s602 + $0x9] sm:$0xff]
  %v5884 = vld [vmem:[%s602 + $0x19] sm:$0xff]
  %v5885 = vld [vmem:[%s602 + $0x21] sm:$0xff]
  %v5886 = vld [vmem:[%s602 + $0x31] sm:$0xff]
  %v5887 = vld [vmem:[%s602 + $0x39] sm:$0xff]
  %v5888 = vld [vmem:[%s602 + $0x49] sm:$0xff]
  %v5889 = vld [vmem:[%s602 + $0x51] sm:$0xff]
  %v5890 = vld [vmem:[%s602 + $0x61] sm:$0xff]
  %v5891 = vld [vmem:[%s602 + $0x69] sm:$0xff]
  %v5892 = vld [vmem:[%s602 + $0x79] sm:$0xff]
  %v5893 = vld [vmem:[%s602 + $0x81] sm:$0xff]
  %v5894 = vld [vmem:[%s602 + $0x91] sm:$0xff]
  %v5895 = vld [vmem:[%s602 + $0x99] sm:$0xff]
  %v5896 = vld [vmem:[%s602 + $0xa9] sm:$0xff]
  %v5897 = vld [vmem:[%s602 + $0xb1] sm:$0xff]
  %v5898 = vld [vmem:[%s602 + $0xc1] sm:$0xff]
  %v5899 = vld [vmem:[%s602 + $0xc9] sm:$0xff]
  %v5900 = vld [vmem:[%s602 + $0xd9] sm:$0xff]
  %v5901 = vld [vmem:[%s602 + $0xe1] sm:$0xff]
  %v5902 = vld [vmem:[%s602 + $0xf1] sm:$0xff]
  %v5903 = vld [vmem:[%s602 + $0xf9] sm:$0xff]
  %v5904 = vld [vmem:[%s602 + $0x109] sm:$0xff]
  %v5905 = vld [vmem:[%s602 + $0x111] sm:$0xff]
  %v5906 = vld [vmem:[%s602 + $0x121] sm:$0xff]
  %v5907 = vld [vmem:[%s602 + $0x129] sm:$0xff]
  %v5908 = vld [vmem:[%s602 + $0x139] sm:$0xff]
  %v5909 = vld [vmem:[%s602 + $0x141] sm:$0xff]
  %v5910 = vld [vmem:[%s602 + $0x151] sm:$0xff]
  %v5911 = vld [vmem:[%s602 + $0x159] sm:$0xff]
  %v5912 = vld [vmem:[%s602 + $0x169] sm:$0xff]
  %v5913 = vld [vmem:[%s602 + $0x171] sm:$0xff]
  %v5914 = vld [vmem:[%s602 + $0x1b1] sm:$0xff]
  %v5915 = vld [vmem:[%s602 + $0x1b9] sm:$0xff]
  %v5916 = vld [vmem:[%s602 + $0x1c9] sm:$0xff]
  %v5917 = vld [vmem:[%s602 + $0x1d1] sm:$0xff]
  %v5918 = vld [vmem:[%s602 + $0x1e1] sm:$0xff]
  %v5919 = vld [vmem:[%s602 + $0x1e9] sm:$0xff]
  %v5920 = vld [vmem:[%s602 + $0x1f9] sm:$0xff]
  %v5921 = vld [vmem:[%s602 + $0x201] sm:$0xff]
  %v5922 = vld [vmem:[%s602 + $0x211] sm:$0xff]
  %v5923 = vld [vmem:[%s602 + $0x219] sm:$0xff]
  %v5924 = vld [vmem:[%s602 + $0x229] sm:$0xff]
  %v5925 = vld [vmem:[%s602 + $0x231] sm:$0xff]
  %v5926 = vld [vmem:[%s602 + $0x241] sm:$0xff]
  %v5927 = vld [vmem:[%s602 + $0x249] sm:$0xff]
  %v5928 = vld [vmem:[%s602 + $0x259] sm:$0xff]
  %v5929 = vld [vmem:[%s602 + $0x261] sm:$0xff]
  %v5930 = vld [vmem:[%s602 + $0x271] sm:$0xff]
  %v5931 = vld [vmem:[%s602 + $0x279] sm:$0xff]
  %v5932 = vld [vmem:[%s602 + $0x289] sm:$0xff]
  %v5933 = vld [vmem:[%s602 + $0x291] sm:$0xff]
  %v5934 = vld [vmem:[%s602 + $0x2a1] sm:$0xff]
  %v5935 = vld [vmem:[%s602 + $0x2a9] sm:$0xff]
  %v5936 = vld [vmem:[%s602 + $0x2b9] sm:$0xff]
  %v5937 = vld [vmem:[%s602 + $0x2c1] sm:$0xff]
  %v5938 = vld [vmem:[%s602 + $0x2d1] sm:$0xff]
  %v5939 = vld [vmem:[%s602 + $0x2d9] sm:$0xff]
  %v5940 = vld [vmem:[%s602 + $0x2e9] sm:$0xff]
  %v5941 = vld [vmem:[%s602 + $0x2f1] sm:$0xff]
  %v5942 = vld [vmem:[%s602 + $0x301] sm:$0xff]
  %v5943 = vld [vmem:[%s602 + $0x309] sm:$0xff]
  %v5944 = vld [vmem:[%s602 + $0x319] sm:$0xff]
  %v5945 = vld [vmem:[%s602 + $0x321] sm:$0xff]
  %v5946 = vadd.f32 %v5818, %v5882
  %v5947 = vadd.f32 %v5819, %v5883
  %v5948 = vadd.f32 %v5820, %v5884
  %v5949 = vadd.f32 %v5821, %v5885
  %v5950 = vadd.f32 %v5822, %v5886
  %v5951 = vadd.f32 %v5823, %v5887
  %v5952 = vadd.f32 %v5824, %v5888
  %v5953 = vadd.f32 %v5825, %v5889
  %v5954 = vadd.f32 %v5826, %v5890
  %v5955 = vadd.f32 %v5827, %v5891
  %v5956 = vadd.f32 %v5828, %v5892
  %v5957 = vadd.f32 %v5829, %v5893
  %v5958 = vadd.f32 %v5830, %v5894
  %v5959 = vadd.f32 %v5831, %v5895
  %v5960 = vadd.f32 %v5832, %v5896
  %v5961 = vadd.f32 %v5833, %v5897
  %v5962 = vadd.f32 %v5834, %v5898
  %v5963 = vadd.f32 %v5835, %v5899
  %v5964 = vadd.f32 %v5836, %v5900
  %v5965 = vadd.f32 %v5837, %v5901
  %v5966 = vadd.f32 %v5838, %v5902
  %v5967 = vadd.f32 %v5839, %v5903
  %v5968 = vadd.f32 %v5840, %v5904
  %v5969 = vadd.f32 %v5841, %v5905
  %v5970 = vadd.f32 %v5842, %v5906
  %v5971 = vadd.f32 %v5843, %v5907
  %v5972 = vadd.f32 %v5844, %v5908
  %v5973 = vadd.f32 %v5845, %v5909
  %v5974 = vadd.f32 %v5846, %v5910
  %v5975 = vadd.f32 %v5847, %v5911
  %v5976 = vadd.f32 %v5848, %v5912
  %v5977 = vadd.f32 %v5849, %v5913
  %v5978 = vadd.f32 %v5850, %v5914
  %v5979 = vadd.f32 %v5851, %v5915
  %v5980 = vadd.f32 %v5852, %v5916
  %v5981 = vadd.f32 %v5853, %v5917
  %v5982 = vadd.f32 %v5854, %v5918
  %v5983 = vadd.f32 %v5855, %v5919
  %v5984 = vadd.f32 %v5856, %v5920
  %v5985 = vadd.f32 %v5857, %v5921
  %v5986 = vadd.f32 %v5858, %v5922
  %v5987 = vadd.f32 %v5859, %v5923
  %v5988 = vadd.f32 %v5860, %v5924
  %v5989 = vadd.f32 %v5861, %v5925
  %v5990 = vadd.f32 %v5862, %v5926
  %v5991 = vadd.f32 %v5863, %v5927
  %v5992 = vadd.f32 %v5864, %v5928
  %v5993 = vadd.f32 %v5865, %v5929
  %v5994 = vadd.f32 %v5866, %v5930
  %v5995 = vadd.f32 %v5867, %v5931
  %v5996 = vadd.f32 %v5868, %v5932
  %v5997 = vadd.f32 %v5869, %v5933
  %v5998 = vadd.f32 %v5870, %v5934
  %v5999 = vadd.f32 %v5871, %v5935
  %v6000 = vadd.f32 %v5872, %v5936
  %v6001 = vadd.f32 %v5873, %v5937
  %v6002 = vadd.f32 %v5874, %v5938
  %v6003 = vadd.f32 %v5875, %v5939
  %v6004 = vadd.f32 %v5876, %v5940
  %v6005 = vadd.f32 %v5877, %v5941
  %v6006 = vadd.f32 %v5878, %v5942
  %v6007 = vadd.f32 %v5879, %v5943
  %v6008 = vadd.f32 %v5880, %v5944
  %v6009 = vadd.f32 %v5881, %v5945
  %v6010 = vmax.f32 %v5946, 0.0
  %v6011 = vmax.f32 %v5947, 0.0
  %v6012 = vmax.f32 %v5948, 0.0
  %v6013 = vmax.f32 %v5949, 0.0
  %v6014 = vmax.f32 %v5950, 0.0
  %v6015 = vmax.f32 %v5951, 0.0
  %v6016 = vmax.f32 %v5952, 0.0
  %v6017 = vmax.f32 %v5953, 0.0
  %v6018 = vmax.f32 %v5954, 0.0
  %v6019 = vmax.f32 %v5955, 0.0
  %v6020 = vmax.f32 %v5956, 0.0
  %v6021 = vmax.f32 %v5957, 0.0
  %v6022 = vmax.f32 %v5958, 0.0
  %v6023 = vmax.f32 %v5959, 0.0
  %v6024 = vmax.f32 %v5960, 0.0
  %v6025 = vmax.f32 %v5961, 0.0
  %v6026 = vmax.f32 %v5962, 0.0
  %v6027 = vmax.f32 %v5963, 0.0
  %v6028 = vmax.f32 %v5964, 0.0
  %v6029 = vmax.f32 %v5965, 0.0
  %v6030 = vmax.f32 %v5966, 0.0
  %v6031 = vmax.f32 %v5967, 0.0
  %v6032 = vmax.f32 %v5968, 0.0
  %v6033 = vmax.f32 %v5969, 0.0
  %v6034 = vmax.f32 %v5970, 0.0
  %v6035 = vmax.f32 %v5971, 0.0
  %v6036 = vmax.f32 %v5972, 0.0
  %v6037 = vmax.f32 %v5973, 0.0
  %v6038 = vmax.f32 %v5974, 0.0
  %v6039 = vmax.f32 %v5975, 0.0
  %v6040 = vmax.f32 %v5976, 0.0
  %v6041 = vmax.f32 %v5977, 0.0
  %v6042 = vmax.f32 %v5978, 0.0
  %v6043 = vmax.f32 %v5979, 0.0
  %v6044 = vmax.f32 %v5980, 0.0
  %v6045 = vmax.f32 %v5981, 0.0
  %v6046 = vmax.f32 %v5982, 0.0
  %v6047 = vmax.f32 %v5983, 0.0
  %v6048 = vmax.f32 %v5984, 0.0
  %v6049 = vmax.f32 %v5985, 0.0
  %v6050 = vmax.f32 %v5986, 0.0
  %v6051 = vmax.f32 %v5987, 0.0
  %v6052 = vmax.f32 %v5988, 0.0
  %v6053 = vmax.f32 %v5989, 0.0
  %v6054 = vmax.f32 %v5990, 0.0
  %v6055 = vmax.f32 %v5991, 0.0
  %v6056 = vmax.f32 %v5992, 0.0
  %v6057 = vmax.f32 %v5993, 0.0
  %v6058 = vmax.f32 %v5994, 0.0
  %v6059 = vmax.f32 %v5995, 0.0
  %v6060 = vmax.f32 %v5996, 0.0
  %v6061 = vmax.f32 %v5997, 0.0
  %v6062 = vmax.f32 %v5998, 0.0
  %v6063 = vmax.f32 %v5999, 0.0
  %v6064 = vmax.f32 %v6000, 0.0
  %v6065 = vmax.f32 %v6001, 0.0
  %v6066 = vmax.f32 %v6002, 0.0
  %v6067 = vmax.f32 %v6003, 0.0
  %v6068 = vmax.f32 %v6004, 0.0
  %v6069 = vmax.f32 %v6005, 0.0
  %v6070 = vmax.f32 %v6006, 0.0
  %v6071 = vmax.f32 %v6007, 0.0
  %v6072 = vmax.f32 %v6008, 0.0
  %v6073 = vmax.f32 %v6009, 0.0
  %6074 = vst [vmem:[%s7] sm:$0xff] %v6010
  %6075 = vst [vmem:[%s7 + $0x8] sm:$0xff] %v6011
  %6076 = vst [vmem:[%s7 + $0x10] sm:$0xff] %v6012
  %6077 = vst [vmem:[%s7 + $0x18] sm:$0xff] %v6013
  %6078 = vst [vmem:[%s7 + $0x20] sm:$0xff] %v6014
  %6079 = vst [vmem:[%s7 + $0x28] sm:$0xff] %v6015
  %6080 = vst [vmem:[%s7 + $0x30] sm:$0xff] %v6016
  %6081 = vst [vmem:[%s7 + $0x38] sm:$0xff] %v6017
  %6082 = vst [vmem:[%s7 + $0x40] sm:$0xff] %v6018
  %6083 = vst [vmem:[%s7 + $0x48] sm:$0xff] %v6019
  %6084 = vst [vmem:[%s7 + $0x50] sm:$0xff] %v6020
  %6085 = vst [vmem:[%s7 + $0x58] sm:$0xff] %v6021
  %6086 = vst [vmem:[%s7 + $0x60] sm:$0xff] %v6022
  %6087 = vst [vmem:[%s7 + $0x68] sm:$0xff] %v6023
  %6088 = vst [vmem:[%s7 + $0x70] sm:$0xff] %v6024
  %6089 = vst [vmem:[%s7 + $0x78] sm:$0xff] %v6025
  %6090 = vst [vmem:[%s7 + $0x80] sm:$0xff] %v6026
  %6091 = vst [vmem:[%s7 + $0x88] sm:$0xff] %v6027
  %6092 = vst [vmem:[%s7 + $0x90] sm:$0xff] %v6028
  %6093 = vst [vmem:[%s7 + $0x98] sm:$0xff] %v6029
  %6094 = vst [vmem:[%s7 + $0xa0] sm:$0xff] %v6030
  %6095 = vst [vmem:[%s7 + $0xa8] sm:$0xff] %v6031
  %6096 = vst [vmem:[%s7 + $0xb0] sm:$0xff] %v6032
  %6097 = vst [vmem:[%s7 + $0xb8] sm:$0xff] %v6033
  %6098 = vst [vmem:[%s7 + $0xc0] sm:$0xff] %v6034
  %6099 = vst [vmem:[%s7 + $0xc8] sm:$0xff] %v6035
  %6100 = vst [vmem:[%s7 + $0xd0] sm:$0xff] %v6036
  %6101 = vst [vmem:[%s7 + $0xd8] sm:$0xff] %v6037
  %6102 = vst [vmem:[%s7 + $0xe0] sm:$0xff] %v6038
  %6103 = vst [vmem:[%s7 + $0xe8] sm:$0xff] %v6039
  %6104 = vst [vmem:[%s7 + $0xf0] sm:$0xff] %v6040
  %6105 = vst [vmem:[%s7 + $0xf8] sm:$0xff] %v6041
  %6106 = vst [vmem:[%s7 + $0x100] sm:$0xff] %v6042
  %6107 = vst [vmem:[%s7 + $0x108] sm:$0xff] %v6043
  %6108 = vst [vmem:[%s7 + $0x110] sm:$0xff] %v6044
  %6109 = vst [vmem:[%s7 + $0x118] sm:$0xff] %v6045
  %6110 = vst [vmem:[%s7 + $0x120] sm:$0xff] %v6046
  %6111 = vst [vmem:[%s7 + $0x128] sm:$0xff] %v6047
  %6112 = vst [vmem:[%s7 + $0x130] sm:$0xff] %v6048
  %6113 = vst [vmem:[%s7 + $0x138] sm:$0xff] %v6049
  %6114 = vst [vmem:[%s7 + $0x140] sm:$0xff] %v6050
  %6115 = vst [vmem:[%s7 + $0x148] sm:$0xff] %v6051
  %6116 = vst [vmem:[%s7 + $0x150] sm:$0xff] %v6052
  %6117 = vst [vmem:[%s7 + $0x158] sm:$0xff] %v6053
  %6118 = vst [vmem:[%s7 + $0x160] sm:$0xff] %v6054
  %6119 = vst [vmem:[%s7 + $0x168] sm:$0xff] %v6055
  %6120 = vst [vmem:[%s7 + $0x170] sm:$0xff] %v6056
  %6121 = vst [vmem:[%s7 + $0x178] sm:$0xff] %v6057
  %6122 = vst [vmem:[%s7 + $0x180] sm:$0xff] %v6058
  %6123 = vst [vmem:[%s7 + $0x188] sm:$0xff] %v6059
  %6124 = vst [vmem:[%s7 + $0x190] sm:$0xff] %v6060
  %6125 = vst [vmem:[%s7 + $0x198] sm:$0xff] %v6061
  %6126 = vst [vmem:[%s7 + $0x1a0] sm:$0xff] %v6062
  %6127 = vst [vmem:[%s7 + $0x1a8] sm:$0xff] %v6063
  %6128 = vst [vmem:[%s7 + $0x1b0] sm:$0xff] %v6064
  %6129 = vst [vmem:[%s7 + $0x1b8] sm:$0xff] %v6065
  %6130 = vst [vmem:[%s7 + $0x1c0] sm:$0xff] %v6066
  %6131 = vst [vmem:[%s7 + $0x1c8] sm:$0xff] %v6067
  %6132 = vst [vmem:[%s7 + $0x1d0] sm:$0xff] %v6068
  %6133 = vst [vmem:[%s7 + $0x1d8] sm:$0xff] %v6069
  %6134 = vst [vmem:[%s7 + $0x1e0] sm:$0xff] %v6070
  %6135 = vst [vmem:[%s7 + $0x1e8] sm:$0xff] %v6071
  %6136 = vst [vmem:[%s7 + $0x1f0] sm:$0xff] %v6072
  %6137 = vst [vmem:[%s7 + $0x1f8] sm:$0xff] %v6073
  // Predicated region
  $region30: #{basic_block_forward.1} parent=0 // pred_check
    _
  $region31: #{basic_block_forward.1} parent=0 // pred_check_branch
    %6139 = sbr.rel (0) target = $region33
  $region32: #{basic_block_forward.1} parent=0 // pred_region
    _
  $region33: #{basic_block_forward.1} parent=0 // pred_fallthru
    _
  // Predicated region
  $region34: #{basic_block_forward.1} parent=0 // pred_check
    _
  $region35: #{basic_block_forward.1} parent=0 // pred_check_branch
    %6141 = sbr.rel (0) target = $region37
  $region36: #{basic_block_forward.1} parent=0 // pred_region
    _
  $region37: #{basic_block_forward.1} parent=0 // pred_fallthru
    _

</llo_original>
